<compile_context>
chip_gen: v6e
topology: v6e:2x2x1
jax: 0.10.0
libtpu: 0.0.40
codegen_flags: <defaults>
</compile_context>

<pallas_src>
import math

import numpy as np
import jax
import jax.numpy as jnp
from jax.experimental import pallas as pl
from jax.experimental.pallas import tpu as pltpu

# ----------------------------- configuration -----------------------------
NUM_CLASSES = 10
VOCAB = 10000
EMB = 256

# image path (simplified ResNet50 stand-in)
IMG_C, IMG_H, IMG_W = 3, 16, 16
CONV_K = 3
CONV_OUT = 32
N_POS = IMG_H * IMG_W                     # 256 conv spatial positions
K_RAW = CONV_K * CONV_K * IMG_C           # 27
K_PAD = 32                                # lane-friendly padded im2col depth
FC_IN = (IMG_H // 2) * (IMG_W // 2) * CONV_OUT   # 2048 == resnet50.fc.in_features

# audio / MFCC (torchaudio.transforms.MFCC semantics, center=False)
SR = 16000
N_FFT = 400
HOP = 160
N_FREQ = N_FFT // 2 + 1                   # 201
N_FREQ_PAD = 256                          # lane-padded spectrum width
N_MELS = 23
N_MFCC = 256
TOP_DB = 80.0
AUDIO_LEN = N_FFT + 4 * HOP               # -> 5 frames
N_FRAMES = 1 + (AUDIO_LEN - N_FFT) // HOP

_LOG10_SCALE = 10.0 / math.log(10.0)


# ------------------------------ Pallas kernels ----------------------------
def _feature_kernel(audio_ref, patches_ref, wdft_ref, melfb_ref, dct_ref,
                    convw_ref, convb_ref, audio_out_ref, conv_out_ref, fr_ref):
    """Per-batch-item feature extraction: MFCC(mean over time) + conv stand-in."""
    # ---- audio: frames built in-kernel, window folded into the DFT basis ----
    a = audio_ref[0]                                            # (1, AUDIO_LEN)
    for i in range(N_FRAMES):                                   # static unroll
        fr_ref[i:i + 1, :] = a[:, i * HOP:i * HOP + N_FFT]
    spec = jnp.dot(fr_ref[...], wdft_ref[...],
                   preferred_element_type=jnp.float32)          # (F, 512)
    re = spec[:, :N_FREQ_PAD]
    im = spec[:, N_FREQ_PAD:]
    power = re * re + im * im                                   # cols >=201 are 0
    mel = jnp.dot(power, melfb_ref[...],
                  preferred_element_type=jnp.float32)           # (F, 23)
    db = _LOG10_SCALE * jnp.log(jnp.maximum(mel, 1e-10))        # 10*log10
    db = jnp.maximum(db, jnp.max(db, axis=(0, 1), keepdims=True) - TOP_DB)
    db_mean = jnp.mean(db, axis=0, keepdims=True)               # mean over time,
    audio_out_ref[0] = jnp.dot(db_mean, dct_ref[...],           # then (linear) DCT
                               preferred_element_type=jnp.float32)  # (1, 256)

    # ---- image: 3x3 conv stand-in, channel-major so output is lane-dense ----
    pt = patches_ref[0]                                         # (K_PAD, 256)
    conv = jnp.dot(convw_ref[...], pt,
                   preferred_element_type=jnp.float32) + convb_ref[...]
    conv_out_ref[0] = jnp.maximum(conv, 0.0).astype(conv_out_ref.dtype)  # bf16


def _head_kernel(word_ref, convflat_ref, audio_ref, fcw_ref, fcb_ref,
                 w1_ref, b1_ref, w2_ref, b2_ref, w3_ref, b3_ref,
                 w4_ref, b4_ref, o_ref, tok_ref):
    """Image fc + token stack + shared MLP + output layer (single invocation)."""
    b = word_ref.shape[0]
    # image embedding: (B, 8192) bf16 @ (8192, 256) bf16, f32 accumulation
    img = jnp.dot(convflat_ref[...], fcw_ref[...],
                  preferred_element_type=jnp.float32) + fcb_ref[...]
    # stack the three modality tokens (modality-major) into a VMEM scratch
    tok_ref[0:b, :] = word_ref[...]
    tok_ref[b:2 * b, :] = img
    tok_ref[2 * b:3 * b, :] = audio_ref[...]
    h = tok_ref[...].astype(jnp.bfloat16)                       # (3B, 256)
    h = jnp.maximum(jnp.dot(h, w1_ref[...],
                            preferred_element_type=jnp.float32) + b1_ref[...], 0.0)
    h = jnp.maximum(jnp.dot(h.astype(jnp.bfloat16), w2_ref[...],
                            preferred_element_type=jnp.float32) + b2_ref[...], 0.0)
    h = jnp.maximum(jnp.dot(h.astype(jnp.bfloat16), w3_ref[...],
                            preferred_element_type=jnp.float32) + b3_ref[...], 0.0)
    o_ref[...] = jnp.dot(h, w4_ref[...],
                         preferred_element_type=jnp.float32) + b4_ref[...]


# ------------------------------ kernel wrappers ----------------------------
def pallas_features(audio3, patches_t, p):
    B = audio3.shape[0]
    return pl.pallas_call(
        _feature_kernel,
        out_shape=(jax.ShapeDtypeStruct((B, 1, N_MFCC), jnp.float32),
                   jax.ShapeDtypeStruct((B, CONV_OUT, N_POS), jnp.bfloat16)),
        grid=(B,),
        in_specs=[
            pl.BlockSpec((1, 1, AUDIO_LEN), lambda b: (b, 0, 0)),        # x_audio
            pl.BlockSpec((1, K_PAD, N_POS), lambda b: (b, 0, 0)),        # patches^T
            pl.BlockSpec((N_FFT, 2 * N_FREQ_PAD), lambda b: (0, 0)),     # [cos|sin]*win
            pl.BlockSpec((N_FREQ_PAD, N_MELS), lambda b: (0, 0)),        # mel fb
            pl.BlockSpec((N_MELS, N_MFCC), lambda b: (0, 0)),            # DCT
            pl.BlockSpec((CONV_OUT, K_PAD), lambda b: (0, 0)),           # conv_w^T
            pl.BlockSpec((CONV_OUT, 1), lambda b: (0, 0)),               # conv bias
        ],
        out_specs=(
            pl.BlockSpec((1, 1, N_MFCC), lambda b: (b, 0, 0)),
            pl.BlockSpec((1, CONV_OUT, N_POS), lambda b: (b, 0, 0)),
        ),
        scratch_shapes=[pltpu.VMEM((N_FRAMES, N_FFT), jnp.float32)],
        compiler_params=pltpu.CompilerParams(
            dimension_semantics=("parallel",)),   # shard batch across v7x's 2 TCs
    )(audio3, patches_t, p["wdft"], p["melfb"], p["dct"], p["conv_wT"], p["conv_b"])


def pallas_head(word_e, conv_flat, audio_e, p):
    B = word_e.shape[0]
    args = (word_e, conv_flat, audio_e, p["fc_w"], p["fc_b"],
            p["w1"], p["b1"], p["w2"], p["b2"], p["w3"], p["b3"],
            p["w4"], p["b4"])
    # All-resident full-array blocks; total VMEM (incl. double-buffering of the
    # 4 MiB bf16 fc weight) is ~11 MiB -- well under the 32 MiB request and
    # v7x's 64 MiB physical VMEM.
    return pl.pallas_call(
        _head_kernel,
        out_shape=jax.ShapeDtypeStruct((3 * B, NUM_CLASSES), jnp.float32),
        grid=(1,),
        in_specs=[pl.BlockSpec(a.shape, lambda i: (0, 0)) for a in args],
        out_specs=pl.BlockSpec((3 * B, NUM_CLASSES), lambda i: (0, 0)),
        scratch_shapes=[pltpu.VMEM((3 * B, EMB), jnp.float32)],
        compiler_params=pltpu.CompilerParams(vmem_limit_bytes=32 * 1024 * 1024),
    )(*args)


# --------------------------- fixed (non-learned) bases ---------------------------
def _hz_to_mel(f):
    return 2595.0 * np.log10(1.0 + np.asarray(f, np.float64) / 700.0)


def _mel_to_hz(m):
    return 700.0 * (10.0 ** (np.asarray(m, np.float64) / 2595.0) - 1.0)


def mel_filterbank(n_freqs, n_mels, sr, f_min=0.0, f_max=None):
    f_max = f_max if f_max is not None else sr / 2.0
    all_freqs = np.linspace(0.0, sr / 2.0, n_freqs)
    f_pts = _mel_to_hz(np.linspace(_hz_to_mel(f_min), _hz_to_mel(f_max), n_mels + 2))
    fb = np.zeros((n_freqs, n_mels), np.float64)
    for m in range(n_mels):
        f_l, f_c, f_r = f_pts[m], f_pts[m + 1], f_pts[m + 2]
        up = (all_freqs - f_l) / (f_c - f_l)
        down = (f_r - all_freqs) / (f_r - f_c)
        fb[:, m] = np.maximum(0.0, np.minimum(up, down))
    return fb.astype(np.float32)                                  # (n_freqs, n_mels)


def create_dct(n_mfcc, n_mels):
    n = np.arange(n_mels, dtype=np.float64)
    k = np.arange(n_mfcc, dtype=np.float64)[:, None]
    dct = np.cos(np.pi / n_mels * (n + 0.5) * k)                  # (n_mfcc, n_mels)
    dct[0] *= 1.0 / math.sqrt(2.0)                                # ortho norm
    dct *= math.sqrt(2.0 / n_mels)
    return dct.T.astype(np.float32)                               # (n_mels, n_mfcc)


def dft_bases(n_fft, n_freqs):
    n = np.arange(n_fft, dtype=np.float64)[:, None]
    k = np.arange(n_freqs, dtype=np.float64)[None, :]
    ang = 2.0 * np.pi * n * k / n_fft
    return np.cos(ang).astype(np.float32), np.sin(ang).astype(np.float32)


def hann_window(n):
    i = np.arange(n, dtype=np.float64)
    return (0.5 - 0.5 * np.cos(2.0 * np.pi * i / n)).astype(np.float32)


# ----------------------------- parameter init -----------------------------
def init_params(key):
    ks = jax.random.split(key, 8)
    p = {}
    p["emb"] = 0.02 * jax.random.normal(ks[0], (VOCAB, EMB), jnp.float32)

    # image conv stand-in: weight pre-transposed + K padded 27->32
    conv_w = 0.1 * jax.random.normal(ks[1], (K_RAW, CONV_OUT), jnp.float32)
    p["conv_wT"] = jnp.pad(conv_w.T, ((0, 0), (0, K_PAD - K_RAW)))       # (32, 32)
    p["conv_b"] = jnp.zeros((CONV_OUT, 1), jnp.float32)

    # image fc (resnet50.fc stand-in): reference weight (2048, 256) in torch's
    # channel-major (C, H/2, W/2) flatten order; fold the 2x2 avg-pool into it so
    # the fc consumes un-pooled conv activations (row order c*256 + h*16 + w).
    fc_w = 0.05 * jax.random.normal(ks[2], (FC_IN, EMB), jnp.float32)
    cc, hh, ww = np.meshgrid(np.arange(CONV_OUT), np.arange(IMG_H),
                             np.arange(IMG_W), indexing="ij")
    pooled_idx = (cc * (IMG_H // 2) + hh // 2) * (IMG_W // 2) + ww // 2  # (C, H, W)
    p["fc_w"] = (fc_w[jnp.asarray(pooled_idx.reshape(-1))] / 4.0).astype(jnp.bfloat16)
    p["fc_b"] = jnp.zeros((1, EMB), jnp.float32)

    # shared_layers + output_layer (bf16 weights, f32 biases / accumulation)
    p["w1"] = (0.05 * jax.random.normal(ks[3], (EMB, 512), jnp.float32)).astype(jnp.bfloat16)
    p["b1"] = jnp.zeros((1, 512), jnp.float32)
    p["w2"] = (0.05 * jax.random.normal(ks[4], (512, 512), jnp.float32)).astype(jnp.bfloat16)
    p["b2"] = jnp.zeros((1, 512), jnp.float32)
    p["w3"] = (0.05 * jax.random.normal(ks[5], (512, EMB), jnp.float32)).astype(jnp.bfloat16)
    p["b3"] = jnp.zeros((1, EMB), jnp.float32)
    p["w4"] = 0.05 * jax.random.normal(ks[6], (EMB, NUM_CLASSES), jnp.float32)
    p["b4"] = jnp.zeros((1, NUM_CLASSES), jnp.float32)

    # fixed MFCC bases: Hann window folded into one lane-padded [cos | sin] basis
    cos_b, sin_b = dft_bases(N_FFT, N_FREQ)
    win = hann_window(N_FFT)[:, None]
    wdft = np.zeros((N_FFT, 2 * N_FREQ_PAD), np.float32)
    wdft[:, :N_FREQ] = win * cos_b
    wdft[:, N_FREQ_PAD:N_FREQ_PAD + N_FREQ] = win * sin_b
    p["wdft"] = jnp.asarray(wdft)
    melfb = np.zeros((N_FREQ_PAD, N_MELS), np.float32)
    melfb[:N_FREQ, :] = mel_filterbank(N_FREQ, N_MELS, SR)
    p["melfb"] = jnp.asarray(melfb)
    p["dct"] = jnp.asarray(create_dct(N_MFCC, N_MELS))
    return p


# ------------------------------ forward pass ------------------------------
def im2col_3x3(x_nhwc):
    B, H, W, C = x_nhwc.shape
    xp = jnp.pad(x_nhwc, ((0, 0), (1, 1), (1, 1), (0, 0)))
    cols = [xp[:, di:di + H, dj:dj + W, :] for di in range(3) for dj in range(3)]
    return jnp.concatenate(cols, axis=-1)                        # (B, H, W, 27)


def multimodal_forward(params, x_word, x_image, x_audio):
    B = x_image.shape[0]

    # word branch: tiny B-row gather kept as XLA glue
    word_e = jnp.take(params["emb"], x_word, axis=0)             # (B, 256)

    # image branch glue: NCHW->NHWC, 3x3 im2col, pad K 27->32, transpose to (B,K,P)
    x_nhwc = jnp.transpose(x_image, (0, 2, 3, 1))
    patches = im2col_3x3(x_nhwc).reshape(B, N_POS, K_RAW)
    patches = jnp.pad(patches, ((0, 0), (0, 0), (0, K_PAD - K_RAW)))
    patches_t = jnp.transpose(patches, (0, 2, 1))                # (B, 32, 256)

    audio3 = x_audio.reshape(B, 1, AUDIO_LEN)

    # kernel 1: per-item MFCC (time-pooled) + conv activations
    audio_e3, conv_t = pallas_features(audio3, patches_t, params)
    audio_e = audio_e3.reshape(B, N_MFCC)                        # (B, 256)
    conv_flat = conv_t.reshape(B, CONV_OUT * N_POS)              # (B, 8192) bf16

    # kernel 2: image fc + 3-token stack + shared MLP + output layer
    logits = pallas_head(word_e, conv_flat, audio_e, params)     # (3B, 10)
    return logits.reshape(3, B, NUM_CLASSES).transpose(1, 0, 2)  # (B, 3, 10)


# ----------------------------------- main -----------------------------------
if __name__ == "__main__":
    B = 2
    key = jax.random.PRNGKey(0)
    k_params, k_word, k_img, k_aud = jax.random.split(key, 4)

    params = init_params(k_params)
    x_word = jax.random.randint(k_word, (B,), 0, VOCAB, dtype=jnp.int32)
    x_image = jax.random.normal(k_img, (B, IMG_C, IMG_H, IMG_W), jnp.float32)
    x_audio = jax.random.normal(k_aud, (B, AUDIO_LEN), jnp.float32)

    fwd = jax.jit(multimodal_forward)
    out = jax.block_until_ready(fwd(params, x_word, x_image, x_audio))
    assert out.shape == (B, 3, NUM_CLASSES), out.shape
    assert bool(jnp.all(jnp.isfinite(out)))
    print("KERNEL_OK")
</pallas_src>

<mosaic_0001>
module attributes {stable_mosaic.version = 11 : i64} {
  func.func @_feature_kernel(%arg0: i32, %arg1: memref<1x1x1040xf32, #tpu.memory_space<vmem>>, %arg2: memref<1x32x256xf32, #tpu.memory_space<vmem>>, %arg3: memref<400x512xf32, #tpu.memory_space<vmem>>, %arg4: memref<256x23xf32, #tpu.memory_space<vmem>>, %arg5: memref<23x256xf32, #tpu.memory_space<vmem>>, %arg6: memref<32x32xf32, #tpu.memory_space<vmem>>, %arg7: memref<32x1xf32, #tpu.memory_space<vmem>>, %arg8: memref<1x1x256xf32, #tpu.memory_space<vmem>>, %arg9: memref<1x32x256xbf16, #tpu.memory_space<vmem>>, %arg10: memref<5x400xf32, #tpu.memory_space<vmem>>) attributes {dimension_semantics = [#tpu.dimension_semantics<parallel>], iteration_bounds = array<i64: 2>, scalar_prefetch = 0 : i64, scratch_operands = 1 : i64, tpu.core_type = #tpu.core_type<tc>, window_params = [{transform_indices = @transform_0, window_bounds = array<i64: 1, 1, 1040>}, {transform_indices = @transform_1, window_bounds = array<i64: 1, 32, 256>}, {pipeline_mode = #tpu.pipeline_mode<synchronous>, transform_indices = @transform_2, window_bounds = array<i64: 400, 512>}, {pipeline_mode = #tpu.pipeline_mode<synchronous>, transform_indices = @transform_3, window_bounds = array<i64: 256, 23>}, {pipeline_mode = #tpu.pipeline_mode<synchronous>, transform_indices = @transform_4, window_bounds = array<i64: 23, 256>}, {pipeline_mode = #tpu.pipeline_mode<synchronous>, transform_indices = @transform_5, window_bounds = array<i64: 32, 32>}, {pipeline_mode = #tpu.pipeline_mode<synchronous>, transform_indices = @transform_6, window_bounds = array<i64: 32, 1>}, {transform_indices = @transform_7, window_bounds = array<i64: 1, 1, 256>}, {transform_indices = @transform_8, window_bounds = array<i64: 1, 32, 256>}]} {
    %c0 = arith.constant 0 : index
    %c0_0 = arith.constant 0 : index
    %c0_1 = arith.constant 0 : index
    %0 = vector.load %arg1[%c0, %c0_0, %c0_1] : memref<1x1x1040xf32, #tpu.memory_space<vmem>>, vector<1x1x1040xf32>
    %1 = vector.shape_cast %0 : vector<1x1x1040xf32> to vector<1x1040xf32>
    %2 = vector.extract_strided_slice %1 {offsets = [0, 0], sizes = [1, 400], strides = [1, 1]} : vector<1x1040xf32> to vector<1x400xf32>
    %c0_2 = arith.constant 0 : index
    %c0_3 = arith.constant 0 : index
    %3 = vector.load %arg10[%c0_2, %c0_3] : memref<5x400xf32, #tpu.memory_space<vmem>>, vector<1x400xf32>
    tpu.vector_store %arg10[%c0_2, %c0_3], %2 {strides = array<i32>} : memref<5x400xf32, #tpu.memory_space<vmem>>, vector<1x400xf32>,
    %4 = vector.extract_strided_slice %1 {offsets = [0, 160], sizes = [1, 400], strides = [1, 1]} : vector<1x1040xf32> to vector<1x400xf32>
    %c1 = arith.constant 1 : index
    %c0_4 = arith.constant 0 : index
    %5 = vector.load %arg10[%c1, %c0_4] : memref<5x400xf32, #tpu.memory_space<vmem>>, vector<1x400xf32>
    tpu.vector_store %arg10[%c1, %c0_4], %4 {strides = array<i32>} : memref<5x400xf32, #tpu.memory_space<vmem>>, vector<1x400xf32>,
    %6 = vector.extract_strided_slice %1 {offsets = [0, 320], sizes = [1, 400], strides = [1, 1]} : vector<1x1040xf32> to vector<1x400xf32>
    %c2 = arith.constant 2 : index
    %c0_5 = arith.constant 0 : index
    %7 = vector.load %arg10[%c2, %c0_5] : memref<5x400xf32, #tpu.memory_space<vmem>>, vector<1x400xf32>
    tpu.vector_store %arg10[%c2, %c0_5], %6 {strides = array<i32>} : memref<5x400xf32, #tpu.memory_space<vmem>>, vector<1x400xf32>,
    %8 = vector.extract_strided_slice %1 {offsets = [0, 480], sizes = [1, 400], strides = [1, 1]} : vector<1x1040xf32> to vector<1x400xf32>
    %c3 = arith.constant 3 : index
    %c0_6 = arith.constant 0 : index
    %9 = vector.load %arg10[%c3, %c0_6] : memref<5x400xf32, #tpu.memory_space<vmem>>, vector<1x400xf32>
    tpu.vector_store %arg10[%c3, %c0_6], %8 {strides = array<i32>} : memref<5x400xf32, #tpu.memory_space<vmem>>, vector<1x400xf32>,
    %10 = vector.extract_strided_slice %1 {offsets = [0, 640], sizes = [1, 400], strides = [1, 1]} : vector<1x1040xf32> to vector<1x400xf32>
    %c4 = arith.constant 4 : index
    %c0_7 = arith.constant 0 : index
    %11 = vector.load %arg10[%c4, %c0_7] : memref<5x400xf32, #tpu.memory_space<vmem>>, vector<1x400xf32>
    tpu.vector_store %arg10[%c4, %c0_7], %10 {strides = array<i32>} : memref<5x400xf32, #tpu.memory_space<vmem>>, vector<1x400xf32>,
    %c0_8 = arith.constant 0 : index
    %c0_9 = arith.constant 0 : index
    %12 = vector.load %arg10[%c0_8, %c0_9] : memref<5x400xf32, #tpu.memory_space<vmem>>, vector<5x400xf32>
    %c0_10 = arith.constant 0 : index
    %c0_11 = arith.constant 0 : index
    %13 = vector.load %arg3[%c0_10, %c0_11] : memref<400x512xf32, #tpu.memory_space<vmem>>, vector<400x512xf32>
    %cst = arith.constant dense<0.000000e+00> : vector<5x512xf32>
    %14 = tpu.matmul %12, %13, %cst {dimension_numbers = #tpu.dot_dimension_numbers<[1], [0], [0], [1], [0, 0, 1, 1], [], []>} : vector<5x400xf32>, vector<400x512xf32>, vector<5x512xf32> -> vector<5x512xf32>
    %15 = vector.extract_strided_slice %14 {offsets = [0, 0], sizes = [5, 256], strides = [1, 1]} : vector<5x512xf32> to vector<5x256xf32>
    %16 = vector.extract_strided_slice %14 {offsets = [0, 256], sizes = [5, 256], strides = [1, 1]} : vector<5x512xf32> to vector<5x256xf32>
    %17 = arith.mulf %15, %15 : vector<5x256xf32>
    %18 = arith.mulf %16, %16 : vector<5x256xf32>
    %19 = arith.addf %17, %18 : vector<5x256xf32>
    %c0_12 = arith.constant 0 : index
    %c0_13 = arith.constant 0 : index
    %20 = vector.load %arg4[%c0_12, %c0_13] : memref<256x23xf32, #tpu.memory_space<vmem>>, vector<256x23xf32>
    %cst_14 = arith.constant dense<0.000000e+00> : vector<5x23xf32>
    %21 = tpu.matmul %19, %20, %cst_14 {dimension_numbers = #tpu.dot_dimension_numbers<[1], [0], [0], [1], [0, 0, 1, 1], [], []>} : vector<5x256xf32>, vector<256x23xf32>, vector<5x23xf32> -> vector<5x23xf32>
    %cst_15 = arith.constant 1.000000e-10 : f32
    %22 = vector.broadcast %cst_15 : f32 to vector<5x23xf32>
    %23 = arith.maximumf %21, %22 : vector<5x23xf32>
    %24 = math.log %23 : vector<5x23xf32>
    %cst_16 = arith.constant 4.34294462 : f32
    %25 = vector.broadcast %cst_16 : f32 to vector<5x23xf32>
    %26 = arith.mulf %25, %24 : vector<5x23xf32>
    %27 = vector.shape_cast %26 : vector<5x23xf32> to vector<1x5x23xf32>
    %cst_17 = arith.constant dense<0xFF800000> : vector<1xf32>
    %28 = vector.multi_reduction <maximumf>, %27, %cst_17 [1, 2] : vector<1x5x23xf32> to vector<1xf32>
    %29 = vector.shape_cast %28 : vector<1xf32> to vector<1x1x1xf32>
    %30 = vector.extract %29[0, 0, 0] : f32 from vector<1x1x1xf32>
    %31 = vector.broadcast %30 : f32 to vector<1x1xf32>
    %cst_18 = arith.constant 8.000000e+01 : f32
    %32 = vector.broadcast %cst_18 : f32 to vector<1x1xf32>
    %33 = arith.subf %31, %32 : vector<1x1xf32>
    %34 = vector.broadcast %33 : vector<1x1xf32> to vector<5x23xf32>
    %35 = arith.maximumf %26, %34 : vector<5x23xf32>
    %cst_19 = arith.constant dense<0.000000e+00> : vector<23xf32>
    %36 = vector.multi_reduction <add>, %35, %cst_19 [0] : vector<5x23xf32> to vector<23xf32>
    %37 = vector.shape_cast %36 : vector<23xf32> to vector<1x23xf32>
    %cst_20 = arith.constant 5.000000e+00 : f32
    %38 = vector.broadcast %cst_20 : f32 to vector<1x23xf32>
    %39 = arith.divf %37, %38 : vector<1x23xf32>
    %c0_21 = arith.constant 0 : index
    %c0_22 = arith.constant 0 : index
    %40 = vector.load %arg5[%c0_21, %c0_22] : memref<23x256xf32, #tpu.memory_space<vmem>>, vector<23x256xf32>
    %cst_23 = arith.constant dense<0.000000e+00> : vector<1x256xf32>
    %41 = tpu.matmul %39, %40, %cst_23 {dimension_numbers = #tpu.dot_dimension_numbers<[1], [0], [0], [1], [0, 0, 1, 1], [], []>} : vector<1x23xf32>, vector<23x256xf32>, vector<1x256xf32> -> vector<1x256xf32>
    %c0_24 = arith.constant 0 : index
    %c0_25 = arith.constant 0 : index
    %c0_26 = arith.constant 0 : index
    %42 = vector.load %arg8[%c0_24, %c0_25, %c0_26] : memref<1x1x256xf32, #tpu.memory_space<vmem>>, vector<1x1x256xf32>
    %43 = vector.shape_cast %42 : vector<1x1x256xf32> to vector<1x256xf32>
    %44 = vector.shape_cast %41 : vector<1x256xf32> to vector<1x1x256xf32>
    tpu.vector_store %arg8[%c0_24, %c0_25, %c0_26], %44 {strides = array<i32>} : memref<1x1x256xf32, #tpu.memory_space<vmem>>, vector<1x1x256xf32>,
    %c0_27 = arith.constant 0 : index
    %c0_28 = arith.constant 0 : index
    %c0_29 = arith.constant 0 : index
    %45 = vector.load %arg2[%c0_27, %c0_28, %c0_29] : memref<1x32x256xf32, #tpu.memory_space<vmem>>, vector<1x32x256xf32>
    %46 = vector.shape_cast %45 : vector<1x32x256xf32> to vector<32x256xf32>
    %c0_30 = arith.constant 0 : index
    %c0_31 = arith.constant 0 : index
    %47 = vector.load %arg6[%c0_30, %c0_31] : memref<32x32xf32, #tpu.memory_space<vmem>>, vector<32x32xf32>
    %cst_32 = arith.constant dense<0.000000e+00> : vector<32x256xf32>
    %48 = tpu.matmul %47, %46, %cst_32 {dimension_numbers = #tpu.dot_dimension_numbers<[1], [0], [0], [1], [0, 0, 1, 1], [], []>} : vector<32x32xf32>, vector<32x256xf32>, vector<32x256xf32> -> vector<32x256xf32>
    %c0_33 = arith.constant 0 : index
    %c0_34 = arith.constant 0 : index
    %49 = vector.load %arg7[%c0_33, %c0_34] : memref<32x1xf32, #tpu.memory_space<vmem>>, vector<32x1xf32>
    %50 = vector.broadcast %49 : vector<32x1xf32> to vector<32x256xf32>
    %51 = arith.addf %48, %50 : vector<32x256xf32>
    %cst_35 = arith.constant 0.000000e+00 : f32
    %52 = vector.broadcast %cst_35 : f32 to vector<32x256xf32>
    %53 = arith.maximumf %51, %52 : vector<32x256xf32>
    %54 = arith.truncf %53 : vector<32x256xf32> to vector<32x256xbf16>
    %c0_36 = arith.constant 0 : index
    %c0_37 = arith.constant 0 : index
    %c0_38 = arith.constant 0 : index
    %55 = vector.load %arg9[%c0_36, %c0_37, %c0_38] : memref<1x32x256xbf16, #tpu.memory_space<vmem>>, vector<1x32x256xbf16>
    %56 = vector.shape_cast %55 : vector<1x32x256xbf16> to vector<32x256xbf16>
    %57 = vector.shape_cast %54 : vector<32x256xbf16> to vector<1x32x256xbf16>
    tpu.vector_store %arg9[%c0_36, %c0_37, %c0_38], %57 {strides = array<i32>} : memref<1x32x256xbf16, #tpu.memory_space<vmem>>, vector<1x32x256xbf16>,
    return
  }
  func.func @transform_0(%arg0: i32) -> (i32, i32, i32) {
    %c0_i32 = arith.constant 0 : i32
    %c0_i32_0 = arith.constant 0 : i32
    %c0_i32_1 = arith.constant 0 : i32
    return %arg0, %c0_i32, %c0_i32_0 : i32, i32, i32
  }
  func.func @transform_1(%arg0: i32) -> (i32, i32, i32) {
    %c0_i32 = arith.constant 0 : i32
    %c0_i32_0 = arith.constant 0 : i32
    %c0_i32_1 = arith.constant 0 : i32
    return %arg0, %c0_i32, %c0_i32_0 : i32, i32, i32
  }
  func.func @transform_2(%arg0: i32) -> (i32, i32) {
    %c0_i32 = arith.constant 0 : i32
    %c0_i32_0 = arith.constant 0 : i32
    %c0_i32_1 = arith.constant 0 : i32
    return %c0_i32, %c0_i32_0 : i32, i32
  }
  func.func @transform_3(%arg0: i32) -> (i32, i32) {
    %c0_i32 = arith.constant 0 : i32
    %c0_i32_0 = arith.constant 0 : i32
    %c0_i32_1 = arith.constant 0 : i32
    return %c0_i32, %c0_i32_0 : i32, i32
  }
  func.func @transform_4(%arg0: i32) -> (i32, i32) {
    %c0_i32 = arith.constant 0 : i32
    %c0_i32_0 = arith.constant 0 : i32
    %c0_i32_1 = arith.constant 0 : i32
    return %c0_i32, %c0_i32_0 : i32, i32
  }
  func.func @transform_5(%arg0: i32) -> (i32, i32) {
    %c0_i32 = arith.constant 0 : i32
    %c0_i32_0 = arith.constant 0 : i32
    %c0_i32_1 = arith.constant 0 : i32
    return %c0_i32, %c0_i32_0 : i32, i32
  }
  func.func @transform_6(%arg0: i32) -> (i32, i32) {
    %c0_i32 = arith.constant 0 : i32
    %c0_i32_0 = arith.constant 0 : i32
    %c0_i32_1 = arith.constant 0 : i32
    return %c0_i32, %c0_i32_0 : i32, i32
  }
  func.func @transform_7(%arg0: i32) -> (i32, i32, i32) {
    %c0_i32 = arith.constant 0 : i32
    %c0_i32_0 = arith.constant 0 : i32
    %c0_i32_1 = arith.constant 0 : i32
    return %arg0, %c0_i32, %c0_i32_0 : i32, i32, i32
  }
  func.func @transform_8(%arg0: i32) -> (i32, i32, i32) {
    %c0_i32 = arith.constant 0 : i32
    %c0_i32_0 = arith.constant 0 : i32
    %c0_i32_1 = arith.constant 0 : i32
    return %arg0, %c0_i32, %c0_i32_0 : i32, i32, i32
  }
}

module attributes {stable_mosaic.version = 11 : i64} {
  func.func @_head_kernel(%arg0: i32, %arg1: memref<2x256xf32, #tpu.memory_space<vmem>>, %arg2: memref<2x8192xbf16, #tpu.memory_space<vmem>>, %arg3: memref<2x256xf32, #tpu.memory_space<vmem>>, %arg4: memref<8192x256xbf16, #tpu.memory_space<vmem>>, %arg5: memref<1x256xf32, #tpu.memory_space<vmem>>, %arg6: memref<256x512xbf16, #tpu.memory_space<vmem>>, %arg7: memref<1x512xf32, #tpu.memory_space<vmem>>, %arg8: memref<512x512xbf16, #tpu.memory_space<vmem>>, %arg9: memref<1x512xf32, #tpu.memory_space<vmem>>, %arg10: memref<512x256xbf16, #tpu.memory_space<vmem>>, %arg11: memref<1x256xf32, #tpu.memory_space<vmem>>, %arg12: memref<256x10xf32, #tpu.memory_space<vmem>>, %arg13: memref<1x10xf32, #tpu.memory_space<vmem>>, %arg14: memref<6x10xf32, #tpu.memory_space<vmem>>, %arg15: memref<6x256xf32, #tpu.memory_space<vmem>>) attributes {dimension_semantics = [#tpu.dimension_semantics<arbitrary>], iteration_bounds = array<i64: 1>, scalar_prefetch = 0 : i64, scratch_operands = 1 : i64, tpu.core_type = #tpu.core_type<tc>, window_params = [{pipeline_mode = #tpu.pipeline_mode<synchronous>, transform_indices = @transform_0, window_bounds = array<i64: 2, 256>}, {pipeline_mode = #tpu.pipeline_mode<synchronous>, transform_indices = @transform_1, window_bounds = array<i64: 2, 8192>}, {pipeline_mode = #tpu.pipeline_mode<synchronous>, transform_indices = @transform_2, window_bounds = array<i64: 2, 256>}, {pipeline_mode = #tpu.pipeline_mode<synchronous>, transform_indices = @transform_3, window_bounds = array<i64: 8192, 256>}, {pipeline_mode = #tpu.pipeline_mode<synchronous>, transform_indices = @transform_4, window_bounds = array<i64: 1, 256>}, {pipeline_mode = #tpu.pipeline_mode<synchronous>, transform_indices = @transform_5, window_bounds = array<i64: 256, 512>}, {pipeline_mode = #tpu.pipeline_mode<synchronous>, transform_indices = @transform_6, window_bounds = array<i64: 1, 512>}, {pipeline_mode = #tpu.pipeline_mode<synchronous>, transform_indices = @transform_7, window_bounds = array<i64: 512, 512>}, {pipeline_mode = #tpu.pipeline_mode<synchronous>, transform_indices = @transform_8, window_bounds = array<i64: 1, 512>}, {pipeline_mode = #tpu.pipeline_mode<synchronous>, transform_indices = @transform_9, window_bounds = array<i64: 512, 256>}, {pipeline_mode = #tpu.pipeline_mode<synchronous>, transform_indices = @transform_10, window_bounds = array<i64: 1, 256>}, {pipeline_mode = #tpu.pipeline_mode<synchronous>, transform_indices = @transform_11, window_bounds = array<i64: 256, 10>}, {pipeline_mode = #tpu.pipeline_mode<synchronous>, transform_indices = @transform_12, window_bounds = array<i64: 1, 10>}, {pipeline_mode = #tpu.pipeline_mode<synchronous>, transform_indices = @transform_13, window_bounds = array<i64: 6, 10>}]} {
    %c0 = arith.constant 0 : index
    %c0_0 = arith.constant 0 : index
    %0 = vector.load %arg2[%c0, %c0_0] : memref<2x8192xbf16, #tpu.memory_space<vmem>>, vector<2x8192xbf16>
    %c0_1 = arith.constant 0 : index
    %c0_2 = arith.constant 0 : index
    %1 = vector.load %arg4[%c0_1, %c0_2] : memref<8192x256xbf16, #tpu.memory_space<vmem>>, vector<8192x256xbf16>
    %cst = arith.constant dense<0.000000e+00> : vector<2x256xf32>
    %2 = tpu.matmul %0, %1, %cst {dimension_numbers = #tpu.dot_dimension_numbers<[1], [0], [0], [1], [0, 0, 1, 1], [], []>} : vector<2x8192xbf16>, vector<8192x256xbf16>, vector<2x256xf32> -> vector<2x256xf32>
    %c0_3 = arith.constant 0 : index
    %c0_4 = arith.constant 0 : index
    %3 = vector.load %arg5[%c0_3, %c0_4] : memref<1x256xf32, #tpu.memory_space<vmem>>, vector<1x256xf32>
    %4 = vector.broadcast %3 : vector<1x256xf32> to vector<2x256xf32>
    %5 = arith.addf %2, %4 : vector<2x256xf32>
    %c0_5 = arith.constant 0 : index
    %c0_6 = arith.constant 0 : index
    %6 = vector.load %arg1[%c0_5, %c0_6] : memref<2x256xf32, #tpu.memory_space<vmem>>, vector<2x256xf32>
    %c0_7 = arith.constant 0 : index
    %c0_8 = arith.constant 0 : index
    %7 = vector.load %arg15[%c0_7, %c0_8] : memref<6x256xf32, #tpu.memory_space<vmem>>, vector<2x256xf32>
    tpu.vector_store %arg15[%c0_7, %c0_8], %6 {strides = array<i32>} : memref<6x256xf32, #tpu.memory_space<vmem>>, vector<2x256xf32>,
    %c2 = arith.constant 2 : index
    %c0_9 = arith.constant 0 : index
    %8 = vector.load %arg15[%c2, %c0_9] : memref<6x256xf32, #tpu.memory_space<vmem>>, vector<2x256xf32>
    tpu.vector_store %arg15[%c2, %c0_9], %5 {strides = array<i32>} : memref<6x256xf32, #tpu.memory_space<vmem>>, vector<2x256xf32>,
    %c0_10 = arith.constant 0 : index
    %c0_11 = arith.constant 0 : index
    %9 = vector.load %arg3[%c0_10, %c0_11] : memref<2x256xf32, #tpu.memory_space<vmem>>, vector<2x256xf32>
    %c4 = arith.constant 4 : index
    %c0_12 = arith.constant 0 : index
    %10 = vector.load %arg15[%c4, %c0_12] : memref<6x256xf32, #tpu.memory_space<vmem>>, vector<2x256xf32>
    tpu.vector_store %arg15[%c4, %c0_12], %9 {strides = array<i32>} : memref<6x256xf32, #tpu.memory_space<vmem>>, vector<2x256xf32>,
    %c0_13 = arith.constant 0 : index
    %c0_14 = arith.constant 0 : index
    %11 = vector.load %arg15[%c0_13, %c0_14] : memref<6x256xf32, #tpu.memory_space<vmem>>, vector<6x256xf32>
    %12 = arith.truncf %11 : vector<6x256xf32> to vector<6x256xbf16>
    %c0_15 = arith.constant 0 : index
    %c0_16 = arith.constant 0 : index
    %13 = vector.load %arg6[%c0_15, %c0_16] : memref<256x512xbf16, #tpu.memory_space<vmem>>, vector<256x512xbf16>
    %cst_17 = arith.constant dense<0.000000e+00> : vector<6x512xf32>
    %14 = tpu.matmul %12, %13, %cst_17 {dimension_numbers = #tpu.dot_dimension_numbers<[1], [0], [0], [1], [0, 0, 1, 1], [], []>} : vector<6x256xbf16>, vector<256x512xbf16>, vector<6x512xf32> -> vector<6x512xf32>
    %c0_18 = arith.constant 0 : index
    %c0_19 = arith.constant 0 : index
    %15 = vector.load %arg7[%c0_18, %c0_19] : memref<1x512xf32, #tpu.memory_space<vmem>>, vector<1x512xf32>
    %16 = vector.broadcast %15 : vector<1x512xf32> to vector<6x512xf32>
    %17 = arith.addf %14, %16 : vector<6x512xf32>
    %cst_20 = arith.constant 0.000000e+00 : f32
    %18 = vector.broadcast %cst_20 : f32 to vector<6x512xf32>
    %19 = arith.maximumf %17, %18 : vector<6x512xf32>
    %20 = arith.truncf %19 : vector<6x512xf32> to vector<6x512xbf16>
    %c0_21 = arith.constant 0 : index
    %c0_22 = arith.constant 0 : index
    %21 = vector.load %arg8[%c0_21, %c0_22] : memref<512x512xbf16, #tpu.memory_space<vmem>>, vector<512x512xbf16>
    %cst_23 = arith.constant dense<0.000000e+00> : vector<6x512xf32>
    %22 = tpu.matmul %20, %21, %cst_23 {dimension_numbers = #tpu.dot_dimension_numbers<[1], [0], [0], [1], [0, 0, 1, 1], [], []>} : vector<6x512xbf16>, vector<512x512xbf16>, vector<6x512xf32> -> vector<6x512xf32>
    %c0_24 = arith.constant 0 : index
    %c0_25 = arith.constant 0 : index
    %23 = vector.load %arg9[%c0_24, %c0_25] : memref<1x512xf32, #tpu.memory_space<vmem>>, vector<1x512xf32>
    %24 = vector.broadcast %23 : vector<1x512xf32> to vector<6x512xf32>
    %25 = arith.addf %22, %24 : vector<6x512xf32>
    %cst_26 = arith.constant 0.000000e+00 : f32
    %26 = vector.broadcast %cst_26 : f32 to vector<6x512xf32>
    %27 = arith.maximumf %25, %26 : vector<6x512xf32>
    %28 = arith.truncf %27 : vector<6x512xf32> to vector<6x512xbf16>
    %c0_27 = arith.constant 0 : index
    %c0_28 = arith.constant 0 : index
    %29 = vector.load %arg10[%c0_27, %c0_28] : memref<512x256xbf16, #tpu.memory_space<vmem>>, vector<512x256xbf16>
    %cst_29 = arith.constant dense<0.000000e+00> : vector<6x256xf32>
    %30 = tpu.matmul %28, %29, %cst_29 {dimension_numbers = #tpu.dot_dimension_numbers<[1], [0], [0], [1], [0, 0, 1, 1], [], []>} : vector<6x512xbf16>, vector<512x256xbf16>, vector<6x256xf32> -> vector<6x256xf32>
    %c0_30 = arith.constant 0 : index
    %c0_31 = arith.constant 0 : index
    %31 = vector.load %arg11[%c0_30, %c0_31] : memref<1x256xf32, #tpu.memory_space<vmem>>, vector<1x256xf32>
    %32 = vector.broadcast %31 : vector<1x256xf32> to vector<6x256xf32>
    %33 = arith.addf %30, %32 : vector<6x256xf32>
    %cst_32 = arith.constant 0.000000e+00 : f32
    %34 = vector.broadcast %cst_32 : f32 to vector<6x256xf32>
    %35 = arith.maximumf %33, %34 : vector<6x256xf32>
    %c0_33 = arith.constant 0 : index
    %c0_34 = arith.constant 0 : index
    %36 = vector.load %arg12[%c0_33, %c0_34] : memref<256x10xf32, #tpu.memory_space<vmem>>, vector<256x10xf32>
    %cst_35 = arith.constant dense<0.000000e+00> : vector<6x10xf32>
    %37 = tpu.matmul %35, %36, %cst_35 {dimension_numbers = #tpu.dot_dimension_numbers<[1], [0], [0], [1], [0, 0, 1, 1], [], []>} : vector<6x256xf32>, vector<256x10xf32>, vector<6x10xf32> -> vector<6x10xf32>
    %c0_36 = arith.constant 0 : index
    %c0_37 = arith.constant 0 : index
    %38 = vector.load %arg13[%c0_36, %c0_37] : memref<1x10xf32, #tpu.memory_space<vmem>>, vector<1x10xf32>
    %39 = vector.broadcast %38 : vector<1x10xf32> to vector<6x10xf32>
    %40 = arith.addf %37, %39 : vector<6x10xf32>
    %c0_38 = arith.constant 0 : index
    %c0_39 = arith.constant 0 : index
    %41 = vector.load %arg14[%c0_38, %c0_39] : memref<6x10xf32, #tpu.memory_space<vmem>>, vector<6x10xf32>
    tpu.vector_store %arg14[%c0_38, %c0_39], %40 {strides = array<i32>} : memref<6x10xf32, #tpu.memory_space<vmem>>, vector<6x10xf32>,
    return
  }
  func.func @transform_0(%arg0: i32) -> (i32, i32) {
    %c0_i32 = arith.constant 0 : i32
    %c0_i32_0 = arith.constant 0 : i32
    %c0_i32_1 = arith.constant 0 : i32
    return %c0_i32, %c0_i32_0 : i32, i32
  }
  func.func @transform_1(%arg0: i32) -> (i32, i32) {
    %c0_i32 = arith.constant 0 : i32
    %c0_i32_0 = arith.constant 0 : i32
    %c0_i32_1 = arith.constant 0 : i32
    return %c0_i32, %c0_i32_0 : i32, i32
  }
  func.func @transform_2(%arg0: i32) -> (i32, i32) {
    %c0_i32 = arith.constant 0 : i32
    %c0_i32_0 = arith.constant 0 : i32
    %c0_i32_1 = arith.constant 0 : i32
    return %c0_i32, %c0_i32_0 : i32, i32
  }
  func.func @transform_3(%arg0: i32) -> (i32, i32) {
    %c0_i32 = arith.constant 0 : i32
    %c0_i32_0 = arith.constant 0 : i32
    %c0_i32_1 = arith.constant 0 : i32
    return %c0_i32, %c0_i32_0 : i32, i32
  }
  func.func @transform_4(%arg0: i32) -> (i32, i32) {
    %c0_i32 = arith.constant 0 : i32
    %c0_i32_0 = arith.constant 0 : i32
    %c0_i32_1 = arith.constant 0 : i32
    return %c0_i32, %c0_i32_0 : i32, i32
  }
  func.func @transform_5(%arg0: i32) -> (i32, i32) {
    %c0_i32 = arith.constant 0 : i32
    %c0_i32_0 = arith.constant 0 : i32
    %c0_i32_1 = arith.constant 0 : i32
    return %c0_i32, %c0_i32_0 : i32, i32
  }
  func.func @transform_6(%arg0: i32) -> (i32, i32) {
    %c0_i32 = arith.constant 0 : i32
    %c0_i32_0 = arith.constant 0 : i32
    %c0_i32_1 = arith.constant 0 : i32
    return %c0_i32, %c0_i32_0 : i32, i32
  }
  func.func @transform_7(%arg0: i32) -> (i32, i32) {
    %c0_i32 = arith.constant 0 : i32
    %c0_i32_0 = arith.constant 0 : i32
    %c0_i32_1 = arith.constant 0 : i32
    return %c0_i32, %c0_i32_0 : i32, i32
  }
  func.func @transform_8(%arg0: i32) -> (i32, i32) {
    %c0_i32 = arith.constant 0 : i32
    %c0_i32_0 = arith.constant 0 : i32
    %c0_i32_1 = arith.constant 0 : i32
    return %c0_i32, %c0_i32_0 : i32, i32
  }
  func.func @transform_9(%arg0: i32) -> (i32, i32) {
    %c0_i32 = arith.constant 0 : i32
    %c0_i32_0 = arith.constant 0 : i32
    %c0_i32_1 = arith.constant 0 : i32
    return %c0_i32, %c0_i32_0 : i32, i32
  }
  func.func @transform_10(%arg0: i32) -> (i32, i32) {
    %c0_i32 = arith.constant 0 : i32
    %c0_i32_0 = arith.constant 0 : i32
    %c0_i32_1 = arith.constant 0 : i32
    return %c0_i32, %c0_i32_0 : i32, i32
  }
  func.func @transform_11(%arg0: i32) -> (i32, i32) {
    %c0_i32 = arith.constant 0 : i32
    %c0_i32_0 = arith.constant 0 : i32
    %c0_i32_1 = arith.constant 0 : i32
    return %c0_i32, %c0_i32_0 : i32, i32
  }
  func.func @transform_12(%arg0: i32) -> (i32, i32) {
    %c0_i32 = arith.constant 0 : i32
    %c0_i32_0 = arith.constant 0 : i32
    %c0_i32_1 = arith.constant 0 : i32
    return %c0_i32, %c0_i32_0 : i32, i32
  }
  func.func @transform_13(%arg0: i32) -> (i32, i32) {
    %c0_i32 = arith.constant 0 : i32
    %c0_i32_0 = arith.constant 0 : i32
    %c0_i32_1 = arith.constant 0 : i32
    return %c0_i32, %c0_i32_0 : i32, i32
  }
}

</mosaic_0001>

<llo_original>
// kernel: multimodal_forward.2
$region0: #{multimodal_forward.2}
  #allocation0 [shape = 'u32[]', space=smem, size = 0x4, offset = 0x4, fixed_abs, tag = 'smem constant byte address 0x4 - core index']
  #allocation1 [shape = 'u32[144,128]{1,0:T(1,128)}', space=vmem, size = 0x12000, scoped, tag = 'internal scratch']
  #allocation2 [shape = 'f32[5,400]{1,0:T(8,128)}', space=vmem, size = 0x4000, scoped, tag = 'scratch operand']
  %s0 = inlined_call_operand.vmem [shape: f32[2,1,1040], index: 0, kind: input, shape index: {}]
  %s1 = inlined_call_operand.vmem [shape: f32[2,32,256], index: 1, kind: input, shape index: {}]
  %s2 = inlined_call_operand.hbm [shape: f32[400,512], index: 2, kind: input, shape index: {}]
  %s3 = inlined_call_operand.vmem [shape: f32[256,23], index: 3, kind: input, shape index: {}]
  %s4 = inlined_call_operand.hbm [shape: f32[23,256], index: 4, kind: input, shape index: {}]
  %s5 = inlined_call_operand.hbm [shape: f32[32,32], index: 5, kind: input, shape index: {}]
  %s6 = inlined_call_operand.vmem [shape: f32[32,1], index: 6, kind: input, shape index: {}]
  %s7 = inlined_call_operand.vmem [shape: f32[2,1,256], index: 7, kind: output, shape index: {0}]
  %s8 = inlined_call_operand.vmem [shape: bf16[2,32,256], index: 8, kind: output, shape index: {1}]
  %9 = xla_tuple %s7, %s8
  %s10 = sld [smem:[#allocation0]]
  $region81: #{multimodal_forward.2} parent=0
    _
  %s12 = ssub.s32 1, %s10
  %s13 = scalar_select 0, %s12, %s10
  $region1: #{multimodal_forward.2} parent=0
    #allocation3 [shape = 'u8[819200]{0}', space=vmem, size = 0xc8000, scoped, tag = 'input window, operand 2, single buffered']
    #allocation4 [shape = 's32[2]{0}', space=sflag, size = 0x8, scoped, tag = 'scoped memory for multimodal_forward.2']
    #allocation5 [shape = 'u8[24576]{0}', space=vmem, size = 0x6000, scoped, tag = 'input window, operand 4, single buffered']
    #allocation6 [shape = 's32[1]{0}', space=sflag, size = 0x4, scoped, tag = 'scoped memory for multimodal_forward.2']
    #allocation7 [shape = 'u8[16384]{0}', space=vmem, size = 0x4000, scoped, tag = 'input window, operand 5, single buffered']
    %14 = vsyncpa [#allocation4], 0
    %15 = vsyncpa [#allocation6], 0
    loop: start=0, step=1, limit=4
    $region2: #{multimodal_forward.2} parent=1 // loop_pre_header
      _
    $region3: #{multimodal_forward.2} parent=1 // loop_header
      %s17 = sphi 0, %s21
      %p18 = scmp.ge.s32.totalorder %s17, 4
      %s27 = sphi 0, %s29
      %s30 = sphi 0, %s27
      %s31 = sphi 0, %s30
      %s47 = sphi 0, %s31
      %s53 = sphi 0, %s55
      %s56 = sphi 0, %s53
      %s57 = sphi 0, %s56
      %s73 = sphi 0, %s57
      %s77 = sphi 0, %s77
      %s79 = sphi 0, %s77
      %s80 = sphi 0, %s79
      %s94 = sphi 0, %s80
      %s98 = sphi 0, %s98
      %s100 = sphi 0, %s98
      %s101 = sphi 0, %s100
      %s115 = sphi 0, %s101
      %s119 = sphi 0, %s119
      %s121 = sphi 0, %s119
      %s122 = sphi 0, %s121
      %s136 = sphi 0, %s122
      %s140 = sphi 0, %s140
      %s142 = sphi 0, %s140
      %s143 = sphi 0, %s142
      %s157 = sphi 0, %s143
      %s161 = sphi 0, %s161
      %s163 = sphi 0, %s161
      %s164 = sphi 0, %s163
      %s178 = sphi 0, %s164
      %s184 = sphi 0, %s186
      %s187 = sphi 0, %s184
      %s188 = sphi 0, %s187
      %s204 = sphi 0, %s188
      %s210 = sphi 0, %s212
      %s213 = sphi 0, %s210
      %s214 = sphi 0, %s213
      %s230 = sphi 0, %s214
    $region4: #{multimodal_forward.2} parent=1 // loop_header_branch
      %20 = sbr.rel (%p18) target = $region8
    $region5: #{multimodal_forward.2} parent=1 // loop_body
      %s22 = ssub.s32 %s17, 1
      %s23 = ssub.s32 %s17, 2
      %s24 = sadd.s32 %s17, 1
      %s25 = ssub.s32 %s17, %s24
      %p26 = scmp.eq.s32.totalorder %s25, 0
      %s28 = sadd.s32 %s27, 1
      %s29 = scalar_select %p26, %s27, %s28
      %p32 = pneg %p26
      %p33 = scmp.eq.s32.totalorder %s17, 1
      %p34 = por %p32, %p33
      %p35 = scmp.ne.s32.totalorder %s27, %s30
      %p36 = scmp.eq.s32.totalorder %s17, 0
      %p37 = por %p35, %p36
      %p38 = scmp.ne.s32.totalorder %s27, %s30
      %p39 = scmp.eq.s32.totalorder %s22, 1
      %p40 = por %p38, %p39
      %p41 = scmp.ne.s32.totalorder %s30, %s31
      %p42 = scmp.eq.s32.totalorder %s22, 0
      %p43 = por %p41, %p42
      %p44 = scmp.ne.s32.totalorder %s30, %s31
      %p45 = scmp.eq.s32.totalorder %s23, 1
      %p46 = por %p44, %p45
      %p48 = scmp.ne.s32.totalorder %s31, %s47
      %p49 = scmp.eq.s32.totalorder %s23, 0
      %p50 = por %p48, %p49
      %s51 = ssub.s32 %s17, %s24
      %p52 = scmp.eq.s32.totalorder %s51, 0
      %s54 = sadd.s32 %s53, 1
      %s55 = scalar_select %p52, %s53, %s54
      %p58 = pneg %p52
      %p59 = scmp.eq.s32.totalorder %s17, 1
      %p60 = por %p58, %p59
      %p61 = scmp.ne.s32.totalorder %s53, %s56
      %p62 = scmp.eq.s32.totalorder %s17, 0
      %p63 = por %p61, %p62
      %p64 = scmp.ne.s32.totalorder %s53, %s56
      %p65 = scmp.eq.s32.totalorder %s22, 1
      %p66 = por %p64, %p65
      %p67 = scmp.ne.s32.totalorder %s56, %s57
      %p68 = scmp.eq.s32.totalorder %s22, 0
      %p69 = por %p67, %p68
      %p70 = scmp.ne.s32.totalorder %s56, %s57
      %p71 = scmp.eq.s32.totalorder %s23, 1
      %p72 = por %p70, %p71
      %p74 = scmp.ne.s32.totalorder %s57, %s73
      %p75 = scmp.eq.s32.totalorder %s23, 0
      %p76 = por %p74, %p75
      %s78 = sadd.s32 %s77, 1
      %p81 = scmp.eq.s32.totalorder %s17, 1
      %p82 = scmp.ne.s32.totalorder %s77, %s79
      %p83 = scmp.eq.s32.totalorder %s17, 0
      %p84 = por %p82, %p83
      %p85 = scmp.ne.s32.totalorder %s77, %s79
      %p86 = scmp.eq.s32.totalorder %s22, 1
      %p87 = por %p85, %p86
      %p88 = scmp.ne.s32.totalorder %s79, %s80
      %p89 = scmp.eq.s32.totalorder %s22, 0
      %p90 = por %p88, %p89
      %p91 = scmp.ne.s32.totalorder %s79, %s80
      %p92 = scmp.eq.s32.totalorder %s23, 1
      %p93 = por %p91, %p92
      %p95 = scmp.ne.s32.totalorder %s80, %s94
      %p96 = scmp.eq.s32.totalorder %s23, 0
      %p97 = por %p95, %p96
      %s99 = sadd.s32 %s98, 1
      %p102 = scmp.eq.s32.totalorder %s17, 1
      %p103 = scmp.ne.s32.totalorder %s98, %s100
      %p104 = scmp.eq.s32.totalorder %s17, 0
      %p105 = por %p103, %p104
      %p106 = scmp.ne.s32.totalorder %s98, %s100
      %p107 = scmp.eq.s32.totalorder %s22, 1
      %p108 = por %p106, %p107
      %p109 = scmp.ne.s32.totalorder %s100, %s101
      %p110 = scmp.eq.s32.totalorder %s22, 0
      %p111 = por %p109, %p110
      %p112 = scmp.ne.s32.totalorder %s100, %s101
      %p113 = scmp.eq.s32.totalorder %s23, 1
      %p114 = por %p112, %p113
      %p116 = scmp.ne.s32.totalorder %s101, %s115
      %p117 = scmp.eq.s32.totalorder %s23, 0
      %p118 = por %p116, %p117
      %s120 = sadd.s32 %s119, 1
      %p123 = scmp.eq.s32.totalorder %s17, 1
      %p124 = scmp.ne.s32.totalorder %s119, %s121
      %p125 = scmp.eq.s32.totalorder %s17, 0
      %p126 = por %p124, %p125
      %p127 = scmp.ne.s32.totalorder %s119, %s121
      %p128 = scmp.eq.s32.totalorder %s22, 1
      %p129 = por %p127, %p128
      %p130 = scmp.ne.s32.totalorder %s121, %s122
      %p131 = scmp.eq.s32.totalorder %s22, 0
      %p132 = por %p130, %p131
      %p133 = scmp.ne.s32.totalorder %s121, %s122
      %p134 = scmp.eq.s32.totalorder %s23, 1
      %p135 = por %p133, %p134
      %p137 = scmp.ne.s32.totalorder %s122, %s136
      %p138 = scmp.eq.s32.totalorder %s23, 0
      %p139 = por %p137, %p138
      %s141 = sadd.s32 %s140, 1
      %p144 = scmp.eq.s32.totalorder %s17, 1
      %p145 = scmp.ne.s32.totalorder %s140, %s142
      %p146 = scmp.eq.s32.totalorder %s17, 0
      %p147 = por %p145, %p146
      %p148 = scmp.ne.s32.totalorder %s140, %s142
      %p149 = scmp.eq.s32.totalorder %s22, 1
      %p150 = por %p148, %p149
      %p151 = scmp.ne.s32.totalorder %s142, %s143
      %p152 = scmp.eq.s32.totalorder %s22, 0
      %p153 = por %p151, %p152
      %p154 = scmp.ne.s32.totalorder %s142, %s143
      %p155 = scmp.eq.s32.totalorder %s23, 1
      %p156 = por %p154, %p155
      %p158 = scmp.ne.s32.totalorder %s143, %s157
      %p159 = scmp.eq.s32.totalorder %s23, 0
      %p160 = por %p158, %p159
      %s162 = sadd.s32 %s161, 1
      %p165 = scmp.eq.s32.totalorder %s17, 1
      %p166 = scmp.ne.s32.totalorder %s161, %s163
      %p167 = scmp.eq.s32.totalorder %s17, 0
      %p168 = por %p166, %p167
      %p169 = scmp.ne.s32.totalorder %s161, %s163
      %p170 = scmp.eq.s32.totalorder %s22, 1
      %p171 = por %p169, %p170
      %p172 = scmp.ne.s32.totalorder %s163, %s164
      %p173 = scmp.eq.s32.totalorder %s22, 0
      %p174 = por %p172, %p173
      %p175 = scmp.ne.s32.totalorder %s163, %s164
      %p176 = scmp.eq.s32.totalorder %s23, 1
      %p177 = por %p175, %p176
      %p179 = scmp.ne.s32.totalorder %s164, %s178
      %p180 = scmp.eq.s32.totalorder %s23, 0
      %p181 = por %p179, %p180
      %s182 = ssub.s32 %s17, %s24
      %p183 = scmp.eq.s32.totalorder %s182, 0
      %s185 = sadd.s32 %s184, 1
      %s186 = scalar_select %p183, %s184, %s185
      %p189 = pneg %p183
      %p190 = scmp.eq.s32.totalorder %s17, 1
      %p191 = por %p189, %p190
      %p192 = scmp.ne.s32.totalorder %s184, %s187
      %p193 = scmp.eq.s32.totalorder %s17, 0
      %p194 = por %p192, %p193
      %p195 = scmp.ne.s32.totalorder %s184, %s187
      %p196 = scmp.eq.s32.totalorder %s22, 1
      %p197 = por %p195, %p196
      %p198 = scmp.ne.s32.totalorder %s187, %s188
      %p199 = scmp.eq.s32.totalorder %s22, 0
      %p200 = por %p198, %p199
      %p201 = scmp.ne.s32.totalorder %s187, %s188
      %p202 = scmp.eq.s32.totalorder %s23, 1
      %p203 = por %p201, %p202
      %p205 = scmp.ne.s32.totalorder %s188, %s204
      %p206 = scmp.eq.s32.totalorder %s23, 0
      %p207 = por %p205, %p206
      %s208 = ssub.s32 %s17, %s24
      %p209 = scmp.eq.s32.totalorder %s208, 0
      %s211 = sadd.s32 %s210, 1
      %s212 = scalar_select %p209, %s210, %s211
      %p215 = pneg %p209
      %p216 = scmp.eq.s32.totalorder %s17, 1
      %p217 = por %p215, %p216
      %p218 = scmp.ne.s32.totalorder %s210, %s213
      %p219 = scmp.eq.s32.totalorder %s17, 0
      %p220 = por %p218, %p219
      %p221 = scmp.ne.s32.totalorder %s210, %s213
      %p222 = scmp.eq.s32.totalorder %s22, 1
      %p223 = por %p221, %p222
      %p224 = scmp.ne.s32.totalorder %s213, %s214
      %p225 = scmp.eq.s32.totalorder %s22, 0
      %p226 = por %p224, %p225
      %p227 = scmp.ne.s32.totalorder %s213, %s214
      %p228 = scmp.eq.s32.totalorder %s23, 1
      %p229 = por %p227, %p228
      %p231 = scmp.ne.s32.totalorder %s214, %s230
      %p232 = scmp.eq.s32.totalorder %s23, 0
      %p233 = por %p231, %p232
      %p234 = scmp.le.s32.totalorder 1, %s17
      %p235 = scmp.lt.s32.totalorder %s17, 3
      %p236 = pnand %p234, %p235
      %p237 = pneg %p236
      // Predicated region
      $region9: #{multimodal_forward.2} parent=5 // pred_check
        _
      $region10: #{multimodal_forward.2} parent=5 // pred_check_branch
        %239 = sbr.rel (%p236) target = $region12
      $region11: #{multimodal_forward.2} parent=5 // pred_region
        %s240 = ssub.s32 %s17, 1
        // Predicated region
        $region13: #{multimodal_forward.2} parent=11 // pred_check
          %p241 = pneg %p90
        $region14: #{multimodal_forward.2} parent=11 // pred_check_branch
          %243 = sbr.rel (%p241) target = $region16
        $region15: #{multimodal_forward.2} parent=11 // pred_region
          %s245 = ssub.s32 25600, 25600
          %246 = vsyncadd [#allocation4], %s245
          %s247 = sshll.u32 [#allocation3], 4
          %s248 = int_to_ptr.vmem [resolvable:$true] %s247
          %253 = dma.hbm_to_vmem [thread:$0]  %s2, 25600, %s248, [#allocation4], 512, 512, 32
        $region16: #{multimodal_forward.2} parent=11 // pred_fallthru
          _
        // Predicated region
        $region17: #{multimodal_forward.2} parent=11 // pred_check
          %p254 = pneg %p111
        $region18: #{multimodal_forward.2} parent=11 // pred_check_branch
          %256 = sbr.rel (%p254) target = $region20
        $region19: #{multimodal_forward.2} parent=11 // pred_region
          _
        $region20: #{multimodal_forward.2} parent=11 // pred_fallthru
          _
        // Predicated region
        $region21: #{multimodal_forward.2} parent=11 // pred_check
          %p257 = pneg %p132
        $region22: #{multimodal_forward.2} parent=11 // pred_check_branch
          %259 = sbr.rel (%p257) target = $region24
        $region23: #{multimodal_forward.2} parent=11 // pred_region
          %s261 = ssub.s32 768, 768
          %262 = vsyncadd [#allocation6], %s261
          %s263 = sshll.u32 [#allocation5], 4
          %s264 = int_to_ptr.vmem [resolvable:$true] %s263
          %269 = dma.hbm_to_vmem [thread:$0]  %s4, 768, %s264, [#allocation6], 256, 256, 16
        $region24: #{multimodal_forward.2} parent=11 // pred_fallthru
          _
        // Predicated region
        $region25: #{multimodal_forward.2} parent=11 // pred_check
          %p270 = pneg %p153
        $region26: #{multimodal_forward.2} parent=11 // pred_check_branch
          %272 = sbr.rel (%p270) target = $region28
        $region27: #{multimodal_forward.2} parent=11 // pred_region
          %s274 = ssub.s32 512, 512
          %275 = vsyncadd [#allocation6], %s274
          %s276 = sshll.u32 [#allocation7], 4
          %s277 = int_to_ptr.vmem [resolvable:$true] %s276
          %282 = dma.hbm_to_vmem [thread:$0]  %s5, 512, %s277, [#allocation6], 128, 128, 8
        $region28: #{multimodal_forward.2} parent=11 // pred_fallthru
          _
        // Predicated region
        $region29: #{multimodal_forward.2} parent=11 // pred_check
          %p283 = pneg %p174
        $region30: #{multimodal_forward.2} parent=11 // pred_check_branch
          %285 = sbr.rel (%p283) target = $region32
        $region31: #{multimodal_forward.2} parent=11 // pred_region
          _
        $region32: #{multimodal_forward.2} parent=11 // pred_fallthru
          _
      $region12: #{multimodal_forward.2} parent=5 // pred_fallthru
        _
      %p286 = scmp.lt.s32.totalorder %s17, 2
      // Predicated region
      $region33: #{multimodal_forward.2} parent=5 // pred_check
        %p287 = pneg %p286
      $region34: #{multimodal_forward.2} parent=5 // pred_check_branch
        %289 = sbr.rel (%p287) target = $region36
      $region35: #{multimodal_forward.2} parent=5 // pred_region
        // Predicated region
        $region37: #{multimodal_forward.2} parent=35 // pred_check
          %p290 = pneg %p37
        $region38: #{multimodal_forward.2} parent=35 // pred_check_branch
          %292 = sbr.rel (%p290) target = $region40
        $region39: #{multimodal_forward.2} parent=35 // pred_region
          %p293 = scmp.lt.s32.totalorder %s17, 1
          %s294 = scalar_select %p293, %s17, 1
          %s295 = smul.addr %s294, 9
          %s296 = scalar_lea.vmem %s0, %s295
        $region40: #{multimodal_forward.2} parent=35 // pred_fallthru
          _
        // Predicated region
        $region41: #{multimodal_forward.2} parent=35 // pred_check
          %p297 = pneg %p63
        $region42: #{multimodal_forward.2} parent=35 // pred_check_branch
          %299 = sbr.rel (%p297) target = $region44
        $region43: #{multimodal_forward.2} parent=35 // pred_region
          %p300 = scmp.lt.s32.totalorder %s17, 1
          %s301 = scalar_select %p300, %s17, 1
          %s302 = smul.addr %s301, 8
          %s303 = smul.addr %s302, 8
          %s304 = scalar_lea.vmem %s1, %s303
        $region44: #{multimodal_forward.2} parent=35 // pred_fallthru
          _
      $region36: #{multimodal_forward.2} parent=5 // pred_fallthru
        _
      %p305 = scmp.le.s32.totalorder 1, %s17
      %p306 = scmp.lt.s32.totalorder %s17, 3
      %p307 = pnand %p305, %p306
      %p308 = pneg %p307
      // Predicated region
      $region45: #{multimodal_forward.2} parent=5 // pred_check
        _
      $region46: #{multimodal_forward.2} parent=5 // pred_check_branch
        %310 = sbr.rel (%p307) target = $region48
      $region47: #{multimodal_forward.2} parent=5 // pred_region
        %s311 = ssub.s32 %s17, 1
        // Predicated region
        $region49: #{multimodal_forward.2} parent=47 // pred_check
          %p312 = pneg %p90
        $region50: #{multimodal_forward.2} parent=47 // pred_check_branch
          %314 = sbr.rel (%p312) target = $region52
        $region51: #{multimodal_forward.2} parent=47 // pred_region
          %315 = dma.done [#allocation4], 25600
        $region52: #{multimodal_forward.2} parent=47 // pred_fallthru
          _
        // Predicated region
        $region53: #{multimodal_forward.2} parent=47 // pred_check
          %p316 = pneg %p132
        $region54: #{multimodal_forward.2} parent=47 // pred_check_branch
          %318 = sbr.rel (%p316) target = $region56
        $region55: #{multimodal_forward.2} parent=47 // pred_region
          %319 = dma.done [#allocation6], 768
        $region56: #{multimodal_forward.2} parent=47 // pred_fallthru
          _
        // Predicated region
        $region57: #{multimodal_forward.2} parent=47 // pred_check
          %p320 = pneg %p153
        $region58: #{multimodal_forward.2} parent=47 // pred_check_branch
          %322 = sbr.rel (%p320) target = $region60
        $region59: #{multimodal_forward.2} parent=47 // pred_region
          %323 = dma.done [#allocation6], 512
        $region60: #{multimodal_forward.2} parent=47 // pred_fallthru
          _
        %p324 = scmp.lt.s32.totalorder %s22, 1
        %s325 = scalar_select %p324, %s22, 1
        %s326 = smul.addr %s325, 9
        %s327 = scalar_lea.vmem %s0, %s326
        %p328 = pneg %p43
        %p329 = pneg %p40
        %p330 = scmp.lt.s32.totalorder %s22, 1
        %s331 = scalar_select %p330, %s22, 1
        %s332 = smul.addr %s331, 8
        %s333 = smul.addr %s332, 8
        %s334 = scalar_lea.vmem %s1, %s333
        %p335 = pneg %p69
        %p336 = pneg %p66
        %p337 = pneg %p90
        %p338 = pneg %p87
        %p339 = pneg %p111
        %p340 = pneg %p108
        %p341 = pneg %p132
        %p342 = pneg %p129
        %p343 = pneg %p153
        %p344 = pneg %p150
        %p345 = pneg %p174
        %p346 = pneg %p171
        %p347 = pneg %p200
        %p348 = pneg %p197
        %p349 = scmp.lt.s32.totalorder %s22, 1
        %s350 = scalar_select %p349, %s22, 1
        %s351 = smul.addr %s350, 2
        %s352 = scalar_lea.vmem %s7, %s351
        %p353 = pneg %p226
        %p354 = pneg %p223
        %p355 = scmp.lt.s32.totalorder %s22, 1
        %s356 = scalar_select %p355, %s22, 1
        %s357 = smul.addr %s356, 8
        %s358 = smul.addr %s357, 4
        %s359 = scalar_lea.vmem %s8, %s358
        %p360 = scmp.lt.s32.totalorder %s22, 1
        %s361 = scalar_select %p360, %s22, 1
        %s362 = smul.addr %s361, 9
        %s363 = scalar_lea.vmem %s0, %s362
        %p364 = scmp.lt.s32.totalorder %s22, 1
        %s365 = scalar_select %p364, %s22, 1
        %s366 = smul.addr %s365, 8
        %s367 = smul.addr %s366, 8
        %s368 = scalar_lea.vmem %s1, %s367
        %p369 = scmp.lt.s32.totalorder %s22, 1
        %s370 = scalar_select %p369, %s22, 1
        %s371 = smul.addr %s370, 2
        %s372 = scalar_lea.vmem %s7, %s371
        %p373 = scmp.lt.s32.totalorder %s22, 1
        %s374 = scalar_select %p373, %s22, 1
        %s375 = smul.addr %s374, 8
        %s376 = smul.addr %s375, 4
        %s377 = scalar_lea.vmem %s8, %s376
        %v378 = vld [vmem:[%s363] sm:$0xff]
        %v379 = vld [vmem:[%s363 + $0x8] sm:$0x1]
        %v380 = vlaneseq
        %vm381 = vcmp.ge.s32.totalorder %v380, 0
        %vm382 = vcmp.lt.s32.totalorder %v380, 400
        %vm383 = vmand %vm381, %vm382
        %384 = vst.msk [vmem:[#allocation2] ss:$8 sm:$0xf] %vm383, %v378
        %385 = vst.msk [vmem:[#allocation2] ss:$8 sm:$0x0] %vm383, %v378
        %387 = vrot.lane.b32.xlu0 %v378, 96
        %v388 = vpop.permute.xlu0 %387
        %v389 = vrot.slane %v388, 1
        %v390 = vrot.slane %v388, 2
        %vm391 = vcmask 785408
        %v392 = vsel %vm391, %v389, %v390
        %s394 = scalar_lea.vmem [#allocation2], 1
        %395 = vst.msk [vmem:[%s394] ss:$8 sm:$0xf] %vm383, %v392
        %396 = vst.msk [vmem:[%s394] ss:$8 sm:$0x0] %vm383, %v392
        %397 = vrot.lane.b32.xlu0 %v378, 64
        %v398 = vpop.permute.xlu0 %397
        %v399 = vrot.slane %v398, 2
        %v400 = vrot.slane %v398, 3
        %vm401 = vcmask 523264
        %v402 = vsel %vm401, %v399, %v400
        %s404 = scalar_lea.vmem [#allocation2], 2
        %405 = vst.msk [vmem:[%s404] ss:$8 sm:$0xf] %vm383, %v402
        %406 = vst.msk [vmem:[%s404] ss:$8 sm:$0x0] %vm383, %v402
        %407 = vrot.lane.b32.xlu0 %v378, 32
        %v408 = vpop.permute.xlu0 %407
        %v409 = vrot.slane %v408, 3
        %v410 = vrot.slane %v408, 4
        %vm411 = vcmask 261120
        %v412 = vsel %vm411, %v409, %v410
        %s414 = scalar_lea.vmem [#allocation2], 3
        %415 = vst.msk [vmem:[%s414] ss:$8 sm:$0xf] %vm383, %v412
        %416 = vst.msk [vmem:[%s414] ss:$8 sm:$0x0] %vm383, %v412
        %v418 = vrot.slane %v378, 5
        %v419 = vrot.slane %v379, 5
        %vm420 = vcmask 1042432
        %v421 = vsel %vm420, %v418, %v419
        %s423 = scalar_lea.vmem [#allocation2], 4
        %424 = vst.msk [vmem:[%s423] ss:$8 sm:$0xf] %vm383, %v421
        %425 = vst.msk [vmem:[%s423] ss:$8 sm:$0x0] %vm383, %v421
        %v426 = vld [vmem:[#allocation2] sm:$0x1f]
        %v427 = vld [vmem:[#allocation2 + $0x8] sm:$0x1f]
        %v428 = vld [vmem:[#allocation2 + $0x10] sm:$0x1f]
        %v429 = vld [vmem:[#allocation2 + $0x18] sm:$0x1f]
        %v430 = vld [vmem:[#allocation3] sm:$0xff]
        %v431 = vld [vmem:[#allocation3 + $0x8] sm:$0xff]
        %v432 = vld [vmem:[#allocation3 + $0x10] sm:$0xff]
        %v433 = vld [vmem:[#allocation3 + $0x18] sm:$0xff]
        %v434 = vld [vmem:[#allocation3 + $0x20] sm:$0xff]
        %v435 = vld [vmem:[#allocation3 + $0x28] sm:$0xff]
        %v436 = vld [vmem:[#allocation3 + $0x30] sm:$0xff]
        %v437 = vld [vmem:[#allocation3 + $0x38] sm:$0xff]
        %v438 = vld [vmem:[#allocation3 + $0x40] sm:$0xff]
        %v439 = vld [vmem:[#allocation3 + $0x48] sm:$0xff]
        %v440 = vld [vmem:[#allocation3 + $0x50] sm:$0xff]
        %v441 = vld [vmem:[#allocation3 + $0x58] sm:$0xff]
        %v442 = vld [vmem:[#allocation3 + $0x60] sm:$0xff]
        %v443 = vld [vmem:[#allocation3 + $0x68] sm:$0xff]
        %v444 = vld [vmem:[#allocation3 + $0x70] sm:$0xff]
        %v445 = vld [vmem:[#allocation3 + $0x78] sm:$0xff]
        %v446 = vld [vmem:[#allocation3 + $0x80] sm:$0xff]
        %v447 = vld [vmem:[#allocation3 + $0x88] sm:$0xff]
        %v448 = vld [vmem:[#allocation3 + $0x90] sm:$0xff]
        %v449 = vld [vmem:[#allocation3 + $0x98] sm:$0xff]
        %v450 = vld [vmem:[#allocation3 + $0xa0] sm:$0xff]
        %v451 = vld [vmem:[#allocation3 + $0xa8] sm:$0xff]
        %v452 = vld [vmem:[#allocation3 + $0xb0] sm:$0xff]
        %v453 = vld [vmem:[#allocation3 + $0xb8] sm:$0xff]
        %v454 = vld [vmem:[#allocation3 + $0xc0] sm:$0xff]
        %v455 = vld [vmem:[#allocation3 + $0xc8] sm:$0xff]
        %v456 = vld [vmem:[#allocation3 + $0xd0] sm:$0xff]
        %v457 = vld [vmem:[#allocation3 + $0xd8] sm:$0xff]
        %v458 = vld [vmem:[#allocation3 + $0xe0] sm:$0xff]
        %v459 = vld [vmem:[#allocation3 + $0xe8] sm:$0xff]
        %v460 = vld [vmem:[#allocation3 + $0xf0] sm:$0xff]
        %v461 = vld [vmem:[#allocation3 + $0xf8] sm:$0xff]
        %v462 = vld [vmem:[#allocation3 + $0x100] sm:$0xff]
        %v463 = vld [vmem:[#allocation3 + $0x108] sm:$0xff]
        %v464 = vld [vmem:[#allocation3 + $0x110] sm:$0xff]
        %v465 = vld [vmem:[#allocation3 + $0x118] sm:$0xff]
        %v466 = vld [vmem:[#allocation3 + $0x120] sm:$0xff]
        %v467 = vld [vmem:[#allocation3 + $0x128] sm:$0xff]
        %v468 = vld [vmem:[#allocation3 + $0x130] sm:$0xff]
        %v469 = vld [vmem:[#allocation3 + $0x138] sm:$0xff]
        %v470 = vld [vmem:[#allocation3 + $0x140] sm:$0xff]
        %v471 = vld [vmem:[#allocation3 + $0x148] sm:$0xff]
        %v472 = vld [vmem:[#allocation3 + $0x150] sm:$0xff]
        %v473 = vld [vmem:[#allocation3 + $0x158] sm:$0xff]
        %v474 = vld [vmem:[#allocation3 + $0x160] sm:$0xff]
        %v475 = vld [vmem:[#allocation3 + $0x168] sm:$0xff]
        %v476 = vld [vmem:[#allocation3 + $0x170] sm:$0xff]
        %v477 = vld [vmem:[#allocation3 + $0x178] sm:$0xff]
        %v478 = vld [vmem:[#allocation3 + $0x180] sm:$0xff]
        %v479 = vld [vmem:[#allocation3 + $0x188] sm:$0xff]
        %v480 = vld [vmem:[#allocation3 + $0x190] sm:$0xff]
        %v481 = vld [vmem:[#allocation3 + $0x198] sm:$0xff]
        %v482 = vld [vmem:[#allocation3 + $0x1a0] sm:$0xff]
        %v483 = vld [vmem:[#allocation3 + $0x1a8] sm:$0xff]
        %v484 = vld [vmem:[#allocation3 + $0x1b0] sm:$0xff]
        %v485 = vld [vmem:[#allocation3 + $0x1b8] sm:$0xff]
        %v486 = vld [vmem:[#allocation3 + $0x1c0] sm:$0xff]
        %v487 = vld [vmem:[#allocation3 + $0x1c8] sm:$0xff]
        %v488 = vld [vmem:[#allocation3 + $0x1d0] sm:$0xff]
        %v489 = vld [vmem:[#allocation3 + $0x1d8] sm:$0xff]
        %v490 = vld [vmem:[#allocation3 + $0x1e0] sm:$0xff]
        %v491 = vld [vmem:[#allocation3 + $0x1e8] sm:$0xff]
        %v492 = vld [vmem:[#allocation3 + $0x1f0] sm:$0xff]
        %v493 = vld [vmem:[#allocation3 + $0x1f8] sm:$0xff]
        %v494 = vld [vmem:[#allocation3 + $0x200] sm:$0xff]
        %v495 = vld [vmem:[#allocation3 + $0x208] sm:$0xff]
        %v496 = vld [vmem:[#allocation3 + $0x210] sm:$0xff]
        %v497 = vld [vmem:[#allocation3 + $0x218] sm:$0xff]
        %v498 = vld [vmem:[#allocation3 + $0x220] sm:$0xff]
        %v499 = vld [vmem:[#allocation3 + $0x228] sm:$0xff]
        %v500 = vld [vmem:[#allocation3 + $0x230] sm:$0xff]
        %v501 = vld [vmem:[#allocation3 + $0x238] sm:$0xff]
        %v502 = vld [vmem:[#allocation3 + $0x240] sm:$0xff]
        %v503 = vld [vmem:[#allocation3 + $0x248] sm:$0xff]
        %v504 = vld [vmem:[#allocation3 + $0x250] sm:$0xff]
        %v505 = vld [vmem:[#allocation3 + $0x258] sm:$0xff]
        %v506 = vld [vmem:[#allocation3 + $0x260] sm:$0xff]
        %v507 = vld [vmem:[#allocation3 + $0x268] sm:$0xff]
        %v508 = vld [vmem:[#allocation3 + $0x270] sm:$0xff]
        %v509 = vld [vmem:[#allocation3 + $0x278] sm:$0xff]
        %v510 = vld [vmem:[#allocation3 + $0x280] sm:$0xff]
        %v511 = vld [vmem:[#allocation3 + $0x288] sm:$0xff]
        %v512 = vld [vmem:[#allocation3 + $0x290] sm:$0xff]
        %v513 = vld [vmem:[#allocation3 + $0x298] sm:$0xff]
        %v514 = vld [vmem:[#allocation3 + $0x2a0] sm:$0xff]
        %v515 = vld [vmem:[#allocation3 + $0x2a8] sm:$0xff]
        %v516 = vld [vmem:[#allocation3 + $0x2b0] sm:$0xff]
        %v517 = vld [vmem:[#allocation3 + $0x2b8] sm:$0xff]
        %v518 = vld [vmem:[#allocation3 + $0x2c0] sm:$0xff]
        %v519 = vld [vmem:[#allocation3 + $0x2c8] sm:$0xff]
        %v520 = vld [vmem:[#allocation3 + $0x2d0] sm:$0xff]
        %v521 = vld [vmem:[#allocation3 + $0x2d8] sm:$0xff]
        %v522 = vld [vmem:[#allocation3 + $0x2e0] sm:$0xff]
        %v523 = vld [vmem:[#allocation3 + $0x2e8] sm:$0xff]
        %v524 = vld [vmem:[#allocation3 + $0x2f0] sm:$0xff]
        %v525 = vld [vmem:[#allocation3 + $0x2f8] sm:$0xff]
        %v526 = vld [vmem:[#allocation3 + $0x300] sm:$0xff]
        %v527 = vld [vmem:[#allocation3 + $0x308] sm:$0xff]
        %v528 = vld [vmem:[#allocation3 + $0x310] sm:$0xff]
        %v529 = vld [vmem:[#allocation3 + $0x318] sm:$0xff]
        %v530 = vld [vmem:[#allocation3 + $0x320] sm:$0xff]
        %v531 = vld [vmem:[#allocation3 + $0x328] sm:$0xff]
        %v532 = vld [vmem:[#allocation3 + $0x330] sm:$0xff]
        %v533 = vld [vmem:[#allocation3 + $0x338] sm:$0xff]
        %v534 = vld [vmem:[#allocation3 + $0x340] sm:$0xff]
        %v535 = vld [vmem:[#allocation3 + $0x348] sm:$0xff]
        %v536 = vld [vmem:[#allocation3 + $0x350] sm:$0xff]
        %v537 = vld [vmem:[#allocation3 + $0x358] sm:$0xff]
        %v538 = vld [vmem:[#allocation3 + $0x360] sm:$0xff]
        %v539 = vld [vmem:[#allocation3 + $0x368] sm:$0xff]
        %v540 = vld [vmem:[#allocation3 + $0x370] sm:$0xff]
        %v541 = vld [vmem:[#allocation3 + $0x378] sm:$0xff]
        %v542 = vld [vmem:[#allocation3 + $0x380] sm:$0xff]
        %v543 = vld [vmem:[#allocation3 + $0x388] sm:$0xff]
        %v544 = vld [vmem:[#allocation3 + $0x390] sm:$0xff]
        %v545 = vld [vmem:[#allocation3 + $0x398] sm:$0xff]
        %v546 = vld [vmem:[#allocation3 + $0x3a0] sm:$0xff]
        %v547 = vld [vmem:[#allocation3 + $0x3a8] sm:$0xff]
        %v548 = vld [vmem:[#allocation3 + $0x3b0] sm:$0xff]
        %v549 = vld [vmem:[#allocation3 + $0x3b8] sm:$0xff]
        %v550 = vld [vmem:[#allocation3 + $0x3c0] sm:$0xff]
        %v551 = vld [vmem:[#allocation3 + $0x3c8] sm:$0xff]
        %v552 = vld [vmem:[#allocation3 + $0x3d0] sm:$0xff]
        %v553 = vld [vmem:[#allocation3 + $0x3d8] sm:$0xff]
        %v554 = vld [vmem:[#allocation3 + $0x3e0] sm:$0xff]
        %v555 = vld [vmem:[#allocation3 + $0x3e8] sm:$0xff]
        %v556 = vld [vmem:[#allocation3 + $0x3f0] sm:$0xff]
        %v557 = vld [vmem:[#allocation3 + $0x3f8] sm:$0xff]
        %v558 = vld [vmem:[#allocation3 + $0x400] sm:$0xff]
        %v559 = vld [vmem:[#allocation3 + $0x408] sm:$0xff]
        %v560 = vld [vmem:[#allocation3 + $0x410] sm:$0xff]
        %v561 = vld [vmem:[#allocation3 + $0x418] sm:$0xff]
        %v562 = vld [vmem:[#allocation3 + $0x420] sm:$0xff]
        %v563 = vld [vmem:[#allocation3 + $0x428] sm:$0xff]
        %v564 = vld [vmem:[#allocation3 + $0x430] sm:$0xff]
        %v565 = vld [vmem:[#allocation3 + $0x438] sm:$0xff]
        %v566 = vld [vmem:[#allocation3 + $0x440] sm:$0xff]
        %v567 = vld [vmem:[#allocation3 + $0x448] sm:$0xff]
        %v568 = vld [vmem:[#allocation3 + $0x450] sm:$0xff]
        %v569 = vld [vmem:[#allocation3 + $0x458] sm:$0xff]
        %v570 = vld [vmem:[#allocation3 + $0x460] sm:$0xff]
        %v571 = vld [vmem:[#allocation3 + $0x468] sm:$0xff]
        %v572 = vld [vmem:[#allocation3 + $0x470] sm:$0xff]
        %v573 = vld [vmem:[#allocation3 + $0x478] sm:$0xff]
        %v574 = vld [vmem:[#allocation3 + $0x480] sm:$0xff]
        %v575 = vld [vmem:[#allocation3 + $0x488] sm:$0xff]
        %v576 = vld [vmem:[#allocation3 + $0x490] sm:$0xff]
        %v577 = vld [vmem:[#allocation3 + $0x498] sm:$0xff]
        %v578 = vld [vmem:[#allocation3 + $0x4a0] sm:$0xff]
        %v579 = vld [vmem:[#allocation3 + $0x4a8] sm:$0xff]
        %v580 = vld [vmem:[#allocation3 + $0x4b0] sm:$0xff]
        %v581 = vld [vmem:[#allocation3 + $0x4b8] sm:$0xff]
        %v582 = vld [vmem:[#allocation3 + $0x4c0] sm:$0xff]
        %v583 = vld [vmem:[#allocation3 + $0x4c8] sm:$0xff]
        %v584 = vld [vmem:[#allocation3 + $0x4d0] sm:$0xff]
        %v585 = vld [vmem:[#allocation3 + $0x4d8] sm:$0xff]
        %v586 = vld [vmem:[#allocation3 + $0x4e0] sm:$0xff]
        %v587 = vld [vmem:[#allocation3 + $0x4e8] sm:$0xff]
        %v588 = vld [vmem:[#allocation3 + $0x4f0] sm:$0xff]
        %v589 = vld [vmem:[#allocation3 + $0x4f8] sm:$0xff]
        %v590 = vld [vmem:[#allocation3 + $0x500] sm:$0xff]
        %v591 = vld [vmem:[#allocation3 + $0x508] sm:$0xff]
        %v592 = vld [vmem:[#allocation3 + $0x510] sm:$0xff]
        %v593 = vld [vmem:[#allocation3 + $0x518] sm:$0xff]
        %v594 = vld [vmem:[#allocation3 + $0x520] sm:$0xff]
        %v595 = vld [vmem:[#allocation3 + $0x528] sm:$0xff]
        %v596 = vld [vmem:[#allocation3 + $0x530] sm:$0xff]
        %v597 = vld [vmem:[#allocation3 + $0x538] sm:$0xff]
        %v598 = vld [vmem:[#allocation3 + $0x540] sm:$0xff]
        %v599 = vld [vmem:[#allocation3 + $0x548] sm:$0xff]
        %v600 = vld [vmem:[#allocation3 + $0x550] sm:$0xff]
        %v601 = vld [vmem:[#allocation3 + $0x558] sm:$0xff]
        %v602 = vld [vmem:[#allocation3 + $0x560] sm:$0xff]
        %v603 = vld [vmem:[#allocation3 + $0x568] sm:$0xff]
        %v604 = vld [vmem:[#allocation3 + $0x570] sm:$0xff]
        %v605 = vld [vmem:[#allocation3 + $0x578] sm:$0xff]
        %v606 = vld [vmem:[#allocation3 + $0x580] sm:$0xff]
        %v607 = vld [vmem:[#allocation3 + $0x588] sm:$0xff]
        %v608 = vld [vmem:[#allocation3 + $0x590] sm:$0xff]
        %v609 = vld [vmem:[#allocation3 + $0x598] sm:$0xff]
        %v610 = vld [vmem:[#allocation3 + $0x5a0] sm:$0xff]
        %v611 = vld [vmem:[#allocation3 + $0x5a8] sm:$0xff]
        %v612 = vld [vmem:[#allocation3 + $0x5b0] sm:$0xff]
        %v613 = vld [vmem:[#allocation3 + $0x5b8] sm:$0xff]
        %v614 = vld [vmem:[#allocation3 + $0x5c0] sm:$0xff]
        %v615 = vld [vmem:[#allocation3 + $0x5c8] sm:$0xff]
        %v616 = vld [vmem:[#allocation3 + $0x5d0] sm:$0xff]
        %v617 = vld [vmem:[#allocation3 + $0x5d8] sm:$0xff]
        %v618 = vld [vmem:[#allocation3 + $0x5e0] sm:$0xff]
        %v619 = vld [vmem:[#allocation3 + $0x5e8] sm:$0xff]
        %v620 = vld [vmem:[#allocation3 + $0x5f0] sm:$0xff]
        %v621 = vld [vmem:[#allocation3 + $0x5f8] sm:$0xff]
        %v622 = vld [vmem:[#allocation3 + $0x600] sm:$0xff]
        %v623 = vld [vmem:[#allocation3 + $0x608] sm:$0xff]
        %v624 = vld [vmem:[#allocation3 + $0x610] sm:$0xff]
        %v625 = vld [vmem:[#allocation3 + $0x618] sm:$0xff]
        %v626 = vld [vmem:[#allocation3 + $0x620] sm:$0xff]
        %v627 = vld [vmem:[#allocation3 + $0x628] sm:$0xff]
        %v628 = vld [vmem:[#allocation3 + $0x630] sm:$0xff]
        %v629 = vld [vmem:[#allocation3 + $0x638] sm:$0xff]
        %vm630 = vcmask 130048
        %v632 = vsel %vm630, %v429, 0
        %634 = vmatprep.subr.mxu0 %v491
        %635 = vmatpush1.msra.mxu0 %v490
        %636 = vmatprep.subr.mxu0 %v487
        %637 = vmatpush1.msra.mxu0 %v486
        %638 = vmatprep.subr.mxu0 %v483
        %639 = vmatpush1.msra.mxu0 %v482
        %640 = vmatprep.subr.mxu0 %v479
        %641 = vmatpush1.msra.mxu0 %v478
        %642 = vmatprep.subr.mxu0 %v475
        %643 = vmatpush1.msra.mxu0 %v474
        %644 = vmatprep.subr.mxu0 %v471
        %645 = vmatpush1.msra.mxu0 %v470
        %646 = vmatprep.subr.mxu0 %v467
        %647 = vmatpush1.msra.mxu0 %v466
        %648 = vmatprep.subr.mxu0 %v463
        %649 = vmatpush1.msra.mxu0 %v462
        %650 = vmatprep.subr.mxu0 %v459
        %651 = vmatpush1.msra.mxu0 %v458
        %652 = vmatprep.subr.mxu0 %v455
        %653 = vmatpush1.msra.mxu0 %v454
        %654 = vmatprep.subr.mxu0 %v451
        %655 = vmatpush1.msra.mxu0 %v450
        %656 = vmatprep.subr.mxu0 %v447
        %657 = vmatpush1.msra.mxu0 %v446
        %658 = vmatprep.subr.mxu0 %v443
        %659 = vmatpush1.msra.mxu0 %v442
        %660 = vmatprep.subr.mxu0 %v439
        %661 = vmatpush1.msra.mxu0 %v438
        %662 = vmatprep.subr.mxu0 %v435
        %663 = vmatpush1.msra.mxu0 %v434
        %664 = vmatprep.subr.mxu0 %v431
        %665 = vmatpush1.msra.mxu0 %v430
        %666 = vmatprep.subr.mxu0 %v555
        %667 = vmatpush2.msra.mxu0 %v554
        %668 = vmatprep.subr.mxu0 %v551
        %669 = vmatpush2.msra.mxu0 %v550
        %670 = vmatprep.subr.mxu0 %v547
        %671 = vmatpush2.msra.mxu0 %v546
        %672 = vmatprep.subr.mxu0 %v543
        %673 = vmatpush2.msra.mxu0 %v542
        %674 = vmatprep.subr.mxu0 %v539
        %675 = vmatpush2.msra.mxu0 %v538
        %676 = vmatprep.subr.mxu0 %v535
        %677 = vmatpush2.msra.mxu0 %v534
        %678 = vmatprep.subr.mxu0 %v531
        %679 = vmatpush2.msra.mxu0 %v530
        %680 = vmatprep.subr.mxu0 %v527
        %681 = vmatpush2.msra.mxu0 %v526
        %682 = vmatprep.subr.mxu0 %v523
        %683 = vmatpush2.msra.mxu0 %v522
        %684 = vmatprep.subr.mxu0 %v519
        %685 = vmatpush2.msra.mxu0 %v518
        %686 = vmatprep.subr.mxu0 %v515
        %687 = vmatpush2.msra.mxu0 %v514
        %688 = vmatprep.subr.mxu0 %v511
        %689 = vmatpush2.msra.mxu0 %v510
        %690 = vmatprep.subr.mxu0 %v507
        %691 = vmatpush2.msra.mxu0 %v506
        %692 = vmatprep.subr.mxu0 %v503
        %693 = vmatpush2.msra.mxu0 %v502
        %694 = vmatprep.subr.mxu0 %v499
        %695 = vmatpush2.msra.mxu0 %v498
        %696 = vmatprep.subr.mxu0 %v495
        %697 = vmatpush2.msra.mxu0 %v494
        %698 = vmatprep.mubr.f32.mxu0 %v427
        %699 = vmatmul.mubr.f32.gmra.mxu0 %v426
        %v700 = vpop.f32.mrf.mxu0
        %v701 = vadd.f32 0.0, %v700
        %v702 = vpop.f32.mrf.mxu0
        %v703 = vadd.f32 0.0, %v702
        %704 = vdwg.mxu0
        %705 = vmatprep.subr.mxu0 %v619
        %706 = vmatpush1.msra.mxu0 %v618
        %707 = vmatprep.subr.mxu0 %v615
        %708 = vmatpush1.msra.mxu0 %v614
        %709 = vmatprep.subr.mxu0 %v611
        %710 = vmatpush1.msra.mxu0 %v610
        %711 = vmatprep.subr.mxu0 %v607
        %712 = vmatpush1.msra.mxu0 %v606
        %713 = vmatprep.subr.mxu0 %v603
        %714 = vmatpush1.msra.mxu0 %v602
        %715 = vmatprep.subr.mxu0 %v599
        %716 = vmatpush1.msra.mxu0 %v598
        %717 = vmatprep.subr.mxu0 %v595
        %718 = vmatpush1.msra.mxu0 %v594
        %719 = vmatprep.subr.mxu0 %v591
        %720 = vmatpush1.msra.mxu0 %v590
        %721 = vmatprep.subr.mxu0 %v587
        %722 = vmatpush1.msra.mxu0 %v586
        %723 = vmatprep.subr.mxu0 %v583
        %724 = vmatpush1.msra.mxu0 %v582
        %725 = vmatprep.subr.mxu0 %v579
        %726 = vmatpush1.msra.mxu0 %v578
        %727 = vmatprep.subr.mxu0 %v575
        %728 = vmatpush1.msra.mxu0 %v574
        %729 = vmatprep.subr.mxu0 %v571
        %730 = vmatpush1.msra.mxu0 %v570
        %731 = vmatprep.subr.mxu0 %v567
        %732 = vmatpush1.msra.mxu0 %v566
        %733 = vmatprep.subr.mxu0 %v563
        %734 = vmatpush1.msra.mxu0 %v562
        %735 = vmatprep.subr.mxu0 %v559
        %736 = vmatpush1.msra.mxu0 %v558
        %737 = vmatprep.subr.mxu0 0.0
        %738 = vmatpush2.msra.mxu0 0.0
        %739 = vmatprep.subr.mxu0 0.0
        %740 = vmatpush2.msra.mxu0 0.0
        %741 = vmatprep.subr.mxu0 0.0
        %742 = vmatpush2.msra.mxu0 0.0
        %743 = vmatprep.subr.mxu0 0.0
        %744 = vmatpush2.msra.mxu0 0.0
        %745 = vmatprep.subr.mxu0 0.0
        %746 = vmatpush2.msra.mxu0 0.0
        %747 = vmatprep.subr.mxu0 0.0
        %748 = vmatpush2.msra.mxu0 0.0
        %749 = vmatprep.subr.mxu0 0.0
        %750 = vmatpush2.msra.mxu0 0.0
        %751 = vmatprep.subr.mxu0 0.0
        %752 = vmatpush2.msra.mxu0 0.0
        %753 = vmatprep.subr.mxu0 0.0
        %754 = vmatpush2.msra.mxu0 0.0
        %755 = vmatprep.subr.mxu0 0.0
        %756 = vmatpush2.msra.mxu0 0.0
        %757 = vmatprep.subr.mxu0 0.0
        %758 = vmatpush2.msra.mxu0 0.0
        %759 = vmatprep.subr.mxu0 0.0
        %760 = vmatpush2.msra.mxu0 0.0
        %761 = vmatprep.subr.mxu0 0.0
        %762 = vmatpush2.msra.mxu0 0.0
        %763 = vmatprep.subr.mxu0 0.0
        %764 = vmatpush2.msra.mxu0 0.0
        %765 = vmatprep.subr.mxu0 %v627
        %766 = vmatpush2.msra.mxu0 %v626
        %767 = vmatprep.subr.mxu0 %v623
        %768 = vmatpush2.msra.mxu0 %v622
        %769 = vmatprep.mubr.f32.mxu0 %v632
        %770 = vmatmul.mubr.f32.gmra.mxu0 %v428
        %v771 = vpop.f32.mrf.mxu0
        %v772 = vadd.f32 %v701, %v771
        %v773 = vpop.f32.mrf.mxu0
        %v774 = vadd.f32 %v703, %v773
        %775 = vdwg.mxu0
        %776 = vmatprep.subr.mxu0 %v493
        %777 = vmatpush1.msra.mxu0 %v492
        %778 = vmatprep.subr.mxu0 %v489
        %779 = vmatpush1.msra.mxu0 %v488
        %780 = vmatprep.subr.mxu0 %v485
        %781 = vmatpush1.msra.mxu0 %v484
        %782 = vmatprep.subr.mxu0 %v481
        %783 = vmatpush1.msra.mxu0 %v480
        %784 = vmatprep.subr.mxu0 %v477
        %785 = vmatpush1.msra.mxu0 %v476
        %786 = vmatprep.subr.mxu0 %v473
        %787 = vmatpush1.msra.mxu0 %v472
        %788 = vmatprep.subr.mxu0 %v469
        %789 = vmatpush1.msra.mxu0 %v468
        %790 = vmatprep.subr.mxu0 %v465
        %791 = vmatpush1.msra.mxu0 %v464
        %792 = vmatprep.subr.mxu0 %v461
        %793 = vmatpush1.msra.mxu0 %v460
        %794 = vmatprep.subr.mxu0 %v457
        %795 = vmatpush1.msra.mxu0 %v456
        %796 = vmatprep.subr.mxu0 %v453
        %797 = vmatpush1.msra.mxu0 %v452
        %798 = vmatprep.subr.mxu0 %v449
        %799 = vmatpush1.msra.mxu0 %v448
        %800 = vmatprep.subr.mxu0 %v445
        %801 = vmatpush1.msra.mxu0 %v444
        %802 = vmatprep.subr.mxu0 %v441
        %803 = vmatpush1.msra.mxu0 %v440
        %804 = vmatprep.subr.mxu0 %v437
        %805 = vmatpush1.msra.mxu0 %v436
        %806 = vmatprep.subr.mxu0 %v433
        %807 = vmatpush1.msra.mxu0 %v432
        %808 = vmatprep.subr.mxu0 %v557
        %809 = vmatpush2.msra.mxu0 %v556
        %810 = vmatprep.subr.mxu0 %v553
        %811 = vmatpush2.msra.mxu0 %v552
        %812 = vmatprep.subr.mxu0 %v549
        %813 = vmatpush2.msra.mxu0 %v548
        %814 = vmatprep.subr.mxu0 %v545
        %815 = vmatpush2.msra.mxu0 %v544
        %816 = vmatprep.subr.mxu0 %v541
        %817 = vmatpush2.msra.mxu0 %v540
        %818 = vmatprep.subr.mxu0 %v537
        %819 = vmatpush2.msra.mxu0 %v536
        %820 = vmatprep.subr.mxu0 %v533
        %821 = vmatpush2.msra.mxu0 %v532
        %822 = vmatprep.subr.mxu0 %v529
        %823 = vmatpush2.msra.mxu0 %v528
        %824 = vmatprep.subr.mxu0 %v525
        %825 = vmatpush2.msra.mxu0 %v524
        %826 = vmatprep.subr.mxu0 %v521
        %827 = vmatpush2.msra.mxu0 %v520
        %828 = vmatprep.subr.mxu0 %v517
        %829 = vmatpush2.msra.mxu0 %v516
        %830 = vmatprep.subr.mxu0 %v513
        %831 = vmatpush2.msra.mxu0 %v512
        %832 = vmatprep.subr.mxu0 %v509
        %833 = vmatpush2.msra.mxu0 %v508
        %834 = vmatprep.subr.mxu0 %v505
        %835 = vmatpush2.msra.mxu0 %v504
        %836 = vmatprep.subr.mxu0 %v501
        %837 = vmatpush2.msra.mxu0 %v500
        %838 = vmatprep.subr.mxu0 %v497
        %839 = vmatpush2.msra.mxu0 %v496
        %840 = vmatprep.mubr.f32.mxu0 %v427
        %841 = vmatmul.mubr.f32.gmra.mxu0 %v426
        %v842 = vpop.f32.mrf.mxu0
        %v843 = vadd.f32 0.0, %v842
        %v844 = vpop.f32.mrf.mxu0
        %v845 = vadd.f32 0.0, %v844
        %846 = vdwg.mxu0
        %847 = vmatprep.subr.mxu0 %v621
        %848 = vmatpush1.msra.mxu0 %v620
        %849 = vmatprep.subr.mxu0 %v617
        %850 = vmatpush1.msra.mxu0 %v616
        %851 = vmatprep.subr.mxu0 %v613
        %852 = vmatpush1.msra.mxu0 %v612
        %853 = vmatprep.subr.mxu0 %v609
        %854 = vmatpush1.msra.mxu0 %v608
        %855 = vmatprep.subr.mxu0 %v605
        %856 = vmatpush1.msra.mxu0 %v604
        %857 = vmatprep.subr.mxu0 %v601
        %858 = vmatpush1.msra.mxu0 %v600
        %859 = vmatprep.subr.mxu0 %v597
        %860 = vmatpush1.msra.mxu0 %v596
        %861 = vmatprep.subr.mxu0 %v593
        %862 = vmatpush1.msra.mxu0 %v592
        %863 = vmatprep.subr.mxu0 %v589
        %864 = vmatpush1.msra.mxu0 %v588
        %865 = vmatprep.subr.mxu0 %v585
        %866 = vmatpush1.msra.mxu0 %v584
        %867 = vmatprep.subr.mxu0 %v581
        %868 = vmatpush1.msra.mxu0 %v580
        %869 = vmatprep.subr.mxu0 %v577
        %870 = vmatpush1.msra.mxu0 %v576
        %871 = vmatprep.subr.mxu0 %v573
        %872 = vmatpush1.msra.mxu0 %v572
        %873 = vmatprep.subr.mxu0 %v569
        %874 = vmatpush1.msra.mxu0 %v568
        %875 = vmatprep.subr.mxu0 %v565
        %876 = vmatpush1.msra.mxu0 %v564
        %877 = vmatprep.subr.mxu0 %v561
        %878 = vmatpush1.msra.mxu0 %v560
        %879 = vmatprep.subr.mxu0 0.0
        %880 = vmatpush2.msra.mxu0 0.0
        %881 = vmatprep.subr.mxu0 0.0
        %882 = vmatpush2.msra.mxu0 0.0
        %883 = vmatprep.subr.mxu0 0.0
        %884 = vmatpush2.msra.mxu0 0.0
        %885 = vmatprep.subr.mxu0 0.0
        %886 = vmatpush2.msra.mxu0 0.0
        %887 = vmatprep.subr.mxu0 0.0
        %888 = vmatpush2.msra.mxu0 0.0
        %889 = vmatprep.subr.mxu0 0.0
        %890 = vmatpush2.msra.mxu0 0.0
        %891 = vmatprep.subr.mxu0 0.0
        %892 = vmatpush2.msra.mxu0 0.0
        %893 = vmatprep.subr.mxu0 0.0
        %894 = vmatpush2.msra.mxu0 0.0
        %895 = vmatprep.subr.mxu0 0.0
        %896 = vmatpush2.msra.mxu0 0.0
        %897 = vmatprep.subr.mxu0 0.0
        %898 = vmatpush2.msra.mxu0 0.0
        %899 = vmatprep.subr.mxu0 0.0
        %900 = vmatpush2.msra.mxu0 0.0
        %901 = vmatprep.subr.mxu0 0.0
        %902 = vmatpush2.msra.mxu0 0.0
        %903 = vmatprep.subr.mxu0 0.0
        %904 = vmatpush2.msra.mxu0 0.0
        %905 = vmatprep.subr.mxu0 0.0
        %906 = vmatpush2.msra.mxu0 0.0
        %907 = vmatprep.subr.mxu0 %v629
        %908 = vmatpush2.msra.mxu0 %v628
        %909 = vmatprep.subr.mxu0 %v625
        %910 = vmatpush2.msra.mxu0 %v624
        %911 = vmatprep.mubr.f32.mxu0 %v632
        %912 = vmatmul.mubr.f32.gmra.mxu0 %v428
        %v913 = vpop.f32.mrf.mxu0
        %v914 = vadd.f32 %v843, %v913
        %v915 = vpop.f32.mrf.mxu0
        %v916 = vadd.f32 %v845, %v915
        %917 = vdwg.mxu0
        %v918 = vmul.f32 %v772, %v772
        %v919 = vmul.f32 %v774, %v774
        %v920 = vmul.f32 %v914, %v914
        %v921 = vmul.f32 %v916, %v916
        %v922 = vadd.f32 %v918, %v920
        %v923 = vadd.f32 %v919, %v921
        %v924 = vld [vmem:[%s3] sm:$0xff]
        %v925 = vld [vmem:[%s3 + $0x8] sm:$0xff]
        %v926 = vld [vmem:[%s3 + $0x10] sm:$0xff]
        %v927 = vld [vmem:[%s3 + $0x18] sm:$0xff]
        %v928 = vld [vmem:[%s3 + $0x20] sm:$0xff]
        %v929 = vld [vmem:[%s3 + $0x28] sm:$0xff]
        %v930 = vld [vmem:[%s3 + $0x30] sm:$0xff]
        %v931 = vld [vmem:[%s3 + $0x38] sm:$0xff]
        %v932 = vld [vmem:[%s3 + $0x40] sm:$0xff]
        %v933 = vld [vmem:[%s3 + $0x48] sm:$0xff]
        %v934 = vld [vmem:[%s3 + $0x50] sm:$0xff]
        %v935 = vld [vmem:[%s3 + $0x58] sm:$0xff]
        %v936 = vld [vmem:[%s3 + $0x60] sm:$0xff]
        %v937 = vld [vmem:[%s3 + $0x68] sm:$0xff]
        %v938 = vld [vmem:[%s3 + $0x70] sm:$0xff]
        %v939 = vld [vmem:[%s3 + $0x78] sm:$0xff]
        %v940 = vld [vmem:[%s3 + $0x80] sm:$0xff]
        %v941 = vld [vmem:[%s3 + $0x88] sm:$0xff]
        %v942 = vld [vmem:[%s3 + $0x90] sm:$0xff]
        %v943 = vld [vmem:[%s3 + $0x98] sm:$0xff]
        %v944 = vld [vmem:[%s3 + $0xa0] sm:$0xff]
        %v945 = vld [vmem:[%s3 + $0xa8] sm:$0xff]
        %v946 = vld [vmem:[%s3 + $0xb0] sm:$0xff]
        %v947 = vld [vmem:[%s3 + $0xb8] sm:$0xff]
        %v948 = vld [vmem:[%s3 + $0xc0] sm:$0xff]
        %v949 = vld [vmem:[%s3 + $0xc8] sm:$0xff]
        %v950 = vld [vmem:[%s3 + $0xd0] sm:$0xff]
        %v951 = vld [vmem:[%s3 + $0xd8] sm:$0xff]
        %v952 = vld [vmem:[%s3 + $0xe0] sm:$0xff]
        %v953 = vld [vmem:[%s3 + $0xe8] sm:$0xff]
        %v954 = vld [vmem:[%s3 + $0xf0] sm:$0xff]
        %v955 = vld [vmem:[%s3 + $0xf8] sm:$0xff]
        %956 = vmatprep.subr.mxu0 0.0
        %957 = vmatpush1.msra.mxu0 %v939
        %958 = vmatprep.subr.mxu0 0.0
        %959 = vmatpush1.msra.mxu0 %v938
        %960 = vmatprep.subr.mxu0 0.0
        %961 = vmatpush1.msra.mxu0 %v937
        %962 = vmatprep.subr.mxu0 0.0
        %963 = vmatpush1.msra.mxu0 %v936
        %964 = vmatprep.subr.mxu0 0.0
        %965 = vmatpush1.msra.mxu0 %v935
        %966 = vmatprep.subr.mxu0 0.0
        %967 = vmatpush1.msra.mxu0 %v934
        %968 = vmatprep.subr.mxu0 0.0
        %969 = vmatpush1.msra.mxu0 %v933
        %970 = vmatprep.subr.mxu0 0.0
        %971 = vmatpush1.msra.mxu0 %v932
        %972 = vmatprep.subr.mxu0 0.0
        %973 = vmatpush1.msra.mxu0 %v931
        %974 = vmatprep.subr.mxu0 0.0
        %975 = vmatpush1.msra.mxu0 %v930
        %976 = vmatprep.subr.mxu0 0.0
        %977 = vmatpush1.msra.mxu0 %v929
        %978 = vmatprep.subr.mxu0 0.0
        %979 = vmatpush1.msra.mxu0 %v928
        %980 = vmatprep.subr.mxu0 0.0
        %981 = vmatpush1.msra.mxu0 %v927
        %982 = vmatprep.subr.mxu0 0.0
        %983 = vmatpush1.msra.mxu0 %v926
        %984 = vmatprep.subr.mxu0 0.0
        %985 = vmatpush1.msra.mxu0 %v925
        %986 = vmatprep.subr.mxu0 0.0
        %987 = vmatpush1.msra.mxu0 %v924
        %988 = vmatprep.subr.mxu0 0.0
        %989 = vmatpush2.msra.mxu0 %v955
        %990 = vmatprep.subr.mxu0 0.0
        %991 = vmatpush2.msra.mxu0 %v954
        %992 = vmatprep.subr.mxu0 0.0
        %993 = vmatpush2.msra.mxu0 %v953
        %994 = vmatprep.subr.mxu0 0.0
        %995 = vmatpush2.msra.mxu0 %v952
        %996 = vmatprep.subr.mxu0 0.0
        %997 = vmatpush2.msra.mxu0 %v951
        %998 = vmatprep.subr.mxu0 0.0
        %999 = vmatpush2.msra.mxu0 %v950
        %1000 = vmatprep.subr.mxu0 0.0
        %1001 = vmatpush2.msra.mxu0 %v949
        %1002 = vmatprep.subr.mxu0 0.0
        %1003 = vmatpush2.msra.mxu0 %v948
        %1004 = vmatprep.subr.mxu0 0.0
        %1005 = vmatpush2.msra.mxu0 %v947
        %1006 = vmatprep.subr.mxu0 0.0
        %1007 = vmatpush2.msra.mxu0 %v946
        %1008 = vmatprep.subr.mxu0 0.0
        %1009 = vmatpush2.msra.mxu0 %v945
        %1010 = vmatprep.subr.mxu0 0.0
        %1011 = vmatpush2.msra.mxu0 %v944
        %1012 = vmatprep.subr.mxu0 0.0
        %1013 = vmatpush2.msra.mxu0 %v943
        %1014 = vmatprep.subr.mxu0 0.0
        %1015 = vmatpush2.msra.mxu0 %v942
        %1016 = vmatprep.subr.mxu0 0.0
        %1017 = vmatpush2.msra.mxu0 %v941
        %1018 = vmatprep.subr.mxu0 0.0
        %1019 = vmatpush2.msra.mxu0 %v940
        %1020 = vmatprep.mubr.f32.mxu0 %v923
        %1021 = vmatmul.mubr.f32.gmra.mxu0 %v922
        %v1022 = vpop.f32.mrf.mxu0
        %v1023 = vadd.f32 0.0, %v1022
        %v1024 = vpop.f32.mrf.mxu0
        %1025 = vdwg.mxu0
        %v1026 = vmax.f32 %v1023, 1e-10
        %v1027 = vlog2.pop %v1026
        %v1028 = vmul.f32 %v1027, 0.6931472
        %v1029 = vmul.f32 %v1028, 4.3429446
        %vm1030 = vcmask 184320
        %v1031 = vsel %vm1030, %v1029, -inf
        %1032 = vmax.xlane.f32.xlu0 %v1031
        %v1033 = vpop.xlane.xlu0 %1032
        %v1034 = vrot.slane %v1033, 4
        %v1035 = vmax.f32 %v1033, %v1034
        %v1036 = vrot.slane %v1035, 2
        %v1037 = vmax.f32 %v1035, %v1036
        %v1038 = vrot.slane %v1037, 1
        %v1039 = vmax.f32 %v1037, %v1038
        %s1040 = vtos %v1039
        %v1041 = vstv %s1040
        %v1042 = vsub.f32 %v1041, 80.0
        %v1043 = vmax.f32 %v1029, %v1042
        %v1044 = vsel %vm1030, %v1043, 0.0
        %v1045 = vrot.slane %v1044, 4
        %v1046 = vadd.f32 %v1044, %v1045
        %v1047 = vrot.slane %v1046, 2
        %v1048 = vadd.f32 %v1046, %v1047
        %v1049 = vrot.slane %v1048, 1
        %v1050 = vadd.f32 %v1048, %v1049
        %v1051 = vrcp.pop 5.0
        %v1052 = vmul.f32 %v1050, %v1051
        %v1053 = vld [vmem:[#allocation5] sm:$0xff]
        %v1054 = vld [vmem:[#allocation5 + $0x8] sm:$0xff]
        %v1055 = vld [vmem:[#allocation5 + $0x10] sm:$0xff]
        %v1056 = vld [vmem:[#allocation5 + $0x18] sm:$0xff]
        %v1057 = vld [vmem:[#allocation5 + $0x20] sm:$0x7f]
        %v1058 = vld [vmem:[#allocation5 + $0x28] sm:$0x7f]
        %vm1059 = vcmask 187392
        %v1061 = vsel %vm1059, %v1052, 0
        %vm1063 = vcmask 1046528
        %v1065 = vsel %vm1063, %v1057, 0
        %v1068 = vsel %vm1063, %v1058, 0
        %1070 = vmatprep.subr.mxu0 0.0
        %1071 = vmatpush1.msra.mxu0 0.0
        %1072 = vmatprep.subr.mxu0 0.0
        %1073 = vmatpush1.msra.mxu0 0.0
        %1074 = vmatprep.subr.mxu0 0.0
        %1075 = vmatpush1.msra.mxu0 0.0
        %1076 = vmatprep.subr.mxu0 0.0
        %1077 = vmatpush1.msra.mxu0 0.0
        %1078 = vmatprep.subr.mxu0 0.0
        %1079 = vmatpush1.msra.mxu0 0.0
        %1080 = vmatprep.subr.mxu0 0.0
        %1081 = vmatpush1.msra.mxu0 0.0
        %1082 = vmatprep.subr.mxu0 0.0
        %1083 = vmatpush1.msra.mxu0 0.0
        %1084 = vmatprep.subr.mxu0 0.0
        %1085 = vmatpush1.msra.mxu0 0.0
        %1086 = vmatprep.subr.mxu0 0.0
        %1087 = vmatpush1.msra.mxu0 0.0
        %1088 = vmatprep.subr.mxu0 0.0
        %1089 = vmatpush1.msra.mxu0 0.0
        %1090 = vmatprep.subr.mxu0 0.0
        %1091 = vmatpush1.msra.mxu0 0.0
        %1092 = vmatprep.subr.mxu0 0.0
        %1093 = vmatpush1.msra.mxu0 0.0
        %1094 = vmatprep.subr.mxu0 0.0
        %1095 = vmatpush1.msra.mxu0 0.0
        %1096 = vmatprep.subr.mxu0 %v1068
        %1097 = vmatpush1.msra.mxu0 %v1065
        %1098 = vmatprep.subr.mxu0 %v1056
        %1099 = vmatpush1.msra.mxu0 %v1055
        %1100 = vmatprep.subr.mxu0 %v1054
        %1101 = vmatpush1.msra.mxu0 %v1053
        %1102 = vmatprep.subr.mxu0 0.0
        %1103 = vmatpush2.msra.mxu0 0.0
        %1104 = vmatprep.subr.mxu0 0.0
        %1105 = vmatpush2.msra.mxu0 0.0
        %1106 = vmatprep.subr.mxu0 0.0
        %1107 = vmatpush2.msra.mxu0 0.0
        %1108 = vmatprep.subr.mxu0 0.0
        %1109 = vmatpush2.msra.mxu0 0.0
        %1110 = vmatprep.subr.mxu0 0.0
        %1111 = vmatpush2.msra.mxu0 0.0
        %1112 = vmatprep.subr.mxu0 0.0
        %1113 = vmatpush2.msra.mxu0 0.0
        %1114 = vmatprep.subr.mxu0 0.0
        %1115 = vmatpush2.msra.mxu0 0.0
        %1116 = vmatprep.subr.mxu0 0.0
        %1117 = vmatpush2.msra.mxu0 0.0
        %1118 = vmatprep.subr.mxu0 0.0
        %1119 = vmatpush2.msra.mxu0 0.0
        %1120 = vmatprep.subr.mxu0 0.0
        %1121 = vmatpush2.msra.mxu0 0.0
        %1122 = vmatprep.subr.mxu0 0.0
        %1123 = vmatpush2.msra.mxu0 0.0
        %1124 = vmatprep.subr.mxu0 0.0
        %1125 = vmatpush2.msra.mxu0 0.0
        %1126 = vmatprep.subr.mxu0 0.0
        %1127 = vmatpush2.msra.mxu0 0.0
        %1128 = vmatprep.subr.mxu0 0.0
        %1129 = vmatpush2.msra.mxu0 0.0
        %1130 = vmatprep.subr.mxu0 0.0
        %1131 = vmatpush2.msra.mxu0 0.0
        %1132 = vmatprep.subr.mxu0 0.0
        %1133 = vmatpush2.msra.mxu0 0.0
        %1134 = vmatprep.mubr.f32.mxu0 0.0
        %1135 = vmatmul.mubr.f32.gmra.mxu0 %v1061
        %v1136 = vpop.f32.mrf.mxu0
        %v1137 = vadd.f32 0.0, %v1136
        %v1138 = vpop.f32.mrf.mxu0
        %v1139 = vadd.f32 0.0, %v1138
        %1140 = vdwg.mxu0
        %v1143 = vcombine.low %v1137, %v1139
        %v1145 = vunpack.c.l.s4 1966171168
        %v1146 = vunpack.c.0.s8 %v1145
        %v1147 = vlaneseq
        %v1148 = vshrl.u32 %v1147, 7
        %v1149 = vsub.s32 %v1146, %v1148
        %v1150 = vrot.slane %v1143, %v1149
        %v1152 = vunpack.c.l.s4 1966171168
        %v1153 = vunpack.c.0.s8 %v1152
        %v1154 = vlaneseq
        %v1155 = vshrl.u32 %v1154, 7
        %v1156 = vsub.s32 %v1153, %v1155
        %v1157 = vrot.slane %v1150, %v1156
        %vm1159 = vcmp.lt.s32.totalorder %v380, 256
        %vm1160 = vmand %vm381, %vm1159
        %1161 = vst.msk [vmem:[%s372] sm:$0x3] %vm1160, %v1157
        %v1162 = vld [vmem:[%s368] sm:$0xff]
        %v1163 = vld [vmem:[%s368 + $0x8] sm:$0xff]
        %v1164 = vld [vmem:[%s368 + $0x10] sm:$0xff]
        %v1165 = vld [vmem:[%s368 + $0x18] sm:$0xff]
        %v1166 = vld [vmem:[%s368 + $0x20] sm:$0xff]
        %v1167 = vld [vmem:[%s368 + $0x28] sm:$0xff]
        %v1168 = vld [vmem:[%s368 + $0x30] sm:$0xff]
        %v1169 = vld [vmem:[%s368 + $0x38] sm:$0xff]
        %v1170 = vld [vmem:[#allocation7] sm:$0xff]
        %v1171 = vld [vmem:[#allocation7 + $0x8] sm:$0xff]
        %v1172 = vld [vmem:[#allocation7 + $0x10] sm:$0xff]
        %v1173 = vld [vmem:[#allocation7 + $0x18] sm:$0xff]
        %v1174 = vld [vmem:[%s6] sm:$0xff]
        %v1175 = vld [vmem:[%s6 + $0x8] sm:$0xff]
        %v1176 = vld [vmem:[%s6 + $0x10] sm:$0xff]
        %v1177 = vld [vmem:[%s6 + $0x18] sm:$0xff]
        %1179 = vset.pattern.permute.xlu0 0
        %1180 = vperm.xlu0 %1179, %v1174
        %v1181 = vpop.permute.xlu0 %1180
        %1184 = vset.pattern.permute.xlu0 0
        %1185 = vperm.xlu0 %1184, %v1175
        %v1186 = vpop.permute.xlu0 %1185
        %1189 = vset.pattern.permute.xlu0 0
        %1190 = vperm.xlu0 %1189, %v1176
        %v1191 = vpop.permute.xlu0 %1190
        %1194 = vset.pattern.permute.xlu0 0
        %1195 = vperm.xlu0 %1194, %v1177
        %v1196 = vpop.permute.xlu0 %1195
        %v1199 = vsel %vm411, %v1170, 0
        %v1202 = vsel %vm411, %v1171, 0
        %v1205 = vsel %vm411, %v1172, 0
        %v1208 = vsel %vm411, %v1173, 0
        %1210 = vmatprep.subr.mxu0 0.0
        %1211 = vmatpush1.msra.mxu0 0.0
        %1212 = vmatprep.subr.mxu0 0.0
        %1213 = vmatpush1.msra.mxu0 0.0
        %1214 = vmatprep.subr.mxu0 0.0
        %1215 = vmatpush1.msra.mxu0 0.0
        %1216 = vmatprep.subr.mxu0 0.0
        %1217 = vmatpush1.msra.mxu0 0.0
        %1218 = vmatprep.subr.mxu0 0.0
        %1219 = vmatpush1.msra.mxu0 0.0
        %1220 = vmatprep.subr.mxu0 0.0
        %1221 = vmatpush1.msra.mxu0 0.0
        %1222 = vmatprep.subr.mxu0 0.0
        %1223 = vmatpush1.msra.mxu0 0.0
        %1224 = vmatprep.subr.mxu0 0.0
        %1225 = vmatpush1.msra.mxu0 0.0
        %1226 = vmatprep.subr.mxu0 0.0
        %1227 = vmatpush1.msra.mxu0 0.0
        %1228 = vmatprep.subr.mxu0 0.0
        %1229 = vmatpush1.msra.mxu0 0.0
        %1230 = vmatprep.subr.mxu0 0.0
        %1231 = vmatpush1.msra.mxu0 0.0
        %1232 = vmatprep.subr.mxu0 0.0
        %1233 = vmatpush1.msra.mxu0 0.0
        %1234 = vmatprep.subr.mxu0 %v1169
        %1235 = vmatpush1.msra.mxu0 %v1168
        %1236 = vmatprep.subr.mxu0 %v1167
        %1237 = vmatpush1.msra.mxu0 %v1166
        %1238 = vmatprep.subr.mxu0 %v1165
        %1239 = vmatpush1.msra.mxu0 %v1164
        %1240 = vmatprep.subr.mxu0 %v1163
        %1241 = vmatpush1.msra.mxu0 %v1162
        %1242 = vmatprep.subr.mxu0 0.0
        %1243 = vmatpush2.msra.mxu0 0.0
        %1244 = vmatprep.subr.mxu0 0.0
        %1245 = vmatpush2.msra.mxu0 0.0
        %1246 = vmatprep.subr.mxu0 0.0
        %1247 = vmatpush2.msra.mxu0 0.0
        %1248 = vmatprep.subr.mxu0 0.0
        %1249 = vmatpush2.msra.mxu0 0.0
        %1250 = vmatprep.subr.mxu0 0.0
        %1251 = vmatpush2.msra.mxu0 0.0
        %1252 = vmatprep.subr.mxu0 0.0
        %1253 = vmatpush2.msra.mxu0 0.0
        %1254 = vmatprep.subr.mxu0 0.0
        %1255 = vmatpush2.msra.mxu0 0.0
        %1256 = vmatprep.subr.mxu0 0.0
        %1257 = vmatpush2.msra.mxu0 0.0
        %1258 = vmatprep.subr.mxu0 0.0
        %1259 = vmatpush2.msra.mxu0 0.0
        %1260 = vmatprep.subr.mxu0 0.0
        %1261 = vmatpush2.msra.mxu0 0.0
        %1262 = vmatprep.subr.mxu0 0.0
        %1263 = vmatpush2.msra.mxu0 0.0
        %1264 = vmatprep.subr.mxu0 0.0
        %1265 = vmatpush2.msra.mxu0 0.0
        %1266 = vmatprep.subr.mxu0 0.0
        %1267 = vmatpush2.msra.mxu0 0.0
        %1268 = vmatprep.subr.mxu0 0.0
        %1269 = vmatpush2.msra.mxu0 0.0
        %1270 = vmatprep.subr.mxu0 0.0
        %1271 = vmatpush2.msra.mxu0 0.0
        %1272 = vmatprep.subr.mxu0 0.0
        %1273 = vmatpush2.msra.mxu0 0.0
        %1274 = vmatprep.mubr.f32.mxu0 0.0
        %1275 = vmatmul.mubr.f32.gmra.mxu0 %v1199
        %v1276 = vpop.f32.mrf.mxu0
        %v1277 = vadd.f32 %v1181, %v1276
        %v1278 = vpop.f32.mrf.mxu0
        %v1279 = vadd.f32 %v1181, %v1278
        %1280 = vmatprep.mubr.f32.mxu0 0.0
        %1281 = vmatmul.mubr.f32.gmra.mxu0 %v1202
        %v1282 = vpop.f32.mrf.mxu0
        %v1283 = vadd.f32 %v1186, %v1282
        %v1284 = vpop.f32.mrf.mxu0
        %v1285 = vadd.f32 %v1186, %v1284
        %1286 = vmatprep.mubr.f32.mxu0 0.0
        %1287 = vmatmul.mubr.f32.gmra.mxu0 %v1205
        %v1288 = vpop.f32.mrf.mxu0
        %v1289 = vadd.f32 %v1191, %v1288
        %v1290 = vpop.f32.mrf.mxu0
        %v1291 = vadd.f32 %v1191, %v1290
        %1292 = vmatprep.mubr.f32.mxu0 0.0
        %1293 = vmatmul.mubr.f32.gmra.mxu0 %v1208
        %v1294 = vpop.f32.mrf.mxu0
        %v1295 = vadd.f32 %v1196, %v1294
        %v1296 = vpop.f32.mrf.mxu0
        %v1297 = vadd.f32 %v1196, %v1296
        %1298 = vdwg.mxu0
        %v1299 = vmax.f32 %v1277, 0.0
        %v1300 = vmax.f32 %v1279, 0.0
        %v1301 = vmax.f32 %v1283, 0.0
        %v1302 = vmax.f32 %v1285, 0.0
        %v1303 = vmax.f32 %v1289, 0.0
        %v1304 = vmax.f32 %v1291, 0.0
        %v1305 = vmax.f32 %v1295, 0.0
        %v1306 = vmax.f32 %v1297, 0.0
        %v1307 = vpack.c.bf16 %v1301, %v1299
        %v1308 = vpack.c.bf16 %v1302, %v1300
        %v1309 = vpack.c.bf16 %v1305, %v1303
        %v1310 = vpack.c.bf16 %v1306, %v1304
        %v1315 = vunpack.c.l.b16 %v1307
        %v1316 = vunpack.c.l.b16 %v1308
        %v1317 = vunpack.c.h.b16 %v1307
        %v1318 = vunpack.c.h.b16 %v1308
        %v1319 = vunpack.c.l.b16 %v1309
        %v1320 = vunpack.c.l.b16 %v1310
        %v1321 = vunpack.c.h.b16 %v1309
        %v1322 = vunpack.c.h.b16 %v1310
        %v1323 = vpack.c.b16 %v1316, %v1315
        %v1324 = vpack.c.b16 %v1318, %v1317
        %v1325 = vpack.c.b16 %v1320, %v1319
        %v1326 = vpack.c.b16 %v1322, %v1321
        %1331 = vst [vmem:[%s377] sm:$0xff] %v1323
        %1332 = vst [vmem:[%s377 + $0x8] sm:$0xff] %v1324
        %1333 = vst [vmem:[%s377 + $0x10] sm:$0xff] %v1325
        %1334 = vst [vmem:[%s377 + $0x18] sm:$0xff] %v1326
        %p1335 = scmp.lt.s32.totalorder %s22, 1
        %s1336 = scalar_select %p1335, %s22, 1
        %s1337 = smul.addr %s1336, 2
        %s1338 = scalar_lea.vmem %s7, %s1337
        %p1339 = scmp.lt.s32.totalorder %s22, 1
        %s1340 = scalar_select %p1339, %s22, 1
        %s1341 = smul.addr %s1340, 8
        %s1342 = smul.addr %s1341, 4
        %s1343 = scalar_lea.vmem %s8, %s1342
        // Predicated region
        $region61: #{multimodal_forward.2} parent=47 // pred_check
          %p1344 = pneg %p197
        $region62: #{multimodal_forward.2} parent=47 // pred_check_branch
          %1346 = sbr.rel (%p1344) target = $region64
        $region63: #{multimodal_forward.2} parent=47 // pred_region
          _
        $region64: #{multimodal_forward.2} parent=47 // pred_fallthru
          _
        // Predicated region
        $region65: #{multimodal_forward.2} parent=47 // pred_check
          %p1347 = pneg %p223
        $region66: #{multimodal_forward.2} parent=47 // pred_check_branch
          %1349 = sbr.rel (%p1347) target = $region68
        $region67: #{multimodal_forward.2} parent=47 // pred_region
          _
        $region68: #{multimodal_forward.2} parent=47 // pred_fallthru
          _
      $region48: #{multimodal_forward.2} parent=5 // pred_fallthru
        _
      %p1350 = scmp.le.s32.totalorder 2, %s17
      // Predicated region
      $region69: #{multimodal_forward.2} parent=5 // pred_check
        %p1351 = pneg %p1350
      $region70: #{multimodal_forward.2} parent=5 // pred_check_branch
        %1353 = sbr.rel (%p1351) target = $region72
      $region71: #{multimodal_forward.2} parent=5 // pred_region
        %s1354 = ssub.s32 %s17, 2
        // Predicated region
        $region73: #{multimodal_forward.2} parent=71 // pred_check
          %p1355 = pneg %p203
        $region74: #{multimodal_forward.2} parent=71 // pred_check_branch
          %1357 = sbr.rel (%p1355) target = $region76
        $region75: #{multimodal_forward.2} parent=71 // pred_region
          %p1358 = scmp.lt.s32.totalorder %s23, 1
          %s1359 = scalar_select %p1358, %s23, 1
          %s1360 = smul.addr %s1359, 2
          %s1361 = scalar_lea.vmem %s7, %s1360
        $region76: #{multimodal_forward.2} parent=71 // pred_fallthru
          _
        // Predicated region
        $region77: #{multimodal_forward.2} parent=71 // pred_check
          %p1362 = pneg %p229
        $region78: #{multimodal_forward.2} parent=71 // pred_check_branch
          %1364 = sbr.rel (%p1362) target = $region80
        $region79: #{multimodal_forward.2} parent=71 // pred_region
          %p1365 = scmp.lt.s32.totalorder %s23, 1
          %s1366 = scalar_select %p1365, %s23, 1
          %s1367 = smul.addr %s1366, 8
          %s1368 = smul.addr %s1367, 4
          %s1369 = scalar_lea.vmem %s8, %s1368
        $region80: #{multimodal_forward.2} parent=71 // pred_fallthru
          _
      $region72: #{multimodal_forward.2} parent=5 // pred_fallthru
        _
    $region6: #{multimodal_forward.2} parent=1 // loop_footer
      %s21 = sadd.s32 1, %s17
    $region7: #{multimodal_forward.2} parent=1 // loop_footer_branch
      %16 = sbr.rel target = $region3
    $region8: #{multimodal_forward.2} parent=1 // loop_exit
      _
    %1370 = vsyncpa [#allocation4], 1
    %s1371 = scalar_lea.sflag [#allocation4], 1
    %1372 = vsyncpa %s1371, 1
    %1373 = vsyncpa [#allocation6], 1

// kernel: multimodal_forward.3
$region0: #{multimodal_forward.3}
  #allocation0 [shape = 'u32[]', space=smem, size = 0x4, offset = 0x4, fixed_abs, tag = 'smem constant byte address 0x4 - core index']
  #allocation1 [shape = 'u32[144,128]{1,0:T(1,128)}', space=vmem, size = 0x12000, scoped, tag = 'internal scratch']
  #allocation2 [shape = 'f32[6,256]{1,0:T(8,128)}', space=vmem, size = 0x2000, scoped, tag = 'scratch operand']
  %s0 = inlined_call_operand.vmem [shape: f32[2,256], index: 0, kind: input, shape index: {}]
  %s1 = inlined_call_operand.vmem [shape: bf16[2,8192], index: 1, kind: input, shape index: {}]
  %s2 = inlined_call_operand.vmem [shape: f32[2,256], index: 2, kind: input, shape index: {}]
  %s3 = inlined_call_operand.hbm [shape: bf16[8192,256], index: 3, kind: input, shape index: {}]
  %s4 = inlined_call_operand.hbm [shape: f32[1,256], index: 4, kind: input, shape index: {}]
  %s5 = inlined_call_operand.hbm [shape: bf16[256,512], index: 5, kind: input, shape index: {}]
  %s6 = inlined_call_operand.hbm [shape: f32[1,512], index: 6, kind: input, shape index: {}]
  %s7 = inlined_call_operand.hbm [shape: bf16[512,512], index: 7, kind: input, shape index: {}]
  %s8 = inlined_call_operand.hbm [shape: f32[1,512], index: 8, kind: input, shape index: {}]
  %s9 = inlined_call_operand.hbm [shape: bf16[512,256], index: 9, kind: input, shape index: {}]
  %s10 = inlined_call_operand.hbm [shape: f32[1,256], index: 10, kind: input, shape index: {}]
  %s11 = inlined_call_operand.vmem [shape: f32[256,10], index: 11, kind: input, shape index: {}]
  %s12 = inlined_call_operand.hbm [shape: f32[1,10], index: 12, kind: input, shape index: {}]
  %s13 = inlined_call_operand.vmem [shape: f32[6,10], index: 13, kind: output, shape index: {}]
  %s14 = sld [smem:[#allocation0]]
  $region98: #{multimodal_forward.3} parent=0
    _
  %s16 = ssub.s32 1, %s14
  %s17 = scalar_select 0, %s16, %s14
  $region1: #{multimodal_forward.3} parent=0
    #allocation3 [shape = 'u8[4194304]{0}', space=vmem, size = 0x400000, scoped, tag = 'input window, operand 3, single buffered']
    #allocation4 [shape = 's32[1]{0}', space=sflag, size = 0x4, scoped, tag = 'scoped memory for multimodal_forward.3']
    #allocation5 [shape = 'u8[1024]{0}', space=vmem, size = 0x400, scoped, tag = 'input window, operand 4, single buffered']
    #allocation6 [shape = 's32[1]{0}', space=sflag, size = 0x4, scoped, tag = 'scoped memory for multimodal_forward.3']
    #allocation7 [shape = 'u8[262144]{0}', space=vmem, size = 0x40000, scoped, tag = 'input window, operand 5, single buffered']
    #allocation8 [shape = 'u8[2048]{0}', space=vmem, size = 0x800, scoped, tag = 'input window, operand 6, single buffered']
    #allocation9 [shape = 's32[1]{0}', space=sflag, size = 0x4, scoped, tag = 'scoped memory for multimodal_forward.3']
    #allocation10 [shape = 'u8[524288]{0}', space=vmem, size = 0x80000, scoped, tag = 'input window, operand 7, single buffered']
    #allocation11 [shape = 'u8[2048]{0}', space=vmem, size = 0x800, scoped, tag = 'input window, operand 8, single buffered']
    #allocation12 [shape = 's32[1]{0}', space=sflag, size = 0x4, scoped, tag = 'scoped memory for multimodal_forward.3']
    #allocation13 [shape = 'u8[262144]{0}', space=vmem, size = 0x40000, scoped, tag = 'input window, operand 9, single buffered']
    #allocation14 [shape = 'u8[1024]{0}', space=vmem, size = 0x400, scoped, tag = 'input window, operand 10, single buffered']
    #allocation15 [shape = 's32[1]{0}', space=sflag, size = 0x4, scoped, tag = 'scoped memory for multimodal_forward.3']
    #allocation16 [shape = 'u8[512]{0}', space=vmem, size = 0x400, scoped, tag = 'input window, operand 12, single buffered']
    %18 = vsyncpa [#allocation4], 0
    %19 = vsyncpa [#allocation6], 0
    %20 = vsyncpa [#allocation9], 0
    %21 = vsyncpa [#allocation12], 0
    %22 = vsyncpa [#allocation15], 0
    // Predicated region
    $region2: #{multimodal_forward.3} parent=1 // pred_check
      _
    $region3: #{multimodal_forward.3} parent=1 // pred_check_branch
      %24 = sbr.rel (0) target = $region5
    $region4: #{multimodal_forward.3} parent=1 // pred_region
      _
    $region5: #{multimodal_forward.3} parent=1 // pred_fallthru
      _
    // Predicated region
    $region6: #{multimodal_forward.3} parent=1 // pred_check
      _
    $region7: #{multimodal_forward.3} parent=1 // pred_check_branch
      %26 = sbr.rel (0) target = $region9
    $region8: #{multimodal_forward.3} parent=1 // pred_region
      _
    $region9: #{multimodal_forward.3} parent=1 // pred_fallthru
      _
    // Predicated region
    $region10: #{multimodal_forward.3} parent=1 // pred_check
      _
    $region11: #{multimodal_forward.3} parent=1 // pred_check_branch
      %28 = sbr.rel (0) target = $region13
    $region12: #{multimodal_forward.3} parent=1 // pred_region
      _
    $region13: #{multimodal_forward.3} parent=1 // pred_fallthru
      _
    // Predicated region
    $region14: #{multimodal_forward.3} parent=1 // pred_check
      _
    $region15: #{multimodal_forward.3} parent=1 // pred_check_branch
      %30 = sbr.rel (0) target = $region17
    $region16: #{multimodal_forward.3} parent=1 // pred_region
      %s32 = ssub.s32 131072, 131072
      %33 = vsyncadd [#allocation4], %s32
      %s34 = sshll.u32 [#allocation3], 4
      %s35 = int_to_ptr.vmem [resolvable:$true] %s34
      %40 = dma.hbm_to_vmem [thread:$0]  %s3, 131072, %s35, [#allocation4], 128, 128, 8
    $region17: #{multimodal_forward.3} parent=1 // pred_fallthru
      _
    // Predicated region
    $region18: #{multimodal_forward.3} parent=1 // pred_check
      _
    $region19: #{multimodal_forward.3} parent=1 // pred_check_branch
      %42 = sbr.rel (0) target = $region21
    $region20: #{multimodal_forward.3} parent=1 // pred_region
      %s44 = ssub.s32 32, 32
      %45 = vsyncadd [#allocation6], %s44
      %s47 = sshll.u32 [#allocation5], 4
      %s48 = int_to_ptr.vmem [resolvable:$true] %s47
      %50 = dma.hbm_to_vmem [thread:$0]  %s4, 32, %s48, [#allocation6]
    $region21: #{multimodal_forward.3} parent=1 // pred_fallthru
      _
    // Predicated region
    $region22: #{multimodal_forward.3} parent=1 // pred_check
      _
    $region23: #{multimodal_forward.3} parent=1 // pred_check_branch
      %52 = sbr.rel (0) target = $region25
    $region24: #{multimodal_forward.3} parent=1 // pred_region
      %s54 = ssub.s32 8192, 8192
      %55 = vsyncadd [#allocation6], %s54
      %s56 = sshll.u32 [#allocation7], 4
      %s57 = int_to_ptr.vmem [resolvable:$true] %s56
      %62 = dma.hbm_to_vmem [thread:$0]  %s5, 8192, %s57, [#allocation6], 256, 256, 16
    $region25: #{multimodal_forward.3} parent=1 // pred_fallthru
      _
    // Predicated region
    $region26: #{multimodal_forward.3} parent=1 // pred_check
      _
    $region27: #{multimodal_forward.3} parent=1 // pred_check_branch
      %64 = sbr.rel (0) target = $region29
    $region28: #{multimodal_forward.3} parent=1 // pred_region
      %s66 = ssub.s32 64, 64
      %67 = vsyncadd [#allocation9], %s66
      %s69 = sshll.u32 [#allocation8], 4
      %s70 = int_to_ptr.vmem [resolvable:$true] %s69
      %72 = dma.hbm_to_vmem [thread:$0]  %s6, 64, %s70, [#allocation9]
    $region29: #{multimodal_forward.3} parent=1 // pred_fallthru
      _
    // Predicated region
    $region30: #{multimodal_forward.3} parent=1 // pred_check
      _
    $region31: #{multimodal_forward.3} parent=1 // pred_check_branch
      %74 = sbr.rel (0) target = $region33
    $region32: #{multimodal_forward.3} parent=1 // pred_region
      %s76 = ssub.s32 16384, 16384
      %77 = vsyncadd [#allocation9], %s76
      %s78 = sshll.u32 [#allocation10], 4
      %s79 = int_to_ptr.vmem [resolvable:$true] %s78
      %84 = dma.hbm_to_vmem [thread:$0]  %s7, 16384, %s79, [#allocation9], 256, 256, 16
    $region33: #{multimodal_forward.3} parent=1 // pred_fallthru
      _
    // Predicated region
    $region34: #{multimodal_forward.3} parent=1 // pred_check
      _
    $region35: #{multimodal_forward.3} parent=1 // pred_check_branch
      %86 = sbr.rel (0) target = $region37
    $region36: #{multimodal_forward.3} parent=1 // pred_region
      %s88 = ssub.s32 64, 64
      %89 = vsyncadd [#allocation12], %s88
      %s91 = sshll.u32 [#allocation11], 4
      %s92 = int_to_ptr.vmem [resolvable:$true] %s91
      %94 = dma.hbm_to_vmem [thread:$0]  %s8, 64, %s92, [#allocation12]
    $region37: #{multimodal_forward.3} parent=1 // pred_fallthru
      _
    // Predicated region
    $region38: #{multimodal_forward.3} parent=1 // pred_check
      _
    $region39: #{multimodal_forward.3} parent=1 // pred_check_branch
      %96 = sbr.rel (0) target = $region41
    $region40: #{multimodal_forward.3} parent=1 // pred_region
      %s98 = ssub.s32 8192, 8192
      %99 = vsyncadd [#allocation12], %s98
      %s100 = sshll.u32 [#allocation13], 4
      %s101 = int_to_ptr.vmem [resolvable:$true] %s100
      %106 = dma.hbm_to_vmem [thread:$0]  %s9, 8192, %s101, [#allocation12], 128, 128, 8
    $region41: #{multimodal_forward.3} parent=1 // pred_fallthru
      _
    // Predicated region
    $region42: #{multimodal_forward.3} parent=1 // pred_check
      _
    $region43: #{multimodal_forward.3} parent=1 // pred_check_branch
      %108 = sbr.rel (0) target = $region45
    $region44: #{multimodal_forward.3} parent=1 // pred_region
      %s110 = ssub.s32 32, 32
      %111 = vsyncadd [#allocation15], %s110
      %s113 = sshll.u32 [#allocation14], 4
      %s114 = int_to_ptr.vmem [resolvable:$true] %s113
      %116 = dma.hbm_to_vmem [thread:$0]  %s10, 32, %s114, [#allocation15]
    $region45: #{multimodal_forward.3} parent=1 // pred_fallthru
      _
    // Predicated region
    $region46: #{multimodal_forward.3} parent=1 // pred_check
      _
    $region47: #{multimodal_forward.3} parent=1 // pred_check_branch
      %118 = sbr.rel (0) target = $region49
    $region48: #{multimodal_forward.3} parent=1 // pred_region
      _
    $region49: #{multimodal_forward.3} parent=1 // pred_fallthru
      _
    // Predicated region
    $region50: #{multimodal_forward.3} parent=1 // pred_check
      _
    $region51: #{multimodal_forward.3} parent=1 // pred_check_branch
      %120 = sbr.rel (0) target = $region53
    $region52: #{multimodal_forward.3} parent=1 // pred_region
      %s122 = ssub.s32 16, 16
      %123 = vsyncadd [#allocation15], %s122
      %s125 = sshll.u32 [#allocation16], 4
      %s126 = int_to_ptr.vmem [resolvable:$true] %s125
      %128 = dma.hbm_to_vmem [thread:$0]  %s12, 16, %s126, [#allocation15]
    $region53: #{multimodal_forward.3} parent=1 // pred_fallthru
      _
    // Predicated region
    $region54: #{multimodal_forward.3} parent=1 // pred_check
      _
    $region55: #{multimodal_forward.3} parent=1 // pred_check_branch
      %130 = sbr.rel (0) target = $region57
    $region56: #{multimodal_forward.3} parent=1 // pred_region
      %131 = dma.done [#allocation4], 131072
    $region57: #{multimodal_forward.3} parent=1 // pred_fallthru
      _
    // Predicated region
    $region58: #{multimodal_forward.3} parent=1 // pred_check
      _
    $region59: #{multimodal_forward.3} parent=1 // pred_check_branch
      %133 = sbr.rel (0) target = $region61
    $region60: #{multimodal_forward.3} parent=1 // pred_region
      %134 = dma.done [#allocation6], 32
    $region61: #{multimodal_forward.3} parent=1 // pred_fallthru
      _
    // Predicated region
    $region62: #{multimodal_forward.3} parent=1 // pred_check
      _
    $region63: #{multimodal_forward.3} parent=1 // pred_check_branch
      %136 = sbr.rel (0) target = $region65
    $region64: #{multimodal_forward.3} parent=1 // pred_region
      %137 = dma.done [#allocation6], 8192
    $region65: #{multimodal_forward.3} parent=1 // pred_fallthru
      _
    // Predicated region
    $region66: #{multimodal_forward.3} parent=1 // pred_check
      _
    $region67: #{multimodal_forward.3} parent=1 // pred_check_branch
      %139 = sbr.rel (0) target = $region69
    $region68: #{multimodal_forward.3} parent=1 // pred_region
      %140 = dma.done [#allocation9], 64
    $region69: #{multimodal_forward.3} parent=1 // pred_fallthru
      _
    // Predicated region
    $region70: #{multimodal_forward.3} parent=1 // pred_check
      _
    $region71: #{multimodal_forward.3} parent=1 // pred_check_branch
      %142 = sbr.rel (0) target = $region73
    $region72: #{multimodal_forward.3} parent=1 // pred_region
      %143 = dma.done [#allocation9], 16384
    $region73: #{multimodal_forward.3} parent=1 // pred_fallthru
      _
    // Predicated region
    $region74: #{multimodal_forward.3} parent=1 // pred_check
      _
    $region75: #{multimodal_forward.3} parent=1 // pred_check_branch
      %145 = sbr.rel (0) target = $region77
    $region76: #{multimodal_forward.3} parent=1 // pred_region
      %146 = dma.done [#allocation12], 64
    $region77: #{multimodal_forward.3} parent=1 // pred_fallthru
      _
    // Predicated region
    $region78: #{multimodal_forward.3} parent=1 // pred_check
      _
    $region79: #{multimodal_forward.3} parent=1 // pred_check_branch
      %148 = sbr.rel (0) target = $region81
    $region80: #{multimodal_forward.3} parent=1 // pred_region
      %149 = dma.done [#allocation12], 8192
    $region81: #{multimodal_forward.3} parent=1 // pred_fallthru
      _
    // Predicated region
    $region82: #{multimodal_forward.3} parent=1 // pred_check
      _
    $region83: #{multimodal_forward.3} parent=1 // pred_check_branch
      %151 = sbr.rel (0) target = $region85
    $region84: #{multimodal_forward.3} parent=1 // pred_region
      %152 = dma.done [#allocation15], 32
    $region85: #{multimodal_forward.3} parent=1 // pred_fallthru
      _
    // Predicated region
    $region86: #{multimodal_forward.3} parent=1 // pred_check
      _
    $region87: #{multimodal_forward.3} parent=1 // pred_check_branch
      %154 = sbr.rel (0) target = $region89
    $region88: #{multimodal_forward.3} parent=1 // pred_region
      %155 = dma.done [#allocation15], 16
    $region89: #{multimodal_forward.3} parent=1 // pred_fallthru
      _
    %v156 = vld [vmem:[%s1] sm:$0xff]
    %v157 = vld [vmem:[%s1 + $0x8] sm:$0xff]
    %v158 = vld [vmem:[%s1 + $0x10] sm:$0xff]
    %v159 = vld [vmem:[%s1 + $0x18] sm:$0xff]
    %v160 = vld [vmem:[%s1 + $0x20] sm:$0xff]
    %v161 = vld [vmem:[%s1 + $0x28] sm:$0xff]
    %v162 = vld [vmem:[%s1 + $0x30] sm:$0xff]
    %v163 = vld [vmem:[%s1 + $0x38] sm:$0xff]
    %v164 = vld [vmem:[#allocation3] sm:$0xff]
    %v165 = vld [vmem:[#allocation3 + $0x8] sm:$0xff]
    %v166 = vld [vmem:[#allocation3 + $0x10] sm:$0xff]
    %v167 = vld [vmem:[#allocation3 + $0x18] sm:$0xff]
    %v168 = vld [vmem:[#allocation3 + $0x20] sm:$0xff]
    %v169 = vld [vmem:[#allocation3 + $0x28] sm:$0xff]
    %v170 = vld [vmem:[#allocation3 + $0x30] sm:$0xff]
    %v171 = vld [vmem:[#allocation3 + $0x38] sm:$0xff]
    %v172 = vld [vmem:[#allocation3 + $0x40] sm:$0xff]
    %v173 = vld [vmem:[#allocation3 + $0x48] sm:$0xff]
    %v174 = vld [vmem:[#allocation3 + $0x50] sm:$0xff]
    %v175 = vld [vmem:[#allocation3 + $0x58] sm:$0xff]
    %v176 = vld [vmem:[#allocation3 + $0x60] sm:$0xff]
    %v177 = vld [vmem:[#allocation3 + $0x68] sm:$0xff]
    %v178 = vld [vmem:[#allocation3 + $0x70] sm:$0xff]
    %v179 = vld [vmem:[#allocation3 + $0x78] sm:$0xff]
    %v180 = vld [vmem:[#allocation3 + $0x80] sm:$0xff]
    %v181 = vld [vmem:[#allocation3 + $0x88] sm:$0xff]
    %v182 = vld [vmem:[#allocation3 + $0x90] sm:$0xff]
    %v183 = vld [vmem:[#allocation3 + $0x98] sm:$0xff]
    %v184 = vld [vmem:[#allocation3 + $0xa0] sm:$0xff]
    %v185 = vld [vmem:[#allocation3 + $0xa8] sm:$0xff]
    %v186 = vld [vmem:[#allocation3 + $0xb0] sm:$0xff]
    %v187 = vld [vmem:[#allocation3 + $0xb8] sm:$0xff]
    %v188 = vld [vmem:[#allocation3 + $0xc0] sm:$0xff]
    %v189 = vld [vmem:[#allocation3 + $0xc8] sm:$0xff]
    %v190 = vld [vmem:[#allocation3 + $0xd0] sm:$0xff]
    %v191 = vld [vmem:[#allocation3 + $0xd8] sm:$0xff]
    %v192 = vld [vmem:[#allocation3 + $0xe0] sm:$0xff]
    %v193 = vld [vmem:[#allocation3 + $0xe8] sm:$0xff]
    %v194 = vld [vmem:[#allocation3 + $0xf0] sm:$0xff]
    %v195 = vld [vmem:[#allocation3 + $0xf8] sm:$0xff]
    %v196 = vld [vmem:[#allocation3 + $0x100] sm:$0xff]
    %v197 = vld [vmem:[#allocation3 + $0x108] sm:$0xff]
    %v198 = vld [vmem:[#allocation3 + $0x110] sm:$0xff]
    %v199 = vld [vmem:[#allocation3 + $0x118] sm:$0xff]
    %v200 = vld [vmem:[#allocation3 + $0x120] sm:$0xff]
    %v201 = vld [vmem:[#allocation3 + $0x128] sm:$0xff]
    %v202 = vld [vmem:[#allocation3 + $0x130] sm:$0xff]
    %v203 = vld [vmem:[#allocation3 + $0x138] sm:$0xff]
    %v204 = vld [vmem:[#allocation3 + $0x140] sm:$0xff]
    %v205 = vld [vmem:[#allocation3 + $0x148] sm:$0xff]
    %v206 = vld [vmem:[#allocation3 + $0x150] sm:$0xff]
    %v207 = vld [vmem:[#allocation3 + $0x158] sm:$0xff]
    %v208 = vld [vmem:[#allocation3 + $0x160] sm:$0xff]
    %v209 = vld [vmem:[#allocation3 + $0x168] sm:$0xff]
    %v210 = vld [vmem:[#allocation3 + $0x170] sm:$0xff]
    %v211 = vld [vmem:[#allocation3 + $0x178] sm:$0xff]
    %v212 = vld [vmem:[#allocation3 + $0x180] sm:$0xff]
    %v213 = vld [vmem:[#allocation3 + $0x188] sm:$0xff]
    %v214 = vld [vmem:[#allocation3 + $0x190] sm:$0xff]
    %v215 = vld [vmem:[#allocation3 + $0x198] sm:$0xff]
    %v216 = vld [vmem:[#allocation3 + $0x1a0] sm:$0xff]
    %v217 = vld [vmem:[#allocation3 + $0x1a8] sm:$0xff]
    %v218 = vld [vmem:[#allocation3 + $0x1b0] sm:$0xff]
    %v219 = vld [vmem:[#allocation3 + $0x1b8] sm:$0xff]
    %v220 = vld [vmem:[#allocation3 + $0x1c0] sm:$0xff]
    %v221 = vld [vmem:[#allocation3 + $0x1c8] sm:$0xff]
    %v222 = vld [vmem:[#allocation3 + $0x1d0] sm:$0xff]
    %v223 = vld [vmem:[#allocation3 + $0x1d8] sm:$0xff]
    %v224 = vld [vmem:[#allocation3 + $0x1e0] sm:$0xff]
    %v225 = vld [vmem:[#allocation3 + $0x1e8] sm:$0xff]
    %v226 = vld [vmem:[#allocation3 + $0x1f0] sm:$0xff]
    %v227 = vld [vmem:[#allocation3 + $0x1f8] sm:$0xff]
    %v228 = vld [vmem:[#allocation3 + $0x200] sm:$0xff]
    %v229 = vld [vmem:[#allocation3 + $0x208] sm:$0xff]
    %v230 = vld [vmem:[#allocation3 + $0x210] sm:$0xff]
    %v231 = vld [vmem:[#allocation3 + $0x218] sm:$0xff]
    %v232 = vld [vmem:[#allocation3 + $0x220] sm:$0xff]
    %v233 = vld [vmem:[#allocation3 + $0x228] sm:$0xff]
    %v234 = vld [vmem:[#allocation3 + $0x230] sm:$0xff]
    %v235 = vld [vmem:[#allocation3 + $0x238] sm:$0xff]
    %v236 = vld [vmem:[#allocation3 + $0x240] sm:$0xff]
    %v237 = vld [vmem:[#allocation3 + $0x248] sm:$0xff]
    %v238 = vld [vmem:[#allocation3 + $0x250] sm:$0xff]
    %v239 = vld [vmem:[#allocation3 + $0x258] sm:$0xff]
    %v240 = vld [vmem:[#allocation3 + $0x260] sm:$0xff]
    %v241 = vld [vmem:[#allocation3 + $0x268] sm:$0xff]
    %v242 = vld [vmem:[#allocation3 + $0x270] sm:$0xff]
    %v243 = vld [vmem:[#allocation3 + $0x278] sm:$0xff]
    %v244 = vld [vmem:[#allocation3 + $0x280] sm:$0xff]
    %v245 = vld [vmem:[#allocation3 + $0x288] sm:$0xff]
    %v246 = vld [vmem:[#allocation3 + $0x290] sm:$0xff]
    %v247 = vld [vmem:[#allocation3 + $0x298] sm:$0xff]
    %v248 = vld [vmem:[#allocation3 + $0x2a0] sm:$0xff]
    %v249 = vld [vmem:[#allocation3 + $0x2a8] sm:$0xff]
    %v250 = vld [vmem:[#allocation3 + $0x2b0] sm:$0xff]
    %v251 = vld [vmem:[#allocation3 + $0x2b8] sm:$0xff]
    %v252 = vld [vmem:[#allocation3 + $0x2c0] sm:$0xff]
    %v253 = vld [vmem:[#allocation3 + $0x2c8] sm:$0xff]
    %v254 = vld [vmem:[#allocation3 + $0x2d0] sm:$0xff]
    %v255 = vld [vmem:[#allocation3 + $0x2d8] sm:$0xff]
    %v256 = vld [vmem:[#allocation3 + $0x2e0] sm:$0xff]
    %v257 = vld [vmem:[#allocation3 + $0x2e8] sm:$0xff]
    %v258 = vld [vmem:[#allocation3 + $0x2f0] sm:$0xff]
    %v259 = vld [vmem:[#allocation3 + $0x2f8] sm:$0xff]
    %v260 = vld [vmem:[#allocation3 + $0x300] sm:$0xff]
    %v261 = vld [vmem:[#allocation3 + $0x308] sm:$0xff]
    %v262 = vld [vmem:[#allocation3 + $0x310] sm:$0xff]
    %v263 = vld [vmem:[#allocation3 + $0x318] sm:$0xff]
    %v264 = vld [vmem:[#allocation3 + $0x320] sm:$0xff]
    %v265 = vld [vmem:[#allocation3 + $0x328] sm:$0xff]
    %v266 = vld [vmem:[#allocation3 + $0x330] sm:$0xff]
    %v267 = vld [vmem:[#allocation3 + $0x338] sm:$0xff]
    %v268 = vld [vmem:[#allocation3 + $0x340] sm:$0xff]
    %v269 = vld [vmem:[#allocation3 + $0x348] sm:$0xff]
    %v270 = vld [vmem:[#allocation3 + $0x350] sm:$0xff]
    %v271 = vld [vmem:[#allocation3 + $0x358] sm:$0xff]
    %v272 = vld [vmem:[#allocation3 + $0x360] sm:$0xff]
    %v273 = vld [vmem:[#allocation3 + $0x368] sm:$0xff]
    %v274 = vld [vmem:[#allocation3 + $0x370] sm:$0xff]
    %v275 = vld [vmem:[#allocation3 + $0x378] sm:$0xff]
    %v276 = vld [vmem:[#allocation3 + $0x380] sm:$0xff]
    %v277 = vld [vmem:[#allocation3 + $0x388] sm:$0xff]
    %v278 = vld [vmem:[#allocation3 + $0x390] sm:$0xff]
    %v279 = vld [vmem:[#allocation3 + $0x398] sm:$0xff]
    %v280 = vld [vmem:[#allocation3 + $0x3a0] sm:$0xff]
    %v281 = vld [vmem:[#allocation3 + $0x3a8] sm:$0xff]
    %v282 = vld [vmem:[#allocation3 + $0x3b0] sm:$0xff]
    %v283 = vld [vmem:[#allocation3 + $0x3b8] sm:$0xff]
    %v284 = vld [vmem:[#allocation3 + $0x3c0] sm:$0xff]
    %v285 = vld [vmem:[#allocation3 + $0x3c8] sm:$0xff]
    %v286 = vld [vmem:[#allocation3 + $0x3d0] sm:$0xff]
    %v287 = vld [vmem:[#allocation3 + $0x3d8] sm:$0xff]
    %v288 = vld [vmem:[#allocation3 + $0x3e0] sm:$0xff]
    %v289 = vld [vmem:[#allocation3 + $0x3e8] sm:$0xff]
    %v290 = vld [vmem:[#allocation3 + $0x3f0] sm:$0xff]
    %v291 = vld [vmem:[#allocation3 + $0x3f8] sm:$0xff]
    %v292 = vld [vmem:[#allocation3 + $0x400] sm:$0xff]
    %v293 = vld [vmem:[#allocation3 + $0x408] sm:$0xff]
    %v294 = vld [vmem:[#allocation3 + $0x410] sm:$0xff]
    %v295 = vld [vmem:[#allocation3 + $0x418] sm:$0xff]
    %v296 = vld [vmem:[#allocation3 + $0x420] sm:$0xff]
    %v297 = vld [vmem:[#allocation3 + $0x428] sm:$0xff]
    %v298 = vld [vmem:[#allocation3 + $0x430] sm:$0xff]
    %v299 = vld [vmem:[#allocation3 + $0x438] sm:$0xff]
    %v300 = vld [vmem:[#allocation3 + $0x440] sm:$0xff]
    %v301 = vld [vmem:[#allocation3 + $0x448] sm:$0xff]
    %v302 = vld [vmem:[#allocation3 + $0x450] sm:$0xff]
    %v303 = vld [vmem:[#allocation3 + $0x458] sm:$0xff]
    %v304 = vld [vmem:[#allocation3 + $0x460] sm:$0xff]
    %v305 = vld [vmem:[#allocation3 + $0x468] sm:$0xff]
    %v306 = vld [vmem:[#allocation3 + $0x470] sm:$0xff]
    %v307 = vld [vmem:[#allocation3 + $0x478] sm:$0xff]
    %v308 = vld [vmem:[#allocation3 + $0x480] sm:$0xff]
    %v309 = vld [vmem:[#allocation3 + $0x488] sm:$0xff]
    %v310 = vld [vmem:[#allocation3 + $0x490] sm:$0xff]
    %v311 = vld [vmem:[#allocation3 + $0x498] sm:$0xff]
    %v312 = vld [vmem:[#allocation3 + $0x4a0] sm:$0xff]
    %v313 = vld [vmem:[#allocation3 + $0x4a8] sm:$0xff]
    %v314 = vld [vmem:[#allocation3 + $0x4b0] sm:$0xff]
    %v315 = vld [vmem:[#allocation3 + $0x4b8] sm:$0xff]
    %v316 = vld [vmem:[#allocation3 + $0x4c0] sm:$0xff]
    %v317 = vld [vmem:[#allocation3 + $0x4c8] sm:$0xff]
    %v318 = vld [vmem:[#allocation3 + $0x4d0] sm:$0xff]
    %v319 = vld [vmem:[#allocation3 + $0x4d8] sm:$0xff]
    %v320 = vld [vmem:[#allocation3 + $0x4e0] sm:$0xff]
    %v321 = vld [vmem:[#allocation3 + $0x4e8] sm:$0xff]
    %v322 = vld [vmem:[#allocation3 + $0x4f0] sm:$0xff]
    %v323 = vld [vmem:[#allocation3 + $0x4f8] sm:$0xff]
    %v324 = vld [vmem:[#allocation3 + $0x500] sm:$0xff]
    %v325 = vld [vmem:[#allocation3 + $0x508] sm:$0xff]
    %v326 = vld [vmem:[#allocation3 + $0x510] sm:$0xff]
    %v327 = vld [vmem:[#allocation3 + $0x518] sm:$0xff]
    %v328 = vld [vmem:[#allocation3 + $0x520] sm:$0xff]
    %v329 = vld [vmem:[#allocation3 + $0x528] sm:$0xff]
    %v330 = vld [vmem:[#allocation3 + $0x530] sm:$0xff]
    %v331 = vld [vmem:[#allocation3 + $0x538] sm:$0xff]
    %v332 = vld [vmem:[#allocation3 + $0x540] sm:$0xff]
    %v333 = vld [vmem:[#allocation3 + $0x548] sm:$0xff]
    %v334 = vld [vmem:[#allocation3 + $0x550] sm:$0xff]
    %v335 = vld [vmem:[#allocation3 + $0x558] sm:$0xff]
    %v336 = vld [vmem:[#allocation3 + $0x560] sm:$0xff]
    %v337 = vld [vmem:[#allocation3 + $0x568] sm:$0xff]
    %v338 = vld [vmem:[#allocation3 + $0x570] sm:$0xff]
    %v339 = vld [vmem:[#allocation3 + $0x578] sm:$0xff]
    %v340 = vld [vmem:[#allocation3 + $0x580] sm:$0xff]
    %v341 = vld [vmem:[#allocation3 + $0x588] sm:$0xff]
    %v342 = vld [vmem:[#allocation3 + $0x590] sm:$0xff]
    %v343 = vld [vmem:[#allocation3 + $0x598] sm:$0xff]
    %v344 = vld [vmem:[#allocation3 + $0x5a0] sm:$0xff]
    %v345 = vld [vmem:[#allocation3 + $0x5a8] sm:$0xff]
    %v346 = vld [vmem:[#allocation3 + $0x5b0] sm:$0xff]
    %v347 = vld [vmem:[#allocation3 + $0x5b8] sm:$0xff]
    %v348 = vld [vmem:[#allocation3 + $0x5c0] sm:$0xff]
    %v349 = vld [vmem:[#allocation3 + $0x5c8] sm:$0xff]
    %v350 = vld [vmem:[#allocation3 + $0x5d0] sm:$0xff]
    %v351 = vld [vmem:[#allocation3 + $0x5d8] sm:$0xff]
    %v352 = vld [vmem:[#allocation3 + $0x5e0] sm:$0xff]
    %v353 = vld [vmem:[#allocation3 + $0x5e8] sm:$0xff]
    %v354 = vld [vmem:[#allocation3 + $0x5f0] sm:$0xff]
    %v355 = vld [vmem:[#allocation3 + $0x5f8] sm:$0xff]
    %v356 = vld [vmem:[#allocation3 + $0x600] sm:$0xff]
    %v357 = vld [vmem:[#allocation3 + $0x608] sm:$0xff]
    %v358 = vld [vmem:[#allocation3 + $0x610] sm:$0xff]
    %v359 = vld [vmem:[#allocation3 + $0x618] sm:$0xff]
    %v360 = vld [vmem:[#allocation3 + $0x620] sm:$0xff]
    %v361 = vld [vmem:[#allocation3 + $0x628] sm:$0xff]
    %v362 = vld [vmem:[#allocation3 + $0x630] sm:$0xff]
    %v363 = vld [vmem:[#allocation3 + $0x638] sm:$0xff]
    %v364 = vld [vmem:[#allocation3 + $0x640] sm:$0xff]
    %v365 = vld [vmem:[#allocation3 + $0x648] sm:$0xff]
    %v366 = vld [vmem:[#allocation3 + $0x650] sm:$0xff]
    %v367 = vld [vmem:[#allocation3 + $0x658] sm:$0xff]
    %v368 = vld [vmem:[#allocation3 + $0x660] sm:$0xff]
    %v369 = vld [vmem:[#allocation3 + $0x668] sm:$0xff]
    %v370 = vld [vmem:[#allocation3 + $0x670] sm:$0xff]
    %v371 = vld [vmem:[#allocation3 + $0x678] sm:$0xff]
    %v372 = vld [vmem:[#allocation3 + $0x680] sm:$0xff]
    %v373 = vld [vmem:[#allocation3 + $0x688] sm:$0xff]
    %v374 = vld [vmem:[#allocation3 + $0x690] sm:$0xff]
    %v375 = vld [vmem:[#allocation3 + $0x698] sm:$0xff]
    %v376 = vld [vmem:[#allocation3 + $0x6a0] sm:$0xff]
    %v377 = vld [vmem:[#allocation3 + $0x6a8] sm:$0xff]
    %v378 = vld [vmem:[#allocation3 + $0x6b0] sm:$0xff]
    %v379 = vld [vmem:[#allocation3 + $0x6b8] sm:$0xff]
    %v380 = vld [vmem:[#allocation3 + $0x6c0] sm:$0xff]
    %v381 = vld [vmem:[#allocation3 + $0x6c8] sm:$0xff]
    %v382 = vld [vmem:[#allocation3 + $0x6d0] sm:$0xff]
    %v383 = vld [vmem:[#allocation3 + $0x6d8] sm:$0xff]
    %v384 = vld [vmem:[#allocation3 + $0x6e0] sm:$0xff]
    %v385 = vld [vmem:[#allocation3 + $0x6e8] sm:$0xff]
    %v386 = vld [vmem:[#allocation3 + $0x6f0] sm:$0xff]
    %v387 = vld [vmem:[#allocation3 + $0x6f8] sm:$0xff]
    %v388 = vld [vmem:[#allocation3 + $0x700] sm:$0xff]
    %v389 = vld [vmem:[#allocation3 + $0x708] sm:$0xff]
    %v390 = vld [vmem:[#allocation3 + $0x710] sm:$0xff]
    %v391 = vld [vmem:[#allocation3 + $0x718] sm:$0xff]
    %v392 = vld [vmem:[#allocation3 + $0x720] sm:$0xff]
    %v393 = vld [vmem:[#allocation3 + $0x728] sm:$0xff]
    %v394 = vld [vmem:[#allocation3 + $0x730] sm:$0xff]
    %v395 = vld [vmem:[#allocation3 + $0x738] sm:$0xff]
    %v396 = vld [vmem:[#allocation3 + $0x740] sm:$0xff]
    %v397 = vld [vmem:[#allocation3 + $0x748] sm:$0xff]
    %v398 = vld [vmem:[#allocation3 + $0x750] sm:$0xff]
    %v399 = vld [vmem:[#allocation3 + $0x758] sm:$0xff]
    %v400 = vld [vmem:[#allocation3 + $0x760] sm:$0xff]
    %v401 = vld [vmem:[#allocation3 + $0x768] sm:$0xff]
    %v402 = vld [vmem:[#allocation3 + $0x770] sm:$0xff]
    %v403 = vld [vmem:[#allocation3 + $0x778] sm:$0xff]
    %v404 = vld [vmem:[#allocation3 + $0x780] sm:$0xff]
    %v405 = vld [vmem:[#allocation3 + $0x788] sm:$0xff]
    %v406 = vld [vmem:[#allocation3 + $0x790] sm:$0xff]
    %v407 = vld [vmem:[#allocation3 + $0x798] sm:$0xff]
    %v408 = vld [vmem:[#allocation3 + $0x7a0] sm:$0xff]
    %v409 = vld [vmem:[#allocation3 + $0x7a8] sm:$0xff]
    %v410 = vld [vmem:[#allocation3 + $0x7b0] sm:$0xff]
    %v411 = vld [vmem:[#allocation3 + $0x7b8] sm:$0xff]
    %v412 = vld [vmem:[#allocation3 + $0x7c0] sm:$0xff]
    %v413 = vld [vmem:[#allocation3 + $0x7c8] sm:$0xff]
    %v414 = vld [vmem:[#allocation3 + $0x7d0] sm:$0xff]
    %v415 = vld [vmem:[#allocation3 + $0x7d8] sm:$0xff]
    %v416 = vld [vmem:[#allocation3 + $0x7e0] sm:$0xff]
    %v417 = vld [vmem:[#allocation3 + $0x7e8] sm:$0xff]
    %v418 = vld [vmem:[#allocation3 + $0x7f0] sm:$0xff]
    %v419 = vld [vmem:[#allocation3 + $0x7f8] sm:$0xff]
    %v420 = vld [vmem:[#allocation3 + $0x800] sm:$0xff]
    %v421 = vld [vmem:[#allocation3 + $0x808] sm:$0xff]
    %v422 = vld [vmem:[#allocation3 + $0x810] sm:$0xff]
    %v423 = vld [vmem:[#allocation3 + $0x818] sm:$0xff]
    %v424 = vld [vmem:[#allocation3 + $0x820] sm:$0xff]
    %v425 = vld [vmem:[#allocation3 + $0x828] sm:$0xff]
    %v426 = vld [vmem:[#allocation3 + $0x830] sm:$0xff]
    %v427 = vld [vmem:[#allocation3 + $0x838] sm:$0xff]
    %v428 = vld [vmem:[#allocation3 + $0x840] sm:$0xff]
    %v429 = vld [vmem:[#allocation3 + $0x848] sm:$0xff]
    %v430 = vld [vmem:[#allocation3 + $0x850] sm:$0xff]
    %v431 = vld [vmem:[#allocation3 + $0x858] sm:$0xff]
    %v432 = vld [vmem:[#allocation3 + $0x860] sm:$0xff]
    %v433 = vld [vmem:[#allocation3 + $0x868] sm:$0xff]
    %v434 = vld [vmem:[#allocation3 + $0x870] sm:$0xff]
    %v435 = vld [vmem:[#allocation3 + $0x878] sm:$0xff]
    %v436 = vld [vmem:[#allocation3 + $0x880] sm:$0xff]
    %v437 = vld [vmem:[#allocation3 + $0x888] sm:$0xff]
    %v438 = vld [vmem:[#allocation3 + $0x890] sm:$0xff]
    %v439 = vld [vmem:[#allocation3 + $0x898] sm:$0xff]
    %v440 = vld [vmem:[#allocation3 + $0x8a0] sm:$0xff]
    %v441 = vld [vmem:[#allocation3 + $0x8a8] sm:$0xff]
    %v442 = vld [vmem:[#allocation3 + $0x8b0] sm:$0xff]
    %v443 = vld [vmem:[#allocation3 + $0x8b8] sm:$0xff]
    %v444 = vld [vmem:[#allocation3 + $0x8c0] sm:$0xff]
    %v445 = vld [vmem:[#allocation3 + $0x8c8] sm:$0xff]
    %v446 = vld [vmem:[#allocation3 + $0x8d0] sm:$0xff]
    %v447 = vld [vmem:[#allocation3 + $0x8d8] sm:$0xff]
    %v448 = vld [vmem:[#allocation3 + $0x8e0] sm:$0xff]
    %v449 = vld [vmem:[#allocation3 + $0x8e8] sm:$0xff]
    %v450 = vld [vmem:[#allocation3 + $0x8f0] sm:$0xff]
    %v451 = vld [vmem:[#allocation3 + $0x8f8] sm:$0xff]
    %v452 = vld [vmem:[#allocation3 + $0x900] sm:$0xff]
    %v453 = vld [vmem:[#allocation3 + $0x908] sm:$0xff]
    %v454 = vld [vmem:[#allocation3 + $0x910] sm:$0xff]
    %v455 = vld [vmem:[#allocation3 + $0x918] sm:$0xff]
    %v456 = vld [vmem:[#allocation3 + $0x920] sm:$0xff]
    %v457 = vld [vmem:[#allocation3 + $0x928] sm:$0xff]
    %v458 = vld [vmem:[#allocation3 + $0x930] sm:$0xff]
    %v459 = vld [vmem:[#allocation3 + $0x938] sm:$0xff]
    %v460 = vld [vmem:[#allocation3 + $0x940] sm:$0xff]
    %v461 = vld [vmem:[#allocation3 + $0x948] sm:$0xff]
    %v462 = vld [vmem:[#allocation3 + $0x950] sm:$0xff]
    %v463 = vld [vmem:[#allocation3 + $0x958] sm:$0xff]
    %v464 = vld [vmem:[#allocation3 + $0x960] sm:$0xff]
    %v465 = vld [vmem:[#allocation3 + $0x968] sm:$0xff]
    %v466 = vld [vmem:[#allocation3 + $0x970] sm:$0xff]
    %v467 = vld [vmem:[#allocation3 + $0x978] sm:$0xff]
    %v468 = vld [vmem:[#allocation3 + $0x980] sm:$0xff]
    %v469 = vld [vmem:[#allocation3 + $0x988] sm:$0xff]
    %v470 = vld [vmem:[#allocation3 + $0x990] sm:$0xff]
    %v471 = vld [vmem:[#allocation3 + $0x998] sm:$0xff]
    %v472 = vld [vmem:[#allocation3 + $0x9a0] sm:$0xff]
    %v473 = vld [vmem:[#allocation3 + $0x9a8] sm:$0xff]
    %v474 = vld [vmem:[#allocation3 + $0x9b0] sm:$0xff]
    %v475 = vld [vmem:[#allocation3 + $0x9b8] sm:$0xff]
    %v476 = vld [vmem:[#allocation3 + $0x9c0] sm:$0xff]
    %v477 = vld [vmem:[#allocation3 + $0x9c8] sm:$0xff]
    %v478 = vld [vmem:[#allocation3 + $0x9d0] sm:$0xff]
    %v479 = vld [vmem:[#allocation3 + $0x9d8] sm:$0xff]
    %v480 = vld [vmem:[#allocation3 + $0x9e0] sm:$0xff]
    %v481 = vld [vmem:[#allocation3 + $0x9e8] sm:$0xff]
    %v482 = vld [vmem:[#allocation3 + $0x9f0] sm:$0xff]
    %v483 = vld [vmem:[#allocation3 + $0x9f8] sm:$0xff]
    %v484 = vld [vmem:[#allocation3 + $0xa00] sm:$0xff]
    %v485 = vld [vmem:[#allocation3 + $0xa08] sm:$0xff]
    %v486 = vld [vmem:[#allocation3 + $0xa10] sm:$0xff]
    %v487 = vld [vmem:[#allocation3 + $0xa18] sm:$0xff]
    %v488 = vld [vmem:[#allocation3 + $0xa20] sm:$0xff]
    %v489 = vld [vmem:[#allocation3 + $0xa28] sm:$0xff]
    %v490 = vld [vmem:[#allocation3 + $0xa30] sm:$0xff]
    %v491 = vld [vmem:[#allocation3 + $0xa38] sm:$0xff]
    %v492 = vld [vmem:[#allocation3 + $0xa40] sm:$0xff]
    %v493 = vld [vmem:[#allocation3 + $0xa48] sm:$0xff]
    %v494 = vld [vmem:[#allocation3 + $0xa50] sm:$0xff]
    %v495 = vld [vmem:[#allocation3 + $0xa58] sm:$0xff]
    %v496 = vld [vmem:[#allocation3 + $0xa60] sm:$0xff]
    %v497 = vld [vmem:[#allocation3 + $0xa68] sm:$0xff]
    %v498 = vld [vmem:[#allocation3 + $0xa70] sm:$0xff]
    %v499 = vld [vmem:[#allocation3 + $0xa78] sm:$0xff]
    %v500 = vld [vmem:[#allocation3 + $0xa80] sm:$0xff]
    %v501 = vld [vmem:[#allocation3 + $0xa88] sm:$0xff]
    %v502 = vld [vmem:[#allocation3 + $0xa90] sm:$0xff]
    %v503 = vld [vmem:[#allocation3 + $0xa98] sm:$0xff]
    %v504 = vld [vmem:[#allocation3 + $0xaa0] sm:$0xff]
    %v505 = vld [vmem:[#allocation3 + $0xaa8] sm:$0xff]
    %v506 = vld [vmem:[#allocation3 + $0xab0] sm:$0xff]
    %v507 = vld [vmem:[#allocation3 + $0xab8] sm:$0xff]
    %v508 = vld [vmem:[#allocation3 + $0xac0] sm:$0xff]
    %v509 = vld [vmem:[#allocation3 + $0xac8] sm:$0xff]
    %v510 = vld [vmem:[#allocation3 + $0xad0] sm:$0xff]
    %v511 = vld [vmem:[#allocation3 + $0xad8] sm:$0xff]
    %v512 = vld [vmem:[#allocation3 + $0xae0] sm:$0xff]
    %v513 = vld [vmem:[#allocation3 + $0xae8] sm:$0xff]
    %v514 = vld [vmem:[#allocation3 + $0xaf0] sm:$0xff]
    %v515 = vld [vmem:[#allocation3 + $0xaf8] sm:$0xff]
    %v516 = vld [vmem:[#allocation3 + $0xb00] sm:$0xff]
    %v517 = vld [vmem:[#allocation3 + $0xb08] sm:$0xff]
    %v518 = vld [vmem:[#allocation3 + $0xb10] sm:$0xff]
    %v519 = vld [vmem:[#allocation3 + $0xb18] sm:$0xff]
    %v520 = vld [vmem:[#allocation3 + $0xb20] sm:$0xff]
    %v521 = vld [vmem:[#allocation3 + $0xb28] sm:$0xff]
    %v522 = vld [vmem:[#allocation3 + $0xb30] sm:$0xff]
    %v523 = vld [vmem:[#allocation3 + $0xb38] sm:$0xff]
    %v524 = vld [vmem:[#allocation3 + $0xb40] sm:$0xff]
    %v525 = vld [vmem:[#allocation3 + $0xb48] sm:$0xff]
    %v526 = vld [vmem:[#allocation3 + $0xb50] sm:$0xff]
    %v527 = vld [vmem:[#allocation3 + $0xb58] sm:$0xff]
    %v528 = vld [vmem:[#allocation3 + $0xb60] sm:$0xff]
    %v529 = vld [vmem:[#allocation3 + $0xb68] sm:$0xff]
    %v530 = vld [vmem:[#allocation3 + $0xb70] sm:$0xff]
    %v531 = vld [vmem:[#allocation3 + $0xb78] sm:$0xff]
    %v532 = vld [vmem:[#allocation3 + $0xb80] sm:$0xff]
    %v533 = vld [vmem:[#allocation3 + $0xb88] sm:$0xff]
    %v534 = vld [vmem:[#allocation3 + $0xb90] sm:$0xff]
    %v535 = vld [vmem:[#allocation3 + $0xb98] sm:$0xff]
    %v536 = vld [vmem:[#allocation3 + $0xba0] sm:$0xff]
    %v537 = vld [vmem:[#allocation3 + $0xba8] sm:$0xff]
    %v538 = vld [vmem:[#allocation3 + $0xbb0] sm:$0xff]
    %v539 = vld [vmem:[#allocation3 + $0xbb8] sm:$0xff]
    %v540 = vld [vmem:[#allocation3 + $0xbc0] sm:$0xff]
    %v541 = vld [vmem:[#allocation3 + $0xbc8] sm:$0xff]
    %v542 = vld [vmem:[#allocation3 + $0xbd0] sm:$0xff]
    %v543 = vld [vmem:[#allocation3 + $0xbd8] sm:$0xff]
    %v544 = vld [vmem:[#allocation3 + $0xbe0] sm:$0xff]
    %v545 = vld [vmem:[#allocation3 + $0xbe8] sm:$0xff]
    %v546 = vld [vmem:[#allocation3 + $0xbf0] sm:$0xff]
    %v547 = vld [vmem:[#allocation3 + $0xbf8] sm:$0xff]
    %v548 = vld [vmem:[#allocation3 + $0xc00] sm:$0xff]
    %v549 = vld [vmem:[#allocation3 + $0xc08] sm:$0xff]
    %v550 = vld [vmem:[#allocation3 + $0xc10] sm:$0xff]
    %v551 = vld [vmem:[#allocation3 + $0xc18] sm:$0xff]
    %v552 = vld [vmem:[#allocation3 + $0xc20] sm:$0xff]
    %v553 = vld [vmem:[#allocation3 + $0xc28] sm:$0xff]
    %v554 = vld [vmem:[#allocation3 + $0xc30] sm:$0xff]
    %v555 = vld [vmem:[#allocation3 + $0xc38] sm:$0xff]
    %v556 = vld [vmem:[#allocation3 + $0xc40] sm:$0xff]
    %v557 = vld [vmem:[#allocation3 + $0xc48] sm:$0xff]
    %v558 = vld [vmem:[#allocation3 + $0xc50] sm:$0xff]
    %v559 = vld [vmem:[#allocation3 + $0xc58] sm:$0xff]
    %v560 = vld [vmem:[#allocation3 + $0xc60] sm:$0xff]
    %v561 = vld [vmem:[#allocation3 + $0xc68] sm:$0xff]
    %v562 = vld [vmem:[#allocation3 + $0xc70] sm:$0xff]
    %v563 = vld [vmem:[#allocation3 + $0xc78] sm:$0xff]
    %v564 = vld [vmem:[#allocation3 + $0xc80] sm:$0xff]
    %v565 = vld [vmem:[#allocation3 + $0xc88] sm:$0xff]
    %v566 = vld [vmem:[#allocation3 + $0xc90] sm:$0xff]
    %v567 = vld [vmem:[#allocation3 + $0xc98] sm:$0xff]
    %v568 = vld [vmem:[#allocation3 + $0xca0] sm:$0xff]
    %v569 = vld [vmem:[#allocation3 + $0xca8] sm:$0xff]
    %v570 = vld [vmem:[#allocation3 + $0xcb0] sm:$0xff]
    %v571 = vld [vmem:[#allocation3 + $0xcb8] sm:$0xff]
    %v572 = vld [vmem:[#allocation3 + $0xcc0] sm:$0xff]
    %v573 = vld [vmem:[#allocation3 + $0xcc8] sm:$0xff]
    %v574 = vld [vmem:[#allocation3 + $0xcd0] sm:$0xff]
    %v575 = vld [vmem:[#allocation3 + $0xcd8] sm:$0xff]
    %v576 = vld [vmem:[#allocation3 + $0xce0] sm:$0xff]
    %v577 = vld [vmem:[#allocation3 + $0xce8] sm:$0xff]
    %v578 = vld [vmem:[#allocation3 + $0xcf0] sm:$0xff]
    %v579 = vld [vmem:[#allocation3 + $0xcf8] sm:$0xff]
    %v580 = vld [vmem:[#allocation3 + $0xd00] sm:$0xff]
    %v581 = vld [vmem:[#allocation3 + $0xd08] sm:$0xff]
    %v582 = vld [vmem:[#allocation3 + $0xd10] sm:$0xff]
    %v583 = vld [vmem:[#allocation3 + $0xd18] sm:$0xff]
    %v584 = vld [vmem:[#allocation3 + $0xd20] sm:$0xff]
    %v585 = vld [vmem:[#allocation3 + $0xd28] sm:$0xff]
    %v586 = vld [vmem:[#allocation3 + $0xd30] sm:$0xff]
    %v587 = vld [vmem:[#allocation3 + $0xd38] sm:$0xff]
    %v588 = vld [vmem:[#allocation3 + $0xd40] sm:$0xff]
    %v589 = vld [vmem:[#allocation3 + $0xd48] sm:$0xff]
    %v590 = vld [vmem:[#allocation3 + $0xd50] sm:$0xff]
    %v591 = vld [vmem:[#allocation3 + $0xd58] sm:$0xff]
    %v592 = vld [vmem:[#allocation3 + $0xd60] sm:$0xff]
    %v593 = vld [vmem:[#allocation3 + $0xd68] sm:$0xff]
    %v594 = vld [vmem:[#allocation3 + $0xd70] sm:$0xff]
    %v595 = vld [vmem:[#allocation3 + $0xd78] sm:$0xff]
    %v596 = vld [vmem:[#allocation3 + $0xd80] sm:$0xff]
    %v597 = vld [vmem:[#allocation3 + $0xd88] sm:$0xff]
    %v598 = vld [vmem:[#allocation3 + $0xd90] sm:$0xff]
    %v599 = vld [vmem:[#allocation3 + $0xd98] sm:$0xff]
    %v600 = vld [vmem:[#allocation3 + $0xda0] sm:$0xff]
    %v601 = vld [vmem:[#allocation3 + $0xda8] sm:$0xff]
    %v602 = vld [vmem:[#allocation3 + $0xdb0] sm:$0xff]
    %v603 = vld [vmem:[#allocation3 + $0xdb8] sm:$0xff]
    %v604 = vld [vmem:[#allocation3 + $0xdc0] sm:$0xff]
    %v605 = vld [vmem:[#allocation3 + $0xdc8] sm:$0xff]
    %v606 = vld [vmem:[#allocation3 + $0xdd0] sm:$0xff]
    %v607 = vld [vmem:[#allocation3 + $0xdd8] sm:$0xff]
    %v608 = vld [vmem:[#allocation3 + $0xde0] sm:$0xff]
    %v609 = vld [vmem:[#allocation3 + $0xde8] sm:$0xff]
    %v610 = vld [vmem:[#allocation3 + $0xdf0] sm:$0xff]
    %v611 = vld [vmem:[#allocation3 + $0xdf8] sm:$0xff]
    %v612 = vld [vmem:[#allocation3 + $0xe00] sm:$0xff]
    %v613 = vld [vmem:[#allocation3 + $0xe08] sm:$0xff]
    %v614 = vld [vmem:[#allocation3 + $0xe10] sm:$0xff]
    %v615 = vld [vmem:[#allocation3 + $0xe18] sm:$0xff]
    %v616 = vld [vmem:[#allocation3 + $0xe20] sm:$0xff]
    %v617 = vld [vmem:[#allocation3 + $0xe28] sm:$0xff]
    %v618 = vld [vmem:[#allocation3 + $0xe30] sm:$0xff]
    %v619 = vld [vmem:[#allocation3 + $0xe38] sm:$0xff]
    %v620 = vld [vmem:[#allocation3 + $0xe40] sm:$0xff]
    %v621 = vld [vmem:[#allocation3 + $0xe48] sm:$0xff]
    %v622 = vld [vmem:[#allocation3 + $0xe50] sm:$0xff]
    %v623 = vld [vmem:[#allocation3 + $0xe58] sm:$0xff]
    %v624 = vld [vmem:[#allocation3 + $0xe60] sm:$0xff]
    %v625 = vld [vmem:[#allocation3 + $0xe68] sm:$0xff]
    %v626 = vld [vmem:[#allocation3 + $0xe70] sm:$0xff]
    %v627 = vld [vmem:[#allocation3 + $0xe78] sm:$0xff]
    %v628 = vld [vmem:[#allocation3 + $0xe80] sm:$0xff]
    %v629 = vld [vmem:[#allocation3 + $0xe88] sm:$0xff]
    %v630 = vld [vmem:[#allocation3 + $0xe90] sm:$0xff]
    %v631 = vld [vmem:[#allocation3 + $0xe98] sm:$0xff]
    %v632 = vld [vmem:[#allocation3 + $0xea0] sm:$0xff]
    %v633 = vld [vmem:[#allocation3 + $0xea8] sm:$0xff]
    %v634 = vld [vmem:[#allocation3 + $0xeb0] sm:$0xff]
    %v635 = vld [vmem:[#allocation3 + $0xeb8] sm:$0xff]
    %v636 = vld [vmem:[#allocation3 + $0xec0] sm:$0xff]
    %v637 = vld [vmem:[#allocation3 + $0xec8] sm:$0xff]
    %v638 = vld [vmem:[#allocation3 + $0xed0] sm:$0xff]
    %v639 = vld [vmem:[#allocation3 + $0xed8] sm:$0xff]
    %v640 = vld [vmem:[#allocation3 + $0xee0] sm:$0xff]
    %v641 = vld [vmem:[#allocation3 + $0xee8] sm:$0xff]
    %v642 = vld [vmem:[#allocation3 + $0xef0] sm:$0xff]
    %v643 = vld [vmem:[#allocation3 + $0xef8] sm:$0xff]
    %v644 = vld [vmem:[#allocation3 + $0xf00] sm:$0xff]
    %v645 = vld [vmem:[#allocation3 + $0xf08] sm:$0xff]
    %v646 = vld [vmem:[#allocation3 + $0xf10] sm:$0xff]
    %v647 = vld [vmem:[#allocation3 + $0xf18] sm:$0xff]
    %v648 = vld [vmem:[#allocation3 + $0xf20] sm:$0xff]
    %v649 = vld [vmem:[#allocation3 + $0xf28] sm:$0xff]
    %v650 = vld [vmem:[#allocation3 + $0xf30] sm:$0xff]
    %v651 = vld [vmem:[#allocation3 + $0xf38] sm:$0xff]
    %v652 = vld [vmem:[#allocation3 + $0xf40] sm:$0xff]
    %v653 = vld [vmem:[#allocation3 + $0xf48] sm:$0xff]
    %v654 = vld [vmem:[#allocation3 + $0xf50] sm:$0xff]
    %v655 = vld [vmem:[#allocation3 + $0xf58] sm:$0xff]
    %v656 = vld [vmem:[#allocation3 + $0xf60] sm:$0xff]
    %v657 = vld [vmem:[#allocation3 + $0xf68] sm:$0xff]
    %v658 = vld [vmem:[#allocation3 + $0xf70] sm:$0xff]
    %v659 = vld [vmem:[#allocation3 + $0xf78] sm:$0xff]
    %v660 = vld [vmem:[#allocation3 + $0xf80] sm:$0xff]
    %v661 = vld [vmem:[#allocation3 + $0xf88] sm:$0xff]
    %v662 = vld [vmem:[#allocation3 + $0xf90] sm:$0xff]
    %v663 = vld [vmem:[#allocation3 + $0xf98] sm:$0xff]
    %v664 = vld [vmem:[#allocation3 + $0xfa0] sm:$0xff]
    %v665 = vld [vmem:[#allocation3 + $0xfa8] sm:$0xff]
    %v666 = vld [vmem:[#allocation3 + $0xfb0] sm:$0xff]
    %v667 = vld [vmem:[#allocation3 + $0xfb8] sm:$0xff]
    %v668 = vld [vmem:[#allocation3 + $0xfc0] sm:$0xff]
    %v669 = vld [vmem:[#allocation3 + $0xfc8] sm:$0xff]
    %v670 = vld [vmem:[#allocation3 + $0xfd0] sm:$0xff]
    %v671 = vld [vmem:[#allocation3 + $0xfd8] sm:$0xff]
    %v672 = vld [vmem:[#allocation3 + $0xfe0] sm:$0xff]
    %v673 = vld [vmem:[#allocation3 + $0xfe8] sm:$0xff]
    %v674 = vld [vmem:[#allocation3 + $0xff0] sm:$0xff]
    %v675 = vld [vmem:[#allocation3 + $0xff8] sm:$0xff]
    %v676 = vld [vmem:[#allocation3 + $0x1000] sm:$0xff]
    %v677 = vld [vmem:[#allocation3 + $0x1008] sm:$0xff]
    %v678 = vld [vmem:[#allocation3 + $0x1010] sm:$0xff]
    %v679 = vld [vmem:[#allocation3 + $0x1018] sm:$0xff]
    %v680 = vld [vmem:[#allocation3 + $0x1020] sm:$0xff]
    %v681 = vld [vmem:[#allocation3 + $0x1028] sm:$0xff]
    %v682 = vld [vmem:[#allocation3 + $0x1030] sm:$0xff]
    %v683 = vld [vmem:[#allocation3 + $0x1038] sm:$0xff]
    %v684 = vld [vmem:[#allocation3 + $0x1040] sm:$0xff]
    %v685 = vld [vmem:[#allocation3 + $0x1048] sm:$0xff]
    %v686 = vld [vmem:[#allocation3 + $0x1050] sm:$0xff]
    %v687 = vld [vmem:[#allocation3 + $0x1058] sm:$0xff]
    %v688 = vld [vmem:[#allocation3 + $0x1060] sm:$0xff]
    %v689 = vld [vmem:[#allocation3 + $0x1068] sm:$0xff]
    %v690 = vld [vmem:[#allocation3 + $0x1070] sm:$0xff]
    %v691 = vld [vmem:[#allocation3 + $0x1078] sm:$0xff]
    %v692 = vld [vmem:[#allocation3 + $0x1080] sm:$0xff]
    %v693 = vld [vmem:[#allocation3 + $0x1088] sm:$0xff]
    %v694 = vld [vmem:[#allocation3 + $0x1090] sm:$0xff]
    %v695 = vld [vmem:[#allocation3 + $0x1098] sm:$0xff]
    %v696 = vld [vmem:[#allocation3 + $0x10a0] sm:$0xff]
    %v697 = vld [vmem:[#allocation3 + $0x10a8] sm:$0xff]
    %v698 = vld [vmem:[#allocation3 + $0x10b0] sm:$0xff]
    %v699 = vld [vmem:[#allocation3 + $0x10b8] sm:$0xff]
    %v700 = vld [vmem:[#allocation3 + $0x10c0] sm:$0xff]
    %v701 = vld [vmem:[#allocation3 + $0x10c8] sm:$0xff]
    %v702 = vld [vmem:[#allocation3 + $0x10d0] sm:$0xff]
    %v703 = vld [vmem:[#allocation3 + $0x10d8] sm:$0xff]
    %v704 = vld [vmem:[#allocation3 + $0x10e0] sm:$0xff]
    %v705 = vld [vmem:[#allocation3 + $0x10e8] sm:$0xff]
    %v706 = vld [vmem:[#allocation3 + $0x10f0] sm:$0xff]
    %v707 = vld [vmem:[#allocation3 + $0x10f8] sm:$0xff]
    %v708 = vld [vmem:[#allocation3 + $0x1100] sm:$0xff]
    %v709 = vld [vmem:[#allocation3 + $0x1108] sm:$0xff]
    %v710 = vld [vmem:[#allocation3 + $0x1110] sm:$0xff]
    %v711 = vld [vmem:[#allocation3 + $0x1118] sm:$0xff]
    %v712 = vld [vmem:[#allocation3 + $0x1120] sm:$0xff]
    %v713 = vld [vmem:[#allocation3 + $0x1128] sm:$0xff]
    %v714 = vld [vmem:[#allocation3 + $0x1130] sm:$0xff]
    %v715 = vld [vmem:[#allocation3 + $0x1138] sm:$0xff]
    %v716 = vld [vmem:[#allocation3 + $0x1140] sm:$0xff]
    %v717 = vld [vmem:[#allocation3 + $0x1148] sm:$0xff]
    %v718 = vld [vmem:[#allocation3 + $0x1150] sm:$0xff]
    %v719 = vld [vmem:[#allocation3 + $0x1158] sm:$0xff]
    %v720 = vld [vmem:[#allocation3 + $0x1160] sm:$0xff]
    %v721 = vld [vmem:[#allocation3 + $0x1168] sm:$0xff]
    %v722 = vld [vmem:[#allocation3 + $0x1170] sm:$0xff]
    %v723 = vld [vmem:[#allocation3 + $0x1178] sm:$0xff]
    %v724 = vld [vmem:[#allocation3 + $0x1180] sm:$0xff]
    %v725 = vld [vmem:[#allocation3 + $0x1188] sm:$0xff]
    %v726 = vld [vmem:[#allocation3 + $0x1190] sm:$0xff]
    %v727 = vld [vmem:[#allocation3 + $0x1198] sm:$0xff]
    %v728 = vld [vmem:[#allocation3 + $0x11a0] sm:$0xff]
    %v729 = vld [vmem:[#allocation3 + $0x11a8] sm:$0xff]
    %v730 = vld [vmem:[#allocation3 + $0x11b0] sm:$0xff]
    %v731 = vld [vmem:[#allocation3 + $0x11b8] sm:$0xff]
    %v732 = vld [vmem:[#allocation3 + $0x11c0] sm:$0xff]
    %v733 = vld [vmem:[#allocation3 + $0x11c8] sm:$0xff]
    %v734 = vld [vmem:[#allocation3 + $0x11d0] sm:$0xff]
    %v735 = vld [vmem:[#allocation3 + $0x11d8] sm:$0xff]
    %v736 = vld [vmem:[#allocation3 + $0x11e0] sm:$0xff]
    %v737 = vld [vmem:[#allocation3 + $0x11e8] sm:$0xff]
    %v738 = vld [vmem:[#allocation3 + $0x11f0] sm:$0xff]
    %v739 = vld [vmem:[#allocation3 + $0x11f8] sm:$0xff]
    %v740 = vld [vmem:[#allocation3 + $0x1200] sm:$0xff]
    %v741 = vld [vmem:[#allocation3 + $0x1208] sm:$0xff]
    %v742 = vld [vmem:[#allocation3 + $0x1210] sm:$0xff]
    %v743 = vld [vmem:[#allocation3 + $0x1218] sm:$0xff]
    %v744 = vld [vmem:[#allocation3 + $0x1220] sm:$0xff]
    %v745 = vld [vmem:[#allocation3 + $0x1228] sm:$0xff]
    %v746 = vld [vmem:[#allocation3 + $0x1230] sm:$0xff]
    %v747 = vld [vmem:[#allocation3 + $0x1238] sm:$0xff]
    %v748 = vld [vmem:[#allocation3 + $0x1240] sm:$0xff]
    %v749 = vld [vmem:[#allocation3 + $0x1248] sm:$0xff]
    %v750 = vld [vmem:[#allocation3 + $0x1250] sm:$0xff]
    %v751 = vld [vmem:[#allocation3 + $0x1258] sm:$0xff]
    %v752 = vld [vmem:[#allocation3 + $0x1260] sm:$0xff]
    %v753 = vld [vmem:[#allocation3 + $0x1268] sm:$0xff]
    %v754 = vld [vmem:[#allocation3 + $0x1270] sm:$0xff]
    %v755 = vld [vmem:[#allocation3 + $0x1278] sm:$0xff]
    %v756 = vld [vmem:[#allocation3 + $0x1280] sm:$0xff]
    %v757 = vld [vmem:[#allocation3 + $0x1288] sm:$0xff]
    %v758 = vld [vmem:[#allocation3 + $0x1290] sm:$0xff]
    %v759 = vld [vmem:[#allocation3 + $0x1298] sm:$0xff]
    %v760 = vld [vmem:[#allocation3 + $0x12a0] sm:$0xff]
    %v761 = vld [vmem:[#allocation3 + $0x12a8] sm:$0xff]
    %v762 = vld [vmem:[#allocation3 + $0x12b0] sm:$0xff]
    %v763 = vld [vmem:[#allocation3 + $0x12b8] sm:$0xff]
    %v764 = vld [vmem:[#allocation3 + $0x12c0] sm:$0xff]
    %v765 = vld [vmem:[#allocation3 + $0x12c8] sm:$0xff]
    %v766 = vld [vmem:[#allocation3 + $0x12d0] sm:$0xff]
    %v767 = vld [vmem:[#allocation3 + $0x12d8] sm:$0xff]
    %v768 = vld [vmem:[#allocation3 + $0x12e0] sm:$0xff]
    %v769 = vld [vmem:[#allocation3 + $0x12e8] sm:$0xff]
    %v770 = vld [vmem:[#allocation3 + $0x12f0] sm:$0xff]
    %v771 = vld [vmem:[#allocation3 + $0x12f8] sm:$0xff]
    %v772 = vld [vmem:[#allocation3 + $0x1300] sm:$0xff]
    %v773 = vld [vmem:[#allocation3 + $0x1308] sm:$0xff]
    %v774 = vld [vmem:[#allocation3 + $0x1310] sm:$0xff]
    %v775 = vld [vmem:[#allocation3 + $0x1318] sm:$0xff]
    %v776 = vld [vmem:[#allocation3 + $0x1320] sm:$0xff]
    %v777 = vld [vmem:[#allocation3 + $0x1328] sm:$0xff]
    %v778 = vld [vmem:[#allocation3 + $0x1330] sm:$0xff]
    %v779 = vld [vmem:[#allocation3 + $0x1338] sm:$0xff]
    %v780 = vld [vmem:[#allocation3 + $0x1340] sm:$0xff]
    %v781 = vld [vmem:[#allocation3 + $0x1348] sm:$0xff]
    %v782 = vld [vmem:[#allocation3 + $0x1350] sm:$0xff]
    %v783 = vld [vmem:[#allocation3 + $0x1358] sm:$0xff]
    %v784 = vld [vmem:[#allocation3 + $0x1360] sm:$0xff]
    %v785 = vld [vmem:[#allocation3 + $0x1368] sm:$0xff]
    %v786 = vld [vmem:[#allocation3 + $0x1370] sm:$0xff]
    %v787 = vld [vmem:[#allocation3 + $0x1378] sm:$0xff]
    %v788 = vld [vmem:[#allocation3 + $0x1380] sm:$0xff]
    %v789 = vld [vmem:[#allocation3 + $0x1388] sm:$0xff]
    %v790 = vld [vmem:[#allocation3 + $0x1390] sm:$0xff]
    %v791 = vld [vmem:[#allocation3 + $0x1398] sm:$0xff]
    %v792 = vld [vmem:[#allocation3 + $0x13a0] sm:$0xff]
    %v793 = vld [vmem:[#allocation3 + $0x13a8] sm:$0xff]
    %v794 = vld [vmem:[#allocation3 + $0x13b0] sm:$0xff]
    %v795 = vld [vmem:[#allocation3 + $0x13b8] sm:$0xff]
    %v796 = vld [vmem:[#allocation3 + $0x13c0] sm:$0xff]
    %v797 = vld [vmem:[#allocation3 + $0x13c8] sm:$0xff]
    %v798 = vld [vmem:[#allocation3 + $0x13d0] sm:$0xff]
    %v799 = vld [vmem:[#allocation3 + $0x13d8] sm:$0xff]
    %v800 = vld [vmem:[#allocation3 + $0x13e0] sm:$0xff]
    %v801 = vld [vmem:[#allocation3 + $0x13e8] sm:$0xff]
    %v802 = vld [vmem:[#allocation3 + $0x13f0] sm:$0xff]
    %v803 = vld [vmem:[#allocation3 + $0x13f8] sm:$0xff]
    %v804 = vld [vmem:[#allocation3 + $0x1400] sm:$0xff]
    %v805 = vld [vmem:[#allocation3 + $0x1408] sm:$0xff]
    %v806 = vld [vmem:[#allocation3 + $0x1410] sm:$0xff]
    %v807 = vld [vmem:[#allocation3 + $0x1418] sm:$0xff]
    %v808 = vld [vmem:[#allocation3 + $0x1420] sm:$0xff]
    %v809 = vld [vmem:[#allocation3 + $0x1428] sm:$0xff]
    %v810 = vld [vmem:[#allocation3 + $0x1430] sm:$0xff]
    %v811 = vld [vmem:[#allocation3 + $0x1438] sm:$0xff]
    %v812 = vld [vmem:[#allocation3 + $0x1440] sm:$0xff]
    %v813 = vld [vmem:[#allocation3 + $0x1448] sm:$0xff]
    %v814 = vld [vmem:[#allocation3 + $0x1450] sm:$0xff]
    %v815 = vld [vmem:[#allocation3 + $0x1458] sm:$0xff]
    %v816 = vld [vmem:[#allocation3 + $0x1460] sm:$0xff]
    %v817 = vld [vmem:[#allocation3 + $0x1468] sm:$0xff]
    %v818 = vld [vmem:[#allocation3 + $0x1470] sm:$0xff]
    %v819 = vld [vmem:[#allocation3 + $0x1478] sm:$0xff]
    %v820 = vld [vmem:[#allocation3 + $0x1480] sm:$0xff]
    %v821 = vld [vmem:[#allocation3 + $0x1488] sm:$0xff]
    %v822 = vld [vmem:[#allocation3 + $0x1490] sm:$0xff]
    %v823 = vld [vmem:[#allocation3 + $0x1498] sm:$0xff]
    %v824 = vld [vmem:[#allocation3 + $0x14a0] sm:$0xff]
    %v825 = vld [vmem:[#allocation3 + $0x14a8] sm:$0xff]
    %v826 = vld [vmem:[#allocation3 + $0x14b0] sm:$0xff]
    %v827 = vld [vmem:[#allocation3 + $0x14b8] sm:$0xff]
    %v828 = vld [vmem:[#allocation3 + $0x14c0] sm:$0xff]
    %v829 = vld [vmem:[#allocation3 + $0x14c8] sm:$0xff]
    %v830 = vld [vmem:[#allocation3 + $0x14d0] sm:$0xff]
    %v831 = vld [vmem:[#allocation3 + $0x14d8] sm:$0xff]
    %v832 = vld [vmem:[#allocation3 + $0x14e0] sm:$0xff]
    %v833 = vld [vmem:[#allocation3 + $0x14e8] sm:$0xff]
    %v834 = vld [vmem:[#allocation3 + $0x14f0] sm:$0xff]
    %v835 = vld [vmem:[#allocation3 + $0x14f8] sm:$0xff]
    %v836 = vld [vmem:[#allocation3 + $0x1500] sm:$0xff]
    %v837 = vld [vmem:[#allocation3 + $0x1508] sm:$0xff]
    %v838 = vld [vmem:[#allocation3 + $0x1510] sm:$0xff]
    %v839 = vld [vmem:[#allocation3 + $0x1518] sm:$0xff]
    %v840 = vld [vmem:[#allocation3 + $0x1520] sm:$0xff]
    %v841 = vld [vmem:[#allocation3 + $0x1528] sm:$0xff]
    %v842 = vld [vmem:[#allocation3 + $0x1530] sm:$0xff]
    %v843 = vld [vmem:[#allocation3 + $0x1538] sm:$0xff]
    %v844 = vld [vmem:[#allocation3 + $0x1540] sm:$0xff]
    %v845 = vld [vmem:[#allocation3 + $0x1548] sm:$0xff]
    %v846 = vld [vmem:[#allocation3 + $0x1550] sm:$0xff]
    %v847 = vld [vmem:[#allocation3 + $0x1558] sm:$0xff]
    %v848 = vld [vmem:[#allocation3 + $0x1560] sm:$0xff]
    %v849 = vld [vmem:[#allocation3 + $0x1568] sm:$0xff]
    %v850 = vld [vmem:[#allocation3 + $0x1570] sm:$0xff]
    %v851 = vld [vmem:[#allocation3 + $0x1578] sm:$0xff]
    %v852 = vld [vmem:[#allocation3 + $0x1580] sm:$0xff]
    %v853 = vld [vmem:[#allocation3 + $0x1588] sm:$0xff]
    %v854 = vld [vmem:[#allocation3 + $0x1590] sm:$0xff]
    %v855 = vld [vmem:[#allocation3 + $0x1598] sm:$0xff]
    %v856 = vld [vmem:[#allocation3 + $0x15a0] sm:$0xff]
    %v857 = vld [vmem:[#allocation3 + $0x15a8] sm:$0xff]
    %v858 = vld [vmem:[#allocation3 + $0x15b0] sm:$0xff]
    %v859 = vld [vmem:[#allocation3 + $0x15b8] sm:$0xff]
    %v860 = vld [vmem:[#allocation3 + $0x15c0] sm:$0xff]
    %v861 = vld [vmem:[#allocation3 + $0x15c8] sm:$0xff]
    %v862 = vld [vmem:[#allocation3 + $0x15d0] sm:$0xff]
    %v863 = vld [vmem:[#allocation3 + $0x15d8] sm:$0xff]
    %v864 = vld [vmem:[#allocation3 + $0x15e0] sm:$0xff]
    %v865 = vld [vmem:[#allocation3 + $0x15e8] sm:$0xff]
    %v866 = vld [vmem:[#allocation3 + $0x15f0] sm:$0xff]
    %v867 = vld [vmem:[#allocation3 + $0x15f8] sm:$0xff]
    %v868 = vld [vmem:[#allocation3 + $0x1600] sm:$0xff]
    %v869 = vld [vmem:[#allocation3 + $0x1608] sm:$0xff]
    %v870 = vld [vmem:[#allocation3 + $0x1610] sm:$0xff]
    %v871 = vld [vmem:[#allocation3 + $0x1618] sm:$0xff]
    %v872 = vld [vmem:[#allocation3 + $0x1620] sm:$0xff]
    %v873 = vld [vmem:[#allocation3 + $0x1628] sm:$0xff]
    %v874 = vld [vmem:[#allocation3 + $0x1630] sm:$0xff]
    %v875 = vld [vmem:[#allocation3 + $0x1638] sm:$0xff]
    %v876 = vld [vmem:[#allocation3 + $0x1640] sm:$0xff]
    %v877 = vld [vmem:[#allocation3 + $0x1648] sm:$0xff]
    %v878 = vld [vmem:[#allocation3 + $0x1650] sm:$0xff]
    %v879 = vld [vmem:[#allocation3 + $0x1658] sm:$0xff]
    %v880 = vld [vmem:[#allocation3 + $0x1660] sm:$0xff]
    %v881 = vld [vmem:[#allocation3 + $0x1668] sm:$0xff]
    %v882 = vld [vmem:[#allocation3 + $0x1670] sm:$0xff]
    %v883 = vld [vmem:[#allocation3 + $0x1678] sm:$0xff]
    %v884 = vld [vmem:[#allocation3 + $0x1680] sm:$0xff]
    %v885 = vld [vmem:[#allocation3 + $0x1688] sm:$0xff]
    %v886 = vld [vmem:[#allocation3 + $0x1690] sm:$0xff]
    %v887 = vld [vmem:[#allocation3 + $0x1698] sm:$0xff]
    %v888 = vld [vmem:[#allocation3 + $0x16a0] sm:$0xff]
    %v889 = vld [vmem:[#allocation3 + $0x16a8] sm:$0xff]
    %v890 = vld [vmem:[#allocation3 + $0x16b0] sm:$0xff]
    %v891 = vld [vmem:[#allocation3 + $0x16b8] sm:$0xff]
    %v892 = vld [vmem:[#allocation3 + $0x16c0] sm:$0xff]
    %v893 = vld [vmem:[#allocation3 + $0x16c8] sm:$0xff]
    %v894 = vld [vmem:[#allocation3 + $0x16d0] sm:$0xff]
    %v895 = vld [vmem:[#allocation3 + $0x16d8] sm:$0xff]
    %v896 = vld [vmem:[#allocation3 + $0x16e0] sm:$0xff]
    %v897 = vld [vmem:[#allocation3 + $0x16e8] sm:$0xff]
    %v898 = vld [vmem:[#allocation3 + $0x16f0] sm:$0xff]
    %v899 = vld [vmem:[#allocation3 + $0x16f8] sm:$0xff]
    %v900 = vld [vmem:[#allocation3 + $0x1700] sm:$0xff]
    %v901 = vld [vmem:[#allocation3 + $0x1708] sm:$0xff]
    %v902 = vld [vmem:[#allocation3 + $0x1710] sm:$0xff]
    %v903 = vld [vmem:[#allocation3 + $0x1718] sm:$0xff]
    %v904 = vld [vmem:[#allocation3 + $0x1720] sm:$0xff]
    %v905 = vld [vmem:[#allocation3 + $0x1728] sm:$0xff]
    %v906 = vld [vmem:[#allocation3 + $0x1730] sm:$0xff]
    %v907 = vld [vmem:[#allocation3 + $0x1738] sm:$0xff]
    %v908 = vld [vmem:[#allocation3 + $0x1740] sm:$0xff]
    %v909 = vld [vmem:[#allocation3 + $0x1748] sm:$0xff]
    %v910 = vld [vmem:[#allocation3 + $0x1750] sm:$0xff]
    %v911 = vld [vmem:[#allocation3 + $0x1758] sm:$0xff]
    %v912 = vld [vmem:[#allocation3 + $0x1760] sm:$0xff]
    %v913 = vld [vmem:[#allocation3 + $0x1768] sm:$0xff]
    %v914 = vld [vmem:[#allocation3 + $0x1770] sm:$0xff]
    %v915 = vld [vmem:[#allocation3 + $0x1778] sm:$0xff]
    %v916 = vld [vmem:[#allocation3 + $0x1780] sm:$0xff]
    %v917 = vld [vmem:[#allocation3 + $0x1788] sm:$0xff]
    %v918 = vld [vmem:[#allocation3 + $0x1790] sm:$0xff]
    %v919 = vld [vmem:[#allocation3 + $0x1798] sm:$0xff]
    %v920 = vld [vmem:[#allocation3 + $0x17a0] sm:$0xff]
    %v921 = vld [vmem:[#allocation3 + $0x17a8] sm:$0xff]
    %v922 = vld [vmem:[#allocation3 + $0x17b0] sm:$0xff]
    %v923 = vld [vmem:[#allocation3 + $0x17b8] sm:$0xff]
    %v924 = vld [vmem:[#allocation3 + $0x17c0] sm:$0xff]
    %v925 = vld [vmem:[#allocation3 + $0x17c8] sm:$0xff]
    %v926 = vld [vmem:[#allocation3 + $0x17d0] sm:$0xff]
    %v927 = vld [vmem:[#allocation3 + $0x17d8] sm:$0xff]
    %v928 = vld [vmem:[#allocation3 + $0x17e0] sm:$0xff]
    %v929 = vld [vmem:[#allocation3 + $0x17e8] sm:$0xff]
    %v930 = vld [vmem:[#allocation3 + $0x17f0] sm:$0xff]
    %v931 = vld [vmem:[#allocation3 + $0x17f8] sm:$0xff]
    %v932 = vld [vmem:[#allocation3 + $0x1800] sm:$0xff]
    %v933 = vld [vmem:[#allocation3 + $0x1808] sm:$0xff]
    %v934 = vld [vmem:[#allocation3 + $0x1810] sm:$0xff]
    %v935 = vld [vmem:[#allocation3 + $0x1818] sm:$0xff]
    %v936 = vld [vmem:[#allocation3 + $0x1820] sm:$0xff]
    %v937 = vld [vmem:[#allocation3 + $0x1828] sm:$0xff]
    %v938 = vld [vmem:[#allocation3 + $0x1830] sm:$0xff]
    %v939 = vld [vmem:[#allocation3 + $0x1838] sm:$0xff]
    %v940 = vld [vmem:[#allocation3 + $0x1840] sm:$0xff]
    %v941 = vld [vmem:[#allocation3 + $0x1848] sm:$0xff]
    %v942 = vld [vmem:[#allocation3 + $0x1850] sm:$0xff]
    %v943 = vld [vmem:[#allocation3 + $0x1858] sm:$0xff]
    %v944 = vld [vmem:[#allocation3 + $0x1860] sm:$0xff]
    %v945 = vld [vmem:[#allocation3 + $0x1868] sm:$0xff]
    %v946 = vld [vmem:[#allocation3 + $0x1870] sm:$0xff]
    %v947 = vld [vmem:[#allocation3 + $0x1878] sm:$0xff]
    %v948 = vld [vmem:[#allocation3 + $0x1880] sm:$0xff]
    %v949 = vld [vmem:[#allocation3 + $0x1888] sm:$0xff]
    %v950 = vld [vmem:[#allocation3 + $0x1890] sm:$0xff]
    %v951 = vld [vmem:[#allocation3 + $0x1898] sm:$0xff]
    %v952 = vld [vmem:[#allocation3 + $0x18a0] sm:$0xff]
    %v953 = vld [vmem:[#allocation3 + $0x18a8] sm:$0xff]
    %v954 = vld [vmem:[#allocation3 + $0x18b0] sm:$0xff]
    %v955 = vld [vmem:[#allocation3 + $0x18b8] sm:$0xff]
    %v956 = vld [vmem:[#allocation3 + $0x18c0] sm:$0xff]
    %v957 = vld [vmem:[#allocation3 + $0x18c8] sm:$0xff]
    %v958 = vld [vmem:[#allocation3 + $0x18d0] sm:$0xff]
    %v959 = vld [vmem:[#allocation3 + $0x18d8] sm:$0xff]
    %v960 = vld [vmem:[#allocation3 + $0x18e0] sm:$0xff]
    %v961 = vld [vmem:[#allocation3 + $0x18e8] sm:$0xff]
    %v962 = vld [vmem:[#allocation3 + $0x18f0] sm:$0xff]
    %v963 = vld [vmem:[#allocation3 + $0x18f8] sm:$0xff]
    %v964 = vld [vmem:[#allocation3 + $0x1900] sm:$0xff]
    %v965 = vld [vmem:[#allocation3 + $0x1908] sm:$0xff]
    %v966 = vld [vmem:[#allocation3 + $0x1910] sm:$0xff]
    %v967 = vld [vmem:[#allocation3 + $0x1918] sm:$0xff]
    %v968 = vld [vmem:[#allocation3 + $0x1920] sm:$0xff]
    %v969 = vld [vmem:[#allocation3 + $0x1928] sm:$0xff]
    %v970 = vld [vmem:[#allocation3 + $0x1930] sm:$0xff]
    %v971 = vld [vmem:[#allocation3 + $0x1938] sm:$0xff]
    %v972 = vld [vmem:[#allocation3 + $0x1940] sm:$0xff]
    %v973 = vld [vmem:[#allocation3 + $0x1948] sm:$0xff]
    %v974 = vld [vmem:[#allocation3 + $0x1950] sm:$0xff]
    %v975 = vld [vmem:[#allocation3 + $0x1958] sm:$0xff]
    %v976 = vld [vmem:[#allocation3 + $0x1960] sm:$0xff]
    %v977 = vld [vmem:[#allocation3 + $0x1968] sm:$0xff]
    %v978 = vld [vmem:[#allocation3 + $0x1970] sm:$0xff]
    %v979 = vld [vmem:[#allocation3 + $0x1978] sm:$0xff]
    %v980 = vld [vmem:[#allocation3 + $0x1980] sm:$0xff]
    %v981 = vld [vmem:[#allocation3 + $0x1988] sm:$0xff]
    %v982 = vld [vmem:[#allocation3 + $0x1990] sm:$0xff]
    %v983 = vld [vmem:[#allocation3 + $0x1998] sm:$0xff]
    %v984 = vld [vmem:[#allocation3 + $0x19a0] sm:$0xff]
    %v985 = vld [vmem:[#allocation3 + $0x19a8] sm:$0xff]
    %v986 = vld [vmem:[#allocation3 + $0x19b0] sm:$0xff]
    %v987 = vld [vmem:[#allocation3 + $0x19b8] sm:$0xff]
    %v988 = vld [vmem:[#allocation3 + $0x19c0] sm:$0xff]
    %v989 = vld [vmem:[#allocation3 + $0x19c8] sm:$0xff]
    %v990 = vld [vmem:[#allocation3 + $0x19d0] sm:$0xff]
    %v991 = vld [vmem:[#allocation3 + $0x19d8] sm:$0xff]
    %v992 = vld [vmem:[#allocation3 + $0x19e0] sm:$0xff]
    %v993 = vld [vmem:[#allocation3 + $0x19e8] sm:$0xff]
    %v994 = vld [vmem:[#allocation3 + $0x19f0] sm:$0xff]
    %v995 = vld [vmem:[#allocation3 + $0x19f8] sm:$0xff]
    %v996 = vld [vmem:[#allocation3 + $0x1a00] sm:$0xff]
    %v997 = vld [vmem:[#allocation3 + $0x1a08] sm:$0xff]
    %v998 = vld [vmem:[#allocation3 + $0x1a10] sm:$0xff]
    %v999 = vld [vmem:[#allocation3 + $0x1a18] sm:$0xff]
    %v1000 = vld [vmem:[#allocation3 + $0x1a20] sm:$0xff]
    %v1001 = vld [vmem:[#allocation3 + $0x1a28] sm:$0xff]
    %v1002 = vld [vmem:[#allocation3 + $0x1a30] sm:$0xff]
    %v1003 = vld [vmem:[#allocation3 + $0x1a38] sm:$0xff]
    %v1004 = vld [vmem:[#allocation3 + $0x1a40] sm:$0xff]
    %v1005 = vld [vmem:[#allocation3 + $0x1a48] sm:$0xff]
    %v1006 = vld [vmem:[#allocation3 + $0x1a50] sm:$0xff]
    %v1007 = vld [vmem:[#allocation3 + $0x1a58] sm:$0xff]
    %v1008 = vld [vmem:[#allocation3 + $0x1a60] sm:$0xff]
    %v1009 = vld [vmem:[#allocation3 + $0x1a68] sm:$0xff]
    %v1010 = vld [vmem:[#allocation3 + $0x1a70] sm:$0xff]
    %v1011 = vld [vmem:[#allocation3 + $0x1a78] sm:$0xff]
    %v1012 = vld [vmem:[#allocation3 + $0x1a80] sm:$0xff]
    %v1013 = vld [vmem:[#allocation3 + $0x1a88] sm:$0xff]
    %v1014 = vld [vmem:[#allocation3 + $0x1a90] sm:$0xff]
    %v1015 = vld [vmem:[#allocation3 + $0x1a98] sm:$0xff]
    %v1016 = vld [vmem:[#allocation3 + $0x1aa0] sm:$0xff]
    %v1017 = vld [vmem:[#allocation3 + $0x1aa8] sm:$0xff]
    %v1018 = vld [vmem:[#allocation3 + $0x1ab0] sm:$0xff]
    %v1019 = vld [vmem:[#allocation3 + $0x1ab8] sm:$0xff]
    %v1020 = vld [vmem:[#allocation3 + $0x1ac0] sm:$0xff]
    %v1021 = vld [vmem:[#allocation3 + $0x1ac8] sm:$0xff]
    %v1022 = vld [vmem:[#allocation3 + $0x1ad0] sm:$0xff]
    %v1023 = vld [vmem:[#allocation3 + $0x1ad8] sm:$0xff]
    %v1024 = vld [vmem:[#allocation3 + $0x1ae0] sm:$0xff]
    %v1025 = vld [vmem:[#allocation3 + $0x1ae8] sm:$0xff]
    %v1026 = vld [vmem:[#allocation3 + $0x1af0] sm:$0xff]
    %v1027 = vld [vmem:[#allocation3 + $0x1af8] sm:$0xff]
    %v1028 = vld [vmem:[#allocation3 + $0x1b00] sm:$0xff]
    %v1029 = vld [vmem:[#allocation3 + $0x1b08] sm:$0xff]
    %v1030 = vld [vmem:[#allocation3 + $0x1b10] sm:$0xff]
    %v1031 = vld [vmem:[#allocation3 + $0x1b18] sm:$0xff]
    %v1032 = vld [vmem:[#allocation3 + $0x1b20] sm:$0xff]
    %v1033 = vld [vmem:[#allocation3 + $0x1b28] sm:$0xff]
    %v1034 = vld [vmem:[#allocation3 + $0x1b30] sm:$0xff]
    %v1035 = vld [vmem:[#allocation3 + $0x1b38] sm:$0xff]
    %v1036 = vld [vmem:[#allocation3 + $0x1b40] sm:$0xff]
    %v1037 = vld [vmem:[#allocation3 + $0x1b48] sm:$0xff]
    %v1038 = vld [vmem:[#allocation3 + $0x1b50] sm:$0xff]
    %v1039 = vld [vmem:[#allocation3 + $0x1b58] sm:$0xff]
    %v1040 = vld [vmem:[#allocation3 + $0x1b60] sm:$0xff]
    %v1041 = vld [vmem:[#allocation3 + $0x1b68] sm:$0xff]
    %v1042 = vld [vmem:[#allocation3 + $0x1b70] sm:$0xff]
    %v1043 = vld [vmem:[#allocation3 + $0x1b78] sm:$0xff]
    %v1044 = vld [vmem:[#allocation3 + $0x1b80] sm:$0xff]
    %v1045 = vld [vmem:[#allocation3 + $0x1b88] sm:$0xff]
    %v1046 = vld [vmem:[#allocation3 + $0x1b90] sm:$0xff]
    %v1047 = vld [vmem:[#allocation3 + $0x1b98] sm:$0xff]
    %v1048 = vld [vmem:[#allocation3 + $0x1ba0] sm:$0xff]
    %v1049 = vld [vmem:[#allocation3 + $0x1ba8] sm:$0xff]
    %v1050 = vld [vmem:[#allocation3 + $0x1bb0] sm:$0xff]
    %v1051 = vld [vmem:[#allocation3 + $0x1bb8] sm:$0xff]
    %v1052 = vld [vmem:[#allocation3 + $0x1bc0] sm:$0xff]
    %v1053 = vld [vmem:[#allocation3 + $0x1bc8] sm:$0xff]
    %v1054 = vld [vmem:[#allocation3 + $0x1bd0] sm:$0xff]
    %v1055 = vld [vmem:[#allocation3 + $0x1bd8] sm:$0xff]
    %v1056 = vld [vmem:[#allocation3 + $0x1be0] sm:$0xff]
    %v1057 = vld [vmem:[#allocation3 + $0x1be8] sm:$0xff]
    %v1058 = vld [vmem:[#allocation3 + $0x1bf0] sm:$0xff]
    %v1059 = vld [vmem:[#allocation3 + $0x1bf8] sm:$0xff]
    %v1060 = vld [vmem:[#allocation3 + $0x1c00] sm:$0xff]
    %v1061 = vld [vmem:[#allocation3 + $0x1c08] sm:$0xff]
    %v1062 = vld [vmem:[#allocation3 + $0x1c10] sm:$0xff]
    %v1063 = vld [vmem:[#allocation3 + $0x1c18] sm:$0xff]
    %v1064 = vld [vmem:[#allocation3 + $0x1c20] sm:$0xff]
    %v1065 = vld [vmem:[#allocation3 + $0x1c28] sm:$0xff]
    %v1066 = vld [vmem:[#allocation3 + $0x1c30] sm:$0xff]
    %v1067 = vld [vmem:[#allocation3 + $0x1c38] sm:$0xff]
    %v1068 = vld [vmem:[#allocation3 + $0x1c40] sm:$0xff]
    %v1069 = vld [vmem:[#allocation3 + $0x1c48] sm:$0xff]
    %v1070 = vld [vmem:[#allocation3 + $0x1c50] sm:$0xff]
    %v1071 = vld [vmem:[#allocation3 + $0x1c58] sm:$0xff]
    %v1072 = vld [vmem:[#allocation3 + $0x1c60] sm:$0xff]
    %v1073 = vld [vmem:[#allocation3 + $0x1c68] sm:$0xff]
    %v1074 = vld [vmem:[#allocation3 + $0x1c70] sm:$0xff]
    %v1075 = vld [vmem:[#allocation3 + $0x1c78] sm:$0xff]
    %v1076 = vld [vmem:[#allocation3 + $0x1c80] sm:$0xff]
    %v1077 = vld [vmem:[#allocation3 + $0x1c88] sm:$0xff]
    %v1078 = vld [vmem:[#allocation3 + $0x1c90] sm:$0xff]
    %v1079 = vld [vmem:[#allocation3 + $0x1c98] sm:$0xff]
    %v1080 = vld [vmem:[#allocation3 + $0x1ca0] sm:$0xff]
    %v1081 = vld [vmem:[#allocation3 + $0x1ca8] sm:$0xff]
    %v1082 = vld [vmem:[#allocation3 + $0x1cb0] sm:$0xff]
    %v1083 = vld [vmem:[#allocation3 + $0x1cb8] sm:$0xff]
    %v1084 = vld [vmem:[#allocation3 + $0x1cc0] sm:$0xff]
    %v1085 = vld [vmem:[#allocation3 + $0x1cc8] sm:$0xff]
    %v1086 = vld [vmem:[#allocation3 + $0x1cd0] sm:$0xff]
    %v1087 = vld [vmem:[#allocation3 + $0x1cd8] sm:$0xff]
    %v1088 = vld [vmem:[#allocation3 + $0x1ce0] sm:$0xff]
    %v1089 = vld [vmem:[#allocation3 + $0x1ce8] sm:$0xff]
    %v1090 = vld [vmem:[#allocation3 + $0x1cf0] sm:$0xff]
    %v1091 = vld [vmem:[#allocation3 + $0x1cf8] sm:$0xff]
    %v1092 = vld [vmem:[#allocation3 + $0x1d00] sm:$0xff]
    %v1093 = vld [vmem:[#allocation3 + $0x1d08] sm:$0xff]
    %v1094 = vld [vmem:[#allocation3 + $0x1d10] sm:$0xff]
    %v1095 = vld [vmem:[#allocation3 + $0x1d18] sm:$0xff]
    %v1096 = vld [vmem:[#allocation3 + $0x1d20] sm:$0xff]
    %v1097 = vld [vmem:[#allocation3 + $0x1d28] sm:$0xff]
    %v1098 = vld [vmem:[#allocation3 + $0x1d30] sm:$0xff]
    %v1099 = vld [vmem:[#allocation3 + $0x1d38] sm:$0xff]
    %v1100 = vld [vmem:[#allocation3 + $0x1d40] sm:$0xff]
    %v1101 = vld [vmem:[#allocation3 + $0x1d48] sm:$0xff]
    %v1102 = vld [vmem:[#allocation3 + $0x1d50] sm:$0xff]
    %v1103 = vld [vmem:[#allocation3 + $0x1d58] sm:$0xff]
    %v1104 = vld [vmem:[#allocation3 + $0x1d60] sm:$0xff]
    %v1105 = vld [vmem:[#allocation3 + $0x1d68] sm:$0xff]
    %v1106 = vld [vmem:[#allocation3 + $0x1d70] sm:$0xff]
    %v1107 = vld [vmem:[#allocation3 + $0x1d78] sm:$0xff]
    %v1108 = vld [vmem:[#allocation3 + $0x1d80] sm:$0xff]
    %v1109 = vld [vmem:[#allocation3 + $0x1d88] sm:$0xff]
    %v1110 = vld [vmem:[#allocation3 + $0x1d90] sm:$0xff]
    %v1111 = vld [vmem:[#allocation3 + $0x1d98] sm:$0xff]
    %v1112 = vld [vmem:[#allocation3 + $0x1da0] sm:$0xff]
    %v1113 = vld [vmem:[#allocation3 + $0x1da8] sm:$0xff]
    %v1114 = vld [vmem:[#allocation3 + $0x1db0] sm:$0xff]
    %v1115 = vld [vmem:[#allocation3 + $0x1db8] sm:$0xff]
    %v1116 = vld [vmem:[#allocation3 + $0x1dc0] sm:$0xff]
    %v1117 = vld [vmem:[#allocation3 + $0x1dc8] sm:$0xff]
    %v1118 = vld [vmem:[#allocation3 + $0x1dd0] sm:$0xff]
    %v1119 = vld [vmem:[#allocation3 + $0x1dd8] sm:$0xff]
    %v1120 = vld [vmem:[#allocation3 + $0x1de0] sm:$0xff]
    %v1121 = vld [vmem:[#allocation3 + $0x1de8] sm:$0xff]
    %v1122 = vld [vmem:[#allocation3 + $0x1df0] sm:$0xff]
    %v1123 = vld [vmem:[#allocation3 + $0x1df8] sm:$0xff]
    %v1124 = vld [vmem:[#allocation3 + $0x1e00] sm:$0xff]
    %v1125 = vld [vmem:[#allocation3 + $0x1e08] sm:$0xff]
    %v1126 = vld [vmem:[#allocation3 + $0x1e10] sm:$0xff]
    %v1127 = vld [vmem:[#allocation3 + $0x1e18] sm:$0xff]
    %v1128 = vld [vmem:[#allocation3 + $0x1e20] sm:$0xff]
    %v1129 = vld [vmem:[#allocation3 + $0x1e28] sm:$0xff]
    %v1130 = vld [vmem:[#allocation3 + $0x1e30] sm:$0xff]
    %v1131 = vld [vmem:[#allocation3 + $0x1e38] sm:$0xff]
    %v1132 = vld [vmem:[#allocation3 + $0x1e40] sm:$0xff]
    %v1133 = vld [vmem:[#allocation3 + $0x1e48] sm:$0xff]
    %v1134 = vld [vmem:[#allocation3 + $0x1e50] sm:$0xff]
    %v1135 = vld [vmem:[#allocation3 + $0x1e58] sm:$0xff]
    %v1136 = vld [vmem:[#allocation3 + $0x1e60] sm:$0xff]
    %v1137 = vld [vmem:[#allocation3 + $0x1e68] sm:$0xff]
    %v1138 = vld [vmem:[#allocation3 + $0x1e70] sm:$0xff]
    %v1139 = vld [vmem:[#allocation3 + $0x1e78] sm:$0xff]
    %v1140 = vld [vmem:[#allocation3 + $0x1e80] sm:$0xff]
    %v1141 = vld [vmem:[#allocation3 + $0x1e88] sm:$0xff]
    %v1142 = vld [vmem:[#allocation3 + $0x1e90] sm:$0xff]
    %v1143 = vld [vmem:[#allocation3 + $0x1e98] sm:$0xff]
    %v1144 = vld [vmem:[#allocation3 + $0x1ea0] sm:$0xff]
    %v1145 = vld [vmem:[#allocation3 + $0x1ea8] sm:$0xff]
    %v1146 = vld [vmem:[#allocation3 + $0x1eb0] sm:$0xff]
    %v1147 = vld [vmem:[#allocation3 + $0x1eb8] sm:$0xff]
    %v1148 = vld [vmem:[#allocation3 + $0x1ec0] sm:$0xff]
    %v1149 = vld [vmem:[#allocation3 + $0x1ec8] sm:$0xff]
    %v1150 = vld [vmem:[#allocation3 + $0x1ed0] sm:$0xff]
    %v1151 = vld [vmem:[#allocation3 + $0x1ed8] sm:$0xff]
    %v1152 = vld [vmem:[#allocation3 + $0x1ee0] sm:$0xff]
    %v1153 = vld [vmem:[#allocation3 + $0x1ee8] sm:$0xff]
    %v1154 = vld [vmem:[#allocation3 + $0x1ef0] sm:$0xff]
    %v1155 = vld [vmem:[#allocation3 + $0x1ef8] sm:$0xff]
    %v1156 = vld [vmem:[#allocation3 + $0x1f00] sm:$0xff]
    %v1157 = vld [vmem:[#allocation3 + $0x1f08] sm:$0xff]
    %v1158 = vld [vmem:[#allocation3 + $0x1f10] sm:$0xff]
    %v1159 = vld [vmem:[#allocation3 + $0x1f18] sm:$0xff]
    %v1160 = vld [vmem:[#allocation3 + $0x1f20] sm:$0xff]
    %v1161 = vld [vmem:[#allocation3 + $0x1f28] sm:$0xff]
    %v1162 = vld [vmem:[#allocation3 + $0x1f30] sm:$0xff]
    %v1163 = vld [vmem:[#allocation3 + $0x1f38] sm:$0xff]
    %v1164 = vld [vmem:[#allocation3 + $0x1f40] sm:$0xff]
    %v1165 = vld [vmem:[#allocation3 + $0x1f48] sm:$0xff]
    %v1166 = vld [vmem:[#allocation3 + $0x1f50] sm:$0xff]
    %v1167 = vld [vmem:[#allocation3 + $0x1f58] sm:$0xff]
    %v1168 = vld [vmem:[#allocation3 + $0x1f60] sm:$0xff]
    %v1169 = vld [vmem:[#allocation3 + $0x1f68] sm:$0xff]
    %v1170 = vld [vmem:[#allocation3 + $0x1f70] sm:$0xff]
    %v1171 = vld [vmem:[#allocation3 + $0x1f78] sm:$0xff]
    %v1172 = vld [vmem:[#allocation3 + $0x1f80] sm:$0xff]
    %v1173 = vld [vmem:[#allocation3 + $0x1f88] sm:$0xff]
    %v1174 = vld [vmem:[#allocation3 + $0x1f90] sm:$0xff]
    %v1175 = vld [vmem:[#allocation3 + $0x1f98] sm:$0xff]
    %v1176 = vld [vmem:[#allocation3 + $0x1fa0] sm:$0xff]
    %v1177 = vld [vmem:[#allocation3 + $0x1fa8] sm:$0xff]
    %v1178 = vld [vmem:[#allocation3 + $0x1fb0] sm:$0xff]
    %v1179 = vld [vmem:[#allocation3 + $0x1fb8] sm:$0xff]
    %v1180 = vld [vmem:[#allocation3 + $0x1fc0] sm:$0xff]
    %v1181 = vld [vmem:[#allocation3 + $0x1fc8] sm:$0xff]
    %v1182 = vld [vmem:[#allocation3 + $0x1fd0] sm:$0xff]
    %v1183 = vld [vmem:[#allocation3 + $0x1fd8] sm:$0xff]
    %v1184 = vld [vmem:[#allocation3 + $0x1fe0] sm:$0xff]
    %v1185 = vld [vmem:[#allocation3 + $0x1fe8] sm:$0xff]
    %v1186 = vld [vmem:[#allocation3 + $0x1ff0] sm:$0xff]
    %v1187 = vld [vmem:[#allocation3 + $0x1ff8] sm:$0xff]
    %v1188 = vld [vmem:[#allocation5] sm:$0x3]
    %v1190 = vlaneseq
    %v1191 = vshrl.u32 %v1190, 7
    %v1192 = vsub.s32 0, %v1191
    %v1193 = vrot.slane %v1188, %v1192
    %v1194 = vlaneseq
    %v1195 = vshrl.u32 %v1194, 7
    %v1196 = vsub.s32 1, %v1195
    %v1197 = vrot.slane %v1188, %v1196
    %v1208 = vcombine.high %v156, %v156
    %v1210 = vunpack.c.l.s4 1966171168
    %v1211 = vunpack.c.0.s8 %v1210
    %v1212 = vlaneseq
    %v1213 = vshrl.u32 %v1212, 7
    %v1214 = vsub.s32 %v1211, %v1213
    %v1215 = vrot.slane %v156, %v1214
    %v1217 = vunpack.c.l.s4 1966171168
    %v1218 = vunpack.c.0.s8 %v1217
    %v1219 = vlaneseq
    %v1220 = vshrl.u32 %v1219, 7
    %v1221 = vsub.s32 %v1218, %v1220
    %v1222 = vrot.slane %v1208, %v1221
    %v1223 = vcombine.high %v1215, %v1215
    %v1224 = vcombine.high %v1222, %v1222
    %v1226 = vunpack.c.l.s4 1966171168
    %v1227 = vunpack.c.0.s8 %v1226
    %v1228 = vlaneseq
    %v1229 = vshrl.u32 %v1228, 7
    %v1230 = vsub.s32 %v1227, %v1229
    %v1231 = vrot.slane %v1215, %v1230
    %v1233 = vunpack.c.l.s4 1966171168
    %v1234 = vunpack.c.0.s8 %v1233
    %v1235 = vlaneseq
    %v1236 = vshrl.u32 %v1235, 7
    %v1237 = vsub.s32 %v1234, %v1236
    %v1238 = vrot.slane %v1222, %v1237
    %v1240 = vunpack.c.l.s4 1966171168
    %v1241 = vunpack.c.0.s8 %v1240
    %v1242 = vlaneseq
    %v1243 = vshrl.u32 %v1242, 7
    %v1244 = vsub.s32 %v1241, %v1243
    %v1245 = vrot.slane %v1223, %v1244
    %v1247 = vunpack.c.l.s4 1966171168
    %v1248 = vunpack.c.0.s8 %v1247
    %v1249 = vlaneseq
    %v1250 = vshrl.u32 %v1249, 7
    %v1251 = vsub.s32 %v1248, %v1250
    %v1252 = vrot.slane %v1224, %v1251
    %v1253 = vcombine.high %v1231, %v1231
    %v1254 = vcombine.high %v1238, %v1238
    %v1255 = vcombine.high %v1245, %v1245
    %v1256 = vcombine.high %v1252, %v1252
    %v1257 = vcombine.high %v157, %v157
    %v1259 = vunpack.c.l.s4 1966171168
    %v1260 = vunpack.c.0.s8 %v1259
    %v1261 = vlaneseq
    %v1262 = vshrl.u32 %v1261, 7
    %v1263 = vsub.s32 %v1260, %v1262
    %v1264 = vrot.slane %v157, %v1263
    %v1266 = vunpack.c.l.s4 1966171168
    %v1267 = vunpack.c.0.s8 %v1266
    %v1268 = vlaneseq
    %v1269 = vshrl.u32 %v1268, 7
    %v1270 = vsub.s32 %v1267, %v1269
    %v1271 = vrot.slane %v1257, %v1270
    %v1272 = vcombine.high %v1264, %v1264
    %v1273 = vcombine.high %v1271, %v1271
    %v1275 = vunpack.c.l.s4 1966171168
    %v1276 = vunpack.c.0.s8 %v1275
    %v1277 = vlaneseq
    %v1278 = vshrl.u32 %v1277, 7
    %v1279 = vsub.s32 %v1276, %v1278
    %v1280 = vrot.slane %v1264, %v1279
    %v1282 = vunpack.c.l.s4 1966171168
    %v1283 = vunpack.c.0.s8 %v1282
    %v1284 = vlaneseq
    %v1285 = vshrl.u32 %v1284, 7
    %v1286 = vsub.s32 %v1283, %v1285
    %v1287 = vrot.slane %v1271, %v1286
    %v1289 = vunpack.c.l.s4 1966171168
    %v1290 = vunpack.c.0.s8 %v1289
    %v1291 = vlaneseq
    %v1292 = vshrl.u32 %v1291, 7
    %v1293 = vsub.s32 %v1290, %v1292
    %v1294 = vrot.slane %v1272, %v1293
    %v1296 = vunpack.c.l.s4 1966171168
    %v1297 = vunpack.c.0.s8 %v1296
    %v1298 = vlaneseq
    %v1299 = vshrl.u32 %v1298, 7
    %v1300 = vsub.s32 %v1297, %v1299
    %v1301 = vrot.slane %v1273, %v1300
    %v1302 = vcombine.high %v1280, %v1280
    %v1303 = vcombine.high %v1287, %v1287
    %v1304 = vcombine.high %v1294, %v1294
    %v1305 = vcombine.high %v1301, %v1301
    %v1306 = vcombine.high %v158, %v158
    %v1308 = vunpack.c.l.s4 1966171168
    %v1309 = vunpack.c.0.s8 %v1308
    %v1310 = vlaneseq
    %v1311 = vshrl.u32 %v1310, 7
    %v1312 = vsub.s32 %v1309, %v1311
    %v1313 = vrot.slane %v158, %v1312
    %v1315 = vunpack.c.l.s4 1966171168
    %v1316 = vunpack.c.0.s8 %v1315
    %v1317 = vlaneseq
    %v1318 = vshrl.u32 %v1317, 7
    %v1319 = vsub.s32 %v1316, %v1318
    %v1320 = vrot.slane %v1306, %v1319
    %v1321 = vcombine.high %v1313, %v1313
    %v1322 = vcombine.high %v1320, %v1320
    %v1324 = vunpack.c.l.s4 1966171168
    %v1325 = vunpack.c.0.s8 %v1324
    %v1326 = vlaneseq
    %v1327 = vshrl.u32 %v1326, 7
    %v1328 = vsub.s32 %v1325, %v1327
    %v1329 = vrot.slane %v1313, %v1328
    %v1331 = vunpack.c.l.s4 1966171168
    %v1332 = vunpack.c.0.s8 %v1331
    %v1333 = vlaneseq
    %v1334 = vshrl.u32 %v1333, 7
    %v1335 = vsub.s32 %v1332, %v1334
    %v1336 = vrot.slane %v1320, %v1335
    %v1338 = vunpack.c.l.s4 1966171168
    %v1339 = vunpack.c.0.s8 %v1338
    %v1340 = vlaneseq
    %v1341 = vshrl.u32 %v1340, 7
    %v1342 = vsub.s32 %v1339, %v1341
    %v1343 = vrot.slane %v1321, %v1342
    %v1345 = vunpack.c.l.s4 1966171168
    %v1346 = vunpack.c.0.s8 %v1345
    %v1347 = vlaneseq
    %v1348 = vshrl.u32 %v1347, 7
    %v1349 = vsub.s32 %v1346, %v1348
    %v1350 = vrot.slane %v1322, %v1349
    %v1351 = vcombine.high %v1329, %v1329
    %v1352 = vcombine.high %v1336, %v1336
    %v1353 = vcombine.high %v1343, %v1343
    %v1354 = vcombine.high %v1350, %v1350
    %v1355 = vcombine.high %v159, %v159
    %v1357 = vunpack.c.l.s4 1966171168
    %v1358 = vunpack.c.0.s8 %v1357
    %v1359 = vlaneseq
    %v1360 = vshrl.u32 %v1359, 7
    %v1361 = vsub.s32 %v1358, %v1360
    %v1362 = vrot.slane %v159, %v1361
    %v1364 = vunpack.c.l.s4 1966171168
    %v1365 = vunpack.c.0.s8 %v1364
    %v1366 = vlaneseq
    %v1367 = vshrl.u32 %v1366, 7
    %v1368 = vsub.s32 %v1365, %v1367
    %v1369 = vrot.slane %v1355, %v1368
    %v1370 = vcombine.high %v1362, %v1362
    %v1371 = vcombine.high %v1369, %v1369
    %v1373 = vunpack.c.l.s4 1966171168
    %v1374 = vunpack.c.0.s8 %v1373
    %v1375 = vlaneseq
    %v1376 = vshrl.u32 %v1375, 7
    %v1377 = vsub.s32 %v1374, %v1376
    %v1378 = vrot.slane %v1362, %v1377
    %v1380 = vunpack.c.l.s4 1966171168
    %v1381 = vunpack.c.0.s8 %v1380
    %v1382 = vlaneseq
    %v1383 = vshrl.u32 %v1382, 7
    %v1384 = vsub.s32 %v1381, %v1383
    %v1385 = vrot.slane %v1369, %v1384
    %v1387 = vunpack.c.l.s4 1966171168
    %v1388 = vunpack.c.0.s8 %v1387
    %v1389 = vlaneseq
    %v1390 = vshrl.u32 %v1389, 7
    %v1391 = vsub.s32 %v1388, %v1390
    %v1392 = vrot.slane %v1370, %v1391
    %v1394 = vunpack.c.l.s4 1966171168
    %v1395 = vunpack.c.0.s8 %v1394
    %v1396 = vlaneseq
    %v1397 = vshrl.u32 %v1396, 7
    %v1398 = vsub.s32 %v1395, %v1397
    %v1399 = vrot.slane %v1371, %v1398
    %v1400 = vcombine.high %v1378, %v1378
    %v1401 = vcombine.high %v1385, %v1385
    %v1402 = vcombine.high %v1392, %v1392
    %v1403 = vcombine.high %v1399, %v1399
    %v1404 = vcombine.high %v160, %v160
    %v1406 = vunpack.c.l.s4 1966171168
    %v1407 = vunpack.c.0.s8 %v1406
    %v1408 = vlaneseq
    %v1409 = vshrl.u32 %v1408, 7
    %v1410 = vsub.s32 %v1407, %v1409
    %v1411 = vrot.slane %v160, %v1410
    %v1413 = vunpack.c.l.s4 1966171168
    %v1414 = vunpack.c.0.s8 %v1413
    %v1415 = vlaneseq
    %v1416 = vshrl.u32 %v1415, 7
    %v1417 = vsub.s32 %v1414, %v1416
    %v1418 = vrot.slane %v1404, %v1417
    %v1419 = vcombine.high %v1411, %v1411
    %v1420 = vcombine.high %v1418, %v1418
    %v1422 = vunpack.c.l.s4 1966171168
    %v1423 = vunpack.c.0.s8 %v1422
    %v1424 = vlaneseq
    %v1425 = vshrl.u32 %v1424, 7
    %v1426 = vsub.s32 %v1423, %v1425
    %v1427 = vrot.slane %v1411, %v1426
    %v1429 = vunpack.c.l.s4 1966171168
    %v1430 = vunpack.c.0.s8 %v1429
    %v1431 = vlaneseq
    %v1432 = vshrl.u32 %v1431, 7
    %v1433 = vsub.s32 %v1430, %v1432
    %v1434 = vrot.slane %v1418, %v1433
    %v1436 = vunpack.c.l.s4 1966171168
    %v1437 = vunpack.c.0.s8 %v1436
    %v1438 = vlaneseq
    %v1439 = vshrl.u32 %v1438, 7
    %v1440 = vsub.s32 %v1437, %v1439
    %v1441 = vrot.slane %v1419, %v1440
    %v1443 = vunpack.c.l.s4 1966171168
    %v1444 = vunpack.c.0.s8 %v1443
    %v1445 = vlaneseq
    %v1446 = vshrl.u32 %v1445, 7
    %v1447 = vsub.s32 %v1444, %v1446
    %v1448 = vrot.slane %v1420, %v1447
    %v1449 = vcombine.high %v1427, %v1427
    %v1450 = vcombine.high %v1434, %v1434
    %v1451 = vcombine.high %v1441, %v1441
    %v1452 = vcombine.high %v1448, %v1448
    %v1453 = vcombine.high %v161, %v161
    %v1455 = vunpack.c.l.s4 1966171168
    %v1456 = vunpack.c.0.s8 %v1455
    %v1457 = vlaneseq
    %v1458 = vshrl.u32 %v1457, 7
    %v1459 = vsub.s32 %v1456, %v1458
    %v1460 = vrot.slane %v161, %v1459
    %v1462 = vunpack.c.l.s4 1966171168
    %v1463 = vunpack.c.0.s8 %v1462
    %v1464 = vlaneseq
    %v1465 = vshrl.u32 %v1464, 7
    %v1466 = vsub.s32 %v1463, %v1465
    %v1467 = vrot.slane %v1453, %v1466
    %v1468 = vcombine.high %v1460, %v1460
    %v1469 = vcombine.high %v1467, %v1467
    %v1471 = vunpack.c.l.s4 1966171168
    %v1472 = vunpack.c.0.s8 %v1471
    %v1473 = vlaneseq
    %v1474 = vshrl.u32 %v1473, 7
    %v1475 = vsub.s32 %v1472, %v1474
    %v1476 = vrot.slane %v1460, %v1475
    %v1478 = vunpack.c.l.s4 1966171168
    %v1479 = vunpack.c.0.s8 %v1478
    %v1480 = vlaneseq
    %v1481 = vshrl.u32 %v1480, 7
    %v1482 = vsub.s32 %v1479, %v1481
    %v1483 = vrot.slane %v1467, %v1482
    %v1485 = vunpack.c.l.s4 1966171168
    %v1486 = vunpack.c.0.s8 %v1485
    %v1487 = vlaneseq
    %v1488 = vshrl.u32 %v1487, 7
    %v1489 = vsub.s32 %v1486, %v1488
    %v1490 = vrot.slane %v1468, %v1489
    %v1492 = vunpack.c.l.s4 1966171168
    %v1493 = vunpack.c.0.s8 %v1492
    %v1494 = vlaneseq
    %v1495 = vshrl.u32 %v1494, 7
    %v1496 = vsub.s32 %v1493, %v1495
    %v1497 = vrot.slane %v1469, %v1496
    %v1498 = vcombine.high %v1476, %v1476
    %v1499 = vcombine.high %v1483, %v1483
    %v1500 = vcombine.high %v1490, %v1490
    %v1501 = vcombine.high %v1497, %v1497
    %v1502 = vcombine.high %v162, %v162
    %v1504 = vunpack.c.l.s4 1966171168
    %v1505 = vunpack.c.0.s8 %v1504
    %v1506 = vlaneseq
    %v1507 = vshrl.u32 %v1506, 7
    %v1508 = vsub.s32 %v1505, %v1507
    %v1509 = vrot.slane %v162, %v1508
    %v1511 = vunpack.c.l.s4 1966171168
    %v1512 = vunpack.c.0.s8 %v1511
    %v1513 = vlaneseq
    %v1514 = vshrl.u32 %v1513, 7
    %v1515 = vsub.s32 %v1512, %v1514
    %v1516 = vrot.slane %v1502, %v1515
    %v1517 = vcombine.high %v1509, %v1509
    %v1518 = vcombine.high %v1516, %v1516
    %v1520 = vunpack.c.l.s4 1966171168
    %v1521 = vunpack.c.0.s8 %v1520
    %v1522 = vlaneseq
    %v1523 = vshrl.u32 %v1522, 7
    %v1524 = vsub.s32 %v1521, %v1523
    %v1525 = vrot.slane %v1509, %v1524
    %v1527 = vunpack.c.l.s4 1966171168
    %v1528 = vunpack.c.0.s8 %v1527
    %v1529 = vlaneseq
    %v1530 = vshrl.u32 %v1529, 7
    %v1531 = vsub.s32 %v1528, %v1530
    %v1532 = vrot.slane %v1516, %v1531
    %v1534 = vunpack.c.l.s4 1966171168
    %v1535 = vunpack.c.0.s8 %v1534
    %v1536 = vlaneseq
    %v1537 = vshrl.u32 %v1536, 7
    %v1538 = vsub.s32 %v1535, %v1537
    %v1539 = vrot.slane %v1517, %v1538
    %v1541 = vunpack.c.l.s4 1966171168
    %v1542 = vunpack.c.0.s8 %v1541
    %v1543 = vlaneseq
    %v1544 = vshrl.u32 %v1543, 7
    %v1545 = vsub.s32 %v1542, %v1544
    %v1546 = vrot.slane %v1518, %v1545
    %v1547 = vcombine.high %v1525, %v1525
    %v1548 = vcombine.high %v1532, %v1532
    %v1549 = vcombine.high %v1539, %v1539
    %v1550 = vcombine.high %v1546, %v1546
    %v1551 = vcombine.high %v163, %v163
    %v1553 = vunpack.c.l.s4 1966171168
    %v1554 = vunpack.c.0.s8 %v1553
    %v1555 = vlaneseq
    %v1556 = vshrl.u32 %v1555, 7
    %v1557 = vsub.s32 %v1554, %v1556
    %v1558 = vrot.slane %v163, %v1557
    %v1560 = vunpack.c.l.s4 1966171168
    %v1561 = vunpack.c.0.s8 %v1560
    %v1562 = vlaneseq
    %v1563 = vshrl.u32 %v1562, 7
    %v1564 = vsub.s32 %v1561, %v1563
    %v1565 = vrot.slane %v1551, %v1564
    %v1566 = vcombine.high %v1558, %v1558
    %v1567 = vcombine.high %v1565, %v1565
    %v1569 = vunpack.c.l.s4 1966171168
    %v1570 = vunpack.c.0.s8 %v1569
    %v1571 = vlaneseq
    %v1572 = vshrl.u32 %v1571, 7
    %v1573 = vsub.s32 %v1570, %v1572
    %v1574 = vrot.slane %v1558, %v1573
    %v1576 = vunpack.c.l.s4 1966171168
    %v1577 = vunpack.c.0.s8 %v1576
    %v1578 = vlaneseq
    %v1579 = vshrl.u32 %v1578, 7
    %v1580 = vsub.s32 %v1577, %v1579
    %v1581 = vrot.slane %v1565, %v1580
    %v1583 = vunpack.c.l.s4 1966171168
    %v1584 = vunpack.c.0.s8 %v1583
    %v1585 = vlaneseq
    %v1586 = vshrl.u32 %v1585, 7
    %v1587 = vsub.s32 %v1584, %v1586
    %v1588 = vrot.slane %v1566, %v1587
    %v1590 = vunpack.c.l.s4 1966171168
    %v1591 = vunpack.c.0.s8 %v1590
    %v1592 = vlaneseq
    %v1593 = vshrl.u32 %v1592, 7
    %v1594 = vsub.s32 %v1591, %v1593
    %v1595 = vrot.slane %v1567, %v1594
    %v1596 = vcombine.high %v1574, %v1574
    %v1597 = vcombine.high %v1581, %v1581
    %v1598 = vcombine.high %v1588, %v1588
    %v1599 = vcombine.high %v1595, %v1595
    %v2688 = vunpack.c.l.b16 %v164
    %v2689 = vunpack.c.h.b16 %v164
    %v2690 = vunpack.c.l.b16 %v165
    %v2691 = vunpack.c.h.b16 %v165
    %v2692 = vunpack.c.l.b16 %v166
    %v2693 = vunpack.c.h.b16 %v166
    %v2694 = vunpack.c.l.b16 %v167
    %v2695 = vunpack.c.h.b16 %v167
    %v2696 = vunpack.c.l.b16 %v168
    %v2697 = vunpack.c.h.b16 %v168
    %v2698 = vunpack.c.l.b16 %v169
    %v2699 = vunpack.c.h.b16 %v169
    %v2700 = vunpack.c.l.b16 %v170
    %v2701 = vunpack.c.h.b16 %v170
    %v2702 = vunpack.c.l.b16 %v171
    %v2703 = vunpack.c.h.b16 %v171
    %v2704 = vunpack.c.l.b16 %v172
    %v2705 = vunpack.c.h.b16 %v172
    %v2706 = vunpack.c.l.b16 %v173
    %v2707 = vunpack.c.h.b16 %v173
    %v2708 = vunpack.c.l.b16 %v174
    %v2709 = vunpack.c.h.b16 %v174
    %v2710 = vunpack.c.l.b16 %v175
    %v2711 = vunpack.c.h.b16 %v175
    %v2712 = vunpack.c.l.b16 %v176
    %v2713 = vunpack.c.h.b16 %v176
    %v2714 = vunpack.c.l.b16 %v177
    %v2715 = vunpack.c.h.b16 %v177
    %v2716 = vunpack.c.l.b16 %v178
    %v2717 = vunpack.c.h.b16 %v178
    %v2718 = vunpack.c.l.b16 %v179
    %v2719 = vunpack.c.h.b16 %v179
    %v2720 = vunpack.c.l.b16 %v180
    %v2721 = vunpack.c.h.b16 %v180
    %v2722 = vunpack.c.l.b16 %v181
    %v2723 = vunpack.c.h.b16 %v181
    %v2724 = vunpack.c.l.b16 %v182
    %v2725 = vunpack.c.h.b16 %v182
    %v2726 = vunpack.c.l.b16 %v183
    %v2727 = vunpack.c.h.b16 %v183
    %v2728 = vunpack.c.l.b16 %v184
    %v2729 = vunpack.c.h.b16 %v184
    %v2730 = vunpack.c.l.b16 %v185
    %v2731 = vunpack.c.h.b16 %v185
    %v2732 = vunpack.c.l.b16 %v186
    %v2733 = vunpack.c.h.b16 %v186
    %v2734 = vunpack.c.l.b16 %v187
    %v2735 = vunpack.c.h.b16 %v187
    %v2736 = vunpack.c.l.b16 %v188
    %v2737 = vunpack.c.h.b16 %v188
    %v2738 = vunpack.c.l.b16 %v189
    %v2739 = vunpack.c.h.b16 %v189
    %v2740 = vunpack.c.l.b16 %v190
    %v2741 = vunpack.c.h.b16 %v190
    %v2742 = vunpack.c.l.b16 %v191
    %v2743 = vunpack.c.h.b16 %v191
    %v2744 = vunpack.c.l.b16 %v192
    %v2745 = vunpack.c.h.b16 %v192
    %v2746 = vunpack.c.l.b16 %v193
    %v2747 = vunpack.c.h.b16 %v193
    %v2748 = vunpack.c.l.b16 %v194
    %v2749 = vunpack.c.h.b16 %v194
    %v2750 = vunpack.c.l.b16 %v195
    %v2751 = vunpack.c.h.b16 %v195
    %v2752 = vunpack.c.l.b16 %v196
    %v2753 = vunpack.c.h.b16 %v196
    %v2754 = vunpack.c.l.b16 %v197
    %v2755 = vunpack.c.h.b16 %v197
    %v2756 = vunpack.c.l.b16 %v198
    %v2757 = vunpack.c.h.b16 %v198
    %v2758 = vunpack.c.l.b16 %v199
    %v2759 = vunpack.c.h.b16 %v199
    %v2760 = vunpack.c.l.b16 %v200
    %v2761 = vunpack.c.h.b16 %v200
    %v2762 = vunpack.c.l.b16 %v201
    %v2763 = vunpack.c.h.b16 %v201
    %v2764 = vunpack.c.l.b16 %v202
    %v2765 = vunpack.c.h.b16 %v202
    %v2766 = vunpack.c.l.b16 %v203
    %v2767 = vunpack.c.h.b16 %v203
    %v2768 = vunpack.c.l.b16 %v204
    %v2769 = vunpack.c.h.b16 %v204
    %v2770 = vunpack.c.l.b16 %v205
    %v2771 = vunpack.c.h.b16 %v205
    %v2772 = vunpack.c.l.b16 %v206
    %v2773 = vunpack.c.h.b16 %v206
    %v2774 = vunpack.c.l.b16 %v207
    %v2775 = vunpack.c.h.b16 %v207
    %v2776 = vunpack.c.l.b16 %v208
    %v2777 = vunpack.c.h.b16 %v208
    %v2778 = vunpack.c.l.b16 %v209
    %v2779 = vunpack.c.h.b16 %v209
    %v2780 = vunpack.c.l.b16 %v210
    %v2781 = vunpack.c.h.b16 %v210
    %v2782 = vunpack.c.l.b16 %v211
    %v2783 = vunpack.c.h.b16 %v211
    %v2784 = vunpack.c.l.b16 %v212
    %v2785 = vunpack.c.h.b16 %v212
    %v2786 = vunpack.c.l.b16 %v213
    %v2787 = vunpack.c.h.b16 %v213
    %v2788 = vunpack.c.l.b16 %v214
    %v2789 = vunpack.c.h.b16 %v214
    %v2790 = vunpack.c.l.b16 %v215
    %v2791 = vunpack.c.h.b16 %v215
    %v2792 = vunpack.c.l.b16 %v216
    %v2793 = vunpack.c.h.b16 %v216
    %v2794 = vunpack.c.l.b16 %v217
    %v2795 = vunpack.c.h.b16 %v217
    %v2796 = vunpack.c.l.b16 %v218
    %v2797 = vunpack.c.h.b16 %v218
    %v2798 = vunpack.c.l.b16 %v219
    %v2799 = vunpack.c.h.b16 %v219
    %v2800 = vunpack.c.l.b16 %v220
    %v2801 = vunpack.c.h.b16 %v220
    %v2802 = vunpack.c.l.b16 %v221
    %v2803 = vunpack.c.h.b16 %v221
    %v2804 = vunpack.c.l.b16 %v222
    %v2805 = vunpack.c.h.b16 %v222
    %v2806 = vunpack.c.l.b16 %v223
    %v2807 = vunpack.c.h.b16 %v223
    %v2808 = vunpack.c.l.b16 %v224
    %v2809 = vunpack.c.h.b16 %v224
    %v2810 = vunpack.c.l.b16 %v225
    %v2811 = vunpack.c.h.b16 %v225
    %v2812 = vunpack.c.l.b16 %v226
    %v2813 = vunpack.c.h.b16 %v226
    %v2814 = vunpack.c.l.b16 %v227
    %v2815 = vunpack.c.h.b16 %v227
    %v2816 = vunpack.c.l.b16 %v228
    %v2817 = vunpack.c.h.b16 %v228
    %v2818 = vunpack.c.l.b16 %v229
    %v2819 = vunpack.c.h.b16 %v229
    %v2820 = vunpack.c.l.b16 %v230
    %v2821 = vunpack.c.h.b16 %v230
    %v2822 = vunpack.c.l.b16 %v231
    %v2823 = vunpack.c.h.b16 %v231
    %v2824 = vunpack.c.l.b16 %v232
    %v2825 = vunpack.c.h.b16 %v232
    %v2826 = vunpack.c.l.b16 %v233
    %v2827 = vunpack.c.h.b16 %v233
    %v2828 = vunpack.c.l.b16 %v234
    %v2829 = vunpack.c.h.b16 %v234
    %v2830 = vunpack.c.l.b16 %v235
    %v2831 = vunpack.c.h.b16 %v235
    %v2832 = vunpack.c.l.b16 %v236
    %v2833 = vunpack.c.h.b16 %v236
    %v2834 = vunpack.c.l.b16 %v237
    %v2835 = vunpack.c.h.b16 %v237
    %v2836 = vunpack.c.l.b16 %v238
    %v2837 = vunpack.c.h.b16 %v238
    %v2838 = vunpack.c.l.b16 %v239
    %v2839 = vunpack.c.h.b16 %v239
    %v2840 = vunpack.c.l.b16 %v240
    %v2841 = vunpack.c.h.b16 %v240
    %v2842 = vunpack.c.l.b16 %v241
    %v2843 = vunpack.c.h.b16 %v241
    %v2844 = vunpack.c.l.b16 %v242
    %v2845 = vunpack.c.h.b16 %v242
    %v2846 = vunpack.c.l.b16 %v243
    %v2847 = vunpack.c.h.b16 %v243
    %v2848 = vunpack.c.l.b16 %v244
    %v2849 = vunpack.c.h.b16 %v244
    %v2850 = vunpack.c.l.b16 %v245
    %v2851 = vunpack.c.h.b16 %v245
    %v2852 = vunpack.c.l.b16 %v246
    %v2853 = vunpack.c.h.b16 %v246
    %v2854 = vunpack.c.l.b16 %v247
    %v2855 = vunpack.c.h.b16 %v247
    %v2856 = vunpack.c.l.b16 %v248
    %v2857 = vunpack.c.h.b16 %v248
    %v2858 = vunpack.c.l.b16 %v249
    %v2859 = vunpack.c.h.b16 %v249
    %v2860 = vunpack.c.l.b16 %v250
    %v2861 = vunpack.c.h.b16 %v250
    %v2862 = vunpack.c.l.b16 %v251
    %v2863 = vunpack.c.h.b16 %v251
    %v2864 = vunpack.c.l.b16 %v252
    %v2865 = vunpack.c.h.b16 %v252
    %v2866 = vunpack.c.l.b16 %v253
    %v2867 = vunpack.c.h.b16 %v253
    %v2868 = vunpack.c.l.b16 %v254
    %v2869 = vunpack.c.h.b16 %v254
    %v2870 = vunpack.c.l.b16 %v255
    %v2871 = vunpack.c.h.b16 %v255
    %v2872 = vunpack.c.l.b16 %v256
    %v2873 = vunpack.c.h.b16 %v256
    %v2874 = vunpack.c.l.b16 %v257
    %v2875 = vunpack.c.h.b16 %v257
    %v2876 = vunpack.c.l.b16 %v258
    %v2877 = vunpack.c.h.b16 %v258
    %v2878 = vunpack.c.l.b16 %v259
    %v2879 = vunpack.c.h.b16 %v259
    %v2880 = vunpack.c.l.b16 %v260
    %v2881 = vunpack.c.h.b16 %v260
    %v2882 = vunpack.c.l.b16 %v261
    %v2883 = vunpack.c.h.b16 %v261
    %v2884 = vunpack.c.l.b16 %v262
    %v2885 = vunpack.c.h.b16 %v262
    %v2886 = vunpack.c.l.b16 %v263
    %v2887 = vunpack.c.h.b16 %v263
    %v2888 = vunpack.c.l.b16 %v264
    %v2889 = vunpack.c.h.b16 %v264
    %v2890 = vunpack.c.l.b16 %v265
    %v2891 = vunpack.c.h.b16 %v265
    %v2892 = vunpack.c.l.b16 %v266
    %v2893 = vunpack.c.h.b16 %v266
    %v2894 = vunpack.c.l.b16 %v267
    %v2895 = vunpack.c.h.b16 %v267
    %v2896 = vunpack.c.l.b16 %v268
    %v2897 = vunpack.c.h.b16 %v268
    %v2898 = vunpack.c.l.b16 %v269
    %v2899 = vunpack.c.h.b16 %v269
    %v2900 = vunpack.c.l.b16 %v270
    %v2901 = vunpack.c.h.b16 %v270
    %v2902 = vunpack.c.l.b16 %v271
    %v2903 = vunpack.c.h.b16 %v271
    %v2904 = vunpack.c.l.b16 %v272
    %v2905 = vunpack.c.h.b16 %v272
    %v2906 = vunpack.c.l.b16 %v273
    %v2907 = vunpack.c.h.b16 %v273
    %v2908 = vunpack.c.l.b16 %v274
    %v2909 = vunpack.c.h.b16 %v274
    %v2910 = vunpack.c.l.b16 %v275
    %v2911 = vunpack.c.h.b16 %v275
    %v2912 = vunpack.c.l.b16 %v276
    %v2913 = vunpack.c.h.b16 %v276
    %v2914 = vunpack.c.l.b16 %v277
    %v2915 = vunpack.c.h.b16 %v277
    %v2916 = vunpack.c.l.b16 %v278
    %v2917 = vunpack.c.h.b16 %v278
    %v2918 = vunpack.c.l.b16 %v279
    %v2919 = vunpack.c.h.b16 %v279
    %v2920 = vunpack.c.l.b16 %v280
    %v2921 = vunpack.c.h.b16 %v280
    %v2922 = vunpack.c.l.b16 %v281
    %v2923 = vunpack.c.h.b16 %v281
    %v2924 = vunpack.c.l.b16 %v282
    %v2925 = vunpack.c.h.b16 %v282
    %v2926 = vunpack.c.l.b16 %v283
    %v2927 = vunpack.c.h.b16 %v283
    %v2928 = vunpack.c.l.b16 %v284
    %v2929 = vunpack.c.h.b16 %v284
    %v2930 = vunpack.c.l.b16 %v285
    %v2931 = vunpack.c.h.b16 %v285
    %v2932 = vunpack.c.l.b16 %v286
    %v2933 = vunpack.c.h.b16 %v286
    %v2934 = vunpack.c.l.b16 %v287
    %v2935 = vunpack.c.h.b16 %v287
    %v2936 = vunpack.c.l.b16 %v288
    %v2937 = vunpack.c.h.b16 %v288
    %v2938 = vunpack.c.l.b16 %v289
    %v2939 = vunpack.c.h.b16 %v289
    %v2940 = vunpack.c.l.b16 %v290
    %v2941 = vunpack.c.h.b16 %v290
    %v2942 = vunpack.c.l.b16 %v291
    %v2943 = vunpack.c.h.b16 %v291
    %v2944 = vunpack.c.l.b16 %v292
    %v2945 = vunpack.c.h.b16 %v292
    %v2946 = vunpack.c.l.b16 %v293
    %v2947 = vunpack.c.h.b16 %v293
    %v2948 = vunpack.c.l.b16 %v294
    %v2949 = vunpack.c.h.b16 %v294
    %v2950 = vunpack.c.l.b16 %v295
    %v2951 = vunpack.c.h.b16 %v295
    %v2952 = vunpack.c.l.b16 %v296
    %v2953 = vunpack.c.h.b16 %v296
    %v2954 = vunpack.c.l.b16 %v297
    %v2955 = vunpack.c.h.b16 %v297
    %v2956 = vunpack.c.l.b16 %v298
    %v2957 = vunpack.c.h.b16 %v298
    %v2958 = vunpack.c.l.b16 %v299
    %v2959 = vunpack.c.h.b16 %v299
    %v2960 = vunpack.c.l.b16 %v300
    %v2961 = vunpack.c.h.b16 %v300
    %v2962 = vunpack.c.l.b16 %v301
    %v2963 = vunpack.c.h.b16 %v301
    %v2964 = vunpack.c.l.b16 %v302
    %v2965 = vunpack.c.h.b16 %v302
    %v2966 = vunpack.c.l.b16 %v303
    %v2967 = vunpack.c.h.b16 %v303
    %v2968 = vunpack.c.l.b16 %v304
    %v2969 = vunpack.c.h.b16 %v304
    %v2970 = vunpack.c.l.b16 %v305
    %v2971 = vunpack.c.h.b16 %v305
    %v2972 = vunpack.c.l.b16 %v306
    %v2973 = vunpack.c.h.b16 %v306
    %v2974 = vunpack.c.l.b16 %v307
    %v2975 = vunpack.c.h.b16 %v307
    %v2976 = vunpack.c.l.b16 %v308
    %v2977 = vunpack.c.h.b16 %v308
    %v2978 = vunpack.c.l.b16 %v309
    %v2979 = vunpack.c.h.b16 %v309
    %v2980 = vunpack.c.l.b16 %v310
    %v2981 = vunpack.c.h.b16 %v310
    %v2982 = vunpack.c.l.b16 %v311
    %v2983 = vunpack.c.h.b16 %v311
    %v2984 = vunpack.c.l.b16 %v312
    %v2985 = vunpack.c.h.b16 %v312
    %v2986 = vunpack.c.l.b16 %v313
    %v2987 = vunpack.c.h.b16 %v313
    %v2988 = vunpack.c.l.b16 %v314
    %v2989 = vunpack.c.h.b16 %v314
    %v2990 = vunpack.c.l.b16 %v315
    %v2991 = vunpack.c.h.b16 %v315
    %v2992 = vunpack.c.l.b16 %v316
    %v2993 = vunpack.c.h.b16 %v316
    %v2994 = vunpack.c.l.b16 %v317
    %v2995 = vunpack.c.h.b16 %v317
    %v2996 = vunpack.c.l.b16 %v318
    %v2997 = vunpack.c.h.b16 %v318
    %v2998 = vunpack.c.l.b16 %v319
    %v2999 = vunpack.c.h.b16 %v319
    %v3000 = vunpack.c.l.b16 %v320
    %v3001 = vunpack.c.h.b16 %v320
    %v3002 = vunpack.c.l.b16 %v321
    %v3003 = vunpack.c.h.b16 %v321
    %v3004 = vunpack.c.l.b16 %v322
    %v3005 = vunpack.c.h.b16 %v322
    %v3006 = vunpack.c.l.b16 %v323
    %v3007 = vunpack.c.h.b16 %v323
    %v3008 = vunpack.c.l.b16 %v324
    %v3009 = vunpack.c.h.b16 %v324
    %v3010 = vunpack.c.l.b16 %v325
    %v3011 = vunpack.c.h.b16 %v325
    %v3012 = vunpack.c.l.b16 %v326
    %v3013 = vunpack.c.h.b16 %v326
    %v3014 = vunpack.c.l.b16 %v327
    %v3015 = vunpack.c.h.b16 %v327
    %v3016 = vunpack.c.l.b16 %v328
    %v3017 = vunpack.c.h.b16 %v328
    %v3018 = vunpack.c.l.b16 %v329
    %v3019 = vunpack.c.h.b16 %v329
    %v3020 = vunpack.c.l.b16 %v330
    %v3021 = vunpack.c.h.b16 %v330
    %v3022 = vunpack.c.l.b16 %v331
    %v3023 = vunpack.c.h.b16 %v331
    %v3024 = vunpack.c.l.b16 %v332
    %v3025 = vunpack.c.h.b16 %v332
    %v3026 = vunpack.c.l.b16 %v333
    %v3027 = vunpack.c.h.b16 %v333
    %v3028 = vunpack.c.l.b16 %v334
    %v3029 = vunpack.c.h.b16 %v334
    %v3030 = vunpack.c.l.b16 %v335
    %v3031 = vunpack.c.h.b16 %v335
    %v3032 = vunpack.c.l.b16 %v336
    %v3033 = vunpack.c.h.b16 %v336
    %v3034 = vunpack.c.l.b16 %v337
    %v3035 = vunpack.c.h.b16 %v337
    %v3036 = vunpack.c.l.b16 %v338
    %v3037 = vunpack.c.h.b16 %v338
    %v3038 = vunpack.c.l.b16 %v339
    %v3039 = vunpack.c.h.b16 %v339
    %v3040 = vunpack.c.l.b16 %v340
    %v3041 = vunpack.c.h.b16 %v340
    %v3042 = vunpack.c.l.b16 %v341
    %v3043 = vunpack.c.h.b16 %v341
    %v3044 = vunpack.c.l.b16 %v342
    %v3045 = vunpack.c.h.b16 %v342
    %v3046 = vunpack.c.l.b16 %v343
    %v3047 = vunpack.c.h.b16 %v343
    %v3048 = vunpack.c.l.b16 %v344
    %v3049 = vunpack.c.h.b16 %v344
    %v3050 = vunpack.c.l.b16 %v345
    %v3051 = vunpack.c.h.b16 %v345
    %v3052 = vunpack.c.l.b16 %v346
    %v3053 = vunpack.c.h.b16 %v346
    %v3054 = vunpack.c.l.b16 %v347
    %v3055 = vunpack.c.h.b16 %v347
    %v3056 = vunpack.c.l.b16 %v348
    %v3057 = vunpack.c.h.b16 %v348
    %v3058 = vunpack.c.l.b16 %v349
    %v3059 = vunpack.c.h.b16 %v349
    %v3060 = vunpack.c.l.b16 %v350
    %v3061 = vunpack.c.h.b16 %v350
    %v3062 = vunpack.c.l.b16 %v351
    %v3063 = vunpack.c.h.b16 %v351
    %v3064 = vunpack.c.l.b16 %v352
    %v3065 = vunpack.c.h.b16 %v352
    %v3066 = vunpack.c.l.b16 %v353
    %v3067 = vunpack.c.h.b16 %v353
    %v3068 = vunpack.c.l.b16 %v354
    %v3069 = vunpack.c.h.b16 %v354
    %v3070 = vunpack.c.l.b16 %v355
    %v3071 = vunpack.c.h.b16 %v355
    %v3072 = vunpack.c.l.b16 %v356
    %v3073 = vunpack.c.h.b16 %v356
    %v3074 = vunpack.c.l.b16 %v357
    %v3075 = vunpack.c.h.b16 %v357
    %v3076 = vunpack.c.l.b16 %v358
    %v3077 = vunpack.c.h.b16 %v358
    %v3078 = vunpack.c.l.b16 %v359
    %v3079 = vunpack.c.h.b16 %v359
    %v3080 = vunpack.c.l.b16 %v360
    %v3081 = vunpack.c.h.b16 %v360
    %v3082 = vunpack.c.l.b16 %v361
    %v3083 = vunpack.c.h.b16 %v361
    %v3084 = vunpack.c.l.b16 %v362
    %v3085 = vunpack.c.h.b16 %v362
    %v3086 = vunpack.c.l.b16 %v363
    %v3087 = vunpack.c.h.b16 %v363
    %v3088 = vunpack.c.l.b16 %v364
    %v3089 = vunpack.c.h.b16 %v364
    %v3090 = vunpack.c.l.b16 %v365
    %v3091 = vunpack.c.h.b16 %v365
    %v3092 = vunpack.c.l.b16 %v366
    %v3093 = vunpack.c.h.b16 %v366
    %v3094 = vunpack.c.l.b16 %v367
    %v3095 = vunpack.c.h.b16 %v367
    %v3096 = vunpack.c.l.b16 %v368
    %v3097 = vunpack.c.h.b16 %v368
    %v3098 = vunpack.c.l.b16 %v369
    %v3099 = vunpack.c.h.b16 %v369
    %v3100 = vunpack.c.l.b16 %v370
    %v3101 = vunpack.c.h.b16 %v370
    %v3102 = vunpack.c.l.b16 %v371
    %v3103 = vunpack.c.h.b16 %v371
    %v3104 = vunpack.c.l.b16 %v372
    %v3105 = vunpack.c.h.b16 %v372
    %v3106 = vunpack.c.l.b16 %v373
    %v3107 = vunpack.c.h.b16 %v373
    %v3108 = vunpack.c.l.b16 %v374
    %v3109 = vunpack.c.h.b16 %v374
    %v3110 = vunpack.c.l.b16 %v375
    %v3111 = vunpack.c.h.b16 %v375
    %v3112 = vunpack.c.l.b16 %v376
    %v3113 = vunpack.c.h.b16 %v376
    %v3114 = vunpack.c.l.b16 %v377
    %v3115 = vunpack.c.h.b16 %v377
    %v3116 = vunpack.c.l.b16 %v378
    %v3117 = vunpack.c.h.b16 %v378
    %v3118 = vunpack.c.l.b16 %v379
    %v3119 = vunpack.c.h.b16 %v379
    %v3120 = vunpack.c.l.b16 %v380
    %v3121 = vunpack.c.h.b16 %v380
    %v3122 = vunpack.c.l.b16 %v381
    %v3123 = vunpack.c.h.b16 %v381
    %v3124 = vunpack.c.l.b16 %v382
    %v3125 = vunpack.c.h.b16 %v382
    %v3126 = vunpack.c.l.b16 %v383
    %v3127 = vunpack.c.h.b16 %v383
    %v3128 = vunpack.c.l.b16 %v384
    %v3129 = vunpack.c.h.b16 %v384
    %v3130 = vunpack.c.l.b16 %v385
    %v3131 = vunpack.c.h.b16 %v385
    %v3132 = vunpack.c.l.b16 %v386
    %v3133 = vunpack.c.h.b16 %v386
    %v3134 = vunpack.c.l.b16 %v387
    %v3135 = vunpack.c.h.b16 %v387
    %v3136 = vunpack.c.l.b16 %v388
    %v3137 = vunpack.c.h.b16 %v388
    %v3138 = vunpack.c.l.b16 %v389
    %v3139 = vunpack.c.h.b16 %v389
    %v3140 = vunpack.c.l.b16 %v390
    %v3141 = vunpack.c.h.b16 %v390
    %v3142 = vunpack.c.l.b16 %v391
    %v3143 = vunpack.c.h.b16 %v391
    %v3144 = vunpack.c.l.b16 %v392
    %v3145 = vunpack.c.h.b16 %v392
    %v3146 = vunpack.c.l.b16 %v393
    %v3147 = vunpack.c.h.b16 %v393
    %v3148 = vunpack.c.l.b16 %v394
    %v3149 = vunpack.c.h.b16 %v394
    %v3150 = vunpack.c.l.b16 %v395
    %v3151 = vunpack.c.h.b16 %v395
    %v3152 = vunpack.c.l.b16 %v396
    %v3153 = vunpack.c.h.b16 %v396
    %v3154 = vunpack.c.l.b16 %v397
    %v3155 = vunpack.c.h.b16 %v397
    %v3156 = vunpack.c.l.b16 %v398
    %v3157 = vunpack.c.h.b16 %v398
    %v3158 = vunpack.c.l.b16 %v399
    %v3159 = vunpack.c.h.b16 %v399
    %v3160 = vunpack.c.l.b16 %v400
    %v3161 = vunpack.c.h.b16 %v400
    %v3162 = vunpack.c.l.b16 %v401
    %v3163 = vunpack.c.h.b16 %v401
    %v3164 = vunpack.c.l.b16 %v402
    %v3165 = vunpack.c.h.b16 %v402
    %v3166 = vunpack.c.l.b16 %v403
    %v3167 = vunpack.c.h.b16 %v403
    %v3168 = vunpack.c.l.b16 %v404
    %v3169 = vunpack.c.h.b16 %v404
    %v3170 = vunpack.c.l.b16 %v405
    %v3171 = vunpack.c.h.b16 %v405
    %v3172 = vunpack.c.l.b16 %v406
    %v3173 = vunpack.c.h.b16 %v406
    %v3174 = vunpack.c.l.b16 %v407
    %v3175 = vunpack.c.h.b16 %v407
    %v3176 = vunpack.c.l.b16 %v408
    %v3177 = vunpack.c.h.b16 %v408
    %v3178 = vunpack.c.l.b16 %v409
    %v3179 = vunpack.c.h.b16 %v409
    %v3180 = vunpack.c.l.b16 %v410
    %v3181 = vunpack.c.h.b16 %v410
    %v3182 = vunpack.c.l.b16 %v411
    %v3183 = vunpack.c.h.b16 %v411
    %v3184 = vunpack.c.l.b16 %v412
    %v3185 = vunpack.c.h.b16 %v412
    %v3186 = vunpack.c.l.b16 %v413
    %v3187 = vunpack.c.h.b16 %v413
    %v3188 = vunpack.c.l.b16 %v414
    %v3189 = vunpack.c.h.b16 %v414
    %v3190 = vunpack.c.l.b16 %v415
    %v3191 = vunpack.c.h.b16 %v415
    %v3192 = vunpack.c.l.b16 %v416
    %v3193 = vunpack.c.h.b16 %v416
    %v3194 = vunpack.c.l.b16 %v417
    %v3195 = vunpack.c.h.b16 %v417
    %v3196 = vunpack.c.l.b16 %v418
    %v3197 = vunpack.c.h.b16 %v418
    %v3198 = vunpack.c.l.b16 %v419
    %v3199 = vunpack.c.h.b16 %v419
    %v3200 = vunpack.c.l.b16 %v420
    %v3201 = vunpack.c.h.b16 %v420
    %v3202 = vunpack.c.l.b16 %v421
    %v3203 = vunpack.c.h.b16 %v421
    %v3204 = vunpack.c.l.b16 %v422
    %v3205 = vunpack.c.h.b16 %v422
    %v3206 = vunpack.c.l.b16 %v423
    %v3207 = vunpack.c.h.b16 %v423
    %v3208 = vunpack.c.l.b16 %v424
    %v3209 = vunpack.c.h.b16 %v424
    %v3210 = vunpack.c.l.b16 %v425
    %v3211 = vunpack.c.h.b16 %v425
    %v3212 = vunpack.c.l.b16 %v426
    %v3213 = vunpack.c.h.b16 %v426
    %v3214 = vunpack.c.l.b16 %v427
    %v3215 = vunpack.c.h.b16 %v427
    %v3216 = vunpack.c.l.b16 %v428
    %v3217 = vunpack.c.h.b16 %v428
    %v3218 = vunpack.c.l.b16 %v429
    %v3219 = vunpack.c.h.b16 %v429
    %v3220 = vunpack.c.l.b16 %v430
    %v3221 = vunpack.c.h.b16 %v430
    %v3222 = vunpack.c.l.b16 %v431
    %v3223 = vunpack.c.h.b16 %v431
    %v3224 = vunpack.c.l.b16 %v432
    %v3225 = vunpack.c.h.b16 %v432
    %v3226 = vunpack.c.l.b16 %v433
    %v3227 = vunpack.c.h.b16 %v433
    %v3228 = vunpack.c.l.b16 %v434
    %v3229 = vunpack.c.h.b16 %v434
    %v3230 = vunpack.c.l.b16 %v435
    %v3231 = vunpack.c.h.b16 %v435
    %v3232 = vunpack.c.l.b16 %v436
    %v3233 = vunpack.c.h.b16 %v436
    %v3234 = vunpack.c.l.b16 %v437
    %v3235 = vunpack.c.h.b16 %v437
    %v3236 = vunpack.c.l.b16 %v438
    %v3237 = vunpack.c.h.b16 %v438
    %v3238 = vunpack.c.l.b16 %v439
    %v3239 = vunpack.c.h.b16 %v439
    %v3240 = vunpack.c.l.b16 %v440
    %v3241 = vunpack.c.h.b16 %v440
    %v3242 = vunpack.c.l.b16 %v441
    %v3243 = vunpack.c.h.b16 %v441
    %v3244 = vunpack.c.l.b16 %v442
    %v3245 = vunpack.c.h.b16 %v442
    %v3246 = vunpack.c.l.b16 %v443
    %v3247 = vunpack.c.h.b16 %v443
    %v3248 = vunpack.c.l.b16 %v444
    %v3249 = vunpack.c.h.b16 %v444
    %v3250 = vunpack.c.l.b16 %v445
    %v3251 = vunpack.c.h.b16 %v445
    %v3252 = vunpack.c.l.b16 %v446
    %v3253 = vunpack.c.h.b16 %v446
    %v3254 = vunpack.c.l.b16 %v447
    %v3255 = vunpack.c.h.b16 %v447
    %v3256 = vunpack.c.l.b16 %v448
    %v3257 = vunpack.c.h.b16 %v448
    %v3258 = vunpack.c.l.b16 %v449
    %v3259 = vunpack.c.h.b16 %v449
    %v3260 = vunpack.c.l.b16 %v450
    %v3261 = vunpack.c.h.b16 %v450
    %v3262 = vunpack.c.l.b16 %v451
    %v3263 = vunpack.c.h.b16 %v451
    %v3264 = vunpack.c.l.b16 %v452
    %v3265 = vunpack.c.h.b16 %v452
    %v3266 = vunpack.c.l.b16 %v453
    %v3267 = vunpack.c.h.b16 %v453
    %v3268 = vunpack.c.l.b16 %v454
    %v3269 = vunpack.c.h.b16 %v454
    %v3270 = vunpack.c.l.b16 %v455
    %v3271 = vunpack.c.h.b16 %v455
    %v3272 = vunpack.c.l.b16 %v456
    %v3273 = vunpack.c.h.b16 %v456
    %v3274 = vunpack.c.l.b16 %v457
    %v3275 = vunpack.c.h.b16 %v457
    %v3276 = vunpack.c.l.b16 %v458
    %v3277 = vunpack.c.h.b16 %v458
    %v3278 = vunpack.c.l.b16 %v459
    %v3279 = vunpack.c.h.b16 %v459
    %v3280 = vunpack.c.l.b16 %v460
    %v3281 = vunpack.c.h.b16 %v460
    %v3282 = vunpack.c.l.b16 %v461
    %v3283 = vunpack.c.h.b16 %v461
    %v3284 = vunpack.c.l.b16 %v462
    %v3285 = vunpack.c.h.b16 %v462
    %v3286 = vunpack.c.l.b16 %v463
    %v3287 = vunpack.c.h.b16 %v463
    %v3288 = vunpack.c.l.b16 %v464
    %v3289 = vunpack.c.h.b16 %v464
    %v3290 = vunpack.c.l.b16 %v465
    %v3291 = vunpack.c.h.b16 %v465
    %v3292 = vunpack.c.l.b16 %v466
    %v3293 = vunpack.c.h.b16 %v466
    %v3294 = vunpack.c.l.b16 %v467
    %v3295 = vunpack.c.h.b16 %v467
    %v3296 = vunpack.c.l.b16 %v468
    %v3297 = vunpack.c.h.b16 %v468
    %v3298 = vunpack.c.l.b16 %v469
    %v3299 = vunpack.c.h.b16 %v469
    %v3300 = vunpack.c.l.b16 %v470
    %v3301 = vunpack.c.h.b16 %v470
    %v3302 = vunpack.c.l.b16 %v471
    %v3303 = vunpack.c.h.b16 %v471
    %v3304 = vunpack.c.l.b16 %v472
    %v3305 = vunpack.c.h.b16 %v472
    %v3306 = vunpack.c.l.b16 %v473
    %v3307 = vunpack.c.h.b16 %v473
    %v3308 = vunpack.c.l.b16 %v474
    %v3309 = vunpack.c.h.b16 %v474
    %v3310 = vunpack.c.l.b16 %v475
    %v3311 = vunpack.c.h.b16 %v475
    %v3312 = vunpack.c.l.b16 %v476
    %v3313 = vunpack.c.h.b16 %v476
    %v3314 = vunpack.c.l.b16 %v477
    %v3315 = vunpack.c.h.b16 %v477
    %v3316 = vunpack.c.l.b16 %v478
    %v3317 = vunpack.c.h.b16 %v478
    %v3318 = vunpack.c.l.b16 %v479
    %v3319 = vunpack.c.h.b16 %v479
    %v3320 = vunpack.c.l.b16 %v480
    %v3321 = vunpack.c.h.b16 %v480
    %v3322 = vunpack.c.l.b16 %v481
    %v3323 = vunpack.c.h.b16 %v481
    %v3324 = vunpack.c.l.b16 %v482
    %v3325 = vunpack.c.h.b16 %v482
    %v3326 = vunpack.c.l.b16 %v483
    %v3327 = vunpack.c.h.b16 %v483
    %v3328 = vunpack.c.l.b16 %v484
    %v3329 = vunpack.c.h.b16 %v484
    %v3330 = vunpack.c.l.b16 %v485
    %v3331 = vunpack.c.h.b16 %v485
    %v3332 = vunpack.c.l.b16 %v486
    %v3333 = vunpack.c.h.b16 %v486
    %v3334 = vunpack.c.l.b16 %v487
    %v3335 = vunpack.c.h.b16 %v487
    %v3336 = vunpack.c.l.b16 %v488
    %v3337 = vunpack.c.h.b16 %v488
    %v3338 = vunpack.c.l.b16 %v489
    %v3339 = vunpack.c.h.b16 %v489
    %v3340 = vunpack.c.l.b16 %v490
    %v3341 = vunpack.c.h.b16 %v490
    %v3342 = vunpack.c.l.b16 %v491
    %v3343 = vunpack.c.h.b16 %v491
    %v3344 = vunpack.c.l.b16 %v492
    %v3345 = vunpack.c.h.b16 %v492
    %v3346 = vunpack.c.l.b16 %v493
    %v3347 = vunpack.c.h.b16 %v493
    %v3348 = vunpack.c.l.b16 %v494
    %v3349 = vunpack.c.h.b16 %v494
    %v3350 = vunpack.c.l.b16 %v495
    %v3351 = vunpack.c.h.b16 %v495
    %v3352 = vunpack.c.l.b16 %v496
    %v3353 = vunpack.c.h.b16 %v496
    %v3354 = vunpack.c.l.b16 %v497
    %v3355 = vunpack.c.h.b16 %v497
    %v3356 = vunpack.c.l.b16 %v498
    %v3357 = vunpack.c.h.b16 %v498
    %v3358 = vunpack.c.l.b16 %v499
    %v3359 = vunpack.c.h.b16 %v499
    %v3360 = vunpack.c.l.b16 %v500
    %v3361 = vunpack.c.h.b16 %v500
    %v3362 = vunpack.c.l.b16 %v501
    %v3363 = vunpack.c.h.b16 %v501
    %v3364 = vunpack.c.l.b16 %v502
    %v3365 = vunpack.c.h.b16 %v502
    %v3366 = vunpack.c.l.b16 %v503
    %v3367 = vunpack.c.h.b16 %v503
    %v3368 = vunpack.c.l.b16 %v504
    %v3369 = vunpack.c.h.b16 %v504
    %v3370 = vunpack.c.l.b16 %v505
    %v3371 = vunpack.c.h.b16 %v505
    %v3372 = vunpack.c.l.b16 %v506
    %v3373 = vunpack.c.h.b16 %v506
    %v3374 = vunpack.c.l.b16 %v507
    %v3375 = vunpack.c.h.b16 %v507
    %v3376 = vunpack.c.l.b16 %v508
    %v3377 = vunpack.c.h.b16 %v508
    %v3378 = vunpack.c.l.b16 %v509
    %v3379 = vunpack.c.h.b16 %v509
    %v3380 = vunpack.c.l.b16 %v510
    %v3381 = vunpack.c.h.b16 %v510
    %v3382 = vunpack.c.l.b16 %v511
    %v3383 = vunpack.c.h.b16 %v511
    %v3384 = vunpack.c.l.b16 %v512
    %v3385 = vunpack.c.h.b16 %v512
    %v3386 = vunpack.c.l.b16 %v513
    %v3387 = vunpack.c.h.b16 %v513
    %v3388 = vunpack.c.l.b16 %v514
    %v3389 = vunpack.c.h.b16 %v514
    %v3390 = vunpack.c.l.b16 %v515
    %v3391 = vunpack.c.h.b16 %v515
    %v3392 = vunpack.c.l.b16 %v516
    %v3393 = vunpack.c.h.b16 %v516
    %v3394 = vunpack.c.l.b16 %v517
    %v3395 = vunpack.c.h.b16 %v517
    %v3396 = vunpack.c.l.b16 %v518
    %v3397 = vunpack.c.h.b16 %v518
    %v3398 = vunpack.c.l.b16 %v519
    %v3399 = vunpack.c.h.b16 %v519
    %v3400 = vunpack.c.l.b16 %v520
    %v3401 = vunpack.c.h.b16 %v520
    %v3402 = vunpack.c.l.b16 %v521
    %v3403 = vunpack.c.h.b16 %v521
    %v3404 = vunpack.c.l.b16 %v522
    %v3405 = vunpack.c.h.b16 %v522
    %v3406 = vunpack.c.l.b16 %v523
    %v3407 = vunpack.c.h.b16 %v523
    %v3408 = vunpack.c.l.b16 %v524
    %v3409 = vunpack.c.h.b16 %v524
    %v3410 = vunpack.c.l.b16 %v525
    %v3411 = vunpack.c.h.b16 %v525
    %v3412 = vunpack.c.l.b16 %v526
    %v3413 = vunpack.c.h.b16 %v526
    %v3414 = vunpack.c.l.b16 %v527
    %v3415 = vunpack.c.h.b16 %v527
    %v3416 = vunpack.c.l.b16 %v528
    %v3417 = vunpack.c.h.b16 %v528
    %v3418 = vunpack.c.l.b16 %v529
    %v3419 = vunpack.c.h.b16 %v529
    %v3420 = vunpack.c.l.b16 %v530
    %v3421 = vunpack.c.h.b16 %v530
    %v3422 = vunpack.c.l.b16 %v531
    %v3423 = vunpack.c.h.b16 %v531
    %v3424 = vunpack.c.l.b16 %v532
    %v3425 = vunpack.c.h.b16 %v532
    %v3426 = vunpack.c.l.b16 %v533
    %v3427 = vunpack.c.h.b16 %v533
    %v3428 = vunpack.c.l.b16 %v534
    %v3429 = vunpack.c.h.b16 %v534
    %v3430 = vunpack.c.l.b16 %v535
    %v3431 = vunpack.c.h.b16 %v535
    %v3432 = vunpack.c.l.b16 %v536
    %v3433 = vunpack.c.h.b16 %v536
    %v3434 = vunpack.c.l.b16 %v537
    %v3435 = vunpack.c.h.b16 %v537
    %v3436 = vunpack.c.l.b16 %v538
    %v3437 = vunpack.c.h.b16 %v538
    %v3438 = vunpack.c.l.b16 %v539
    %v3439 = vunpack.c.h.b16 %v539
    %v3440 = vunpack.c.l.b16 %v540
    %v3441 = vunpack.c.h.b16 %v540
    %v3442 = vunpack.c.l.b16 %v541
    %v3443 = vunpack.c.h.b16 %v541
    %v3444 = vunpack.c.l.b16 %v542
    %v3445 = vunpack.c.h.b16 %v542
    %v3446 = vunpack.c.l.b16 %v543
    %v3447 = vunpack.c.h.b16 %v543
    %v3448 = vunpack.c.l.b16 %v544
    %v3449 = vunpack.c.h.b16 %v544
    %v3450 = vunpack.c.l.b16 %v545
    %v3451 = vunpack.c.h.b16 %v545
    %v3452 = vunpack.c.l.b16 %v546
    %v3453 = vunpack.c.h.b16 %v546
    %v3454 = vunpack.c.l.b16 %v547
    %v3455 = vunpack.c.h.b16 %v547
    %v3456 = vunpack.c.l.b16 %v548
    %v3457 = vunpack.c.h.b16 %v548
    %v3458 = vunpack.c.l.b16 %v549
    %v3459 = vunpack.c.h.b16 %v549
    %v3460 = vunpack.c.l.b16 %v550
    %v3461 = vunpack.c.h.b16 %v550
    %v3462 = vunpack.c.l.b16 %v551
    %v3463 = vunpack.c.h.b16 %v551
    %v3464 = vunpack.c.l.b16 %v552
    %v3465 = vunpack.c.h.b16 %v552
    %v3466 = vunpack.c.l.b16 %v553
    %v3467 = vunpack.c.h.b16 %v553
    %v3468 = vunpack.c.l.b16 %v554
    %v3469 = vunpack.c.h.b16 %v554
    %v3470 = vunpack.c.l.b16 %v555
    %v3471 = vunpack.c.h.b16 %v555
    %v3472 = vunpack.c.l.b16 %v556
    %v3473 = vunpack.c.h.b16 %v556
    %v3474 = vunpack.c.l.b16 %v557
    %v3475 = vunpack.c.h.b16 %v557
    %v3476 = vunpack.c.l.b16 %v558
    %v3477 = vunpack.c.h.b16 %v558
    %v3478 = vunpack.c.l.b16 %v559
    %v3479 = vunpack.c.h.b16 %v559
    %v3480 = vunpack.c.l.b16 %v560
    %v3481 = vunpack.c.h.b16 %v560
    %v3482 = vunpack.c.l.b16 %v561
    %v3483 = vunpack.c.h.b16 %v561
    %v3484 = vunpack.c.l.b16 %v562
    %v3485 = vunpack.c.h.b16 %v562
    %v3486 = vunpack.c.l.b16 %v563
    %v3487 = vunpack.c.h.b16 %v563
    %v3488 = vunpack.c.l.b16 %v564
    %v3489 = vunpack.c.h.b16 %v564
    %v3490 = vunpack.c.l.b16 %v565
    %v3491 = vunpack.c.h.b16 %v565
    %v3492 = vunpack.c.l.b16 %v566
    %v3493 = vunpack.c.h.b16 %v566
    %v3494 = vunpack.c.l.b16 %v567
    %v3495 = vunpack.c.h.b16 %v567
    %v3496 = vunpack.c.l.b16 %v568
    %v3497 = vunpack.c.h.b16 %v568
    %v3498 = vunpack.c.l.b16 %v569
    %v3499 = vunpack.c.h.b16 %v569
    %v3500 = vunpack.c.l.b16 %v570
    %v3501 = vunpack.c.h.b16 %v570
    %v3502 = vunpack.c.l.b16 %v571
    %v3503 = vunpack.c.h.b16 %v571
    %v3504 = vunpack.c.l.b16 %v572
    %v3505 = vunpack.c.h.b16 %v572
    %v3506 = vunpack.c.l.b16 %v573
    %v3507 = vunpack.c.h.b16 %v573
    %v3508 = vunpack.c.l.b16 %v574
    %v3509 = vunpack.c.h.b16 %v574
    %v3510 = vunpack.c.l.b16 %v575
    %v3511 = vunpack.c.h.b16 %v575
    %v3512 = vunpack.c.l.b16 %v576
    %v3513 = vunpack.c.h.b16 %v576
    %v3514 = vunpack.c.l.b16 %v577
    %v3515 = vunpack.c.h.b16 %v577
    %v3516 = vunpack.c.l.b16 %v578
    %v3517 = vunpack.c.h.b16 %v578
    %v3518 = vunpack.c.l.b16 %v579
    %v3519 = vunpack.c.h.b16 %v579
    %v3520 = vunpack.c.l.b16 %v580
    %v3521 = vunpack.c.h.b16 %v580
    %v3522 = vunpack.c.l.b16 %v581
    %v3523 = vunpack.c.h.b16 %v581
    %v3524 = vunpack.c.l.b16 %v582
    %v3525 = vunpack.c.h.b16 %v582
    %v3526 = vunpack.c.l.b16 %v583
    %v3527 = vunpack.c.h.b16 %v583
    %v3528 = vunpack.c.l.b16 %v584
    %v3529 = vunpack.c.h.b16 %v584
    %v3530 = vunpack.c.l.b16 %v585
    %v3531 = vunpack.c.h.b16 %v585
    %v3532 = vunpack.c.l.b16 %v586
    %v3533 = vunpack.c.h.b16 %v586
    %v3534 = vunpack.c.l.b16 %v587
    %v3535 = vunpack.c.h.b16 %v587
    %v3536 = vunpack.c.l.b16 %v588
    %v3537 = vunpack.c.h.b16 %v588
    %v3538 = vunpack.c.l.b16 %v589
    %v3539 = vunpack.c.h.b16 %v589
    %v3540 = vunpack.c.l.b16 %v590
    %v3541 = vunpack.c.h.b16 %v590
    %v3542 = vunpack.c.l.b16 %v591
    %v3543 = vunpack.c.h.b16 %v591
    %v3544 = vunpack.c.l.b16 %v592
    %v3545 = vunpack.c.h.b16 %v592
    %v3546 = vunpack.c.l.b16 %v593
    %v3547 = vunpack.c.h.b16 %v593
    %v3548 = vunpack.c.l.b16 %v594
    %v3549 = vunpack.c.h.b16 %v594
    %v3550 = vunpack.c.l.b16 %v595
    %v3551 = vunpack.c.h.b16 %v595
    %v3552 = vunpack.c.l.b16 %v596
    %v3553 = vunpack.c.h.b16 %v596
    %v3554 = vunpack.c.l.b16 %v597
    %v3555 = vunpack.c.h.b16 %v597
    %v3556 = vunpack.c.l.b16 %v598
    %v3557 = vunpack.c.h.b16 %v598
    %v3558 = vunpack.c.l.b16 %v599
    %v3559 = vunpack.c.h.b16 %v599
    %v3560 = vunpack.c.l.b16 %v600
    %v3561 = vunpack.c.h.b16 %v600
    %v3562 = vunpack.c.l.b16 %v601
    %v3563 = vunpack.c.h.b16 %v601
    %v3564 = vunpack.c.l.b16 %v602
    %v3565 = vunpack.c.h.b16 %v602
    %v3566 = vunpack.c.l.b16 %v603
    %v3567 = vunpack.c.h.b16 %v603
    %v3568 = vunpack.c.l.b16 %v604
    %v3569 = vunpack.c.h.b16 %v604
    %v3570 = vunpack.c.l.b16 %v605
    %v3571 = vunpack.c.h.b16 %v605
    %v3572 = vunpack.c.l.b16 %v606
    %v3573 = vunpack.c.h.b16 %v606
    %v3574 = vunpack.c.l.b16 %v607
    %v3575 = vunpack.c.h.b16 %v607
    %v3576 = vunpack.c.l.b16 %v608
    %v3577 = vunpack.c.h.b16 %v608
    %v3578 = vunpack.c.l.b16 %v609
    %v3579 = vunpack.c.h.b16 %v609
    %v3580 = vunpack.c.l.b16 %v610
    %v3581 = vunpack.c.h.b16 %v610
    %v3582 = vunpack.c.l.b16 %v611
    %v3583 = vunpack.c.h.b16 %v611
    %v3584 = vunpack.c.l.b16 %v612
    %v3585 = vunpack.c.h.b16 %v612
    %v3586 = vunpack.c.l.b16 %v613
    %v3587 = vunpack.c.h.b16 %v613
    %v3588 = vunpack.c.l.b16 %v614
    %v3589 = vunpack.c.h.b16 %v614
    %v3590 = vunpack.c.l.b16 %v615
    %v3591 = vunpack.c.h.b16 %v615
    %v3592 = vunpack.c.l.b16 %v616
    %v3593 = vunpack.c.h.b16 %v616
    %v3594 = vunpack.c.l.b16 %v617
    %v3595 = vunpack.c.h.b16 %v617
    %v3596 = vunpack.c.l.b16 %v618
    %v3597 = vunpack.c.h.b16 %v618
    %v3598 = vunpack.c.l.b16 %v619
    %v3599 = vunpack.c.h.b16 %v619
    %v3600 = vunpack.c.l.b16 %v620
    %v3601 = vunpack.c.h.b16 %v620
    %v3602 = vunpack.c.l.b16 %v621
    %v3603 = vunpack.c.h.b16 %v621
    %v3604 = vunpack.c.l.b16 %v622
    %v3605 = vunpack.c.h.b16 %v622
    %v3606 = vunpack.c.l.b16 %v623
    %v3607 = vunpack.c.h.b16 %v623
    %v3608 = vunpack.c.l.b16 %v624
    %v3609 = vunpack.c.h.b16 %v624
    %v3610 = vunpack.c.l.b16 %v625
    %v3611 = vunpack.c.h.b16 %v625
    %v3612 = vunpack.c.l.b16 %v626
    %v3613 = vunpack.c.h.b16 %v626
    %v3614 = vunpack.c.l.b16 %v627
    %v3615 = vunpack.c.h.b16 %v627
    %v3616 = vunpack.c.l.b16 %v628
    %v3617 = vunpack.c.h.b16 %v628
    %v3618 = vunpack.c.l.b16 %v629
    %v3619 = vunpack.c.h.b16 %v629
    %v3620 = vunpack.c.l.b16 %v630
    %v3621 = vunpack.c.h.b16 %v630
    %v3622 = vunpack.c.l.b16 %v631
    %v3623 = vunpack.c.h.b16 %v631
    %v3624 = vunpack.c.l.b16 %v632
    %v3625 = vunpack.c.h.b16 %v632
    %v3626 = vunpack.c.l.b16 %v633
    %v3627 = vunpack.c.h.b16 %v633
    %v3628 = vunpack.c.l.b16 %v634
    %v3629 = vunpack.c.h.b16 %v634
    %v3630 = vunpack.c.l.b16 %v635
    %v3631 = vunpack.c.h.b16 %v635
    %v3632 = vunpack.c.l.b16 %v636
    %v3633 = vunpack.c.h.b16 %v636
    %v3634 = vunpack.c.l.b16 %v637
    %v3635 = vunpack.c.h.b16 %v637
    %v3636 = vunpack.c.l.b16 %v638
    %v3637 = vunpack.c.h.b16 %v638
    %v3638 = vunpack.c.l.b16 %v639
    %v3639 = vunpack.c.h.b16 %v639
    %v3640 = vunpack.c.l.b16 %v640
    %v3641 = vunpack.c.h.b16 %v640
    %v3642 = vunpack.c.l.b16 %v641
    %v3643 = vunpack.c.h.b16 %v641
    %v3644 = vunpack.c.l.b16 %v642
    %v3645 = vunpack.c.h.b16 %v642
    %v3646 = vunpack.c.l.b16 %v643
    %v3647 = vunpack.c.h.b16 %v643
    %v3648 = vunpack.c.l.b16 %v644
    %v3649 = vunpack.c.h.b16 %v644
    %v3650 = vunpack.c.l.b16 %v645
    %v3651 = vunpack.c.h.b16 %v645
    %v3652 = vunpack.c.l.b16 %v646
    %v3653 = vunpack.c.h.b16 %v646
    %v3654 = vunpack.c.l.b16 %v647
    %v3655 = vunpack.c.h.b16 %v647
    %v3656 = vunpack.c.l.b16 %v648
    %v3657 = vunpack.c.h.b16 %v648
    %v3658 = vunpack.c.l.b16 %v649
    %v3659 = vunpack.c.h.b16 %v649
    %v3660 = vunpack.c.l.b16 %v650
    %v3661 = vunpack.c.h.b16 %v650
    %v3662 = vunpack.c.l.b16 %v651
    %v3663 = vunpack.c.h.b16 %v651
    %v3664 = vunpack.c.l.b16 %v652
    %v3665 = vunpack.c.h.b16 %v652
    %v3666 = vunpack.c.l.b16 %v653
    %v3667 = vunpack.c.h.b16 %v653
    %v3668 = vunpack.c.l.b16 %v654
    %v3669 = vunpack.c.h.b16 %v654
    %v3670 = vunpack.c.l.b16 %v655
    %v3671 = vunpack.c.h.b16 %v655
    %v3672 = vunpack.c.l.b16 %v656
    %v3673 = vunpack.c.h.b16 %v656
    %v3674 = vunpack.c.l.b16 %v657
    %v3675 = vunpack.c.h.b16 %v657
    %v3676 = vunpack.c.l.b16 %v658
    %v3677 = vunpack.c.h.b16 %v658
    %v3678 = vunpack.c.l.b16 %v659
    %v3679 = vunpack.c.h.b16 %v659
    %v3680 = vunpack.c.l.b16 %v660
    %v3681 = vunpack.c.h.b16 %v660
    %v3682 = vunpack.c.l.b16 %v661
    %v3683 = vunpack.c.h.b16 %v661
    %v3684 = vunpack.c.l.b16 %v662
    %v3685 = vunpack.c.h.b16 %v662
    %v3686 = vunpack.c.l.b16 %v663
    %v3687 = vunpack.c.h.b16 %v663
    %v3688 = vunpack.c.l.b16 %v664
    %v3689 = vunpack.c.h.b16 %v664
    %v3690 = vunpack.c.l.b16 %v665
    %v3691 = vunpack.c.h.b16 %v665
    %v3692 = vunpack.c.l.b16 %v666
    %v3693 = vunpack.c.h.b16 %v666
    %v3694 = vunpack.c.l.b16 %v667
    %v3695 = vunpack.c.h.b16 %v667
    %v3696 = vunpack.c.l.b16 %v668
    %v3697 = vunpack.c.h.b16 %v668
    %v3698 = vunpack.c.l.b16 %v669
    %v3699 = vunpack.c.h.b16 %v669
    %v3700 = vunpack.c.l.b16 %v670
    %v3701 = vunpack.c.h.b16 %v670
    %v3702 = vunpack.c.l.b16 %v671
    %v3703 = vunpack.c.h.b16 %v671
    %v3704 = vunpack.c.l.b16 %v672
    %v3705 = vunpack.c.h.b16 %v672
    %v3706 = vunpack.c.l.b16 %v673
    %v3707 = vunpack.c.h.b16 %v673
    %v3708 = vunpack.c.l.b16 %v674
    %v3709 = vunpack.c.h.b16 %v674
    %v3710 = vunpack.c.l.b16 %v675
    %v3711 = vunpack.c.h.b16 %v675
    %v3712 = vunpack.c.l.b16 %v676
    %v3713 = vunpack.c.h.b16 %v676
    %v3714 = vunpack.c.l.b16 %v677
    %v3715 = vunpack.c.h.b16 %v677
    %v3716 = vunpack.c.l.b16 %v678
    %v3717 = vunpack.c.h.b16 %v678
    %v3718 = vunpack.c.l.b16 %v679
    %v3719 = vunpack.c.h.b16 %v679
    %v3720 = vunpack.c.l.b16 %v680
    %v3721 = vunpack.c.h.b16 %v680
    %v3722 = vunpack.c.l.b16 %v681
    %v3723 = vunpack.c.h.b16 %v681
    %v3724 = vunpack.c.l.b16 %v682
    %v3725 = vunpack.c.h.b16 %v682
    %v3726 = vunpack.c.l.b16 %v683
    %v3727 = vunpack.c.h.b16 %v683
    %v3728 = vunpack.c.l.b16 %v684
    %v3729 = vunpack.c.h.b16 %v684
    %v3730 = vunpack.c.l.b16 %v685
    %v3731 = vunpack.c.h.b16 %v685
    %v3732 = vunpack.c.l.b16 %v686
    %v3733 = vunpack.c.h.b16 %v686
    %v3734 = vunpack.c.l.b16 %v687
    %v3735 = vunpack.c.h.b16 %v687
    %v3736 = vunpack.c.l.b16 %v688
    %v3737 = vunpack.c.h.b16 %v688
    %v3738 = vunpack.c.l.b16 %v689
    %v3739 = vunpack.c.h.b16 %v689
    %v3740 = vunpack.c.l.b16 %v690
    %v3741 = vunpack.c.h.b16 %v690
    %v3742 = vunpack.c.l.b16 %v691
    %v3743 = vunpack.c.h.b16 %v691
    %v3744 = vunpack.c.l.b16 %v692
    %v3745 = vunpack.c.h.b16 %v692
    %v3746 = vunpack.c.l.b16 %v693
    %v3747 = vunpack.c.h.b16 %v693
    %v3748 = vunpack.c.l.b16 %v694
    %v3749 = vunpack.c.h.b16 %v694
    %v3750 = vunpack.c.l.b16 %v695
    %v3751 = vunpack.c.h.b16 %v695
    %v3752 = vunpack.c.l.b16 %v696
    %v3753 = vunpack.c.h.b16 %v696
    %v3754 = vunpack.c.l.b16 %v697
    %v3755 = vunpack.c.h.b16 %v697
    %v3756 = vunpack.c.l.b16 %v698
    %v3757 = vunpack.c.h.b16 %v698
    %v3758 = vunpack.c.l.b16 %v699
    %v3759 = vunpack.c.h.b16 %v699
    %v3760 = vunpack.c.l.b16 %v700
    %v3761 = vunpack.c.h.b16 %v700
    %v3762 = vunpack.c.l.b16 %v701
    %v3763 = vunpack.c.h.b16 %v701
    %v3764 = vunpack.c.l.b16 %v702
    %v3765 = vunpack.c.h.b16 %v702
    %v3766 = vunpack.c.l.b16 %v703
    %v3767 = vunpack.c.h.b16 %v703
    %v3768 = vunpack.c.l.b16 %v704
    %v3769 = vunpack.c.h.b16 %v704
    %v3770 = vunpack.c.l.b16 %v705
    %v3771 = vunpack.c.h.b16 %v705
    %v3772 = vunpack.c.l.b16 %v706
    %v3773 = vunpack.c.h.b16 %v706
    %v3774 = vunpack.c.l.b16 %v707
    %v3775 = vunpack.c.h.b16 %v707
    %v3776 = vunpack.c.l.b16 %v708
    %v3777 = vunpack.c.h.b16 %v708
    %v3778 = vunpack.c.l.b16 %v709
    %v3779 = vunpack.c.h.b16 %v709
    %v3780 = vunpack.c.l.b16 %v710
    %v3781 = vunpack.c.h.b16 %v710
    %v3782 = vunpack.c.l.b16 %v711
    %v3783 = vunpack.c.h.b16 %v711
    %v3784 = vunpack.c.l.b16 %v712
    %v3785 = vunpack.c.h.b16 %v712
    %v3786 = vunpack.c.l.b16 %v713
    %v3787 = vunpack.c.h.b16 %v713
    %v3788 = vunpack.c.l.b16 %v714
    %v3789 = vunpack.c.h.b16 %v714
    %v3790 = vunpack.c.l.b16 %v715
    %v3791 = vunpack.c.h.b16 %v715
    %v3792 = vunpack.c.l.b16 %v716
    %v3793 = vunpack.c.h.b16 %v716
    %v3794 = vunpack.c.l.b16 %v717
    %v3795 = vunpack.c.h.b16 %v717
    %v3796 = vunpack.c.l.b16 %v718
    %v3797 = vunpack.c.h.b16 %v718
    %v3798 = vunpack.c.l.b16 %v719
    %v3799 = vunpack.c.h.b16 %v719
    %v3800 = vunpack.c.l.b16 %v720
    %v3801 = vunpack.c.h.b16 %v720
    %v3802 = vunpack.c.l.b16 %v721
    %v3803 = vunpack.c.h.b16 %v721
    %v3804 = vunpack.c.l.b16 %v722
    %v3805 = vunpack.c.h.b16 %v722
    %v3806 = vunpack.c.l.b16 %v723
    %v3807 = vunpack.c.h.b16 %v723
    %v3808 = vunpack.c.l.b16 %v724
    %v3809 = vunpack.c.h.b16 %v724
    %v3810 = vunpack.c.l.b16 %v725
    %v3811 = vunpack.c.h.b16 %v725
    %v3812 = vunpack.c.l.b16 %v726
    %v3813 = vunpack.c.h.b16 %v726
    %v3814 = vunpack.c.l.b16 %v727
    %v3815 = vunpack.c.h.b16 %v727
    %v3816 = vunpack.c.l.b16 %v728
    %v3817 = vunpack.c.h.b16 %v728
    %v3818 = vunpack.c.l.b16 %v729
    %v3819 = vunpack.c.h.b16 %v729
    %v3820 = vunpack.c.l.b16 %v730
    %v3821 = vunpack.c.h.b16 %v730
    %v3822 = vunpack.c.l.b16 %v731
    %v3823 = vunpack.c.h.b16 %v731
    %v3824 = vunpack.c.l.b16 %v732
    %v3825 = vunpack.c.h.b16 %v732
    %v3826 = vunpack.c.l.b16 %v733
    %v3827 = vunpack.c.h.b16 %v733
    %v3828 = vunpack.c.l.b16 %v734
    %v3829 = vunpack.c.h.b16 %v734
    %v3830 = vunpack.c.l.b16 %v735
    %v3831 = vunpack.c.h.b16 %v735
    %v3832 = vunpack.c.l.b16 %v736
    %v3833 = vunpack.c.h.b16 %v736
    %v3834 = vunpack.c.l.b16 %v737
    %v3835 = vunpack.c.h.b16 %v737
    %v3836 = vunpack.c.l.b16 %v738
    %v3837 = vunpack.c.h.b16 %v738
    %v3838 = vunpack.c.l.b16 %v739
    %v3839 = vunpack.c.h.b16 %v739
    %v3840 = vunpack.c.l.b16 %v740
    %v3841 = vunpack.c.h.b16 %v740
    %v3842 = vunpack.c.l.b16 %v741
    %v3843 = vunpack.c.h.b16 %v741
    %v3844 = vunpack.c.l.b16 %v742
    %v3845 = vunpack.c.h.b16 %v742
    %v3846 = vunpack.c.l.b16 %v743
    %v3847 = vunpack.c.h.b16 %v743
    %v3848 = vunpack.c.l.b16 %v744
    %v3849 = vunpack.c.h.b16 %v744
    %v3850 = vunpack.c.l.b16 %v745
    %v3851 = vunpack.c.h.b16 %v745
    %v3852 = vunpack.c.l.b16 %v746
    %v3853 = vunpack.c.h.b16 %v746
    %v3854 = vunpack.c.l.b16 %v747
    %v3855 = vunpack.c.h.b16 %v747
    %v3856 = vunpack.c.l.b16 %v748
    %v3857 = vunpack.c.h.b16 %v748
    %v3858 = vunpack.c.l.b16 %v749
    %v3859 = vunpack.c.h.b16 %v749
    %v3860 = vunpack.c.l.b16 %v750
    %v3861 = vunpack.c.h.b16 %v750
    %v3862 = vunpack.c.l.b16 %v751
    %v3863 = vunpack.c.h.b16 %v751
    %v3864 = vunpack.c.l.b16 %v752
    %v3865 = vunpack.c.h.b16 %v752
    %v3866 = vunpack.c.l.b16 %v753
    %v3867 = vunpack.c.h.b16 %v753
    %v3868 = vunpack.c.l.b16 %v754
    %v3869 = vunpack.c.h.b16 %v754
    %v3870 = vunpack.c.l.b16 %v755
    %v3871 = vunpack.c.h.b16 %v755
    %v3872 = vunpack.c.l.b16 %v756
    %v3873 = vunpack.c.h.b16 %v756
    %v3874 = vunpack.c.l.b16 %v757
    %v3875 = vunpack.c.h.b16 %v757
    %v3876 = vunpack.c.l.b16 %v758
    %v3877 = vunpack.c.h.b16 %v758
    %v3878 = vunpack.c.l.b16 %v759
    %v3879 = vunpack.c.h.b16 %v759
    %v3880 = vunpack.c.l.b16 %v760
    %v3881 = vunpack.c.h.b16 %v760
    %v3882 = vunpack.c.l.b16 %v761
    %v3883 = vunpack.c.h.b16 %v761
    %v3884 = vunpack.c.l.b16 %v762
    %v3885 = vunpack.c.h.b16 %v762
    %v3886 = vunpack.c.l.b16 %v763
    %v3887 = vunpack.c.h.b16 %v763
    %v3888 = vunpack.c.l.b16 %v764
    %v3889 = vunpack.c.h.b16 %v764
    %v3890 = vunpack.c.l.b16 %v765
    %v3891 = vunpack.c.h.b16 %v765
    %v3892 = vunpack.c.l.b16 %v766
    %v3893 = vunpack.c.h.b16 %v766
    %v3894 = vunpack.c.l.b16 %v767
    %v3895 = vunpack.c.h.b16 %v767
    %v3896 = vunpack.c.l.b16 %v768
    %v3897 = vunpack.c.h.b16 %v768
    %v3898 = vunpack.c.l.b16 %v769
    %v3899 = vunpack.c.h.b16 %v769
    %v3900 = vunpack.c.l.b16 %v770
    %v3901 = vunpack.c.h.b16 %v770
    %v3902 = vunpack.c.l.b16 %v771
    %v3903 = vunpack.c.h.b16 %v771
    %v3904 = vunpack.c.l.b16 %v772
    %v3905 = vunpack.c.h.b16 %v772
    %v3906 = vunpack.c.l.b16 %v773
    %v3907 = vunpack.c.h.b16 %v773
    %v3908 = vunpack.c.l.b16 %v774
    %v3909 = vunpack.c.h.b16 %v774
    %v3910 = vunpack.c.l.b16 %v775
    %v3911 = vunpack.c.h.b16 %v775
    %v3912 = vunpack.c.l.b16 %v776
    %v3913 = vunpack.c.h.b16 %v776
    %v3914 = vunpack.c.l.b16 %v777
    %v3915 = vunpack.c.h.b16 %v777
    %v3916 = vunpack.c.l.b16 %v778
    %v3917 = vunpack.c.h.b16 %v778
    %v3918 = vunpack.c.l.b16 %v779
    %v3919 = vunpack.c.h.b16 %v779
    %v3920 = vunpack.c.l.b16 %v780
    %v3921 = vunpack.c.h.b16 %v780
    %v3922 = vunpack.c.l.b16 %v781
    %v3923 = vunpack.c.h.b16 %v781
    %v3924 = vunpack.c.l.b16 %v782
    %v3925 = vunpack.c.h.b16 %v782
    %v3926 = vunpack.c.l.b16 %v783
    %v3927 = vunpack.c.h.b16 %v783
    %v3928 = vunpack.c.l.b16 %v784
    %v3929 = vunpack.c.h.b16 %v784
    %v3930 = vunpack.c.l.b16 %v785
    %v3931 = vunpack.c.h.b16 %v785
    %v3932 = vunpack.c.l.b16 %v786
    %v3933 = vunpack.c.h.b16 %v786
    %v3934 = vunpack.c.l.b16 %v787
    %v3935 = vunpack.c.h.b16 %v787
    %v3936 = vunpack.c.l.b16 %v788
    %v3937 = vunpack.c.h.b16 %v788
    %v3938 = vunpack.c.l.b16 %v789
    %v3939 = vunpack.c.h.b16 %v789
    %v3940 = vunpack.c.l.b16 %v790
    %v3941 = vunpack.c.h.b16 %v790
    %v3942 = vunpack.c.l.b16 %v791
    %v3943 = vunpack.c.h.b16 %v791
    %v3944 = vunpack.c.l.b16 %v792
    %v3945 = vunpack.c.h.b16 %v792
    %v3946 = vunpack.c.l.b16 %v793
    %v3947 = vunpack.c.h.b16 %v793
    %v3948 = vunpack.c.l.b16 %v794
    %v3949 = vunpack.c.h.b16 %v794
    %v3950 = vunpack.c.l.b16 %v795
    %v3951 = vunpack.c.h.b16 %v795
    %v3952 = vunpack.c.l.b16 %v796
    %v3953 = vunpack.c.h.b16 %v796
    %v3954 = vunpack.c.l.b16 %v797
    %v3955 = vunpack.c.h.b16 %v797
    %v3956 = vunpack.c.l.b16 %v798
    %v3957 = vunpack.c.h.b16 %v798
    %v3958 = vunpack.c.l.b16 %v799
    %v3959 = vunpack.c.h.b16 %v799
    %v3960 = vunpack.c.l.b16 %v800
    %v3961 = vunpack.c.h.b16 %v800
    %v3962 = vunpack.c.l.b16 %v801
    %v3963 = vunpack.c.h.b16 %v801
    %v3964 = vunpack.c.l.b16 %v802
    %v3965 = vunpack.c.h.b16 %v802
    %v3966 = vunpack.c.l.b16 %v803
    %v3967 = vunpack.c.h.b16 %v803
    %v3968 = vunpack.c.l.b16 %v804
    %v3969 = vunpack.c.h.b16 %v804
    %v3970 = vunpack.c.l.b16 %v805
    %v3971 = vunpack.c.h.b16 %v805
    %v3972 = vunpack.c.l.b16 %v806
    %v3973 = vunpack.c.h.b16 %v806
    %v3974 = vunpack.c.l.b16 %v807
    %v3975 = vunpack.c.h.b16 %v807
    %v3976 = vunpack.c.l.b16 %v808
    %v3977 = vunpack.c.h.b16 %v808
    %v3978 = vunpack.c.l.b16 %v809
    %v3979 = vunpack.c.h.b16 %v809
    %v3980 = vunpack.c.l.b16 %v810
    %v3981 = vunpack.c.h.b16 %v810
    %v3982 = vunpack.c.l.b16 %v811
    %v3983 = vunpack.c.h.b16 %v811
    %v3984 = vunpack.c.l.b16 %v812
    %v3985 = vunpack.c.h.b16 %v812
    %v3986 = vunpack.c.l.b16 %v813
    %v3987 = vunpack.c.h.b16 %v813
    %v3988 = vunpack.c.l.b16 %v814
    %v3989 = vunpack.c.h.b16 %v814
    %v3990 = vunpack.c.l.b16 %v815
    %v3991 = vunpack.c.h.b16 %v815
    %v3992 = vunpack.c.l.b16 %v816
    %v3993 = vunpack.c.h.b16 %v816
    %v3994 = vunpack.c.l.b16 %v817
    %v3995 = vunpack.c.h.b16 %v817
    %v3996 = vunpack.c.l.b16 %v818
    %v3997 = vunpack.c.h.b16 %v818
    %v3998 = vunpack.c.l.b16 %v819
    %v3999 = vunpack.c.h.b16 %v819
    %v4000 = vunpack.c.l.b16 %v820
    %v4001 = vunpack.c.h.b16 %v820
    %v4002 = vunpack.c.l.b16 %v821
    %v4003 = vunpack.c.h.b16 %v821
    %v4004 = vunpack.c.l.b16 %v822
    %v4005 = vunpack.c.h.b16 %v822
    %v4006 = vunpack.c.l.b16 %v823
    %v4007 = vunpack.c.h.b16 %v823
    %v4008 = vunpack.c.l.b16 %v824
    %v4009 = vunpack.c.h.b16 %v824
    %v4010 = vunpack.c.l.b16 %v825
    %v4011 = vunpack.c.h.b16 %v825
    %v4012 = vunpack.c.l.b16 %v826
    %v4013 = vunpack.c.h.b16 %v826
    %v4014 = vunpack.c.l.b16 %v827
    %v4015 = vunpack.c.h.b16 %v827
    %v4016 = vunpack.c.l.b16 %v828
    %v4017 = vunpack.c.h.b16 %v828
    %v4018 = vunpack.c.l.b16 %v829
    %v4019 = vunpack.c.h.b16 %v829
    %v4020 = vunpack.c.l.b16 %v830
    %v4021 = vunpack.c.h.b16 %v830
    %v4022 = vunpack.c.l.b16 %v831
    %v4023 = vunpack.c.h.b16 %v831
    %v4024 = vunpack.c.l.b16 %v832
    %v4025 = vunpack.c.h.b16 %v832
    %v4026 = vunpack.c.l.b16 %v833
    %v4027 = vunpack.c.h.b16 %v833
    %v4028 = vunpack.c.l.b16 %v834
    %v4029 = vunpack.c.h.b16 %v834
    %v4030 = vunpack.c.l.b16 %v835
    %v4031 = vunpack.c.h.b16 %v835
    %v4032 = vunpack.c.l.b16 %v836
    %v4033 = vunpack.c.h.b16 %v836
    %v4034 = vunpack.c.l.b16 %v837
    %v4035 = vunpack.c.h.b16 %v837
    %v4036 = vunpack.c.l.b16 %v838
    %v4037 = vunpack.c.h.b16 %v838
    %v4038 = vunpack.c.l.b16 %v839
    %v4039 = vunpack.c.h.b16 %v839
    %v4040 = vunpack.c.l.b16 %v840
    %v4041 = vunpack.c.h.b16 %v840
    %v4042 = vunpack.c.l.b16 %v841
    %v4043 = vunpack.c.h.b16 %v841
    %v4044 = vunpack.c.l.b16 %v842
    %v4045 = vunpack.c.h.b16 %v842
    %v4046 = vunpack.c.l.b16 %v843
    %v4047 = vunpack.c.h.b16 %v843
    %v4048 = vunpack.c.l.b16 %v844
    %v4049 = vunpack.c.h.b16 %v844
    %v4050 = vunpack.c.l.b16 %v845
    %v4051 = vunpack.c.h.b16 %v845
    %v4052 = vunpack.c.l.b16 %v846
    %v4053 = vunpack.c.h.b16 %v846
    %v4054 = vunpack.c.l.b16 %v847
    %v4055 = vunpack.c.h.b16 %v847
    %v4056 = vunpack.c.l.b16 %v848
    %v4057 = vunpack.c.h.b16 %v848
    %v4058 = vunpack.c.l.b16 %v849
    %v4059 = vunpack.c.h.b16 %v849
    %v4060 = vunpack.c.l.b16 %v850
    %v4061 = vunpack.c.h.b16 %v850
    %v4062 = vunpack.c.l.b16 %v851
    %v4063 = vunpack.c.h.b16 %v851
    %v4064 = vunpack.c.l.b16 %v852
    %v4065 = vunpack.c.h.b16 %v852
    %v4066 = vunpack.c.l.b16 %v853
    %v4067 = vunpack.c.h.b16 %v853
    %v4068 = vunpack.c.l.b16 %v854
    %v4069 = vunpack.c.h.b16 %v854
    %v4070 = vunpack.c.l.b16 %v855
    %v4071 = vunpack.c.h.b16 %v855
    %v4072 = vunpack.c.l.b16 %v856
    %v4073 = vunpack.c.h.b16 %v856
    %v4074 = vunpack.c.l.b16 %v857
    %v4075 = vunpack.c.h.b16 %v857
    %v4076 = vunpack.c.l.b16 %v858
    %v4077 = vunpack.c.h.b16 %v858
    %v4078 = vunpack.c.l.b16 %v859
    %v4079 = vunpack.c.h.b16 %v859
    %v4080 = vunpack.c.l.b16 %v860
    %v4081 = vunpack.c.h.b16 %v860
    %v4082 = vunpack.c.l.b16 %v861
    %v4083 = vunpack.c.h.b16 %v861
    %v4084 = vunpack.c.l.b16 %v862
    %v4085 = vunpack.c.h.b16 %v862
    %v4086 = vunpack.c.l.b16 %v863
    %v4087 = vunpack.c.h.b16 %v863
    %v4088 = vunpack.c.l.b16 %v864
    %v4089 = vunpack.c.h.b16 %v864
    %v4090 = vunpack.c.l.b16 %v865
    %v4091 = vunpack.c.h.b16 %v865
    %v4092 = vunpack.c.l.b16 %v866
    %v4093 = vunpack.c.h.b16 %v866
    %v4094 = vunpack.c.l.b16 %v867
    %v4095 = vunpack.c.h.b16 %v867
    %v4096 = vunpack.c.l.b16 %v868
    %v4097 = vunpack.c.h.b16 %v868
    %v4098 = vunpack.c.l.b16 %v869
    %v4099 = vunpack.c.h.b16 %v869
    %v4100 = vunpack.c.l.b16 %v870
    %v4101 = vunpack.c.h.b16 %v870
    %v4102 = vunpack.c.l.b16 %v871
    %v4103 = vunpack.c.h.b16 %v871
    %v4104 = vunpack.c.l.b16 %v872
    %v4105 = vunpack.c.h.b16 %v872
    %v4106 = vunpack.c.l.b16 %v873
    %v4107 = vunpack.c.h.b16 %v873
    %v4108 = vunpack.c.l.b16 %v874
    %v4109 = vunpack.c.h.b16 %v874
    %v4110 = vunpack.c.l.b16 %v875
    %v4111 = vunpack.c.h.b16 %v875
    %v4112 = vunpack.c.l.b16 %v876
    %v4113 = vunpack.c.h.b16 %v876
    %v4114 = vunpack.c.l.b16 %v877
    %v4115 = vunpack.c.h.b16 %v877
    %v4116 = vunpack.c.l.b16 %v878
    %v4117 = vunpack.c.h.b16 %v878
    %v4118 = vunpack.c.l.b16 %v879
    %v4119 = vunpack.c.h.b16 %v879
    %v4120 = vunpack.c.l.b16 %v880
    %v4121 = vunpack.c.h.b16 %v880
    %v4122 = vunpack.c.l.b16 %v881
    %v4123 = vunpack.c.h.b16 %v881
    %v4124 = vunpack.c.l.b16 %v882
    %v4125 = vunpack.c.h.b16 %v882
    %v4126 = vunpack.c.l.b16 %v883
    %v4127 = vunpack.c.h.b16 %v883
    %v4128 = vunpack.c.l.b16 %v884
    %v4129 = vunpack.c.h.b16 %v884
    %v4130 = vunpack.c.l.b16 %v885
    %v4131 = vunpack.c.h.b16 %v885
    %v4132 = vunpack.c.l.b16 %v886
    %v4133 = vunpack.c.h.b16 %v886
    %v4134 = vunpack.c.l.b16 %v887
    %v4135 = vunpack.c.h.b16 %v887
    %v4136 = vunpack.c.l.b16 %v888
    %v4137 = vunpack.c.h.b16 %v888
    %v4138 = vunpack.c.l.b16 %v889
    %v4139 = vunpack.c.h.b16 %v889
    %v4140 = vunpack.c.l.b16 %v890
    %v4141 = vunpack.c.h.b16 %v890
    %v4142 = vunpack.c.l.b16 %v891
    %v4143 = vunpack.c.h.b16 %v891
    %v4144 = vunpack.c.l.b16 %v892
    %v4145 = vunpack.c.h.b16 %v892
    %v4146 = vunpack.c.l.b16 %v893
    %v4147 = vunpack.c.h.b16 %v893
    %v4148 = vunpack.c.l.b16 %v894
    %v4149 = vunpack.c.h.b16 %v894
    %v4150 = vunpack.c.l.b16 %v895
    %v4151 = vunpack.c.h.b16 %v895
    %v4152 = vunpack.c.l.b16 %v896
    %v4153 = vunpack.c.h.b16 %v896
    %v4154 = vunpack.c.l.b16 %v897
    %v4155 = vunpack.c.h.b16 %v897
    %v4156 = vunpack.c.l.b16 %v898
    %v4157 = vunpack.c.h.b16 %v898
    %v4158 = vunpack.c.l.b16 %v899
    %v4159 = vunpack.c.h.b16 %v899
    %v4160 = vunpack.c.l.b16 %v900
    %v4161 = vunpack.c.h.b16 %v900
    %v4162 = vunpack.c.l.b16 %v901
    %v4163 = vunpack.c.h.b16 %v901
    %v4164 = vunpack.c.l.b16 %v902
    %v4165 = vunpack.c.h.b16 %v902
    %v4166 = vunpack.c.l.b16 %v903
    %v4167 = vunpack.c.h.b16 %v903
    %v4168 = vunpack.c.l.b16 %v904
    %v4169 = vunpack.c.h.b16 %v904
    %v4170 = vunpack.c.l.b16 %v905
    %v4171 = vunpack.c.h.b16 %v905
    %v4172 = vunpack.c.l.b16 %v906
    %v4173 = vunpack.c.h.b16 %v906
    %v4174 = vunpack.c.l.b16 %v907
    %v4175 = vunpack.c.h.b16 %v907
    %v4176 = vunpack.c.l.b16 %v908
    %v4177 = vunpack.c.h.b16 %v908
    %v4178 = vunpack.c.l.b16 %v909
    %v4179 = vunpack.c.h.b16 %v909
    %v4180 = vunpack.c.l.b16 %v910
    %v4181 = vunpack.c.h.b16 %v910
    %v4182 = vunpack.c.l.b16 %v911
    %v4183 = vunpack.c.h.b16 %v911
    %v4184 = vunpack.c.l.b16 %v912
    %v4185 = vunpack.c.h.b16 %v912
    %v4186 = vunpack.c.l.b16 %v913
    %v4187 = vunpack.c.h.b16 %v913
    %v4188 = vunpack.c.l.b16 %v914
    %v4189 = vunpack.c.h.b16 %v914
    %v4190 = vunpack.c.l.b16 %v915
    %v4191 = vunpack.c.h.b16 %v915
    %v4192 = vunpack.c.l.b16 %v916
    %v4193 = vunpack.c.h.b16 %v916
    %v4194 = vunpack.c.l.b16 %v917
    %v4195 = vunpack.c.h.b16 %v917
    %v4196 = vunpack.c.l.b16 %v918
    %v4197 = vunpack.c.h.b16 %v918
    %v4198 = vunpack.c.l.b16 %v919
    %v4199 = vunpack.c.h.b16 %v919
    %v4200 = vunpack.c.l.b16 %v920
    %v4201 = vunpack.c.h.b16 %v920
    %v4202 = vunpack.c.l.b16 %v921
    %v4203 = vunpack.c.h.b16 %v921
    %v4204 = vunpack.c.l.b16 %v922
    %v4205 = vunpack.c.h.b16 %v922
    %v4206 = vunpack.c.l.b16 %v923
    %v4207 = vunpack.c.h.b16 %v923
    %v4208 = vunpack.c.l.b16 %v924
    %v4209 = vunpack.c.h.b16 %v924
    %v4210 = vunpack.c.l.b16 %v925
    %v4211 = vunpack.c.h.b16 %v925
    %v4212 = vunpack.c.l.b16 %v926
    %v4213 = vunpack.c.h.b16 %v926
    %v4214 = vunpack.c.l.b16 %v927
    %v4215 = vunpack.c.h.b16 %v927
    %v4216 = vunpack.c.l.b16 %v928
    %v4217 = vunpack.c.h.b16 %v928
    %v4218 = vunpack.c.l.b16 %v929
    %v4219 = vunpack.c.h.b16 %v929
    %v4220 = vunpack.c.l.b16 %v930
    %v4221 = vunpack.c.h.b16 %v930
    %v4222 = vunpack.c.l.b16 %v931
    %v4223 = vunpack.c.h.b16 %v931
    %v4224 = vunpack.c.l.b16 %v932
    %v4225 = vunpack.c.h.b16 %v932
    %v4226 = vunpack.c.l.b16 %v933
    %v4227 = vunpack.c.h.b16 %v933
    %v4228 = vunpack.c.l.b16 %v934
    %v4229 = vunpack.c.h.b16 %v934
    %v4230 = vunpack.c.l.b16 %v935
    %v4231 = vunpack.c.h.b16 %v935
    %v4232 = vunpack.c.l.b16 %v936
    %v4233 = vunpack.c.h.b16 %v936
    %v4234 = vunpack.c.l.b16 %v937
    %v4235 = vunpack.c.h.b16 %v937
    %v4236 = vunpack.c.l.b16 %v938
    %v4237 = vunpack.c.h.b16 %v938
    %v4238 = vunpack.c.l.b16 %v939
    %v4239 = vunpack.c.h.b16 %v939
    %v4240 = vunpack.c.l.b16 %v940
    %v4241 = vunpack.c.h.b16 %v940
    %v4242 = vunpack.c.l.b16 %v941
    %v4243 = vunpack.c.h.b16 %v941
    %v4244 = vunpack.c.l.b16 %v942
    %v4245 = vunpack.c.h.b16 %v942
    %v4246 = vunpack.c.l.b16 %v943
    %v4247 = vunpack.c.h.b16 %v943
    %v4248 = vunpack.c.l.b16 %v944
    %v4249 = vunpack.c.h.b16 %v944
    %v4250 = vunpack.c.l.b16 %v945
    %v4251 = vunpack.c.h.b16 %v945
    %v4252 = vunpack.c.l.b16 %v946
    %v4253 = vunpack.c.h.b16 %v946
    %v4254 = vunpack.c.l.b16 %v947
    %v4255 = vunpack.c.h.b16 %v947
    %v4256 = vunpack.c.l.b16 %v948
    %v4257 = vunpack.c.h.b16 %v948
    %v4258 = vunpack.c.l.b16 %v949
    %v4259 = vunpack.c.h.b16 %v949
    %v4260 = vunpack.c.l.b16 %v950
    %v4261 = vunpack.c.h.b16 %v950
    %v4262 = vunpack.c.l.b16 %v951
    %v4263 = vunpack.c.h.b16 %v951
    %v4264 = vunpack.c.l.b16 %v952
    %v4265 = vunpack.c.h.b16 %v952
    %v4266 = vunpack.c.l.b16 %v953
    %v4267 = vunpack.c.h.b16 %v953
    %v4268 = vunpack.c.l.b16 %v954
    %v4269 = vunpack.c.h.b16 %v954
    %v4270 = vunpack.c.l.b16 %v955
    %v4271 = vunpack.c.h.b16 %v955
    %v4272 = vunpack.c.l.b16 %v956
    %v4273 = vunpack.c.h.b16 %v956
    %v4274 = vunpack.c.l.b16 %v957
    %v4275 = vunpack.c.h.b16 %v957
    %v4276 = vunpack.c.l.b16 %v958
    %v4277 = vunpack.c.h.b16 %v958
    %v4278 = vunpack.c.l.b16 %v959
    %v4279 = vunpack.c.h.b16 %v959
    %v4280 = vunpack.c.l.b16 %v960
    %v4281 = vunpack.c.h.b16 %v960
    %v4282 = vunpack.c.l.b16 %v961
    %v4283 = vunpack.c.h.b16 %v961
    %v4284 = vunpack.c.l.b16 %v962
    %v4285 = vunpack.c.h.b16 %v962
    %v4286 = vunpack.c.l.b16 %v963
    %v4287 = vunpack.c.h.b16 %v963
    %v4288 = vunpack.c.l.b16 %v964
    %v4289 = vunpack.c.h.b16 %v964
    %v4290 = vunpack.c.l.b16 %v965
    %v4291 = vunpack.c.h.b16 %v965
    %v4292 = vunpack.c.l.b16 %v966
    %v4293 = vunpack.c.h.b16 %v966
    %v4294 = vunpack.c.l.b16 %v967
    %v4295 = vunpack.c.h.b16 %v967
    %v4296 = vunpack.c.l.b16 %v968
    %v4297 = vunpack.c.h.b16 %v968
    %v4298 = vunpack.c.l.b16 %v969
    %v4299 = vunpack.c.h.b16 %v969
    %v4300 = vunpack.c.l.b16 %v970
    %v4301 = vunpack.c.h.b16 %v970
    %v4302 = vunpack.c.l.b16 %v971
    %v4303 = vunpack.c.h.b16 %v971
    %v4304 = vunpack.c.l.b16 %v972
    %v4305 = vunpack.c.h.b16 %v972
    %v4306 = vunpack.c.l.b16 %v973
    %v4307 = vunpack.c.h.b16 %v973
    %v4308 = vunpack.c.l.b16 %v974
    %v4309 = vunpack.c.h.b16 %v974
    %v4310 = vunpack.c.l.b16 %v975
    %v4311 = vunpack.c.h.b16 %v975
    %v4312 = vunpack.c.l.b16 %v976
    %v4313 = vunpack.c.h.b16 %v976
    %v4314 = vunpack.c.l.b16 %v977
    %v4315 = vunpack.c.h.b16 %v977
    %v4316 = vunpack.c.l.b16 %v978
    %v4317 = vunpack.c.h.b16 %v978
    %v4318 = vunpack.c.l.b16 %v979
    %v4319 = vunpack.c.h.b16 %v979
    %v4320 = vunpack.c.l.b16 %v980
    %v4321 = vunpack.c.h.b16 %v980
    %v4322 = vunpack.c.l.b16 %v981
    %v4323 = vunpack.c.h.b16 %v981
    %v4324 = vunpack.c.l.b16 %v982
    %v4325 = vunpack.c.h.b16 %v982
    %v4326 = vunpack.c.l.b16 %v983
    %v4327 = vunpack.c.h.b16 %v983
    %v4328 = vunpack.c.l.b16 %v984
    %v4329 = vunpack.c.h.b16 %v984
    %v4330 = vunpack.c.l.b16 %v985
    %v4331 = vunpack.c.h.b16 %v985
    %v4332 = vunpack.c.l.b16 %v986
    %v4333 = vunpack.c.h.b16 %v986
    %v4334 = vunpack.c.l.b16 %v987
    %v4335 = vunpack.c.h.b16 %v987
    %v4336 = vunpack.c.l.b16 %v988
    %v4337 = vunpack.c.h.b16 %v988
    %v4338 = vunpack.c.l.b16 %v989
    %v4339 = vunpack.c.h.b16 %v989
    %v4340 = vunpack.c.l.b16 %v990
    %v4341 = vunpack.c.h.b16 %v990
    %v4342 = vunpack.c.l.b16 %v991
    %v4343 = vunpack.c.h.b16 %v991
    %v4344 = vunpack.c.l.b16 %v992
    %v4345 = vunpack.c.h.b16 %v992
    %v4346 = vunpack.c.l.b16 %v993
    %v4347 = vunpack.c.h.b16 %v993
    %v4348 = vunpack.c.l.b16 %v994
    %v4349 = vunpack.c.h.b16 %v994
    %v4350 = vunpack.c.l.b16 %v995
    %v4351 = vunpack.c.h.b16 %v995
    %v4352 = vunpack.c.l.b16 %v996
    %v4353 = vunpack.c.h.b16 %v996
    %v4354 = vunpack.c.l.b16 %v997
    %v4355 = vunpack.c.h.b16 %v997
    %v4356 = vunpack.c.l.b16 %v998
    %v4357 = vunpack.c.h.b16 %v998
    %v4358 = vunpack.c.l.b16 %v999
    %v4359 = vunpack.c.h.b16 %v999
    %v4360 = vunpack.c.l.b16 %v1000
    %v4361 = vunpack.c.h.b16 %v1000
    %v4362 = vunpack.c.l.b16 %v1001
    %v4363 = vunpack.c.h.b16 %v1001
    %v4364 = vunpack.c.l.b16 %v1002
    %v4365 = vunpack.c.h.b16 %v1002
    %v4366 = vunpack.c.l.b16 %v1003
    %v4367 = vunpack.c.h.b16 %v1003
    %v4368 = vunpack.c.l.b16 %v1004
    %v4369 = vunpack.c.h.b16 %v1004
    %v4370 = vunpack.c.l.b16 %v1005
    %v4371 = vunpack.c.h.b16 %v1005
    %v4372 = vunpack.c.l.b16 %v1006
    %v4373 = vunpack.c.h.b16 %v1006
    %v4374 = vunpack.c.l.b16 %v1007
    %v4375 = vunpack.c.h.b16 %v1007
    %v4376 = vunpack.c.l.b16 %v1008
    %v4377 = vunpack.c.h.b16 %v1008
    %v4378 = vunpack.c.l.b16 %v1009
    %v4379 = vunpack.c.h.b16 %v1009
    %v4380 = vunpack.c.l.b16 %v1010
    %v4381 = vunpack.c.h.b16 %v1010
    %v4382 = vunpack.c.l.b16 %v1011
    %v4383 = vunpack.c.h.b16 %v1011
    %v4384 = vunpack.c.l.b16 %v1012
    %v4385 = vunpack.c.h.b16 %v1012
    %v4386 = vunpack.c.l.b16 %v1013
    %v4387 = vunpack.c.h.b16 %v1013
    %v4388 = vunpack.c.l.b16 %v1014
    %v4389 = vunpack.c.h.b16 %v1014
    %v4390 = vunpack.c.l.b16 %v1015
    %v4391 = vunpack.c.h.b16 %v1015
    %v4392 = vunpack.c.l.b16 %v1016
    %v4393 = vunpack.c.h.b16 %v1016
    %v4394 = vunpack.c.l.b16 %v1017
    %v4395 = vunpack.c.h.b16 %v1017
    %v4396 = vunpack.c.l.b16 %v1018
    %v4397 = vunpack.c.h.b16 %v1018
    %v4398 = vunpack.c.l.b16 %v1019
    %v4399 = vunpack.c.h.b16 %v1019
    %v4400 = vunpack.c.l.b16 %v1020
    %v4401 = vunpack.c.h.b16 %v1020
    %v4402 = vunpack.c.l.b16 %v1021
    %v4403 = vunpack.c.h.b16 %v1021
    %v4404 = vunpack.c.l.b16 %v1022
    %v4405 = vunpack.c.h.b16 %v1022
    %v4406 = vunpack.c.l.b16 %v1023
    %v4407 = vunpack.c.h.b16 %v1023
    %v4408 = vunpack.c.l.b16 %v1024
    %v4409 = vunpack.c.h.b16 %v1024
    %v4410 = vunpack.c.l.b16 %v1025
    %v4411 = vunpack.c.h.b16 %v1025
    %v4412 = vunpack.c.l.b16 %v1026
    %v4413 = vunpack.c.h.b16 %v1026
    %v4414 = vunpack.c.l.b16 %v1027
    %v4415 = vunpack.c.h.b16 %v1027
    %v4416 = vunpack.c.l.b16 %v1028
    %v4417 = vunpack.c.h.b16 %v1028
    %v4418 = vunpack.c.l.b16 %v1029
    %v4419 = vunpack.c.h.b16 %v1029
    %v4420 = vunpack.c.l.b16 %v1030
    %v4421 = vunpack.c.h.b16 %v1030
    %v4422 = vunpack.c.l.b16 %v1031
    %v4423 = vunpack.c.h.b16 %v1031
    %v4424 = vunpack.c.l.b16 %v1032
    %v4425 = vunpack.c.h.b16 %v1032
    %v4426 = vunpack.c.l.b16 %v1033
    %v4427 = vunpack.c.h.b16 %v1033
    %v4428 = vunpack.c.l.b16 %v1034
    %v4429 = vunpack.c.h.b16 %v1034
    %v4430 = vunpack.c.l.b16 %v1035
    %v4431 = vunpack.c.h.b16 %v1035
    %v4432 = vunpack.c.l.b16 %v1036
    %v4433 = vunpack.c.h.b16 %v1036
    %v4434 = vunpack.c.l.b16 %v1037
    %v4435 = vunpack.c.h.b16 %v1037
    %v4436 = vunpack.c.l.b16 %v1038
    %v4437 = vunpack.c.h.b16 %v1038
    %v4438 = vunpack.c.l.b16 %v1039
    %v4439 = vunpack.c.h.b16 %v1039
    %v4440 = vunpack.c.l.b16 %v1040
    %v4441 = vunpack.c.h.b16 %v1040
    %v4442 = vunpack.c.l.b16 %v1041
    %v4443 = vunpack.c.h.b16 %v1041
    %v4444 = vunpack.c.l.b16 %v1042
    %v4445 = vunpack.c.h.b16 %v1042
    %v4446 = vunpack.c.l.b16 %v1043
    %v4447 = vunpack.c.h.b16 %v1043
    %v4448 = vunpack.c.l.b16 %v1044
    %v4449 = vunpack.c.h.b16 %v1044
    %v4450 = vunpack.c.l.b16 %v1045
    %v4451 = vunpack.c.h.b16 %v1045
    %v4452 = vunpack.c.l.b16 %v1046
    %v4453 = vunpack.c.h.b16 %v1046
    %v4454 = vunpack.c.l.b16 %v1047
    %v4455 = vunpack.c.h.b16 %v1047
    %v4456 = vunpack.c.l.b16 %v1048
    %v4457 = vunpack.c.h.b16 %v1048
    %v4458 = vunpack.c.l.b16 %v1049
    %v4459 = vunpack.c.h.b16 %v1049
    %v4460 = vunpack.c.l.b16 %v1050
    %v4461 = vunpack.c.h.b16 %v1050
    %v4462 = vunpack.c.l.b16 %v1051
    %v4463 = vunpack.c.h.b16 %v1051
    %v4464 = vunpack.c.l.b16 %v1052
    %v4465 = vunpack.c.h.b16 %v1052
    %v4466 = vunpack.c.l.b16 %v1053
    %v4467 = vunpack.c.h.b16 %v1053
    %v4468 = vunpack.c.l.b16 %v1054
    %v4469 = vunpack.c.h.b16 %v1054
    %v4470 = vunpack.c.l.b16 %v1055
    %v4471 = vunpack.c.h.b16 %v1055
    %v4472 = vunpack.c.l.b16 %v1056
    %v4473 = vunpack.c.h.b16 %v1056
    %v4474 = vunpack.c.l.b16 %v1057
    %v4475 = vunpack.c.h.b16 %v1057
    %v4476 = vunpack.c.l.b16 %v1058
    %v4477 = vunpack.c.h.b16 %v1058
    %v4478 = vunpack.c.l.b16 %v1059
    %v4479 = vunpack.c.h.b16 %v1059
    %v4480 = vunpack.c.l.b16 %v1060
    %v4481 = vunpack.c.h.b16 %v1060
    %v4482 = vunpack.c.l.b16 %v1061
    %v4483 = vunpack.c.h.b16 %v1061
    %v4484 = vunpack.c.l.b16 %v1062
    %v4485 = vunpack.c.h.b16 %v1062
    %v4486 = vunpack.c.l.b16 %v1063
    %v4487 = vunpack.c.h.b16 %v1063
    %v4488 = vunpack.c.l.b16 %v1064
    %v4489 = vunpack.c.h.b16 %v1064
    %v4490 = vunpack.c.l.b16 %v1065
    %v4491 = vunpack.c.h.b16 %v1065
    %v4492 = vunpack.c.l.b16 %v1066
    %v4493 = vunpack.c.h.b16 %v1066
    %v4494 = vunpack.c.l.b16 %v1067
    %v4495 = vunpack.c.h.b16 %v1067
    %v4496 = vunpack.c.l.b16 %v1068
    %v4497 = vunpack.c.h.b16 %v1068
    %v4498 = vunpack.c.l.b16 %v1069
    %v4499 = vunpack.c.h.b16 %v1069
    %v4500 = vunpack.c.l.b16 %v1070
    %v4501 = vunpack.c.h.b16 %v1070
    %v4502 = vunpack.c.l.b16 %v1071
    %v4503 = vunpack.c.h.b16 %v1071
    %v4504 = vunpack.c.l.b16 %v1072
    %v4505 = vunpack.c.h.b16 %v1072
    %v4506 = vunpack.c.l.b16 %v1073
    %v4507 = vunpack.c.h.b16 %v1073
    %v4508 = vunpack.c.l.b16 %v1074
    %v4509 = vunpack.c.h.b16 %v1074
    %v4510 = vunpack.c.l.b16 %v1075
    %v4511 = vunpack.c.h.b16 %v1075
    %v4512 = vunpack.c.l.b16 %v1076
    %v4513 = vunpack.c.h.b16 %v1076
    %v4514 = vunpack.c.l.b16 %v1077
    %v4515 = vunpack.c.h.b16 %v1077
    %v4516 = vunpack.c.l.b16 %v1078
    %v4517 = vunpack.c.h.b16 %v1078
    %v4518 = vunpack.c.l.b16 %v1079
    %v4519 = vunpack.c.h.b16 %v1079
    %v4520 = vunpack.c.l.b16 %v1080
    %v4521 = vunpack.c.h.b16 %v1080
    %v4522 = vunpack.c.l.b16 %v1081
    %v4523 = vunpack.c.h.b16 %v1081
    %v4524 = vunpack.c.l.b16 %v1082
    %v4525 = vunpack.c.h.b16 %v1082
    %v4526 = vunpack.c.l.b16 %v1083
    %v4527 = vunpack.c.h.b16 %v1083
    %v4528 = vunpack.c.l.b16 %v1084
    %v4529 = vunpack.c.h.b16 %v1084
    %v4530 = vunpack.c.l.b16 %v1085
    %v4531 = vunpack.c.h.b16 %v1085
    %v4532 = vunpack.c.l.b16 %v1086
    %v4533 = vunpack.c.h.b16 %v1086
    %v4534 = vunpack.c.l.b16 %v1087
    %v4535 = vunpack.c.h.b16 %v1087
    %v4536 = vunpack.c.l.b16 %v1088
    %v4537 = vunpack.c.h.b16 %v1088
    %v4538 = vunpack.c.l.b16 %v1089
    %v4539 = vunpack.c.h.b16 %v1089
    %v4540 = vunpack.c.l.b16 %v1090
    %v4541 = vunpack.c.h.b16 %v1090
    %v4542 = vunpack.c.l.b16 %v1091
    %v4543 = vunpack.c.h.b16 %v1091
    %v4544 = vunpack.c.l.b16 %v1092
    %v4545 = vunpack.c.h.b16 %v1092
    %v4546 = vunpack.c.l.b16 %v1093
    %v4547 = vunpack.c.h.b16 %v1093
    %v4548 = vunpack.c.l.b16 %v1094
    %v4549 = vunpack.c.h.b16 %v1094
    %v4550 = vunpack.c.l.b16 %v1095
    %v4551 = vunpack.c.h.b16 %v1095
    %v4552 = vunpack.c.l.b16 %v1096
    %v4553 = vunpack.c.h.b16 %v1096
    %v4554 = vunpack.c.l.b16 %v1097
    %v4555 = vunpack.c.h.b16 %v1097
    %v4556 = vunpack.c.l.b16 %v1098
    %v4557 = vunpack.c.h.b16 %v1098
    %v4558 = vunpack.c.l.b16 %v1099
    %v4559 = vunpack.c.h.b16 %v1099
    %v4560 = vunpack.c.l.b16 %v1100
    %v4561 = vunpack.c.h.b16 %v1100
    %v4562 = vunpack.c.l.b16 %v1101
    %v4563 = vunpack.c.h.b16 %v1101
    %v4564 = vunpack.c.l.b16 %v1102
    %v4565 = vunpack.c.h.b16 %v1102
    %v4566 = vunpack.c.l.b16 %v1103
    %v4567 = vunpack.c.h.b16 %v1103
    %v4568 = vunpack.c.l.b16 %v1104
    %v4569 = vunpack.c.h.b16 %v1104
    %v4570 = vunpack.c.l.b16 %v1105
    %v4571 = vunpack.c.h.b16 %v1105
    %v4572 = vunpack.c.l.b16 %v1106
    %v4573 = vunpack.c.h.b16 %v1106
    %v4574 = vunpack.c.l.b16 %v1107
    %v4575 = vunpack.c.h.b16 %v1107
    %v4576 = vunpack.c.l.b16 %v1108
    %v4577 = vunpack.c.h.b16 %v1108
    %v4578 = vunpack.c.l.b16 %v1109
    %v4579 = vunpack.c.h.b16 %v1109
    %v4580 = vunpack.c.l.b16 %v1110
    %v4581 = vunpack.c.h.b16 %v1110
    %v4582 = vunpack.c.l.b16 %v1111
    %v4583 = vunpack.c.h.b16 %v1111
    %v4584 = vunpack.c.l.b16 %v1112
    %v4585 = vunpack.c.h.b16 %v1112
    %v4586 = vunpack.c.l.b16 %v1113
    %v4587 = vunpack.c.h.b16 %v1113
    %v4588 = vunpack.c.l.b16 %v1114
    %v4589 = vunpack.c.h.b16 %v1114
    %v4590 = vunpack.c.l.b16 %v1115
    %v4591 = vunpack.c.h.b16 %v1115
    %v4592 = vunpack.c.l.b16 %v1116
    %v4593 = vunpack.c.h.b16 %v1116
    %v4594 = vunpack.c.l.b16 %v1117
    %v4595 = vunpack.c.h.b16 %v1117
    %v4596 = vunpack.c.l.b16 %v1118
    %v4597 = vunpack.c.h.b16 %v1118
    %v4598 = vunpack.c.l.b16 %v1119
    %v4599 = vunpack.c.h.b16 %v1119
    %v4600 = vunpack.c.l.b16 %v1120
    %v4601 = vunpack.c.h.b16 %v1120
    %v4602 = vunpack.c.l.b16 %v1121
    %v4603 = vunpack.c.h.b16 %v1121
    %v4604 = vunpack.c.l.b16 %v1122
    %v4605 = vunpack.c.h.b16 %v1122
    %v4606 = vunpack.c.l.b16 %v1123
    %v4607 = vunpack.c.h.b16 %v1123
    %v4608 = vunpack.c.l.b16 %v1124
    %v4609 = vunpack.c.h.b16 %v1124
    %v4610 = vunpack.c.l.b16 %v1125
    %v4611 = vunpack.c.h.b16 %v1125
    %v4612 = vunpack.c.l.b16 %v1126
    %v4613 = vunpack.c.h.b16 %v1126
    %v4614 = vunpack.c.l.b16 %v1127
    %v4615 = vunpack.c.h.b16 %v1127
    %v4616 = vunpack.c.l.b16 %v1128
    %v4617 = vunpack.c.h.b16 %v1128
    %v4618 = vunpack.c.l.b16 %v1129
    %v4619 = vunpack.c.h.b16 %v1129
    %v4620 = vunpack.c.l.b16 %v1130
    %v4621 = vunpack.c.h.b16 %v1130
    %v4622 = vunpack.c.l.b16 %v1131
    %v4623 = vunpack.c.h.b16 %v1131
    %v4624 = vunpack.c.l.b16 %v1132
    %v4625 = vunpack.c.h.b16 %v1132
    %v4626 = vunpack.c.l.b16 %v1133
    %v4627 = vunpack.c.h.b16 %v1133
    %v4628 = vunpack.c.l.b16 %v1134
    %v4629 = vunpack.c.h.b16 %v1134
    %v4630 = vunpack.c.l.b16 %v1135
    %v4631 = vunpack.c.h.b16 %v1135
    %v4632 = vunpack.c.l.b16 %v1136
    %v4633 = vunpack.c.h.b16 %v1136
    %v4634 = vunpack.c.l.b16 %v1137
    %v4635 = vunpack.c.h.b16 %v1137
    %v4636 = vunpack.c.l.b16 %v1138
    %v4637 = vunpack.c.h.b16 %v1138
    %v4638 = vunpack.c.l.b16 %v1139
    %v4639 = vunpack.c.h.b16 %v1139
    %v4640 = vunpack.c.l.b16 %v1140
    %v4641 = vunpack.c.h.b16 %v1140
    %v4642 = vunpack.c.l.b16 %v1141
    %v4643 = vunpack.c.h.b16 %v1141
    %v4644 = vunpack.c.l.b16 %v1142
    %v4645 = vunpack.c.h.b16 %v1142
    %v4646 = vunpack.c.l.b16 %v1143
    %v4647 = vunpack.c.h.b16 %v1143
    %v4648 = vunpack.c.l.b16 %v1144
    %v4649 = vunpack.c.h.b16 %v1144
    %v4650 = vunpack.c.l.b16 %v1145
    %v4651 = vunpack.c.h.b16 %v1145
    %v4652 = vunpack.c.l.b16 %v1146
    %v4653 = vunpack.c.h.b16 %v1146
    %v4654 = vunpack.c.l.b16 %v1147
    %v4655 = vunpack.c.h.b16 %v1147
    %v4656 = vunpack.c.l.b16 %v1148
    %v4657 = vunpack.c.h.b16 %v1148
    %v4658 = vunpack.c.l.b16 %v1149
    %v4659 = vunpack.c.h.b16 %v1149
    %v4660 = vunpack.c.l.b16 %v1150
    %v4661 = vunpack.c.h.b16 %v1150
    %v4662 = vunpack.c.l.b16 %v1151
    %v4663 = vunpack.c.h.b16 %v1151
    %v4664 = vunpack.c.l.b16 %v1152
    %v4665 = vunpack.c.h.b16 %v1152
    %v4666 = vunpack.c.l.b16 %v1153
    %v4667 = vunpack.c.h.b16 %v1153
    %v4668 = vunpack.c.l.b16 %v1154
    %v4669 = vunpack.c.h.b16 %v1154
    %v4670 = vunpack.c.l.b16 %v1155
    %v4671 = vunpack.c.h.b16 %v1155
    %v4672 = vunpack.c.l.b16 %v1156
    %v4673 = vunpack.c.h.b16 %v1156
    %v4674 = vunpack.c.l.b16 %v1157
    %v4675 = vunpack.c.h.b16 %v1157
    %v4676 = vunpack.c.l.b16 %v1158
    %v4677 = vunpack.c.h.b16 %v1158
    %v4678 = vunpack.c.l.b16 %v1159
    %v4679 = vunpack.c.h.b16 %v1159
    %v4680 = vunpack.c.l.b16 %v1160
    %v4681 = vunpack.c.h.b16 %v1160
    %v4682 = vunpack.c.l.b16 %v1161
    %v4683 = vunpack.c.h.b16 %v1161
    %v4684 = vunpack.c.l.b16 %v1162
    %v4685 = vunpack.c.h.b16 %v1162
    %v4686 = vunpack.c.l.b16 %v1163
    %v4687 = vunpack.c.h.b16 %v1163
    %v4688 = vunpack.c.l.b16 %v1164
    %v4689 = vunpack.c.h.b16 %v1164
    %v4690 = vunpack.c.l.b16 %v1165
    %v4691 = vunpack.c.h.b16 %v1165
    %v4692 = vunpack.c.l.b16 %v1166
    %v4693 = vunpack.c.h.b16 %v1166
    %v4694 = vunpack.c.l.b16 %v1167
    %v4695 = vunpack.c.h.b16 %v1167
    %v4696 = vunpack.c.l.b16 %v1168
    %v4697 = vunpack.c.h.b16 %v1168
    %v4698 = vunpack.c.l.b16 %v1169
    %v4699 = vunpack.c.h.b16 %v1169
    %v4700 = vunpack.c.l.b16 %v1170
    %v4701 = vunpack.c.h.b16 %v1170
    %v4702 = vunpack.c.l.b16 %v1171
    %v4703 = vunpack.c.h.b16 %v1171
    %v4704 = vunpack.c.l.b16 %v1172
    %v4705 = vunpack.c.h.b16 %v1172
    %v4706 = vunpack.c.l.b16 %v1173
    %v4707 = vunpack.c.h.b16 %v1173
    %v4708 = vunpack.c.l.b16 %v1174
    %v4709 = vunpack.c.h.b16 %v1174
    %v4710 = vunpack.c.l.b16 %v1175
    %v4711 = vunpack.c.h.b16 %v1175
    %v4712 = vunpack.c.l.b16 %v1176
    %v4713 = vunpack.c.h.b16 %v1176
    %v4714 = vunpack.c.l.b16 %v1177
    %v4715 = vunpack.c.h.b16 %v1177
    %v4716 = vunpack.c.l.b16 %v1178
    %v4717 = vunpack.c.h.b16 %v1178
    %v4718 = vunpack.c.l.b16 %v1179
    %v4719 = vunpack.c.h.b16 %v1179
    %v4720 = vunpack.c.l.b16 %v1180
    %v4721 = vunpack.c.h.b16 %v1180
    %v4722 = vunpack.c.l.b16 %v1181
    %v4723 = vunpack.c.h.b16 %v1181
    %v4724 = vunpack.c.l.b16 %v1182
    %v4725 = vunpack.c.h.b16 %v1182
    %v4726 = vunpack.c.l.b16 %v1183
    %v4727 = vunpack.c.h.b16 %v1183
    %v4728 = vunpack.c.l.b16 %v1184
    %v4729 = vunpack.c.h.b16 %v1184
    %v4730 = vunpack.c.l.b16 %v1185
    %v4731 = vunpack.c.h.b16 %v1185
    %v4732 = vunpack.c.l.b16 %v1186
    %v4733 = vunpack.c.h.b16 %v1186
    %v4734 = vunpack.c.l.b16 %v1187
    %v4735 = vunpack.c.h.b16 %v1187
    %v4736 = vpack.c.b16 %v2690, %v2688
    %v4737 = vpack.c.b16 %v2691, %v2689
    %v4738 = vpack.c.b16 %v2694, %v2692
    %v4739 = vpack.c.b16 %v2695, %v2693
    %v4740 = vpack.c.b16 %v2698, %v2696
    %v4741 = vpack.c.b16 %v2699, %v2697
    %v4742 = vpack.c.b16 %v2702, %v2700
    %v4743 = vpack.c.b16 %v2703, %v2701
    %v4744 = vpack.c.b16 %v2706, %v2704
    %v4745 = vpack.c.b16 %v2707, %v2705
    %v4746 = vpack.c.b16 %v2710, %v2708
    %v4747 = vpack.c.b16 %v2711, %v2709
    %v4748 = vpack.c.b16 %v2714, %v2712
    %v4749 = vpack.c.b16 %v2715, %v2713
    %v4750 = vpack.c.b16 %v2718, %v2716
    %v4751 = vpack.c.b16 %v2719, %v2717
    %v4752 = vpack.c.b16 %v2722, %v2720
    %v4753 = vpack.c.b16 %v2723, %v2721
    %v4754 = vpack.c.b16 %v2726, %v2724
    %v4755 = vpack.c.b16 %v2727, %v2725
    %v4756 = vpack.c.b16 %v2730, %v2728
    %v4757 = vpack.c.b16 %v2731, %v2729
    %v4758 = vpack.c.b16 %v2734, %v2732
    %v4759 = vpack.c.b16 %v2735, %v2733
    %v4760 = vpack.c.b16 %v2738, %v2736
    %v4761 = vpack.c.b16 %v2739, %v2737
    %v4762 = vpack.c.b16 %v2742, %v2740
    %v4763 = vpack.c.b16 %v2743, %v2741
    %v4764 = vpack.c.b16 %v2746, %v2744
    %v4765 = vpack.c.b16 %v2747, %v2745
    %v4766 = vpack.c.b16 %v2750, %v2748
    %v4767 = vpack.c.b16 %v2751, %v2749
    %v4768 = vpack.c.b16 %v2754, %v2752
    %v4769 = vpack.c.b16 %v2755, %v2753
    %v4770 = vpack.c.b16 %v2758, %v2756
    %v4771 = vpack.c.b16 %v2759, %v2757
    %v4772 = vpack.c.b16 %v2762, %v2760
    %v4773 = vpack.c.b16 %v2763, %v2761
    %v4774 = vpack.c.b16 %v2766, %v2764
    %v4775 = vpack.c.b16 %v2767, %v2765
    %v4776 = vpack.c.b16 %v2770, %v2768
    %v4777 = vpack.c.b16 %v2771, %v2769
    %v4778 = vpack.c.b16 %v2774, %v2772
    %v4779 = vpack.c.b16 %v2775, %v2773
    %v4780 = vpack.c.b16 %v2778, %v2776
    %v4781 = vpack.c.b16 %v2779, %v2777
    %v4782 = vpack.c.b16 %v2782, %v2780
    %v4783 = vpack.c.b16 %v2783, %v2781
    %v4784 = vpack.c.b16 %v2786, %v2784
    %v4785 = vpack.c.b16 %v2787, %v2785
    %v4786 = vpack.c.b16 %v2790, %v2788
    %v4787 = vpack.c.b16 %v2791, %v2789
    %v4788 = vpack.c.b16 %v2794, %v2792
    %v4789 = vpack.c.b16 %v2795, %v2793
    %v4790 = vpack.c.b16 %v2798, %v2796
    %v4791 = vpack.c.b16 %v2799, %v2797
    %v4792 = vpack.c.b16 %v2802, %v2800
    %v4793 = vpack.c.b16 %v2803, %v2801
    %v4794 = vpack.c.b16 %v2806, %v2804
    %v4795 = vpack.c.b16 %v2807, %v2805
    %v4796 = vpack.c.b16 %v2810, %v2808
    %v4797 = vpack.c.b16 %v2811, %v2809
    %v4798 = vpack.c.b16 %v2814, %v2812
    %v4799 = vpack.c.b16 %v2815, %v2813
    %v4800 = vpack.c.b16 %v2818, %v2816
    %v4801 = vpack.c.b16 %v2819, %v2817
    %v4802 = vpack.c.b16 %v2822, %v2820
    %v4803 = vpack.c.b16 %v2823, %v2821
    %v4804 = vpack.c.b16 %v2826, %v2824
    %v4805 = vpack.c.b16 %v2827, %v2825
    %v4806 = vpack.c.b16 %v2830, %v2828
    %v4807 = vpack.c.b16 %v2831, %v2829
    %v4808 = vpack.c.b16 %v2834, %v2832
    %v4809 = vpack.c.b16 %v2835, %v2833
    %v4810 = vpack.c.b16 %v2838, %v2836
    %v4811 = vpack.c.b16 %v2839, %v2837
    %v4812 = vpack.c.b16 %v2842, %v2840
    %v4813 = vpack.c.b16 %v2843, %v2841
    %v4814 = vpack.c.b16 %v2846, %v2844
    %v4815 = vpack.c.b16 %v2847, %v2845
    %v4816 = vpack.c.b16 %v2850, %v2848
    %v4817 = vpack.c.b16 %v2851, %v2849
    %v4818 = vpack.c.b16 %v2854, %v2852
    %v4819 = vpack.c.b16 %v2855, %v2853
    %v4820 = vpack.c.b16 %v2858, %v2856
    %v4821 = vpack.c.b16 %v2859, %v2857
    %v4822 = vpack.c.b16 %v2862, %v2860
    %v4823 = vpack.c.b16 %v2863, %v2861
    %v4824 = vpack.c.b16 %v2866, %v2864
    %v4825 = vpack.c.b16 %v2867, %v2865
    %v4826 = vpack.c.b16 %v2870, %v2868
    %v4827 = vpack.c.b16 %v2871, %v2869
    %v4828 = vpack.c.b16 %v2874, %v2872
    %v4829 = vpack.c.b16 %v2875, %v2873
    %v4830 = vpack.c.b16 %v2878, %v2876
    %v4831 = vpack.c.b16 %v2879, %v2877
    %v4832 = vpack.c.b16 %v2882, %v2880
    %v4833 = vpack.c.b16 %v2883, %v2881
    %v4834 = vpack.c.b16 %v2886, %v2884
    %v4835 = vpack.c.b16 %v2887, %v2885
    %v4836 = vpack.c.b16 %v2890, %v2888
    %v4837 = vpack.c.b16 %v2891, %v2889
    %v4838 = vpack.c.b16 %v2894, %v2892
    %v4839 = vpack.c.b16 %v2895, %v2893
    %v4840 = vpack.c.b16 %v2898, %v2896
    %v4841 = vpack.c.b16 %v2899, %v2897
    %v4842 = vpack.c.b16 %v2902, %v2900
    %v4843 = vpack.c.b16 %v2903, %v2901
    %v4844 = vpack.c.b16 %v2906, %v2904
    %v4845 = vpack.c.b16 %v2907, %v2905
    %v4846 = vpack.c.b16 %v2910, %v2908
    %v4847 = vpack.c.b16 %v2911, %v2909
    %v4848 = vpack.c.b16 %v2914, %v2912
    %v4849 = vpack.c.b16 %v2915, %v2913
    %v4850 = vpack.c.b16 %v2918, %v2916
    %v4851 = vpack.c.b16 %v2919, %v2917
    %v4852 = vpack.c.b16 %v2922, %v2920
    %v4853 = vpack.c.b16 %v2923, %v2921
    %v4854 = vpack.c.b16 %v2926, %v2924
    %v4855 = vpack.c.b16 %v2927, %v2925
    %v4856 = vpack.c.b16 %v2930, %v2928
    %v4857 = vpack.c.b16 %v2931, %v2929
    %v4858 = vpack.c.b16 %v2934, %v2932
    %v4859 = vpack.c.b16 %v2935, %v2933
    %v4860 = vpack.c.b16 %v2938, %v2936
    %v4861 = vpack.c.b16 %v2939, %v2937
    %v4862 = vpack.c.b16 %v2942, %v2940
    %v4863 = vpack.c.b16 %v2943, %v2941
    %v4864 = vpack.c.b16 %v2946, %v2944
    %v4865 = vpack.c.b16 %v2947, %v2945
    %v4866 = vpack.c.b16 %v2950, %v2948
    %v4867 = vpack.c.b16 %v2951, %v2949
    %v4868 = vpack.c.b16 %v2954, %v2952
    %v4869 = vpack.c.b16 %v2955, %v2953
    %v4870 = vpack.c.b16 %v2958, %v2956
    %v4871 = vpack.c.b16 %v2959, %v2957
    %v4872 = vpack.c.b16 %v2962, %v2960
    %v4873 = vpack.c.b16 %v2963, %v2961
    %v4874 = vpack.c.b16 %v2966, %v2964
    %v4875 = vpack.c.b16 %v2967, %v2965
    %v4876 = vpack.c.b16 %v2970, %v2968
    %v4877 = vpack.c.b16 %v2971, %v2969
    %v4878 = vpack.c.b16 %v2974, %v2972
    %v4879 = vpack.c.b16 %v2975, %v2973
    %v4880 = vpack.c.b16 %v2978, %v2976
    %v4881 = vpack.c.b16 %v2979, %v2977
    %v4882 = vpack.c.b16 %v2982, %v2980
    %v4883 = vpack.c.b16 %v2983, %v2981
    %v4884 = vpack.c.b16 %v2986, %v2984
    %v4885 = vpack.c.b16 %v2987, %v2985
    %v4886 = vpack.c.b16 %v2990, %v2988
    %v4887 = vpack.c.b16 %v2991, %v2989
    %v4888 = vpack.c.b16 %v2994, %v2992
    %v4889 = vpack.c.b16 %v2995, %v2993
    %v4890 = vpack.c.b16 %v2998, %v2996
    %v4891 = vpack.c.b16 %v2999, %v2997
    %v4892 = vpack.c.b16 %v3002, %v3000
    %v4893 = vpack.c.b16 %v3003, %v3001
    %v4894 = vpack.c.b16 %v3006, %v3004
    %v4895 = vpack.c.b16 %v3007, %v3005
    %v4896 = vpack.c.b16 %v3010, %v3008
    %v4897 = vpack.c.b16 %v3011, %v3009
    %v4898 = vpack.c.b16 %v3014, %v3012
    %v4899 = vpack.c.b16 %v3015, %v3013
    %v4900 = vpack.c.b16 %v3018, %v3016
    %v4901 = vpack.c.b16 %v3019, %v3017
    %v4902 = vpack.c.b16 %v3022, %v3020
    %v4903 = vpack.c.b16 %v3023, %v3021
    %v4904 = vpack.c.b16 %v3026, %v3024
    %v4905 = vpack.c.b16 %v3027, %v3025
    %v4906 = vpack.c.b16 %v3030, %v3028
    %v4907 = vpack.c.b16 %v3031, %v3029
    %v4908 = vpack.c.b16 %v3034, %v3032
    %v4909 = vpack.c.b16 %v3035, %v3033
    %v4910 = vpack.c.b16 %v3038, %v3036
    %v4911 = vpack.c.b16 %v3039, %v3037
    %v4912 = vpack.c.b16 %v3042, %v3040
    %v4913 = vpack.c.b16 %v3043, %v3041
    %v4914 = vpack.c.b16 %v3046, %v3044
    %v4915 = vpack.c.b16 %v3047, %v3045
    %v4916 = vpack.c.b16 %v3050, %v3048
    %v4917 = vpack.c.b16 %v3051, %v3049
    %v4918 = vpack.c.b16 %v3054, %v3052
    %v4919 = vpack.c.b16 %v3055, %v3053
    %v4920 = vpack.c.b16 %v3058, %v3056
    %v4921 = vpack.c.b16 %v3059, %v3057
    %v4922 = vpack.c.b16 %v3062, %v3060
    %v4923 = vpack.c.b16 %v3063, %v3061
    %v4924 = vpack.c.b16 %v3066, %v3064
    %v4925 = vpack.c.b16 %v3067, %v3065
    %v4926 = vpack.c.b16 %v3070, %v3068
    %v4927 = vpack.c.b16 %v3071, %v3069
    %v4928 = vpack.c.b16 %v3074, %v3072
    %v4929 = vpack.c.b16 %v3075, %v3073
    %v4930 = vpack.c.b16 %v3078, %v3076
    %v4931 = vpack.c.b16 %v3079, %v3077
    %v4932 = vpack.c.b16 %v3082, %v3080
    %v4933 = vpack.c.b16 %v3083, %v3081
    %v4934 = vpack.c.b16 %v3086, %v3084
    %v4935 = vpack.c.b16 %v3087, %v3085
    %v4936 = vpack.c.b16 %v3090, %v3088
    %v4937 = vpack.c.b16 %v3091, %v3089
    %v4938 = vpack.c.b16 %v3094, %v3092
    %v4939 = vpack.c.b16 %v3095, %v3093
    %v4940 = vpack.c.b16 %v3098, %v3096
    %v4941 = vpack.c.b16 %v3099, %v3097
    %v4942 = vpack.c.b16 %v3102, %v3100
    %v4943 = vpack.c.b16 %v3103, %v3101
    %v4944 = vpack.c.b16 %v3106, %v3104
    %v4945 = vpack.c.b16 %v3107, %v3105
    %v4946 = vpack.c.b16 %v3110, %v3108
    %v4947 = vpack.c.b16 %v3111, %v3109
    %v4948 = vpack.c.b16 %v3114, %v3112
    %v4949 = vpack.c.b16 %v3115, %v3113
    %v4950 = vpack.c.b16 %v3118, %v3116
    %v4951 = vpack.c.b16 %v3119, %v3117
    %v4952 = vpack.c.b16 %v3122, %v3120
    %v4953 = vpack.c.b16 %v3123, %v3121
    %v4954 = vpack.c.b16 %v3126, %v3124
    %v4955 = vpack.c.b16 %v3127, %v3125
    %v4956 = vpack.c.b16 %v3130, %v3128
    %v4957 = vpack.c.b16 %v3131, %v3129
    %v4958 = vpack.c.b16 %v3134, %v3132
    %v4959 = vpack.c.b16 %v3135, %v3133
    %v4960 = vpack.c.b16 %v3138, %v3136
    %v4961 = vpack.c.b16 %v3139, %v3137
    %v4962 = vpack.c.b16 %v3142, %v3140
    %v4963 = vpack.c.b16 %v3143, %v3141
    %v4964 = vpack.c.b16 %v3146, %v3144
    %v4965 = vpack.c.b16 %v3147, %v3145
    %v4966 = vpack.c.b16 %v3150, %v3148
    %v4967 = vpack.c.b16 %v3151, %v3149
    %v4968 = vpack.c.b16 %v3154, %v3152
    %v4969 = vpack.c.b16 %v3155, %v3153
    %v4970 = vpack.c.b16 %v3158, %v3156
    %v4971 = vpack.c.b16 %v3159, %v3157
    %v4972 = vpack.c.b16 %v3162, %v3160
    %v4973 = vpack.c.b16 %v3163, %v3161
    %v4974 = vpack.c.b16 %v3166, %v3164
    %v4975 = vpack.c.b16 %v3167, %v3165
    %v4976 = vpack.c.b16 %v3170, %v3168
    %v4977 = vpack.c.b16 %v3171, %v3169
    %v4978 = vpack.c.b16 %v3174, %v3172
    %v4979 = vpack.c.b16 %v3175, %v3173
    %v4980 = vpack.c.b16 %v3178, %v3176
    %v4981 = vpack.c.b16 %v3179, %v3177
    %v4982 = vpack.c.b16 %v3182, %v3180
    %v4983 = vpack.c.b16 %v3183, %v3181
    %v4984 = vpack.c.b16 %v3186, %v3184
    %v4985 = vpack.c.b16 %v3187, %v3185
    %v4986 = vpack.c.b16 %v3190, %v3188
    %v4987 = vpack.c.b16 %v3191, %v3189
    %v4988 = vpack.c.b16 %v3194, %v3192
    %v4989 = vpack.c.b16 %v3195, %v3193
    %v4990 = vpack.c.b16 %v3198, %v3196
    %v4991 = vpack.c.b16 %v3199, %v3197
    %v4992 = vpack.c.b16 %v3202, %v3200
    %v4993 = vpack.c.b16 %v3203, %v3201
    %v4994 = vpack.c.b16 %v3206, %v3204
    %v4995 = vpack.c.b16 %v3207, %v3205
    %v4996 = vpack.c.b16 %v3210, %v3208
    %v4997 = vpack.c.b16 %v3211, %v3209
    %v4998 = vpack.c.b16 %v3214, %v3212
    %v4999 = vpack.c.b16 %v3215, %v3213
    %v5000 = vpack.c.b16 %v3218, %v3216
    %v5001 = vpack.c.b16 %v3219, %v3217
    %v5002 = vpack.c.b16 %v3222, %v3220
    %v5003 = vpack.c.b16 %v3223, %v3221
    %v5004 = vpack.c.b16 %v3226, %v3224
    %v5005 = vpack.c.b16 %v3227, %v3225
    %v5006 = vpack.c.b16 %v3230, %v3228
    %v5007 = vpack.c.b16 %v3231, %v3229
    %v5008 = vpack.c.b16 %v3234, %v3232
    %v5009 = vpack.c.b16 %v3235, %v3233
    %v5010 = vpack.c.b16 %v3238, %v3236
    %v5011 = vpack.c.b16 %v3239, %v3237
    %v5012 = vpack.c.b16 %v3242, %v3240
    %v5013 = vpack.c.b16 %v3243, %v3241
    %v5014 = vpack.c.b16 %v3246, %v3244
    %v5015 = vpack.c.b16 %v3247, %v3245
    %v5016 = vpack.c.b16 %v3250, %v3248
    %v5017 = vpack.c.b16 %v3251, %v3249
    %v5018 = vpack.c.b16 %v3254, %v3252
    %v5019 = vpack.c.b16 %v3255, %v3253
    %v5020 = vpack.c.b16 %v3258, %v3256
    %v5021 = vpack.c.b16 %v3259, %v3257
    %v5022 = vpack.c.b16 %v3262, %v3260
    %v5023 = vpack.c.b16 %v3263, %v3261
    %v5024 = vpack.c.b16 %v3266, %v3264
    %v5025 = vpack.c.b16 %v3267, %v3265
    %v5026 = vpack.c.b16 %v3270, %v3268
    %v5027 = vpack.c.b16 %v3271, %v3269
    %v5028 = vpack.c.b16 %v3274, %v3272
    %v5029 = vpack.c.b16 %v3275, %v3273
    %v5030 = vpack.c.b16 %v3278, %v3276
    %v5031 = vpack.c.b16 %v3279, %v3277
    %v5032 = vpack.c.b16 %v3282, %v3280
    %v5033 = vpack.c.b16 %v3283, %v3281
    %v5034 = vpack.c.b16 %v3286, %v3284
    %v5035 = vpack.c.b16 %v3287, %v3285
    %v5036 = vpack.c.b16 %v3290, %v3288
    %v5037 = vpack.c.b16 %v3291, %v3289
    %v5038 = vpack.c.b16 %v3294, %v3292
    %v5039 = vpack.c.b16 %v3295, %v3293
    %v5040 = vpack.c.b16 %v3298, %v3296
    %v5041 = vpack.c.b16 %v3299, %v3297
    %v5042 = vpack.c.b16 %v3302, %v3300
    %v5043 = vpack.c.b16 %v3303, %v3301
    %v5044 = vpack.c.b16 %v3306, %v3304
    %v5045 = vpack.c.b16 %v3307, %v3305
    %v5046 = vpack.c.b16 %v3310, %v3308
    %v5047 = vpack.c.b16 %v3311, %v3309
    %v5048 = vpack.c.b16 %v3314, %v3312
    %v5049 = vpack.c.b16 %v3315, %v3313
    %v5050 = vpack.c.b16 %v3318, %v3316
    %v5051 = vpack.c.b16 %v3319, %v3317
    %v5052 = vpack.c.b16 %v3322, %v3320
    %v5053 = vpack.c.b16 %v3323, %v3321
    %v5054 = vpack.c.b16 %v3326, %v3324
    %v5055 = vpack.c.b16 %v3327, %v3325
    %v5056 = vpack.c.b16 %v3330, %v3328
    %v5057 = vpack.c.b16 %v3331, %v3329
    %v5058 = vpack.c.b16 %v3334, %v3332
    %v5059 = vpack.c.b16 %v3335, %v3333
    %v5060 = vpack.c.b16 %v3338, %v3336
    %v5061 = vpack.c.b16 %v3339, %v3337
    %v5062 = vpack.c.b16 %v3342, %v3340
    %v5063 = vpack.c.b16 %v3343, %v3341
    %v5064 = vpack.c.b16 %v3346, %v3344
    %v5065 = vpack.c.b16 %v3347, %v3345
    %v5066 = vpack.c.b16 %v3350, %v3348
    %v5067 = vpack.c.b16 %v3351, %v3349
    %v5068 = vpack.c.b16 %v3354, %v3352
    %v5069 = vpack.c.b16 %v3355, %v3353
    %v5070 = vpack.c.b16 %v3358, %v3356
    %v5071 = vpack.c.b16 %v3359, %v3357
    %v5072 = vpack.c.b16 %v3362, %v3360
    %v5073 = vpack.c.b16 %v3363, %v3361
    %v5074 = vpack.c.b16 %v3366, %v3364
    %v5075 = vpack.c.b16 %v3367, %v3365
    %v5076 = vpack.c.b16 %v3370, %v3368
    %v5077 = vpack.c.b16 %v3371, %v3369
    %v5078 = vpack.c.b16 %v3374, %v3372
    %v5079 = vpack.c.b16 %v3375, %v3373
    %v5080 = vpack.c.b16 %v3378, %v3376
    %v5081 = vpack.c.b16 %v3379, %v3377
    %v5082 = vpack.c.b16 %v3382, %v3380
    %v5083 = vpack.c.b16 %v3383, %v3381
    %v5084 = vpack.c.b16 %v3386, %v3384
    %v5085 = vpack.c.b16 %v3387, %v3385
    %v5086 = vpack.c.b16 %v3390, %v3388
    %v5087 = vpack.c.b16 %v3391, %v3389
    %v5088 = vpack.c.b16 %v3394, %v3392
    %v5089 = vpack.c.b16 %v3395, %v3393
    %v5090 = vpack.c.b16 %v3398, %v3396
    %v5091 = vpack.c.b16 %v3399, %v3397
    %v5092 = vpack.c.b16 %v3402, %v3400
    %v5093 = vpack.c.b16 %v3403, %v3401
    %v5094 = vpack.c.b16 %v3406, %v3404
    %v5095 = vpack.c.b16 %v3407, %v3405
    %v5096 = vpack.c.b16 %v3410, %v3408
    %v5097 = vpack.c.b16 %v3411, %v3409
    %v5098 = vpack.c.b16 %v3414, %v3412
    %v5099 = vpack.c.b16 %v3415, %v3413
    %v5100 = vpack.c.b16 %v3418, %v3416
    %v5101 = vpack.c.b16 %v3419, %v3417
    %v5102 = vpack.c.b16 %v3422, %v3420
    %v5103 = vpack.c.b16 %v3423, %v3421
    %v5104 = vpack.c.b16 %v3426, %v3424
    %v5105 = vpack.c.b16 %v3427, %v3425
    %v5106 = vpack.c.b16 %v3430, %v3428
    %v5107 = vpack.c.b16 %v3431, %v3429
    %v5108 = vpack.c.b16 %v3434, %v3432
    %v5109 = vpack.c.b16 %v3435, %v3433
    %v5110 = vpack.c.b16 %v3438, %v3436
    %v5111 = vpack.c.b16 %v3439, %v3437
    %v5112 = vpack.c.b16 %v3442, %v3440
    %v5113 = vpack.c.b16 %v3443, %v3441
    %v5114 = vpack.c.b16 %v3446, %v3444
    %v5115 = vpack.c.b16 %v3447, %v3445
    %v5116 = vpack.c.b16 %v3450, %v3448
    %v5117 = vpack.c.b16 %v3451, %v3449
    %v5118 = vpack.c.b16 %v3454, %v3452
    %v5119 = vpack.c.b16 %v3455, %v3453
    %v5120 = vpack.c.b16 %v3458, %v3456
    %v5121 = vpack.c.b16 %v3459, %v3457
    %v5122 = vpack.c.b16 %v3462, %v3460
    %v5123 = vpack.c.b16 %v3463, %v3461
    %v5124 = vpack.c.b16 %v3466, %v3464
    %v5125 = vpack.c.b16 %v3467, %v3465
    %v5126 = vpack.c.b16 %v3470, %v3468
    %v5127 = vpack.c.b16 %v3471, %v3469
    %v5128 = vpack.c.b16 %v3474, %v3472
    %v5129 = vpack.c.b16 %v3475, %v3473
    %v5130 = vpack.c.b16 %v3478, %v3476
    %v5131 = vpack.c.b16 %v3479, %v3477
    %v5132 = vpack.c.b16 %v3482, %v3480
    %v5133 = vpack.c.b16 %v3483, %v3481
    %v5134 = vpack.c.b16 %v3486, %v3484
    %v5135 = vpack.c.b16 %v3487, %v3485
    %v5136 = vpack.c.b16 %v3490, %v3488
    %v5137 = vpack.c.b16 %v3491, %v3489
    %v5138 = vpack.c.b16 %v3494, %v3492
    %v5139 = vpack.c.b16 %v3495, %v3493
    %v5140 = vpack.c.b16 %v3498, %v3496
    %v5141 = vpack.c.b16 %v3499, %v3497
    %v5142 = vpack.c.b16 %v3502, %v3500
    %v5143 = vpack.c.b16 %v3503, %v3501
    %v5144 = vpack.c.b16 %v3506, %v3504
    %v5145 = vpack.c.b16 %v3507, %v3505
    %v5146 = vpack.c.b16 %v3510, %v3508
    %v5147 = vpack.c.b16 %v3511, %v3509
    %v5148 = vpack.c.b16 %v3514, %v3512
    %v5149 = vpack.c.b16 %v3515, %v3513
    %v5150 = vpack.c.b16 %v3518, %v3516
    %v5151 = vpack.c.b16 %v3519, %v3517
    %v5152 = vpack.c.b16 %v3522, %v3520
    %v5153 = vpack.c.b16 %v3523, %v3521
    %v5154 = vpack.c.b16 %v3526, %v3524
    %v5155 = vpack.c.b16 %v3527, %v3525
    %v5156 = vpack.c.b16 %v3530, %v3528
    %v5157 = vpack.c.b16 %v3531, %v3529
    %v5158 = vpack.c.b16 %v3534, %v3532
    %v5159 = vpack.c.b16 %v3535, %v3533
    %v5160 = vpack.c.b16 %v3538, %v3536
    %v5161 = vpack.c.b16 %v3539, %v3537
    %v5162 = vpack.c.b16 %v3542, %v3540
    %v5163 = vpack.c.b16 %v3543, %v3541
    %v5164 = vpack.c.b16 %v3546, %v3544
    %v5165 = vpack.c.b16 %v3547, %v3545
    %v5166 = vpack.c.b16 %v3550, %v3548
    %v5167 = vpack.c.b16 %v3551, %v3549
    %v5168 = vpack.c.b16 %v3554, %v3552
    %v5169 = vpack.c.b16 %v3555, %v3553
    %v5170 = vpack.c.b16 %v3558, %v3556
    %v5171 = vpack.c.b16 %v3559, %v3557
    %v5172 = vpack.c.b16 %v3562, %v3560
    %v5173 = vpack.c.b16 %v3563, %v3561
    %v5174 = vpack.c.b16 %v3566, %v3564
    %v5175 = vpack.c.b16 %v3567, %v3565
    %v5176 = vpack.c.b16 %v3570, %v3568
    %v5177 = vpack.c.b16 %v3571, %v3569
    %v5178 = vpack.c.b16 %v3574, %v3572
    %v5179 = vpack.c.b16 %v3575, %v3573
    %v5180 = vpack.c.b16 %v3578, %v3576
    %v5181 = vpack.c.b16 %v3579, %v3577
    %v5182 = vpack.c.b16 %v3582, %v3580
    %v5183 = vpack.c.b16 %v3583, %v3581
    %v5184 = vpack.c.b16 %v3586, %v3584
    %v5185 = vpack.c.b16 %v3587, %v3585
    %v5186 = vpack.c.b16 %v3590, %v3588
    %v5187 = vpack.c.b16 %v3591, %v3589
    %v5188 = vpack.c.b16 %v3594, %v3592
    %v5189 = vpack.c.b16 %v3595, %v3593
    %v5190 = vpack.c.b16 %v3598, %v3596
    %v5191 = vpack.c.b16 %v3599, %v3597
    %v5192 = vpack.c.b16 %v3602, %v3600
    %v5193 = vpack.c.b16 %v3603, %v3601
    %v5194 = vpack.c.b16 %v3606, %v3604
    %v5195 = vpack.c.b16 %v3607, %v3605
    %v5196 = vpack.c.b16 %v3610, %v3608
    %v5197 = vpack.c.b16 %v3611, %v3609
    %v5198 = vpack.c.b16 %v3614, %v3612
    %v5199 = vpack.c.b16 %v3615, %v3613
    %v5200 = vpack.c.b16 %v3618, %v3616
    %v5201 = vpack.c.b16 %v3619, %v3617
    %v5202 = vpack.c.b16 %v3622, %v3620
    %v5203 = vpack.c.b16 %v3623, %v3621
    %v5204 = vpack.c.b16 %v3626, %v3624
    %v5205 = vpack.c.b16 %v3627, %v3625
    %v5206 = vpack.c.b16 %v3630, %v3628
    %v5207 = vpack.c.b16 %v3631, %v3629
    %v5208 = vpack.c.b16 %v3634, %v3632
    %v5209 = vpack.c.b16 %v3635, %v3633
    %v5210 = vpack.c.b16 %v3638, %v3636
    %v5211 = vpack.c.b16 %v3639, %v3637
    %v5212 = vpack.c.b16 %v3642, %v3640
    %v5213 = vpack.c.b16 %v3643, %v3641
    %v5214 = vpack.c.b16 %v3646, %v3644
    %v5215 = vpack.c.b16 %v3647, %v3645
    %v5216 = vpack.c.b16 %v3650, %v3648
    %v5217 = vpack.c.b16 %v3651, %v3649
    %v5218 = vpack.c.b16 %v3654, %v3652
    %v5219 = vpack.c.b16 %v3655, %v3653
    %v5220 = vpack.c.b16 %v3658, %v3656
    %v5221 = vpack.c.b16 %v3659, %v3657
    %v5222 = vpack.c.b16 %v3662, %v3660
    %v5223 = vpack.c.b16 %v3663, %v3661
    %v5224 = vpack.c.b16 %v3666, %v3664
    %v5225 = vpack.c.b16 %v3667, %v3665
    %v5226 = vpack.c.b16 %v3670, %v3668
    %v5227 = vpack.c.b16 %v3671, %v3669
    %v5228 = vpack.c.b16 %v3674, %v3672
    %v5229 = vpack.c.b16 %v3675, %v3673
    %v5230 = vpack.c.b16 %v3678, %v3676
    %v5231 = vpack.c.b16 %v3679, %v3677
    %v5232 = vpack.c.b16 %v3682, %v3680
    %v5233 = vpack.c.b16 %v3683, %v3681
    %v5234 = vpack.c.b16 %v3686, %v3684
    %v5235 = vpack.c.b16 %v3687, %v3685
    %v5236 = vpack.c.b16 %v3690, %v3688
    %v5237 = vpack.c.b16 %v3691, %v3689
    %v5238 = vpack.c.b16 %v3694, %v3692
    %v5239 = vpack.c.b16 %v3695, %v3693
    %v5240 = vpack.c.b16 %v3698, %v3696
    %v5241 = vpack.c.b16 %v3699, %v3697
    %v5242 = vpack.c.b16 %v3702, %v3700
    %v5243 = vpack.c.b16 %v3703, %v3701
    %v5244 = vpack.c.b16 %v3706, %v3704
    %v5245 = vpack.c.b16 %v3707, %v3705
    %v5246 = vpack.c.b16 %v3710, %v3708
    %v5247 = vpack.c.b16 %v3711, %v3709
    %v5248 = vpack.c.b16 %v3714, %v3712
    %v5249 = vpack.c.b16 %v3715, %v3713
    %v5250 = vpack.c.b16 %v3718, %v3716
    %v5251 = vpack.c.b16 %v3719, %v3717
    %v5252 = vpack.c.b16 %v3722, %v3720
    %v5253 = vpack.c.b16 %v3723, %v3721
    %v5254 = vpack.c.b16 %v3726, %v3724
    %v5255 = vpack.c.b16 %v3727, %v3725
    %v5256 = vpack.c.b16 %v3730, %v3728
    %v5257 = vpack.c.b16 %v3731, %v3729
    %v5258 = vpack.c.b16 %v3734, %v3732
    %v5259 = vpack.c.b16 %v3735, %v3733
    %v5260 = vpack.c.b16 %v3738, %v3736
    %v5261 = vpack.c.b16 %v3739, %v3737
    %v5262 = vpack.c.b16 %v3742, %v3740
    %v5263 = vpack.c.b16 %v3743, %v3741
    %v5264 = vpack.c.b16 %v3746, %v3744
    %v5265 = vpack.c.b16 %v3747, %v3745
    %v5266 = vpack.c.b16 %v3750, %v3748
    %v5267 = vpack.c.b16 %v3751, %v3749
    %v5268 = vpack.c.b16 %v3754, %v3752
    %v5269 = vpack.c.b16 %v3755, %v3753
    %v5270 = vpack.c.b16 %v3758, %v3756
    %v5271 = vpack.c.b16 %v3759, %v3757
    %v5272 = vpack.c.b16 %v3762, %v3760
    %v5273 = vpack.c.b16 %v3763, %v3761
    %v5274 = vpack.c.b16 %v3766, %v3764
    %v5275 = vpack.c.b16 %v3767, %v3765
    %v5276 = vpack.c.b16 %v3770, %v3768
    %v5277 = vpack.c.b16 %v3771, %v3769
    %v5278 = vpack.c.b16 %v3774, %v3772
    %v5279 = vpack.c.b16 %v3775, %v3773
    %v5280 = vpack.c.b16 %v3778, %v3776
    %v5281 = vpack.c.b16 %v3779, %v3777
    %v5282 = vpack.c.b16 %v3782, %v3780
    %v5283 = vpack.c.b16 %v3783, %v3781
    %v5284 = vpack.c.b16 %v3786, %v3784
    %v5285 = vpack.c.b16 %v3787, %v3785
    %v5286 = vpack.c.b16 %v3790, %v3788
    %v5287 = vpack.c.b16 %v3791, %v3789
    %v5288 = vpack.c.b16 %v3794, %v3792
    %v5289 = vpack.c.b16 %v3795, %v3793
    %v5290 = vpack.c.b16 %v3798, %v3796
    %v5291 = vpack.c.b16 %v3799, %v3797
    %v5292 = vpack.c.b16 %v3802, %v3800
    %v5293 = vpack.c.b16 %v3803, %v3801
    %v5294 = vpack.c.b16 %v3806, %v3804
    %v5295 = vpack.c.b16 %v3807, %v3805
    %v5296 = vpack.c.b16 %v3810, %v3808
    %v5297 = vpack.c.b16 %v3811, %v3809
    %v5298 = vpack.c.b16 %v3814, %v3812
    %v5299 = vpack.c.b16 %v3815, %v3813
    %v5300 = vpack.c.b16 %v3818, %v3816
    %v5301 = vpack.c.b16 %v3819, %v3817
    %v5302 = vpack.c.b16 %v3822, %v3820
    %v5303 = vpack.c.b16 %v3823, %v3821
    %v5304 = vpack.c.b16 %v3826, %v3824
    %v5305 = vpack.c.b16 %v3827, %v3825
    %v5306 = vpack.c.b16 %v3830, %v3828
    %v5307 = vpack.c.b16 %v3831, %v3829
    %v5308 = vpack.c.b16 %v3834, %v3832
    %v5309 = vpack.c.b16 %v3835, %v3833
    %v5310 = vpack.c.b16 %v3838, %v3836
    %v5311 = vpack.c.b16 %v3839, %v3837
    %v5312 = vpack.c.b16 %v3842, %v3840
    %v5313 = vpack.c.b16 %v3843, %v3841
    %v5314 = vpack.c.b16 %v3846, %v3844
    %v5315 = vpack.c.b16 %v3847, %v3845
    %v5316 = vpack.c.b16 %v3850, %v3848
    %v5317 = vpack.c.b16 %v3851, %v3849
    %v5318 = vpack.c.b16 %v3854, %v3852
    %v5319 = vpack.c.b16 %v3855, %v3853
    %v5320 = vpack.c.b16 %v3858, %v3856
    %v5321 = vpack.c.b16 %v3859, %v3857
    %v5322 = vpack.c.b16 %v3862, %v3860
    %v5323 = vpack.c.b16 %v3863, %v3861
    %v5324 = vpack.c.b16 %v3866, %v3864
    %v5325 = vpack.c.b16 %v3867, %v3865
    %v5326 = vpack.c.b16 %v3870, %v3868
    %v5327 = vpack.c.b16 %v3871, %v3869
    %v5328 = vpack.c.b16 %v3874, %v3872
    %v5329 = vpack.c.b16 %v3875, %v3873
    %v5330 = vpack.c.b16 %v3878, %v3876
    %v5331 = vpack.c.b16 %v3879, %v3877
    %v5332 = vpack.c.b16 %v3882, %v3880
    %v5333 = vpack.c.b16 %v3883, %v3881
    %v5334 = vpack.c.b16 %v3886, %v3884
    %v5335 = vpack.c.b16 %v3887, %v3885
    %v5336 = vpack.c.b16 %v3890, %v3888
    %v5337 = vpack.c.b16 %v3891, %v3889
    %v5338 = vpack.c.b16 %v3894, %v3892
    %v5339 = vpack.c.b16 %v3895, %v3893
    %v5340 = vpack.c.b16 %v3898, %v3896
    %v5341 = vpack.c.b16 %v3899, %v3897
    %v5342 = vpack.c.b16 %v3902, %v3900
    %v5343 = vpack.c.b16 %v3903, %v3901
    %v5344 = vpack.c.b16 %v3906, %v3904
    %v5345 = vpack.c.b16 %v3907, %v3905
    %v5346 = vpack.c.b16 %v3910, %v3908
    %v5347 = vpack.c.b16 %v3911, %v3909
    %v5348 = vpack.c.b16 %v3914, %v3912
    %v5349 = vpack.c.b16 %v3915, %v3913
    %v5350 = vpack.c.b16 %v3918, %v3916
    %v5351 = vpack.c.b16 %v3919, %v3917
    %v5352 = vpack.c.b16 %v3922, %v3920
    %v5353 = vpack.c.b16 %v3923, %v3921
    %v5354 = vpack.c.b16 %v3926, %v3924
    %v5355 = vpack.c.b16 %v3927, %v3925
    %v5356 = vpack.c.b16 %v3930, %v3928
    %v5357 = vpack.c.b16 %v3931, %v3929
    %v5358 = vpack.c.b16 %v3934, %v3932
    %v5359 = vpack.c.b16 %v3935, %v3933
    %v5360 = vpack.c.b16 %v3938, %v3936
    %v5361 = vpack.c.b16 %v3939, %v3937
    %v5362 = vpack.c.b16 %v3942, %v3940
    %v5363 = vpack.c.b16 %v3943, %v3941
    %v5364 = vpack.c.b16 %v3946, %v3944
    %v5365 = vpack.c.b16 %v3947, %v3945
    %v5366 = vpack.c.b16 %v3950, %v3948
    %v5367 = vpack.c.b16 %v3951, %v3949
    %v5368 = vpack.c.b16 %v3954, %v3952
    %v5369 = vpack.c.b16 %v3955, %v3953
    %v5370 = vpack.c.b16 %v3958, %v3956
    %v5371 = vpack.c.b16 %v3959, %v3957
    %v5372 = vpack.c.b16 %v3962, %v3960
    %v5373 = vpack.c.b16 %v3963, %v3961
    %v5374 = vpack.c.b16 %v3966, %v3964
    %v5375 = vpack.c.b16 %v3967, %v3965
    %v5376 = vpack.c.b16 %v3970, %v3968
    %v5377 = vpack.c.b16 %v3971, %v3969
    %v5378 = vpack.c.b16 %v3974, %v3972
    %v5379 = vpack.c.b16 %v3975, %v3973
    %v5380 = vpack.c.b16 %v3978, %v3976
    %v5381 = vpack.c.b16 %v3979, %v3977
    %v5382 = vpack.c.b16 %v3982, %v3980
    %v5383 = vpack.c.b16 %v3983, %v3981
    %v5384 = vpack.c.b16 %v3986, %v3984
    %v5385 = vpack.c.b16 %v3987, %v3985
    %v5386 = vpack.c.b16 %v3990, %v3988
    %v5387 = vpack.c.b16 %v3991, %v3989
    %v5388 = vpack.c.b16 %v3994, %v3992
    %v5389 = vpack.c.b16 %v3995, %v3993
    %v5390 = vpack.c.b16 %v3998, %v3996
    %v5391 = vpack.c.b16 %v3999, %v3997
    %v5392 = vpack.c.b16 %v4002, %v4000
    %v5393 = vpack.c.b16 %v4003, %v4001
    %v5394 = vpack.c.b16 %v4006, %v4004
    %v5395 = vpack.c.b16 %v4007, %v4005
    %v5396 = vpack.c.b16 %v4010, %v4008
    %v5397 = vpack.c.b16 %v4011, %v4009
    %v5398 = vpack.c.b16 %v4014, %v4012
    %v5399 = vpack.c.b16 %v4015, %v4013
    %v5400 = vpack.c.b16 %v4018, %v4016
    %v5401 = vpack.c.b16 %v4019, %v4017
    %v5402 = vpack.c.b16 %v4022, %v4020
    %v5403 = vpack.c.b16 %v4023, %v4021
    %v5404 = vpack.c.b16 %v4026, %v4024
    %v5405 = vpack.c.b16 %v4027, %v4025
    %v5406 = vpack.c.b16 %v4030, %v4028
    %v5407 = vpack.c.b16 %v4031, %v4029
    %v5408 = vpack.c.b16 %v4034, %v4032
    %v5409 = vpack.c.b16 %v4035, %v4033
    %v5410 = vpack.c.b16 %v4038, %v4036
    %v5411 = vpack.c.b16 %v4039, %v4037
    %v5412 = vpack.c.b16 %v4042, %v4040
    %v5413 = vpack.c.b16 %v4043, %v4041
    %v5414 = vpack.c.b16 %v4046, %v4044
    %v5415 = vpack.c.b16 %v4047, %v4045
    %v5416 = vpack.c.b16 %v4050, %v4048
    %v5417 = vpack.c.b16 %v4051, %v4049
    %v5418 = vpack.c.b16 %v4054, %v4052
    %v5419 = vpack.c.b16 %v4055, %v4053
    %v5420 = vpack.c.b16 %v4058, %v4056
    %v5421 = vpack.c.b16 %v4059, %v4057
    %v5422 = vpack.c.b16 %v4062, %v4060
    %v5423 = vpack.c.b16 %v4063, %v4061
    %v5424 = vpack.c.b16 %v4066, %v4064
    %v5425 = vpack.c.b16 %v4067, %v4065
    %v5426 = vpack.c.b16 %v4070, %v4068
    %v5427 = vpack.c.b16 %v4071, %v4069
    %v5428 = vpack.c.b16 %v4074, %v4072
    %v5429 = vpack.c.b16 %v4075, %v4073
    %v5430 = vpack.c.b16 %v4078, %v4076
    %v5431 = vpack.c.b16 %v4079, %v4077
    %v5432 = vpack.c.b16 %v4082, %v4080
    %v5433 = vpack.c.b16 %v4083, %v4081
    %v5434 = vpack.c.b16 %v4086, %v4084
    %v5435 = vpack.c.b16 %v4087, %v4085
    %v5436 = vpack.c.b16 %v4090, %v4088
    %v5437 = vpack.c.b16 %v4091, %v4089
    %v5438 = vpack.c.b16 %v4094, %v4092
    %v5439 = vpack.c.b16 %v4095, %v4093
    %v5440 = vpack.c.b16 %v4098, %v4096
    %v5441 = vpack.c.b16 %v4099, %v4097
    %v5442 = vpack.c.b16 %v4102, %v4100
    %v5443 = vpack.c.b16 %v4103, %v4101
    %v5444 = vpack.c.b16 %v4106, %v4104
    %v5445 = vpack.c.b16 %v4107, %v4105
    %v5446 = vpack.c.b16 %v4110, %v4108
    %v5447 = vpack.c.b16 %v4111, %v4109
    %v5448 = vpack.c.b16 %v4114, %v4112
    %v5449 = vpack.c.b16 %v4115, %v4113
    %v5450 = vpack.c.b16 %v4118, %v4116
    %v5451 = vpack.c.b16 %v4119, %v4117
    %v5452 = vpack.c.b16 %v4122, %v4120
    %v5453 = vpack.c.b16 %v4123, %v4121
    %v5454 = vpack.c.b16 %v4126, %v4124
    %v5455 = vpack.c.b16 %v4127, %v4125
    %v5456 = vpack.c.b16 %v4130, %v4128
    %v5457 = vpack.c.b16 %v4131, %v4129
    %v5458 = vpack.c.b16 %v4134, %v4132
    %v5459 = vpack.c.b16 %v4135, %v4133
    %v5460 = vpack.c.b16 %v4138, %v4136
    %v5461 = vpack.c.b16 %v4139, %v4137
    %v5462 = vpack.c.b16 %v4142, %v4140
    %v5463 = vpack.c.b16 %v4143, %v4141
    %v5464 = vpack.c.b16 %v4146, %v4144
    %v5465 = vpack.c.b16 %v4147, %v4145
    %v5466 = vpack.c.b16 %v4150, %v4148
    %v5467 = vpack.c.b16 %v4151, %v4149
    %v5468 = vpack.c.b16 %v4154, %v4152
    %v5469 = vpack.c.b16 %v4155, %v4153
    %v5470 = vpack.c.b16 %v4158, %v4156
    %v5471 = vpack.c.b16 %v4159, %v4157
    %v5472 = vpack.c.b16 %v4162, %v4160
    %v5473 = vpack.c.b16 %v4163, %v4161
    %v5474 = vpack.c.b16 %v4166, %v4164
    %v5475 = vpack.c.b16 %v4167, %v4165
    %v5476 = vpack.c.b16 %v4170, %v4168
    %v5477 = vpack.c.b16 %v4171, %v4169
    %v5478 = vpack.c.b16 %v4174, %v4172
    %v5479 = vpack.c.b16 %v4175, %v4173
    %v5480 = vpack.c.b16 %v4178, %v4176
    %v5481 = vpack.c.b16 %v4179, %v4177
    %v5482 = vpack.c.b16 %v4182, %v4180
    %v5483 = vpack.c.b16 %v4183, %v4181
    %v5484 = vpack.c.b16 %v4186, %v4184
    %v5485 = vpack.c.b16 %v4187, %v4185
    %v5486 = vpack.c.b16 %v4190, %v4188
    %v5487 = vpack.c.b16 %v4191, %v4189
    %v5488 = vpack.c.b16 %v4194, %v4192
    %v5489 = vpack.c.b16 %v4195, %v4193
    %v5490 = vpack.c.b16 %v4198, %v4196
    %v5491 = vpack.c.b16 %v4199, %v4197
    %v5492 = vpack.c.b16 %v4202, %v4200
    %v5493 = vpack.c.b16 %v4203, %v4201
    %v5494 = vpack.c.b16 %v4206, %v4204
    %v5495 = vpack.c.b16 %v4207, %v4205
    %v5496 = vpack.c.b16 %v4210, %v4208
    %v5497 = vpack.c.b16 %v4211, %v4209
    %v5498 = vpack.c.b16 %v4214, %v4212
    %v5499 = vpack.c.b16 %v4215, %v4213
    %v5500 = vpack.c.b16 %v4218, %v4216
    %v5501 = vpack.c.b16 %v4219, %v4217
    %v5502 = vpack.c.b16 %v4222, %v4220
    %v5503 = vpack.c.b16 %v4223, %v4221
    %v5504 = vpack.c.b16 %v4226, %v4224
    %v5505 = vpack.c.b16 %v4227, %v4225
    %v5506 = vpack.c.b16 %v4230, %v4228
    %v5507 = vpack.c.b16 %v4231, %v4229
    %v5508 = vpack.c.b16 %v4234, %v4232
    %v5509 = vpack.c.b16 %v4235, %v4233
    %v5510 = vpack.c.b16 %v4238, %v4236
    %v5511 = vpack.c.b16 %v4239, %v4237
    %v5512 = vpack.c.b16 %v4242, %v4240
    %v5513 = vpack.c.b16 %v4243, %v4241
    %v5514 = vpack.c.b16 %v4246, %v4244
    %v5515 = vpack.c.b16 %v4247, %v4245
    %v5516 = vpack.c.b16 %v4250, %v4248
    %v5517 = vpack.c.b16 %v4251, %v4249
    %v5518 = vpack.c.b16 %v4254, %v4252
    %v5519 = vpack.c.b16 %v4255, %v4253
    %v5520 = vpack.c.b16 %v4258, %v4256
    %v5521 = vpack.c.b16 %v4259, %v4257
    %v5522 = vpack.c.b16 %v4262, %v4260
    %v5523 = vpack.c.b16 %v4263, %v4261
    %v5524 = vpack.c.b16 %v4266, %v4264
    %v5525 = vpack.c.b16 %v4267, %v4265
    %v5526 = vpack.c.b16 %v4270, %v4268
    %v5527 = vpack.c.b16 %v4271, %v4269
    %v5528 = vpack.c.b16 %v4274, %v4272
    %v5529 = vpack.c.b16 %v4275, %v4273
    %v5530 = vpack.c.b16 %v4278, %v4276
    %v5531 = vpack.c.b16 %v4279, %v4277
    %v5532 = vpack.c.b16 %v4282, %v4280
    %v5533 = vpack.c.b16 %v4283, %v4281
    %v5534 = vpack.c.b16 %v4286, %v4284
    %v5535 = vpack.c.b16 %v4287, %v4285
    %v5536 = vpack.c.b16 %v4290, %v4288
    %v5537 = vpack.c.b16 %v4291, %v4289
    %v5538 = vpack.c.b16 %v4294, %v4292
    %v5539 = vpack.c.b16 %v4295, %v4293
    %v5540 = vpack.c.b16 %v4298, %v4296
    %v5541 = vpack.c.b16 %v4299, %v4297
    %v5542 = vpack.c.b16 %v4302, %v4300
    %v5543 = vpack.c.b16 %v4303, %v4301
    %v5544 = vpack.c.b16 %v4306, %v4304
    %v5545 = vpack.c.b16 %v4307, %v4305
    %v5546 = vpack.c.b16 %v4310, %v4308
    %v5547 = vpack.c.b16 %v4311, %v4309
    %v5548 = vpack.c.b16 %v4314, %v4312
    %v5549 = vpack.c.b16 %v4315, %v4313
    %v5550 = vpack.c.b16 %v4318, %v4316
    %v5551 = vpack.c.b16 %v4319, %v4317
    %v5552 = vpack.c.b16 %v4322, %v4320
    %v5553 = vpack.c.b16 %v4323, %v4321
    %v5554 = vpack.c.b16 %v4326, %v4324
    %v5555 = vpack.c.b16 %v4327, %v4325
    %v5556 = vpack.c.b16 %v4330, %v4328
    %v5557 = vpack.c.b16 %v4331, %v4329
    %v5558 = vpack.c.b16 %v4334, %v4332
    %v5559 = vpack.c.b16 %v4335, %v4333
    %v5560 = vpack.c.b16 %v4338, %v4336
    %v5561 = vpack.c.b16 %v4339, %v4337
    %v5562 = vpack.c.b16 %v4342, %v4340
    %v5563 = vpack.c.b16 %v4343, %v4341
    %v5564 = vpack.c.b16 %v4346, %v4344
    %v5565 = vpack.c.b16 %v4347, %v4345
    %v5566 = vpack.c.b16 %v4350, %v4348
    %v5567 = vpack.c.b16 %v4351, %v4349
    %v5568 = vpack.c.b16 %v4354, %v4352
    %v5569 = vpack.c.b16 %v4355, %v4353
    %v5570 = vpack.c.b16 %v4358, %v4356
    %v5571 = vpack.c.b16 %v4359, %v4357
    %v5572 = vpack.c.b16 %v4362, %v4360
    %v5573 = vpack.c.b16 %v4363, %v4361
    %v5574 = vpack.c.b16 %v4366, %v4364
    %v5575 = vpack.c.b16 %v4367, %v4365
    %v5576 = vpack.c.b16 %v4370, %v4368
    %v5577 = vpack.c.b16 %v4371, %v4369
    %v5578 = vpack.c.b16 %v4374, %v4372
    %v5579 = vpack.c.b16 %v4375, %v4373
    %v5580 = vpack.c.b16 %v4378, %v4376
    %v5581 = vpack.c.b16 %v4379, %v4377
    %v5582 = vpack.c.b16 %v4382, %v4380
    %v5583 = vpack.c.b16 %v4383, %v4381
    %v5584 = vpack.c.b16 %v4386, %v4384
    %v5585 = vpack.c.b16 %v4387, %v4385
    %v5586 = vpack.c.b16 %v4390, %v4388
    %v5587 = vpack.c.b16 %v4391, %v4389
    %v5588 = vpack.c.b16 %v4394, %v4392
    %v5589 = vpack.c.b16 %v4395, %v4393
    %v5590 = vpack.c.b16 %v4398, %v4396
    %v5591 = vpack.c.b16 %v4399, %v4397
    %v5592 = vpack.c.b16 %v4402, %v4400
    %v5593 = vpack.c.b16 %v4403, %v4401
    %v5594 = vpack.c.b16 %v4406, %v4404
    %v5595 = vpack.c.b16 %v4407, %v4405
    %v5596 = vpack.c.b16 %v4410, %v4408
    %v5597 = vpack.c.b16 %v4411, %v4409
    %v5598 = vpack.c.b16 %v4414, %v4412
    %v5599 = vpack.c.b16 %v4415, %v4413
    %v5600 = vpack.c.b16 %v4418, %v4416
    %v5601 = vpack.c.b16 %v4419, %v4417
    %v5602 = vpack.c.b16 %v4422, %v4420
    %v5603 = vpack.c.b16 %v4423, %v4421
    %v5604 = vpack.c.b16 %v4426, %v4424
    %v5605 = vpack.c.b16 %v4427, %v4425
    %v5606 = vpack.c.b16 %v4430, %v4428
    %v5607 = vpack.c.b16 %v4431, %v4429
    %v5608 = vpack.c.b16 %v4434, %v4432
    %v5609 = vpack.c.b16 %v4435, %v4433
    %v5610 = vpack.c.b16 %v4438, %v4436
    %v5611 = vpack.c.b16 %v4439, %v4437
    %v5612 = vpack.c.b16 %v4442, %v4440
    %v5613 = vpack.c.b16 %v4443, %v4441
    %v5614 = vpack.c.b16 %v4446, %v4444
    %v5615 = vpack.c.b16 %v4447, %v4445
    %v5616 = vpack.c.b16 %v4450, %v4448
    %v5617 = vpack.c.b16 %v4451, %v4449
    %v5618 = vpack.c.b16 %v4454, %v4452
    %v5619 = vpack.c.b16 %v4455, %v4453
    %v5620 = vpack.c.b16 %v4458, %v4456
    %v5621 = vpack.c.b16 %v4459, %v4457
    %v5622 = vpack.c.b16 %v4462, %v4460
    %v5623 = vpack.c.b16 %v4463, %v4461
    %v5624 = vpack.c.b16 %v4466, %v4464
    %v5625 = vpack.c.b16 %v4467, %v4465
    %v5626 = vpack.c.b16 %v4470, %v4468
    %v5627 = vpack.c.b16 %v4471, %v4469
    %v5628 = vpack.c.b16 %v4474, %v4472
    %v5629 = vpack.c.b16 %v4475, %v4473
    %v5630 = vpack.c.b16 %v4478, %v4476
    %v5631 = vpack.c.b16 %v4479, %v4477
    %v5632 = vpack.c.b16 %v4482, %v4480
    %v5633 = vpack.c.b16 %v4483, %v4481
    %v5634 = vpack.c.b16 %v4486, %v4484
    %v5635 = vpack.c.b16 %v4487, %v4485
    %v5636 = vpack.c.b16 %v4490, %v4488
    %v5637 = vpack.c.b16 %v4491, %v4489
    %v5638 = vpack.c.b16 %v4494, %v4492
    %v5639 = vpack.c.b16 %v4495, %v4493
    %v5640 = vpack.c.b16 %v4498, %v4496
    %v5641 = vpack.c.b16 %v4499, %v4497
    %v5642 = vpack.c.b16 %v4502, %v4500
    %v5643 = vpack.c.b16 %v4503, %v4501
    %v5644 = vpack.c.b16 %v4506, %v4504
    %v5645 = vpack.c.b16 %v4507, %v4505
    %v5646 = vpack.c.b16 %v4510, %v4508
    %v5647 = vpack.c.b16 %v4511, %v4509
    %v5648 = vpack.c.b16 %v4514, %v4512
    %v5649 = vpack.c.b16 %v4515, %v4513
    %v5650 = vpack.c.b16 %v4518, %v4516
    %v5651 = vpack.c.b16 %v4519, %v4517
    %v5652 = vpack.c.b16 %v4522, %v4520
    %v5653 = vpack.c.b16 %v4523, %v4521
    %v5654 = vpack.c.b16 %v4526, %v4524
    %v5655 = vpack.c.b16 %v4527, %v4525
    %v5656 = vpack.c.b16 %v4530, %v4528
    %v5657 = vpack.c.b16 %v4531, %v4529
    %v5658 = vpack.c.b16 %v4534, %v4532
    %v5659 = vpack.c.b16 %v4535, %v4533
    %v5660 = vpack.c.b16 %v4538, %v4536
    %v5661 = vpack.c.b16 %v4539, %v4537
    %v5662 = vpack.c.b16 %v4542, %v4540
    %v5663 = vpack.c.b16 %v4543, %v4541
    %v5664 = vpack.c.b16 %v4546, %v4544
    %v5665 = vpack.c.b16 %v4547, %v4545
    %v5666 = vpack.c.b16 %v4550, %v4548
    %v5667 = vpack.c.b16 %v4551, %v4549
    %v5668 = vpack.c.b16 %v4554, %v4552
    %v5669 = vpack.c.b16 %v4555, %v4553
    %v5670 = vpack.c.b16 %v4558, %v4556
    %v5671 = vpack.c.b16 %v4559, %v4557
    %v5672 = vpack.c.b16 %v4562, %v4560
    %v5673 = vpack.c.b16 %v4563, %v4561
    %v5674 = vpack.c.b16 %v4566, %v4564
    %v5675 = vpack.c.b16 %v4567, %v4565
    %v5676 = vpack.c.b16 %v4570, %v4568
    %v5677 = vpack.c.b16 %v4571, %v4569
    %v5678 = vpack.c.b16 %v4574, %v4572
    %v5679 = vpack.c.b16 %v4575, %v4573
    %v5680 = vpack.c.b16 %v4578, %v4576
    %v5681 = vpack.c.b16 %v4579, %v4577
    %v5682 = vpack.c.b16 %v4582, %v4580
    %v5683 = vpack.c.b16 %v4583, %v4581
    %v5684 = vpack.c.b16 %v4586, %v4584
    %v5685 = vpack.c.b16 %v4587, %v4585
    %v5686 = vpack.c.b16 %v4590, %v4588
    %v5687 = vpack.c.b16 %v4591, %v4589
    %v5688 = vpack.c.b16 %v4594, %v4592
    %v5689 = vpack.c.b16 %v4595, %v4593
    %v5690 = vpack.c.b16 %v4598, %v4596
    %v5691 = vpack.c.b16 %v4599, %v4597
    %v5692 = vpack.c.b16 %v4602, %v4600
    %v5693 = vpack.c.b16 %v4603, %v4601
    %v5694 = vpack.c.b16 %v4606, %v4604
    %v5695 = vpack.c.b16 %v4607, %v4605
    %v5696 = vpack.c.b16 %v4610, %v4608
    %v5697 = vpack.c.b16 %v4611, %v4609
    %v5698 = vpack.c.b16 %v4614, %v4612
    %v5699 = vpack.c.b16 %v4615, %v4613
    %v5700 = vpack.c.b16 %v4618, %v4616
    %v5701 = vpack.c.b16 %v4619, %v4617
    %v5702 = vpack.c.b16 %v4622, %v4620
    %v5703 = vpack.c.b16 %v4623, %v4621
    %v5704 = vpack.c.b16 %v4626, %v4624
    %v5705 = vpack.c.b16 %v4627, %v4625
    %v5706 = vpack.c.b16 %v4630, %v4628
    %v5707 = vpack.c.b16 %v4631, %v4629
    %v5708 = vpack.c.b16 %v4634, %v4632
    %v5709 = vpack.c.b16 %v4635, %v4633
    %v5710 = vpack.c.b16 %v4638, %v4636
    %v5711 = vpack.c.b16 %v4639, %v4637
    %v5712 = vpack.c.b16 %v4642, %v4640
    %v5713 = vpack.c.b16 %v4643, %v4641
    %v5714 = vpack.c.b16 %v4646, %v4644
    %v5715 = vpack.c.b16 %v4647, %v4645
    %v5716 = vpack.c.b16 %v4650, %v4648
    %v5717 = vpack.c.b16 %v4651, %v4649
    %v5718 = vpack.c.b16 %v4654, %v4652
    %v5719 = vpack.c.b16 %v4655, %v4653
    %v5720 = vpack.c.b16 %v4658, %v4656
    %v5721 = vpack.c.b16 %v4659, %v4657
    %v5722 = vpack.c.b16 %v4662, %v4660
    %v5723 = vpack.c.b16 %v4663, %v4661
    %v5724 = vpack.c.b16 %v4666, %v4664
    %v5725 = vpack.c.b16 %v4667, %v4665
    %v5726 = vpack.c.b16 %v4670, %v4668
    %v5727 = vpack.c.b16 %v4671, %v4669
    %v5728 = vpack.c.b16 %v4674, %v4672
    %v5729 = vpack.c.b16 %v4675, %v4673
    %v5730 = vpack.c.b16 %v4678, %v4676
    %v5731 = vpack.c.b16 %v4679, %v4677
    %v5732 = vpack.c.b16 %v4682, %v4680
    %v5733 = vpack.c.b16 %v4683, %v4681
    %v5734 = vpack.c.b16 %v4686, %v4684
    %v5735 = vpack.c.b16 %v4687, %v4685
    %v5736 = vpack.c.b16 %v4690, %v4688
    %v5737 = vpack.c.b16 %v4691, %v4689
    %v5738 = vpack.c.b16 %v4694, %v4692
    %v5739 = vpack.c.b16 %v4695, %v4693
    %v5740 = vpack.c.b16 %v4698, %v4696
    %v5741 = vpack.c.b16 %v4699, %v4697
    %v5742 = vpack.c.b16 %v4702, %v4700
    %v5743 = vpack.c.b16 %v4703, %v4701
    %v5744 = vpack.c.b16 %v4706, %v4704
    %v5745 = vpack.c.b16 %v4707, %v4705
    %v5746 = vpack.c.b16 %v4710, %v4708
    %v5747 = vpack.c.b16 %v4711, %v4709
    %v5748 = vpack.c.b16 %v4714, %v4712
    %v5749 = vpack.c.b16 %v4715, %v4713
    %v5750 = vpack.c.b16 %v4718, %v4716
    %v5751 = vpack.c.b16 %v4719, %v4717
    %v5752 = vpack.c.b16 %v4722, %v4720
    %v5753 = vpack.c.b16 %v4723, %v4721
    %v5754 = vpack.c.b16 %v4726, %v4724
    %v5755 = vpack.c.b16 %v4727, %v4725
    %v5756 = vpack.c.b16 %v4730, %v4728
    %v5757 = vpack.c.b16 %v4731, %v4729
    %v5758 = vpack.c.b16 %v4734, %v4732
    %v5759 = vpack.c.b16 %v4735, %v4733
    %6784 = vmatprep.subr.bf16.mxu0 %v4751
    %6785 = vmatpush1.bf16.msra.mxu0 %v4750
    %6786 = vmatprep.subr.bf16.mxu0 %v4749
    %6787 = vmatpush1.bf16.msra.mxu0 %v4748
    %6788 = vmatprep.subr.bf16.mxu0 %v4747
    %6789 = vmatpush1.bf16.msra.mxu0 %v4746
    %6790 = vmatprep.subr.bf16.mxu0 %v4745
    %6791 = vmatpush1.bf16.msra.mxu0 %v4744
    %6792 = vmatprep.subr.bf16.mxu0 %v4743
    %6793 = vmatpush1.bf16.msra.mxu0 %v4742
    %6794 = vmatprep.subr.bf16.mxu0 %v4741
    %6795 = vmatpush1.bf16.msra.mxu0 %v4740
    %6796 = vmatprep.subr.bf16.mxu0 %v4739
    %6797 = vmatpush1.bf16.msra.mxu0 %v4738
    %6798 = vmatprep.subr.bf16.mxu0 %v4737
    %6799 = vmatpush1.bf16.msra.mxu0 %v4736
    %6800 = vmatprep.subr.bf16.mxu0 %v4767
    %6801 = vmatpush2.bf16.msra.mxu0 %v4766
    %6802 = vmatprep.subr.bf16.mxu0 %v4765
    %6803 = vmatpush2.bf16.msra.mxu0 %v4764
    %6804 = vmatprep.subr.bf16.mxu0 %v4763
    %6805 = vmatpush2.bf16.msra.mxu0 %v4762
    %6806 = vmatprep.subr.bf16.mxu0 %v4761
    %6807 = vmatpush2.bf16.msra.mxu0 %v4760
    %6808 = vmatprep.subr.bf16.mxu0 %v4759
    %6809 = vmatpush2.bf16.msra.mxu0 %v4758
    %6810 = vmatprep.subr.bf16.mxu0 %v4757
    %6811 = vmatpush2.bf16.msra.mxu0 %v4756
    %6812 = vmatprep.subr.bf16.mxu0 %v4755
    %6813 = vmatpush2.bf16.msra.mxu0 %v4754
    %6814 = vmatprep.subr.bf16.mxu0 %v4753
    %6815 = vmatpush2.bf16.msra.mxu0 %v4752
    %6816 = vmatprep.mubr.bf16.mxu0 %v1245
    %6817 = vmatmul.mubr.bf16.gmra.mxu0 %v1231
    %v6818 = vpop.f32.mrf.mxu0
    %v6819 = vadd.f32 %v1193, %v6818
    %v6820 = vpop.f32.mrf.mxu0
    %v6821 = vadd.f32 %v1197, %v6820
    %v6822 = vpop.f32.mrf.mxu0
    %v6823 = vpop.f32.mrf.mxu0
    %6824 = vdwg.mxu0
    %6825 = vmatprep.subr.bf16.mxu0 %v4783
    %6826 = vmatpush1.bf16.msra.mxu0 %v4782
    %6827 = vmatprep.subr.bf16.mxu0 %v4781
    %6828 = vmatpush1.bf16.msra.mxu0 %v4780
    %6829 = vmatprep.subr.bf16.mxu0 %v4779
    %6830 = vmatpush1.bf16.msra.mxu0 %v4778
    %6831 = vmatprep.subr.bf16.mxu0 %v4777
    %6832 = vmatpush1.bf16.msra.mxu0 %v4776
    %6833 = vmatprep.subr.bf16.mxu0 %v4775
    %6834 = vmatpush1.bf16.msra.mxu0 %v4774
    %6835 = vmatprep.subr.bf16.mxu0 %v4773
    %6836 = vmatpush1.bf16.msra.mxu0 %v4772
    %6837 = vmatprep.subr.bf16.mxu0 %v4771
    %6838 = vmatpush1.bf16.msra.mxu0 %v4770
    %6839 = vmatprep.subr.bf16.mxu0 %v4769
    %6840 = vmatpush1.bf16.msra.mxu0 %v4768
    %6841 = vmatprep.subr.bf16.mxu0 %v4799
    %6842 = vmatpush2.bf16.msra.mxu0 %v4798
    %6843 = vmatprep.subr.bf16.mxu0 %v4797
    %6844 = vmatpush2.bf16.msra.mxu0 %v4796
    %6845 = vmatprep.subr.bf16.mxu0 %v4795
    %6846 = vmatpush2.bf16.msra.mxu0 %v4794
    %6847 = vmatprep.subr.bf16.mxu0 %v4793
    %6848 = vmatpush2.bf16.msra.mxu0 %v4792
    %6849 = vmatprep.subr.bf16.mxu0 %v4791
    %6850 = vmatpush2.bf16.msra.mxu0 %v4790
    %6851 = vmatprep.subr.bf16.mxu0 %v4789
    %6852 = vmatpush2.bf16.msra.mxu0 %v4788
    %6853 = vmatprep.subr.bf16.mxu0 %v4787
    %6854 = vmatpush2.bf16.msra.mxu0 %v4786
    %6855 = vmatprep.subr.bf16.mxu0 %v4785
    %6856 = vmatpush2.bf16.msra.mxu0 %v4784
    %6857 = vmatprep.mubr.bf16.mxu0 %v1255
    %6858 = vmatmul.mubr.bf16.gmra.mxu0 %v1253
    %v6859 = vpop.f32.mrf.mxu0
    %v6860 = vadd.f32 %v6819, %v6859
    %v6861 = vpop.f32.mrf.mxu0
    %v6862 = vadd.f32 %v6821, %v6861
    %v6863 = vpop.f32.mrf.mxu0
    %v6864 = vpop.f32.mrf.mxu0
    %6865 = vdwg.mxu0
    %6866 = vmatprep.subr.bf16.mxu0 %v4815
    %6867 = vmatpush1.bf16.msra.mxu0 %v4814
    %6868 = vmatprep.subr.bf16.mxu0 %v4813
    %6869 = vmatpush1.bf16.msra.mxu0 %v4812
    %6870 = vmatprep.subr.bf16.mxu0 %v4811
    %6871 = vmatpush1.bf16.msra.mxu0 %v4810
    %6872 = vmatprep.subr.bf16.mxu0 %v4809
    %6873 = vmatpush1.bf16.msra.mxu0 %v4808
    %6874 = vmatprep.subr.bf16.mxu0 %v4807
    %6875 = vmatpush1.bf16.msra.mxu0 %v4806
    %6876 = vmatprep.subr.bf16.mxu0 %v4805
    %6877 = vmatpush1.bf16.msra.mxu0 %v4804
    %6878 = vmatprep.subr.bf16.mxu0 %v4803
    %6879 = vmatpush1.bf16.msra.mxu0 %v4802
    %6880 = vmatprep.subr.bf16.mxu0 %v4801
    %6881 = vmatpush1.bf16.msra.mxu0 %v4800
    %6882 = vmatprep.subr.bf16.mxu0 %v4831
    %6883 = vmatpush2.bf16.msra.mxu0 %v4830
    %6884 = vmatprep.subr.bf16.mxu0 %v4829
    %6885 = vmatpush2.bf16.msra.mxu0 %v4828
    %6886 = vmatprep.subr.bf16.mxu0 %v4827
    %6887 = vmatpush2.bf16.msra.mxu0 %v4826
    %6888 = vmatprep.subr.bf16.mxu0 %v4825
    %6889 = vmatpush2.bf16.msra.mxu0 %v4824
    %6890 = vmatprep.subr.bf16.mxu0 %v4823
    %6891 = vmatpush2.bf16.msra.mxu0 %v4822
    %6892 = vmatprep.subr.bf16.mxu0 %v4821
    %6893 = vmatpush2.bf16.msra.mxu0 %v4820
    %6894 = vmatprep.subr.bf16.mxu0 %v4819
    %6895 = vmatpush2.bf16.msra.mxu0 %v4818
    %6896 = vmatprep.subr.bf16.mxu0 %v4817
    %6897 = vmatpush2.bf16.msra.mxu0 %v4816
    %6898 = vmatprep.mubr.bf16.mxu0 %v1252
    %6899 = vmatmul.mubr.bf16.gmra.mxu0 %v1238
    %v6900 = vpop.f32.mrf.mxu0
    %v6901 = vadd.f32 %v6860, %v6900
    %v6902 = vpop.f32.mrf.mxu0
    %v6903 = vadd.f32 %v6862, %v6902
    %v6904 = vpop.f32.mrf.mxu0
    %v6905 = vpop.f32.mrf.mxu0
    %6906 = vdwg.mxu0
    %6907 = vmatprep.subr.bf16.mxu0 %v4847
    %6908 = vmatpush1.bf16.msra.mxu0 %v4846
    %6909 = vmatprep.subr.bf16.mxu0 %v4845
    %6910 = vmatpush1.bf16.msra.mxu0 %v4844
    %6911 = vmatprep.subr.bf16.mxu0 %v4843
    %6912 = vmatpush1.bf16.msra.mxu0 %v4842
    %6913 = vmatprep.subr.bf16.mxu0 %v4841
    %6914 = vmatpush1.bf16.msra.mxu0 %v4840
    %6915 = vmatprep.subr.bf16.mxu0 %v4839
    %6916 = vmatpush1.bf16.msra.mxu0 %v4838
    %6917 = vmatprep.subr.bf16.mxu0 %v4837
    %6918 = vmatpush1.bf16.msra.mxu0 %v4836
    %6919 = vmatprep.subr.bf16.mxu0 %v4835
    %6920 = vmatpush1.bf16.msra.mxu0 %v4834
    %6921 = vmatprep.subr.bf16.mxu0 %v4833
    %6922 = vmatpush1.bf16.msra.mxu0 %v4832
    %6923 = vmatprep.subr.bf16.mxu0 %v4863
    %6924 = vmatpush2.bf16.msra.mxu0 %v4862
    %6925 = vmatprep.subr.bf16.mxu0 %v4861
    %6926 = vmatpush2.bf16.msra.mxu0 %v4860
    %6927 = vmatprep.subr.bf16.mxu0 %v4859
    %6928 = vmatpush2.bf16.msra.mxu0 %v4858
    %6929 = vmatprep.subr.bf16.mxu0 %v4857
    %6930 = vmatpush2.bf16.msra.mxu0 %v4856
    %6931 = vmatprep.subr.bf16.mxu0 %v4855
    %6932 = vmatpush2.bf16.msra.mxu0 %v4854
    %6933 = vmatprep.subr.bf16.mxu0 %v4853
    %6934 = vmatpush2.bf16.msra.mxu0 %v4852
    %6935 = vmatprep.subr.bf16.mxu0 %v4851
    %6936 = vmatpush2.bf16.msra.mxu0 %v4850
    %6937 = vmatprep.subr.bf16.mxu0 %v4849
    %6938 = vmatpush2.bf16.msra.mxu0 %v4848
    %6939 = vmatprep.mubr.bf16.mxu0 %v1256
    %6940 = vmatmul.mubr.bf16.gmra.mxu0 %v1254
    %v6941 = vpop.f32.mrf.mxu0
    %v6942 = vadd.f32 %v6901, %v6941
    %v6943 = vpop.f32.mrf.mxu0
    %v6944 = vadd.f32 %v6903, %v6943
    %v6945 = vpop.f32.mrf.mxu0
    %v6946 = vpop.f32.mrf.mxu0
    %6947 = vdwg.mxu0
    %6948 = vmatprep.subr.bf16.mxu0 %v4879
    %6949 = vmatpush1.bf16.msra.mxu0 %v4878
    %6950 = vmatprep.subr.bf16.mxu0 %v4877
    %6951 = vmatpush1.bf16.msra.mxu0 %v4876
    %6952 = vmatprep.subr.bf16.mxu0 %v4875
    %6953 = vmatpush1.bf16.msra.mxu0 %v4874
    %6954 = vmatprep.subr.bf16.mxu0 %v4873
    %6955 = vmatpush1.bf16.msra.mxu0 %v4872
    %6956 = vmatprep.subr.bf16.mxu0 %v4871
    %6957 = vmatpush1.bf16.msra.mxu0 %v4870
    %6958 = vmatprep.subr.bf16.mxu0 %v4869
    %6959 = vmatpush1.bf16.msra.mxu0 %v4868
    %6960 = vmatprep.subr.bf16.mxu0 %v4867
    %6961 = vmatpush1.bf16.msra.mxu0 %v4866
    %6962 = vmatprep.subr.bf16.mxu0 %v4865
    %6963 = vmatpush1.bf16.msra.mxu0 %v4864
    %6964 = vmatprep.subr.bf16.mxu0 %v4895
    %6965 = vmatpush2.bf16.msra.mxu0 %v4894
    %6966 = vmatprep.subr.bf16.mxu0 %v4893
    %6967 = vmatpush2.bf16.msra.mxu0 %v4892
    %6968 = vmatprep.subr.bf16.mxu0 %v4891
    %6969 = vmatpush2.bf16.msra.mxu0 %v4890
    %6970 = vmatprep.subr.bf16.mxu0 %v4889
    %6971 = vmatpush2.bf16.msra.mxu0 %v4888
    %6972 = vmatprep.subr.bf16.mxu0 %v4887
    %6973 = vmatpush2.bf16.msra.mxu0 %v4886
    %6974 = vmatprep.subr.bf16.mxu0 %v4885
    %6975 = vmatpush2.bf16.msra.mxu0 %v4884
    %6976 = vmatprep.subr.bf16.mxu0 %v4883
    %6977 = vmatpush2.bf16.msra.mxu0 %v4882
    %6978 = vmatprep.subr.bf16.mxu0 %v4881
    %6979 = vmatpush2.bf16.msra.mxu0 %v4880
    %6980 = vmatprep.mubr.bf16.mxu0 %v1294
    %6981 = vmatmul.mubr.bf16.gmra.mxu0 %v1280
    %v6982 = vpop.f32.mrf.mxu0
    %v6983 = vadd.f32 %v6942, %v6982
    %v6984 = vpop.f32.mrf.mxu0
    %v6985 = vadd.f32 %v6944, %v6984
    %v6986 = vpop.f32.mrf.mxu0
    %v6987 = vpop.f32.mrf.mxu0
    %6988 = vdwg.mxu0
    %6989 = vmatprep.subr.bf16.mxu0 %v4911
    %6990 = vmatpush1.bf16.msra.mxu0 %v4910
    %6991 = vmatprep.subr.bf16.mxu0 %v4909
    %6992 = vmatpush1.bf16.msra.mxu0 %v4908
    %6993 = vmatprep.subr.bf16.mxu0 %v4907
    %6994 = vmatpush1.bf16.msra.mxu0 %v4906
    %6995 = vmatprep.subr.bf16.mxu0 %v4905
    %6996 = vmatpush1.bf16.msra.mxu0 %v4904
    %6997 = vmatprep.subr.bf16.mxu0 %v4903
    %6998 = vmatpush1.bf16.msra.mxu0 %v4902
    %6999 = vmatprep.subr.bf16.mxu0 %v4901
    %7000 = vmatpush1.bf16.msra.mxu0 %v4900
    %7001 = vmatprep.subr.bf16.mxu0 %v4899
    %7002 = vmatpush1.bf16.msra.mxu0 %v4898
    %7003 = vmatprep.subr.bf16.mxu0 %v4897
    %7004 = vmatpush1.bf16.msra.mxu0 %v4896
    %7005 = vmatprep.subr.bf16.mxu0 %v4927
    %7006 = vmatpush2.bf16.msra.mxu0 %v4926
    %7007 = vmatprep.subr.bf16.mxu0 %v4925
    %7008 = vmatpush2.bf16.msra.mxu0 %v4924
    %7009 = vmatprep.subr.bf16.mxu0 %v4923
    %7010 = vmatpush2.bf16.msra.mxu0 %v4922
    %7011 = vmatprep.subr.bf16.mxu0 %v4921
    %7012 = vmatpush2.bf16.msra.mxu0 %v4920
    %7013 = vmatprep.subr.bf16.mxu0 %v4919
    %7014 = vmatpush2.bf16.msra.mxu0 %v4918
    %7015 = vmatprep.subr.bf16.mxu0 %v4917
    %7016 = vmatpush2.bf16.msra.mxu0 %v4916
    %7017 = vmatprep.subr.bf16.mxu0 %v4915
    %7018 = vmatpush2.bf16.msra.mxu0 %v4914
    %7019 = vmatprep.subr.bf16.mxu0 %v4913
    %7020 = vmatpush2.bf16.msra.mxu0 %v4912
    %7021 = vmatprep.mubr.bf16.mxu0 %v1304
    %7022 = vmatmul.mubr.bf16.gmra.mxu0 %v1302
    %v7023 = vpop.f32.mrf.mxu0
    %v7024 = vadd.f32 %v6983, %v7023
    %v7025 = vpop.f32.mrf.mxu0
    %v7026 = vadd.f32 %v6985, %v7025
    %v7027 = vpop.f32.mrf.mxu0
    %v7028 = vpop.f32.mrf.mxu0
    %7029 = vdwg.mxu0
    %7030 = vmatprep.subr.bf16.mxu0 %v4943
    %7031 = vmatpush1.bf16.msra.mxu0 %v4942
    %7032 = vmatprep.subr.bf16.mxu0 %v4941
    %7033 = vmatpush1.bf16.msra.mxu0 %v4940
    %7034 = vmatprep.subr.bf16.mxu0 %v4939
    %7035 = vmatpush1.bf16.msra.mxu0 %v4938
    %7036 = vmatprep.subr.bf16.mxu0 %v4937
    %7037 = vmatpush1.bf16.msra.mxu0 %v4936
    %7038 = vmatprep.subr.bf16.mxu0 %v4935
    %7039 = vmatpush1.bf16.msra.mxu0 %v4934
    %7040 = vmatprep.subr.bf16.mxu0 %v4933
    %7041 = vmatpush1.bf16.msra.mxu0 %v4932
    %7042 = vmatprep.subr.bf16.mxu0 %v4931
    %7043 = vmatpush1.bf16.msra.mxu0 %v4930
    %7044 = vmatprep.subr.bf16.mxu0 %v4929
    %7045 = vmatpush1.bf16.msra.mxu0 %v4928
    %7046 = vmatprep.subr.bf16.mxu0 %v4959
    %7047 = vmatpush2.bf16.msra.mxu0 %v4958
    %7048 = vmatprep.subr.bf16.mxu0 %v4957
    %7049 = vmatpush2.bf16.msra.mxu0 %v4956
    %7050 = vmatprep.subr.bf16.mxu0 %v4955
    %7051 = vmatpush2.bf16.msra.mxu0 %v4954
    %7052 = vmatprep.subr.bf16.mxu0 %v4953
    %7053 = vmatpush2.bf16.msra.mxu0 %v4952
    %7054 = vmatprep.subr.bf16.mxu0 %v4951
    %7055 = vmatpush2.bf16.msra.mxu0 %v4950
    %7056 = vmatprep.subr.bf16.mxu0 %v4949
    %7057 = vmatpush2.bf16.msra.mxu0 %v4948
    %7058 = vmatprep.subr.bf16.mxu0 %v4947
    %7059 = vmatpush2.bf16.msra.mxu0 %v4946
    %7060 = vmatprep.subr.bf16.mxu0 %v4945
    %7061 = vmatpush2.bf16.msra.mxu0 %v4944
    %7062 = vmatprep.mubr.bf16.mxu0 %v1301
    %7063 = vmatmul.mubr.bf16.gmra.mxu0 %v1287
    %v7064 = vpop.f32.mrf.mxu0
    %v7065 = vadd.f32 %v7024, %v7064
    %v7066 = vpop.f32.mrf.mxu0
    %v7067 = vadd.f32 %v7026, %v7066
    %v7068 = vpop.f32.mrf.mxu0
    %v7069 = vpop.f32.mrf.mxu0
    %7070 = vdwg.mxu0
    %7071 = vmatprep.subr.bf16.mxu0 %v4975
    %7072 = vmatpush1.bf16.msra.mxu0 %v4974
    %7073 = vmatprep.subr.bf16.mxu0 %v4973
    %7074 = vmatpush1.bf16.msra.mxu0 %v4972
    %7075 = vmatprep.subr.bf16.mxu0 %v4971
    %7076 = vmatpush1.bf16.msra.mxu0 %v4970
    %7077 = vmatprep.subr.bf16.mxu0 %v4969
    %7078 = vmatpush1.bf16.msra.mxu0 %v4968
    %7079 = vmatprep.subr.bf16.mxu0 %v4967
    %7080 = vmatpush1.bf16.msra.mxu0 %v4966
    %7081 = vmatprep.subr.bf16.mxu0 %v4965
    %7082 = vmatpush1.bf16.msra.mxu0 %v4964
    %7083 = vmatprep.subr.bf16.mxu0 %v4963
    %7084 = vmatpush1.bf16.msra.mxu0 %v4962
    %7085 = vmatprep.subr.bf16.mxu0 %v4961
    %7086 = vmatpush1.bf16.msra.mxu0 %v4960
    %7087 = vmatprep.subr.bf16.mxu0 %v4991
    %7088 = vmatpush2.bf16.msra.mxu0 %v4990
    %7089 = vmatprep.subr.bf16.mxu0 %v4989
    %7090 = vmatpush2.bf16.msra.mxu0 %v4988
    %7091 = vmatprep.subr.bf16.mxu0 %v4987
    %7092 = vmatpush2.bf16.msra.mxu0 %v4986
    %7093 = vmatprep.subr.bf16.mxu0 %v4985
    %7094 = vmatpush2.bf16.msra.mxu0 %v4984
    %7095 = vmatprep.subr.bf16.mxu0 %v4983
    %7096 = vmatpush2.bf16.msra.mxu0 %v4982
    %7097 = vmatprep.subr.bf16.mxu0 %v4981
    %7098 = vmatpush2.bf16.msra.mxu0 %v4980
    %7099 = vmatprep.subr.bf16.mxu0 %v4979
    %7100 = vmatpush2.bf16.msra.mxu0 %v4978
    %7101 = vmatprep.subr.bf16.mxu0 %v4977
    %7102 = vmatpush2.bf16.msra.mxu0 %v4976
    %7103 = vmatprep.mubr.bf16.mxu0 %v1305
    %7104 = vmatmul.mubr.bf16.gmra.mxu0 %v1303
    %v7105 = vpop.f32.mrf.mxu0
    %v7106 = vadd.f32 %v7065, %v7105
    %v7107 = vpop.f32.mrf.mxu0
    %v7108 = vadd.f32 %v7067, %v7107
    %v7109 = vpop.f32.mrf.mxu0
    %v7110 = vpop.f32.mrf.mxu0
    %7111 = vdwg.mxu0
    %7112 = vmatprep.subr.bf16.mxu0 %v5007
    %7113 = vmatpush1.bf16.msra.mxu0 %v5006
    %7114 = vmatprep.subr.bf16.mxu0 %v5005
    %7115 = vmatpush1.bf16.msra.mxu0 %v5004
    %7116 = vmatprep.subr.bf16.mxu0 %v5003
    %7117 = vmatpush1.bf16.msra.mxu0 %v5002
    %7118 = vmatprep.subr.bf16.mxu0 %v5001
    %7119 = vmatpush1.bf16.msra.mxu0 %v5000
    %7120 = vmatprep.subr.bf16.mxu0 %v4999
    %7121 = vmatpush1.bf16.msra.mxu0 %v4998
    %7122 = vmatprep.subr.bf16.mxu0 %v4997
    %7123 = vmatpush1.bf16.msra.mxu0 %v4996
    %7124 = vmatprep.subr.bf16.mxu0 %v4995
    %7125 = vmatpush1.bf16.msra.mxu0 %v4994
    %7126 = vmatprep.subr.bf16.mxu0 %v4993
    %7127 = vmatpush1.bf16.msra.mxu0 %v4992
    %7128 = vmatprep.subr.bf16.mxu0 %v5023
    %7129 = vmatpush2.bf16.msra.mxu0 %v5022
    %7130 = vmatprep.subr.bf16.mxu0 %v5021
    %7131 = vmatpush2.bf16.msra.mxu0 %v5020
    %7132 = vmatprep.subr.bf16.mxu0 %v5019
    %7133 = vmatpush2.bf16.msra.mxu0 %v5018
    %7134 = vmatprep.subr.bf16.mxu0 %v5017
    %7135 = vmatpush2.bf16.msra.mxu0 %v5016
    %7136 = vmatprep.subr.bf16.mxu0 %v5015
    %7137 = vmatpush2.bf16.msra.mxu0 %v5014
    %7138 = vmatprep.subr.bf16.mxu0 %v5013
    %7139 = vmatpush2.bf16.msra.mxu0 %v5012
    %7140 = vmatprep.subr.bf16.mxu0 %v5011
    %7141 = vmatpush2.bf16.msra.mxu0 %v5010
    %7142 = vmatprep.subr.bf16.mxu0 %v5009
    %7143 = vmatpush2.bf16.msra.mxu0 %v5008
    %7144 = vmatprep.mubr.bf16.mxu0 %v1343
    %7145 = vmatmul.mubr.bf16.gmra.mxu0 %v1329
    %v7146 = vpop.f32.mrf.mxu0
    %v7147 = vadd.f32 %v7106, %v7146
    %v7148 = vpop.f32.mrf.mxu0
    %v7149 = vadd.f32 %v7108, %v7148
    %v7150 = vpop.f32.mrf.mxu0
    %v7151 = vpop.f32.mrf.mxu0
    %7152 = vdwg.mxu0
    %7153 = vmatprep.subr.bf16.mxu0 %v5039
    %7154 = vmatpush1.bf16.msra.mxu0 %v5038
    %7155 = vmatprep.subr.bf16.mxu0 %v5037
    %7156 = vmatpush1.bf16.msra.mxu0 %v5036
    %7157 = vmatprep.subr.bf16.mxu0 %v5035
    %7158 = vmatpush1.bf16.msra.mxu0 %v5034
    %7159 = vmatprep.subr.bf16.mxu0 %v5033
    %7160 = vmatpush1.bf16.msra.mxu0 %v5032
    %7161 = vmatprep.subr.bf16.mxu0 %v5031
    %7162 = vmatpush1.bf16.msra.mxu0 %v5030
    %7163 = vmatprep.subr.bf16.mxu0 %v5029
    %7164 = vmatpush1.bf16.msra.mxu0 %v5028
    %7165 = vmatprep.subr.bf16.mxu0 %v5027
    %7166 = vmatpush1.bf16.msra.mxu0 %v5026
    %7167 = vmatprep.subr.bf16.mxu0 %v5025
    %7168 = vmatpush1.bf16.msra.mxu0 %v5024
    %7169 = vmatprep.subr.bf16.mxu0 %v5055
    %7170 = vmatpush2.bf16.msra.mxu0 %v5054
    %7171 = vmatprep.subr.bf16.mxu0 %v5053
    %7172 = vmatpush2.bf16.msra.mxu0 %v5052
    %7173 = vmatprep.subr.bf16.mxu0 %v5051
    %7174 = vmatpush2.bf16.msra.mxu0 %v5050
    %7175 = vmatprep.subr.bf16.mxu0 %v5049
    %7176 = vmatpush2.bf16.msra.mxu0 %v5048
    %7177 = vmatprep.subr.bf16.mxu0 %v5047
    %7178 = vmatpush2.bf16.msra.mxu0 %v5046
    %7179 = vmatprep.subr.bf16.mxu0 %v5045
    %7180 = vmatpush2.bf16.msra.mxu0 %v5044
    %7181 = vmatprep.subr.bf16.mxu0 %v5043
    %7182 = vmatpush2.bf16.msra.mxu0 %v5042
    %7183 = vmatprep.subr.bf16.mxu0 %v5041
    %7184 = vmatpush2.bf16.msra.mxu0 %v5040
    %7185 = vmatprep.mubr.bf16.mxu0 %v1353
    %7186 = vmatmul.mubr.bf16.gmra.mxu0 %v1351
    %v7187 = vpop.f32.mrf.mxu0
    %v7188 = vadd.f32 %v7147, %v7187
    %v7189 = vpop.f32.mrf.mxu0
    %v7190 = vadd.f32 %v7149, %v7189
    %v7191 = vpop.f32.mrf.mxu0
    %v7192 = vpop.f32.mrf.mxu0
    %7193 = vdwg.mxu0
    %7194 = vmatprep.subr.bf16.mxu0 %v5071
    %7195 = vmatpush1.bf16.msra.mxu0 %v5070
    %7196 = vmatprep.subr.bf16.mxu0 %v5069
    %7197 = vmatpush1.bf16.msra.mxu0 %v5068
    %7198 = vmatprep.subr.bf16.mxu0 %v5067
    %7199 = vmatpush1.bf16.msra.mxu0 %v5066
    %7200 = vmatprep.subr.bf16.mxu0 %v5065
    %7201 = vmatpush1.bf16.msra.mxu0 %v5064
    %7202 = vmatprep.subr.bf16.mxu0 %v5063
    %7203 = vmatpush1.bf16.msra.mxu0 %v5062
    %7204 = vmatprep.subr.bf16.mxu0 %v5061
    %7205 = vmatpush1.bf16.msra.mxu0 %v5060
    %7206 = vmatprep.subr.bf16.mxu0 %v5059
    %7207 = vmatpush1.bf16.msra.mxu0 %v5058
    %7208 = vmatprep.subr.bf16.mxu0 %v5057
    %7209 = vmatpush1.bf16.msra.mxu0 %v5056
    %7210 = vmatprep.subr.bf16.mxu0 %v5087
    %7211 = vmatpush2.bf16.msra.mxu0 %v5086
    %7212 = vmatprep.subr.bf16.mxu0 %v5085
    %7213 = vmatpush2.bf16.msra.mxu0 %v5084
    %7214 = vmatprep.subr.bf16.mxu0 %v5083
    %7215 = vmatpush2.bf16.msra.mxu0 %v5082
    %7216 = vmatprep.subr.bf16.mxu0 %v5081
    %7217 = vmatpush2.bf16.msra.mxu0 %v5080
    %7218 = vmatprep.subr.bf16.mxu0 %v5079
    %7219 = vmatpush2.bf16.msra.mxu0 %v5078
    %7220 = vmatprep.subr.bf16.mxu0 %v5077
    %7221 = vmatpush2.bf16.msra.mxu0 %v5076
    %7222 = vmatprep.subr.bf16.mxu0 %v5075
    %7223 = vmatpush2.bf16.msra.mxu0 %v5074
    %7224 = vmatprep.subr.bf16.mxu0 %v5073
    %7225 = vmatpush2.bf16.msra.mxu0 %v5072
    %7226 = vmatprep.mubr.bf16.mxu0 %v1350
    %7227 = vmatmul.mubr.bf16.gmra.mxu0 %v1336
    %v7228 = vpop.f32.mrf.mxu0
    %v7229 = vadd.f32 %v7188, %v7228
    %v7230 = vpop.f32.mrf.mxu0
    %v7231 = vadd.f32 %v7190, %v7230
    %v7232 = vpop.f32.mrf.mxu0
    %v7233 = vpop.f32.mrf.mxu0
    %7234 = vdwg.mxu0
    %7235 = vmatprep.subr.bf16.mxu0 %v5103
    %7236 = vmatpush1.bf16.msra.mxu0 %v5102
    %7237 = vmatprep.subr.bf16.mxu0 %v5101
    %7238 = vmatpush1.bf16.msra.mxu0 %v5100
    %7239 = vmatprep.subr.bf16.mxu0 %v5099
    %7240 = vmatpush1.bf16.msra.mxu0 %v5098
    %7241 = vmatprep.subr.bf16.mxu0 %v5097
    %7242 = vmatpush1.bf16.msra.mxu0 %v5096
    %7243 = vmatprep.subr.bf16.mxu0 %v5095
    %7244 = vmatpush1.bf16.msra.mxu0 %v5094
    %7245 = vmatprep.subr.bf16.mxu0 %v5093
    %7246 = vmatpush1.bf16.msra.mxu0 %v5092
    %7247 = vmatprep.subr.bf16.mxu0 %v5091
    %7248 = vmatpush1.bf16.msra.mxu0 %v5090
    %7249 = vmatprep.subr.bf16.mxu0 %v5089
    %7250 = vmatpush1.bf16.msra.mxu0 %v5088
    %7251 = vmatprep.subr.bf16.mxu0 %v5119
    %7252 = vmatpush2.bf16.msra.mxu0 %v5118
    %7253 = vmatprep.subr.bf16.mxu0 %v5117
    %7254 = vmatpush2.bf16.msra.mxu0 %v5116
    %7255 = vmatprep.subr.bf16.mxu0 %v5115
    %7256 = vmatpush2.bf16.msra.mxu0 %v5114
    %7257 = vmatprep.subr.bf16.mxu0 %v5113
    %7258 = vmatpush2.bf16.msra.mxu0 %v5112
    %7259 = vmatprep.subr.bf16.mxu0 %v5111
    %7260 = vmatpush2.bf16.msra.mxu0 %v5110
    %7261 = vmatprep.subr.bf16.mxu0 %v5109
    %7262 = vmatpush2.bf16.msra.mxu0 %v5108
    %7263 = vmatprep.subr.bf16.mxu0 %v5107
    %7264 = vmatpush2.bf16.msra.mxu0 %v5106
    %7265 = vmatprep.subr.bf16.mxu0 %v5105
    %7266 = vmatpush2.bf16.msra.mxu0 %v5104
    %7267 = vmatprep.mubr.bf16.mxu0 %v1354
    %7268 = vmatmul.mubr.bf16.gmra.mxu0 %v1352
    %v7269 = vpop.f32.mrf.mxu0
    %v7270 = vadd.f32 %v7229, %v7269
    %v7271 = vpop.f32.mrf.mxu0
    %v7272 = vadd.f32 %v7231, %v7271
    %v7273 = vpop.f32.mrf.mxu0
    %v7274 = vpop.f32.mrf.mxu0
    %7275 = vdwg.mxu0
    %7276 = vmatprep.subr.bf16.mxu0 %v5135
    %7277 = vmatpush1.bf16.msra.mxu0 %v5134
    %7278 = vmatprep.subr.bf16.mxu0 %v5133
    %7279 = vmatpush1.bf16.msra.mxu0 %v5132
    %7280 = vmatprep.subr.bf16.mxu0 %v5131
    %7281 = vmatpush1.bf16.msra.mxu0 %v5130
    %7282 = vmatprep.subr.bf16.mxu0 %v5129
    %7283 = vmatpush1.bf16.msra.mxu0 %v5128
    %7284 = vmatprep.subr.bf16.mxu0 %v5127
    %7285 = vmatpush1.bf16.msra.mxu0 %v5126
    %7286 = vmatprep.subr.bf16.mxu0 %v5125
    %7287 = vmatpush1.bf16.msra.mxu0 %v5124
    %7288 = vmatprep.subr.bf16.mxu0 %v5123
    %7289 = vmatpush1.bf16.msra.mxu0 %v5122
    %7290 = vmatprep.subr.bf16.mxu0 %v5121
    %7291 = vmatpush1.bf16.msra.mxu0 %v5120
    %7292 = vmatprep.subr.bf16.mxu0 %v5151
    %7293 = vmatpush2.bf16.msra.mxu0 %v5150
    %7294 = vmatprep.subr.bf16.mxu0 %v5149
    %7295 = vmatpush2.bf16.msra.mxu0 %v5148
    %7296 = vmatprep.subr.bf16.mxu0 %v5147
    %7297 = vmatpush2.bf16.msra.mxu0 %v5146
    %7298 = vmatprep.subr.bf16.mxu0 %v5145
    %7299 = vmatpush2.bf16.msra.mxu0 %v5144
    %7300 = vmatprep.subr.bf16.mxu0 %v5143
    %7301 = vmatpush2.bf16.msra.mxu0 %v5142
    %7302 = vmatprep.subr.bf16.mxu0 %v5141
    %7303 = vmatpush2.bf16.msra.mxu0 %v5140
    %7304 = vmatprep.subr.bf16.mxu0 %v5139
    %7305 = vmatpush2.bf16.msra.mxu0 %v5138
    %7306 = vmatprep.subr.bf16.mxu0 %v5137
    %7307 = vmatpush2.bf16.msra.mxu0 %v5136
    %7308 = vmatprep.mubr.bf16.mxu0 %v1392
    %7309 = vmatmul.mubr.bf16.gmra.mxu0 %v1378
    %v7310 = vpop.f32.mrf.mxu0
    %v7311 = vadd.f32 %v7270, %v7310
    %v7312 = vpop.f32.mrf.mxu0
    %v7313 = vadd.f32 %v7272, %v7312
    %v7314 = vpop.f32.mrf.mxu0
    %v7315 = vpop.f32.mrf.mxu0
    %7316 = vdwg.mxu0
    %7317 = vmatprep.subr.bf16.mxu0 %v5167
    %7318 = vmatpush1.bf16.msra.mxu0 %v5166
    %7319 = vmatprep.subr.bf16.mxu0 %v5165
    %7320 = vmatpush1.bf16.msra.mxu0 %v5164
    %7321 = vmatprep.subr.bf16.mxu0 %v5163
    %7322 = vmatpush1.bf16.msra.mxu0 %v5162
    %7323 = vmatprep.subr.bf16.mxu0 %v5161
    %7324 = vmatpush1.bf16.msra.mxu0 %v5160
    %7325 = vmatprep.subr.bf16.mxu0 %v5159
    %7326 = vmatpush1.bf16.msra.mxu0 %v5158
    %7327 = vmatprep.subr.bf16.mxu0 %v5157
    %7328 = vmatpush1.bf16.msra.mxu0 %v5156
    %7329 = vmatprep.subr.bf16.mxu0 %v5155
    %7330 = vmatpush1.bf16.msra.mxu0 %v5154
    %7331 = vmatprep.subr.bf16.mxu0 %v5153
    %7332 = vmatpush1.bf16.msra.mxu0 %v5152
    %7333 = vmatprep.subr.bf16.mxu0 %v5183
    %7334 = vmatpush2.bf16.msra.mxu0 %v5182
    %7335 = vmatprep.subr.bf16.mxu0 %v5181
    %7336 = vmatpush2.bf16.msra.mxu0 %v5180
    %7337 = vmatprep.subr.bf16.mxu0 %v5179
    %7338 = vmatpush2.bf16.msra.mxu0 %v5178
    %7339 = vmatprep.subr.bf16.mxu0 %v5177
    %7340 = vmatpush2.bf16.msra.mxu0 %v5176
    %7341 = vmatprep.subr.bf16.mxu0 %v5175
    %7342 = vmatpush2.bf16.msra.mxu0 %v5174
    %7343 = vmatprep.subr.bf16.mxu0 %v5173
    %7344 = vmatpush2.bf16.msra.mxu0 %v5172
    %7345 = vmatprep.subr.bf16.mxu0 %v5171
    %7346 = vmatpush2.bf16.msra.mxu0 %v5170
    %7347 = vmatprep.subr.bf16.mxu0 %v5169
    %7348 = vmatpush2.bf16.msra.mxu0 %v5168
    %7349 = vmatprep.mubr.bf16.mxu0 %v1402
    %7350 = vmatmul.mubr.bf16.gmra.mxu0 %v1400
    %v7351 = vpop.f32.mrf.mxu0
    %v7352 = vadd.f32 %v7311, %v7351
    %v7353 = vpop.f32.mrf.mxu0
    %v7354 = vadd.f32 %v7313, %v7353
    %v7355 = vpop.f32.mrf.mxu0
    %v7356 = vpop.f32.mrf.mxu0
    %7357 = vdwg.mxu0
    %7358 = vmatprep.subr.bf16.mxu0 %v5199
    %7359 = vmatpush1.bf16.msra.mxu0 %v5198
    %7360 = vmatprep.subr.bf16.mxu0 %v5197
    %7361 = vmatpush1.bf16.msra.mxu0 %v5196
    %7362 = vmatprep.subr.bf16.mxu0 %v5195
    %7363 = vmatpush1.bf16.msra.mxu0 %v5194
    %7364 = vmatprep.subr.bf16.mxu0 %v5193
    %7365 = vmatpush1.bf16.msra.mxu0 %v5192
    %7366 = vmatprep.subr.bf16.mxu0 %v5191
    %7367 = vmatpush1.bf16.msra.mxu0 %v5190
    %7368 = vmatprep.subr.bf16.mxu0 %v5189
    %7369 = vmatpush1.bf16.msra.mxu0 %v5188
    %7370 = vmatprep.subr.bf16.mxu0 %v5187
    %7371 = vmatpush1.bf16.msra.mxu0 %v5186
    %7372 = vmatprep.subr.bf16.mxu0 %v5185
    %7373 = vmatpush1.bf16.msra.mxu0 %v5184
    %7374 = vmatprep.subr.bf16.mxu0 %v5215
    %7375 = vmatpush2.bf16.msra.mxu0 %v5214
    %7376 = vmatprep.subr.bf16.mxu0 %v5213
    %7377 = vmatpush2.bf16.msra.mxu0 %v5212
    %7378 = vmatprep.subr.bf16.mxu0 %v5211
    %7379 = vmatpush2.bf16.msra.mxu0 %v5210
    %7380 = vmatprep.subr.bf16.mxu0 %v5209
    %7381 = vmatpush2.bf16.msra.mxu0 %v5208
    %7382 = vmatprep.subr.bf16.mxu0 %v5207
    %7383 = vmatpush2.bf16.msra.mxu0 %v5206
    %7384 = vmatprep.subr.bf16.mxu0 %v5205
    %7385 = vmatpush2.bf16.msra.mxu0 %v5204
    %7386 = vmatprep.subr.bf16.mxu0 %v5203
    %7387 = vmatpush2.bf16.msra.mxu0 %v5202
    %7388 = vmatprep.subr.bf16.mxu0 %v5201
    %7389 = vmatpush2.bf16.msra.mxu0 %v5200
    %7390 = vmatprep.mubr.bf16.mxu0 %v1399
    %7391 = vmatmul.mubr.bf16.gmra.mxu0 %v1385
    %v7392 = vpop.f32.mrf.mxu0
    %v7393 = vadd.f32 %v7352, %v7392
    %v7394 = vpop.f32.mrf.mxu0
    %v7395 = vadd.f32 %v7354, %v7394
    %v7396 = vpop.f32.mrf.mxu0
    %v7397 = vpop.f32.mrf.mxu0
    %7398 = vdwg.mxu0
    %7399 = vmatprep.subr.bf16.mxu0 %v5231
    %7400 = vmatpush1.bf16.msra.mxu0 %v5230
    %7401 = vmatprep.subr.bf16.mxu0 %v5229
    %7402 = vmatpush1.bf16.msra.mxu0 %v5228
    %7403 = vmatprep.subr.bf16.mxu0 %v5227
    %7404 = vmatpush1.bf16.msra.mxu0 %v5226
    %7405 = vmatprep.subr.bf16.mxu0 %v5225
    %7406 = vmatpush1.bf16.msra.mxu0 %v5224
    %7407 = vmatprep.subr.bf16.mxu0 %v5223
    %7408 = vmatpush1.bf16.msra.mxu0 %v5222
    %7409 = vmatprep.subr.bf16.mxu0 %v5221
    %7410 = vmatpush1.bf16.msra.mxu0 %v5220
    %7411 = vmatprep.subr.bf16.mxu0 %v5219
    %7412 = vmatpush1.bf16.msra.mxu0 %v5218
    %7413 = vmatprep.subr.bf16.mxu0 %v5217
    %7414 = vmatpush1.bf16.msra.mxu0 %v5216
    %7415 = vmatprep.subr.bf16.mxu0 %v5247
    %7416 = vmatpush2.bf16.msra.mxu0 %v5246
    %7417 = vmatprep.subr.bf16.mxu0 %v5245
    %7418 = vmatpush2.bf16.msra.mxu0 %v5244
    %7419 = vmatprep.subr.bf16.mxu0 %v5243
    %7420 = vmatpush2.bf16.msra.mxu0 %v5242
    %7421 = vmatprep.subr.bf16.mxu0 %v5241
    %7422 = vmatpush2.bf16.msra.mxu0 %v5240
    %7423 = vmatprep.subr.bf16.mxu0 %v5239
    %7424 = vmatpush2.bf16.msra.mxu0 %v5238
    %7425 = vmatprep.subr.bf16.mxu0 %v5237
    %7426 = vmatpush2.bf16.msra.mxu0 %v5236
    %7427 = vmatprep.subr.bf16.mxu0 %v5235
    %7428 = vmatpush2.bf16.msra.mxu0 %v5234
    %7429 = vmatprep.subr.bf16.mxu0 %v5233
    %7430 = vmatpush2.bf16.msra.mxu0 %v5232
    %7431 = vmatprep.mubr.bf16.mxu0 %v1403
    %7432 = vmatmul.mubr.bf16.gmra.mxu0 %v1401
    %v7433 = vpop.f32.mrf.mxu0
    %v7434 = vadd.f32 %v7393, %v7433
    %v7435 = vpop.f32.mrf.mxu0
    %v7436 = vadd.f32 %v7395, %v7435
    %v7437 = vpop.f32.mrf.mxu0
    %v7438 = vpop.f32.mrf.mxu0
    %7439 = vdwg.mxu0
    %7440 = vmatprep.subr.bf16.mxu0 %v5263
    %7441 = vmatpush1.bf16.msra.mxu0 %v5262
    %7442 = vmatprep.subr.bf16.mxu0 %v5261
    %7443 = vmatpush1.bf16.msra.mxu0 %v5260
    %7444 = vmatprep.subr.bf16.mxu0 %v5259
    %7445 = vmatpush1.bf16.msra.mxu0 %v5258
    %7446 = vmatprep.subr.bf16.mxu0 %v5257
    %7447 = vmatpush1.bf16.msra.mxu0 %v5256
    %7448 = vmatprep.subr.bf16.mxu0 %v5255
    %7449 = vmatpush1.bf16.msra.mxu0 %v5254
    %7450 = vmatprep.subr.bf16.mxu0 %v5253
    %7451 = vmatpush1.bf16.msra.mxu0 %v5252
    %7452 = vmatprep.subr.bf16.mxu0 %v5251
    %7453 = vmatpush1.bf16.msra.mxu0 %v5250
    %7454 = vmatprep.subr.bf16.mxu0 %v5249
    %7455 = vmatpush1.bf16.msra.mxu0 %v5248
    %7456 = vmatprep.subr.bf16.mxu0 %v5279
    %7457 = vmatpush2.bf16.msra.mxu0 %v5278
    %7458 = vmatprep.subr.bf16.mxu0 %v5277
    %7459 = vmatpush2.bf16.msra.mxu0 %v5276
    %7460 = vmatprep.subr.bf16.mxu0 %v5275
    %7461 = vmatpush2.bf16.msra.mxu0 %v5274
    %7462 = vmatprep.subr.bf16.mxu0 %v5273
    %7463 = vmatpush2.bf16.msra.mxu0 %v5272
    %7464 = vmatprep.subr.bf16.mxu0 %v5271
    %7465 = vmatpush2.bf16.msra.mxu0 %v5270
    %7466 = vmatprep.subr.bf16.mxu0 %v5269
    %7467 = vmatpush2.bf16.msra.mxu0 %v5268
    %7468 = vmatprep.subr.bf16.mxu0 %v5267
    %7469 = vmatpush2.bf16.msra.mxu0 %v5266
    %7470 = vmatprep.subr.bf16.mxu0 %v5265
    %7471 = vmatpush2.bf16.msra.mxu0 %v5264
    %7472 = vmatprep.mubr.bf16.mxu0 %v1441
    %7473 = vmatmul.mubr.bf16.gmra.mxu0 %v1427
    %v7474 = vpop.f32.mrf.mxu0
    %v7475 = vadd.f32 %v7434, %v7474
    %v7476 = vpop.f32.mrf.mxu0
    %v7477 = vadd.f32 %v7436, %v7476
    %v7478 = vpop.f32.mrf.mxu0
    %v7479 = vpop.f32.mrf.mxu0
    %7480 = vdwg.mxu0
    %7481 = vmatprep.subr.bf16.mxu0 %v5295
    %7482 = vmatpush1.bf16.msra.mxu0 %v5294
    %7483 = vmatprep.subr.bf16.mxu0 %v5293
    %7484 = vmatpush1.bf16.msra.mxu0 %v5292
    %7485 = vmatprep.subr.bf16.mxu0 %v5291
    %7486 = vmatpush1.bf16.msra.mxu0 %v5290
    %7487 = vmatprep.subr.bf16.mxu0 %v5289
    %7488 = vmatpush1.bf16.msra.mxu0 %v5288
    %7489 = vmatprep.subr.bf16.mxu0 %v5287
    %7490 = vmatpush1.bf16.msra.mxu0 %v5286
    %7491 = vmatprep.subr.bf16.mxu0 %v5285
    %7492 = vmatpush1.bf16.msra.mxu0 %v5284
    %7493 = vmatprep.subr.bf16.mxu0 %v5283
    %7494 = vmatpush1.bf16.msra.mxu0 %v5282
    %7495 = vmatprep.subr.bf16.mxu0 %v5281
    %7496 = vmatpush1.bf16.msra.mxu0 %v5280
    %7497 = vmatprep.subr.bf16.mxu0 %v5311
    %7498 = vmatpush2.bf16.msra.mxu0 %v5310
    %7499 = vmatprep.subr.bf16.mxu0 %v5309
    %7500 = vmatpush2.bf16.msra.mxu0 %v5308
    %7501 = vmatprep.subr.bf16.mxu0 %v5307
    %7502 = vmatpush2.bf16.msra.mxu0 %v5306
    %7503 = vmatprep.subr.bf16.mxu0 %v5305
    %7504 = vmatpush2.bf16.msra.mxu0 %v5304
    %7505 = vmatprep.subr.bf16.mxu0 %v5303
    %7506 = vmatpush2.bf16.msra.mxu0 %v5302
    %7507 = vmatprep.subr.bf16.mxu0 %v5301
    %7508 = vmatpush2.bf16.msra.mxu0 %v5300
    %7509 = vmatprep.subr.bf16.mxu0 %v5299
    %7510 = vmatpush2.bf16.msra.mxu0 %v5298
    %7511 = vmatprep.subr.bf16.mxu0 %v5297
    %7512 = vmatpush2.bf16.msra.mxu0 %v5296
    %7513 = vmatprep.mubr.bf16.mxu0 %v1451
    %7514 = vmatmul.mubr.bf16.gmra.mxu0 %v1449
    %v7515 = vpop.f32.mrf.mxu0
    %v7516 = vadd.f32 %v7475, %v7515
    %v7517 = vpop.f32.mrf.mxu0
    %v7518 = vadd.f32 %v7477, %v7517
    %v7519 = vpop.f32.mrf.mxu0
    %v7520 = vpop.f32.mrf.mxu0
    %7521 = vdwg.mxu0
    %7522 = vmatprep.subr.bf16.mxu0 %v5327
    %7523 = vmatpush1.bf16.msra.mxu0 %v5326
    %7524 = vmatprep.subr.bf16.mxu0 %v5325
    %7525 = vmatpush1.bf16.msra.mxu0 %v5324
    %7526 = vmatprep.subr.bf16.mxu0 %v5323
    %7527 = vmatpush1.bf16.msra.mxu0 %v5322
    %7528 = vmatprep.subr.bf16.mxu0 %v5321
    %7529 = vmatpush1.bf16.msra.mxu0 %v5320
    %7530 = vmatprep.subr.bf16.mxu0 %v5319
    %7531 = vmatpush1.bf16.msra.mxu0 %v5318
    %7532 = vmatprep.subr.bf16.mxu0 %v5317
    %7533 = vmatpush1.bf16.msra.mxu0 %v5316
    %7534 = vmatprep.subr.bf16.mxu0 %v5315
    %7535 = vmatpush1.bf16.msra.mxu0 %v5314
    %7536 = vmatprep.subr.bf16.mxu0 %v5313
    %7537 = vmatpush1.bf16.msra.mxu0 %v5312
    %7538 = vmatprep.subr.bf16.mxu0 %v5343
    %7539 = vmatpush2.bf16.msra.mxu0 %v5342
    %7540 = vmatprep.subr.bf16.mxu0 %v5341
    %7541 = vmatpush2.bf16.msra.mxu0 %v5340
    %7542 = vmatprep.subr.bf16.mxu0 %v5339
    %7543 = vmatpush2.bf16.msra.mxu0 %v5338
    %7544 = vmatprep.subr.bf16.mxu0 %v5337
    %7545 = vmatpush2.bf16.msra.mxu0 %v5336
    %7546 = vmatprep.subr.bf16.mxu0 %v5335
    %7547 = vmatpush2.bf16.msra.mxu0 %v5334
    %7548 = vmatprep.subr.bf16.mxu0 %v5333
    %7549 = vmatpush2.bf16.msra.mxu0 %v5332
    %7550 = vmatprep.subr.bf16.mxu0 %v5331
    %7551 = vmatpush2.bf16.msra.mxu0 %v5330
    %7552 = vmatprep.subr.bf16.mxu0 %v5329
    %7553 = vmatpush2.bf16.msra.mxu0 %v5328
    %7554 = vmatprep.mubr.bf16.mxu0 %v1448
    %7555 = vmatmul.mubr.bf16.gmra.mxu0 %v1434
    %v7556 = vpop.f32.mrf.mxu0
    %v7557 = vadd.f32 %v7516, %v7556
    %v7558 = vpop.f32.mrf.mxu0
    %v7559 = vadd.f32 %v7518, %v7558
    %v7560 = vpop.f32.mrf.mxu0
    %v7561 = vpop.f32.mrf.mxu0
    %7562 = vdwg.mxu0
    %7563 = vmatprep.subr.bf16.mxu0 %v5359
    %7564 = vmatpush1.bf16.msra.mxu0 %v5358
    %7565 = vmatprep.subr.bf16.mxu0 %v5357
    %7566 = vmatpush1.bf16.msra.mxu0 %v5356
    %7567 = vmatprep.subr.bf16.mxu0 %v5355
    %7568 = vmatpush1.bf16.msra.mxu0 %v5354
    %7569 = vmatprep.subr.bf16.mxu0 %v5353
    %7570 = vmatpush1.bf16.msra.mxu0 %v5352
    %7571 = vmatprep.subr.bf16.mxu0 %v5351
    %7572 = vmatpush1.bf16.msra.mxu0 %v5350
    %7573 = vmatprep.subr.bf16.mxu0 %v5349
    %7574 = vmatpush1.bf16.msra.mxu0 %v5348
    %7575 = vmatprep.subr.bf16.mxu0 %v5347
    %7576 = vmatpush1.bf16.msra.mxu0 %v5346
    %7577 = vmatprep.subr.bf16.mxu0 %v5345
    %7578 = vmatpush1.bf16.msra.mxu0 %v5344
    %7579 = vmatprep.subr.bf16.mxu0 %v5375
    %7580 = vmatpush2.bf16.msra.mxu0 %v5374
    %7581 = vmatprep.subr.bf16.mxu0 %v5373
    %7582 = vmatpush2.bf16.msra.mxu0 %v5372
    %7583 = vmatprep.subr.bf16.mxu0 %v5371
    %7584 = vmatpush2.bf16.msra.mxu0 %v5370
    %7585 = vmatprep.subr.bf16.mxu0 %v5369
    %7586 = vmatpush2.bf16.msra.mxu0 %v5368
    %7587 = vmatprep.subr.bf16.mxu0 %v5367
    %7588 = vmatpush2.bf16.msra.mxu0 %v5366
    %7589 = vmatprep.subr.bf16.mxu0 %v5365
    %7590 = vmatpush2.bf16.msra.mxu0 %v5364
    %7591 = vmatprep.subr.bf16.mxu0 %v5363
    %7592 = vmatpush2.bf16.msra.mxu0 %v5362
    %7593 = vmatprep.subr.bf16.mxu0 %v5361
    %7594 = vmatpush2.bf16.msra.mxu0 %v5360
    %7595 = vmatprep.mubr.bf16.mxu0 %v1452
    %7596 = vmatmul.mubr.bf16.gmra.mxu0 %v1450
    %v7597 = vpop.f32.mrf.mxu0
    %v7598 = vadd.f32 %v7557, %v7597
    %v7599 = vpop.f32.mrf.mxu0
    %v7600 = vadd.f32 %v7559, %v7599
    %v7601 = vpop.f32.mrf.mxu0
    %v7602 = vpop.f32.mrf.mxu0
    %7603 = vdwg.mxu0
    %7604 = vmatprep.subr.bf16.mxu0 %v5391
    %7605 = vmatpush1.bf16.msra.mxu0 %v5390
    %7606 = vmatprep.subr.bf16.mxu0 %v5389
    %7607 = vmatpush1.bf16.msra.mxu0 %v5388
    %7608 = vmatprep.subr.bf16.mxu0 %v5387
    %7609 = vmatpush1.bf16.msra.mxu0 %v5386
    %7610 = vmatprep.subr.bf16.mxu0 %v5385
    %7611 = vmatpush1.bf16.msra.mxu0 %v5384
    %7612 = vmatprep.subr.bf16.mxu0 %v5383
    %7613 = vmatpush1.bf16.msra.mxu0 %v5382
    %7614 = vmatprep.subr.bf16.mxu0 %v5381
    %7615 = vmatpush1.bf16.msra.mxu0 %v5380
    %7616 = vmatprep.subr.bf16.mxu0 %v5379
    %7617 = vmatpush1.bf16.msra.mxu0 %v5378
    %7618 = vmatprep.subr.bf16.mxu0 %v5377
    %7619 = vmatpush1.bf16.msra.mxu0 %v5376
    %7620 = vmatprep.subr.bf16.mxu0 %v5407
    %7621 = vmatpush2.bf16.msra.mxu0 %v5406
    %7622 = vmatprep.subr.bf16.mxu0 %v5405
    %7623 = vmatpush2.bf16.msra.mxu0 %v5404
    %7624 = vmatprep.subr.bf16.mxu0 %v5403
    %7625 = vmatpush2.bf16.msra.mxu0 %v5402
    %7626 = vmatprep.subr.bf16.mxu0 %v5401
    %7627 = vmatpush2.bf16.msra.mxu0 %v5400
    %7628 = vmatprep.subr.bf16.mxu0 %v5399
    %7629 = vmatpush2.bf16.msra.mxu0 %v5398
    %7630 = vmatprep.subr.bf16.mxu0 %v5397
    %7631 = vmatpush2.bf16.msra.mxu0 %v5396
    %7632 = vmatprep.subr.bf16.mxu0 %v5395
    %7633 = vmatpush2.bf16.msra.mxu0 %v5394
    %7634 = vmatprep.subr.bf16.mxu0 %v5393
    %7635 = vmatpush2.bf16.msra.mxu0 %v5392
    %7636 = vmatprep.mubr.bf16.mxu0 %v1490
    %7637 = vmatmul.mubr.bf16.gmra.mxu0 %v1476
    %v7638 = vpop.f32.mrf.mxu0
    %v7639 = vadd.f32 %v7598, %v7638
    %v7640 = vpop.f32.mrf.mxu0
    %v7641 = vadd.f32 %v7600, %v7640
    %v7642 = vpop.f32.mrf.mxu0
    %v7643 = vpop.f32.mrf.mxu0
    %7644 = vdwg.mxu0
    %7645 = vmatprep.subr.bf16.mxu0 %v5423
    %7646 = vmatpush1.bf16.msra.mxu0 %v5422
    %7647 = vmatprep.subr.bf16.mxu0 %v5421
    %7648 = vmatpush1.bf16.msra.mxu0 %v5420
    %7649 = vmatprep.subr.bf16.mxu0 %v5419
    %7650 = vmatpush1.bf16.msra.mxu0 %v5418
    %7651 = vmatprep.subr.bf16.mxu0 %v5417
    %7652 = vmatpush1.bf16.msra.mxu0 %v5416
    %7653 = vmatprep.subr.bf16.mxu0 %v5415
    %7654 = vmatpush1.bf16.msra.mxu0 %v5414
    %7655 = vmatprep.subr.bf16.mxu0 %v5413
    %7656 = vmatpush1.bf16.msra.mxu0 %v5412
    %7657 = vmatprep.subr.bf16.mxu0 %v5411
    %7658 = vmatpush1.bf16.msra.mxu0 %v5410
    %7659 = vmatprep.subr.bf16.mxu0 %v5409
    %7660 = vmatpush1.bf16.msra.mxu0 %v5408
    %7661 = vmatprep.subr.bf16.mxu0 %v5439
    %7662 = vmatpush2.bf16.msra.mxu0 %v5438
    %7663 = vmatprep.subr.bf16.mxu0 %v5437
    %7664 = vmatpush2.bf16.msra.mxu0 %v5436
    %7665 = vmatprep.subr.bf16.mxu0 %v5435
    %7666 = vmatpush2.bf16.msra.mxu0 %v5434
    %7667 = vmatprep.subr.bf16.mxu0 %v5433
    %7668 = vmatpush2.bf16.msra.mxu0 %v5432
    %7669 = vmatprep.subr.bf16.mxu0 %v5431
    %7670 = vmatpush2.bf16.msra.mxu0 %v5430
    %7671 = vmatprep.subr.bf16.mxu0 %v5429
    %7672 = vmatpush2.bf16.msra.mxu0 %v5428
    %7673 = vmatprep.subr.bf16.mxu0 %v5427
    %7674 = vmatpush2.bf16.msra.mxu0 %v5426
    %7675 = vmatprep.subr.bf16.mxu0 %v5425
    %7676 = vmatpush2.bf16.msra.mxu0 %v5424
    %7677 = vmatprep.mubr.bf16.mxu0 %v1500
    %7678 = vmatmul.mubr.bf16.gmra.mxu0 %v1498
    %v7679 = vpop.f32.mrf.mxu0
    %v7680 = vadd.f32 %v7639, %v7679
    %v7681 = vpop.f32.mrf.mxu0
    %v7682 = vadd.f32 %v7641, %v7681
    %v7683 = vpop.f32.mrf.mxu0
    %v7684 = vpop.f32.mrf.mxu0
    %7685 = vdwg.mxu0
    %7686 = vmatprep.subr.bf16.mxu0 %v5455
    %7687 = vmatpush1.bf16.msra.mxu0 %v5454
    %7688 = vmatprep.subr.bf16.mxu0 %v5453
    %7689 = vmatpush1.bf16.msra.mxu0 %v5452
    %7690 = vmatprep.subr.bf16.mxu0 %v5451
    %7691 = vmatpush1.bf16.msra.mxu0 %v5450
    %7692 = vmatprep.subr.bf16.mxu0 %v5449
    %7693 = vmatpush1.bf16.msra.mxu0 %v5448
    %7694 = vmatprep.subr.bf16.mxu0 %v5447
    %7695 = vmatpush1.bf16.msra.mxu0 %v5446
    %7696 = vmatprep.subr.bf16.mxu0 %v5445
    %7697 = vmatpush1.bf16.msra.mxu0 %v5444
    %7698 = vmatprep.subr.bf16.mxu0 %v5443
    %7699 = vmatpush1.bf16.msra.mxu0 %v5442
    %7700 = vmatprep.subr.bf16.mxu0 %v5441
    %7701 = vmatpush1.bf16.msra.mxu0 %v5440
    %7702 = vmatprep.subr.bf16.mxu0 %v5471
    %7703 = vmatpush2.bf16.msra.mxu0 %v5470
    %7704 = vmatprep.subr.bf16.mxu0 %v5469
    %7705 = vmatpush2.bf16.msra.mxu0 %v5468
    %7706 = vmatprep.subr.bf16.mxu0 %v5467
    %7707 = vmatpush2.bf16.msra.mxu0 %v5466
    %7708 = vmatprep.subr.bf16.mxu0 %v5465
    %7709 = vmatpush2.bf16.msra.mxu0 %v5464
    %7710 = vmatprep.subr.bf16.mxu0 %v5463
    %7711 = vmatpush2.bf16.msra.mxu0 %v5462
    %7712 = vmatprep.subr.bf16.mxu0 %v5461
    %7713 = vmatpush2.bf16.msra.mxu0 %v5460
    %7714 = vmatprep.subr.bf16.mxu0 %v5459
    %7715 = vmatpush2.bf16.msra.mxu0 %v5458
    %7716 = vmatprep.subr.bf16.mxu0 %v5457
    %7717 = vmatpush2.bf16.msra.mxu0 %v5456
    %7718 = vmatprep.mubr.bf16.mxu0 %v1497
    %7719 = vmatmul.mubr.bf16.gmra.mxu0 %v1483
    %v7720 = vpop.f32.mrf.mxu0
    %v7721 = vadd.f32 %v7680, %v7720
    %v7722 = vpop.f32.mrf.mxu0
    %v7723 = vadd.f32 %v7682, %v7722
    %v7724 = vpop.f32.mrf.mxu0
    %v7725 = vpop.f32.mrf.mxu0
    %7726 = vdwg.mxu0
    %7727 = vmatprep.subr.bf16.mxu0 %v5487
    %7728 = vmatpush1.bf16.msra.mxu0 %v5486
    %7729 = vmatprep.subr.bf16.mxu0 %v5485
    %7730 = vmatpush1.bf16.msra.mxu0 %v5484
    %7731 = vmatprep.subr.bf16.mxu0 %v5483
    %7732 = vmatpush1.bf16.msra.mxu0 %v5482
    %7733 = vmatprep.subr.bf16.mxu0 %v5481
    %7734 = vmatpush1.bf16.msra.mxu0 %v5480
    %7735 = vmatprep.subr.bf16.mxu0 %v5479
    %7736 = vmatpush1.bf16.msra.mxu0 %v5478
    %7737 = vmatprep.subr.bf16.mxu0 %v5477
    %7738 = vmatpush1.bf16.msra.mxu0 %v5476
    %7739 = vmatprep.subr.bf16.mxu0 %v5475
    %7740 = vmatpush1.bf16.msra.mxu0 %v5474
    %7741 = vmatprep.subr.bf16.mxu0 %v5473
    %7742 = vmatpush1.bf16.msra.mxu0 %v5472
    %7743 = vmatprep.subr.bf16.mxu0 %v5503
    %7744 = vmatpush2.bf16.msra.mxu0 %v5502
    %7745 = vmatprep.subr.bf16.mxu0 %v5501
    %7746 = vmatpush2.bf16.msra.mxu0 %v5500
    %7747 = vmatprep.subr.bf16.mxu0 %v5499
    %7748 = vmatpush2.bf16.msra.mxu0 %v5498
    %7749 = vmatprep.subr.bf16.mxu0 %v5497
    %7750 = vmatpush2.bf16.msra.mxu0 %v5496
    %7751 = vmatprep.subr.bf16.mxu0 %v5495
    %7752 = vmatpush2.bf16.msra.mxu0 %v5494
    %7753 = vmatprep.subr.bf16.mxu0 %v5493
    %7754 = vmatpush2.bf16.msra.mxu0 %v5492
    %7755 = vmatprep.subr.bf16.mxu0 %v5491
    %7756 = vmatpush2.bf16.msra.mxu0 %v5490
    %7757 = vmatprep.subr.bf16.mxu0 %v5489
    %7758 = vmatpush2.bf16.msra.mxu0 %v5488
    %7759 = vmatprep.mubr.bf16.mxu0 %v1501
    %7760 = vmatmul.mubr.bf16.gmra.mxu0 %v1499
    %v7761 = vpop.f32.mrf.mxu0
    %v7762 = vadd.f32 %v7721, %v7761
    %v7763 = vpop.f32.mrf.mxu0
    %v7764 = vadd.f32 %v7723, %v7763
    %v7765 = vpop.f32.mrf.mxu0
    %v7766 = vpop.f32.mrf.mxu0
    %7767 = vdwg.mxu0
    %7768 = vmatprep.subr.bf16.mxu0 %v5519
    %7769 = vmatpush1.bf16.msra.mxu0 %v5518
    %7770 = vmatprep.subr.bf16.mxu0 %v5517
    %7771 = vmatpush1.bf16.msra.mxu0 %v5516
    %7772 = vmatprep.subr.bf16.mxu0 %v5515
    %7773 = vmatpush1.bf16.msra.mxu0 %v5514
    %7774 = vmatprep.subr.bf16.mxu0 %v5513
    %7775 = vmatpush1.bf16.msra.mxu0 %v5512
    %7776 = vmatprep.subr.bf16.mxu0 %v5511
    %7777 = vmatpush1.bf16.msra.mxu0 %v5510
    %7778 = vmatprep.subr.bf16.mxu0 %v5509
    %7779 = vmatpush1.bf16.msra.mxu0 %v5508
    %7780 = vmatprep.subr.bf16.mxu0 %v5507
    %7781 = vmatpush1.bf16.msra.mxu0 %v5506
    %7782 = vmatprep.subr.bf16.mxu0 %v5505
    %7783 = vmatpush1.bf16.msra.mxu0 %v5504
    %7784 = vmatprep.subr.bf16.mxu0 %v5535
    %7785 = vmatpush2.bf16.msra.mxu0 %v5534
    %7786 = vmatprep.subr.bf16.mxu0 %v5533
    %7787 = vmatpush2.bf16.msra.mxu0 %v5532
    %7788 = vmatprep.subr.bf16.mxu0 %v5531
    %7789 = vmatpush2.bf16.msra.mxu0 %v5530
    %7790 = vmatprep.subr.bf16.mxu0 %v5529
    %7791 = vmatpush2.bf16.msra.mxu0 %v5528
    %7792 = vmatprep.subr.bf16.mxu0 %v5527
    %7793 = vmatpush2.bf16.msra.mxu0 %v5526
    %7794 = vmatprep.subr.bf16.mxu0 %v5525
    %7795 = vmatpush2.bf16.msra.mxu0 %v5524
    %7796 = vmatprep.subr.bf16.mxu0 %v5523
    %7797 = vmatpush2.bf16.msra.mxu0 %v5522
    %7798 = vmatprep.subr.bf16.mxu0 %v5521
    %7799 = vmatpush2.bf16.msra.mxu0 %v5520
    %7800 = vmatprep.mubr.bf16.mxu0 %v1539
    %7801 = vmatmul.mubr.bf16.gmra.mxu0 %v1525
    %v7802 = vpop.f32.mrf.mxu0
    %v7803 = vadd.f32 %v7762, %v7802
    %v7804 = vpop.f32.mrf.mxu0
    %v7805 = vadd.f32 %v7764, %v7804
    %v7806 = vpop.f32.mrf.mxu0
    %v7807 = vpop.f32.mrf.mxu0
    %7808 = vdwg.mxu0
    %7809 = vmatprep.subr.bf16.mxu0 %v5551
    %7810 = vmatpush1.bf16.msra.mxu0 %v5550
    %7811 = vmatprep.subr.bf16.mxu0 %v5549
    %7812 = vmatpush1.bf16.msra.mxu0 %v5548
    %7813 = vmatprep.subr.bf16.mxu0 %v5547
    %7814 = vmatpush1.bf16.msra.mxu0 %v5546
    %7815 = vmatprep.subr.bf16.mxu0 %v5545
    %7816 = vmatpush1.bf16.msra.mxu0 %v5544
    %7817 = vmatprep.subr.bf16.mxu0 %v5543
    %7818 = vmatpush1.bf16.msra.mxu0 %v5542
    %7819 = vmatprep.subr.bf16.mxu0 %v5541
    %7820 = vmatpush1.bf16.msra.mxu0 %v5540
    %7821 = vmatprep.subr.bf16.mxu0 %v5539
    %7822 = vmatpush1.bf16.msra.mxu0 %v5538
    %7823 = vmatprep.subr.bf16.mxu0 %v5537
    %7824 = vmatpush1.bf16.msra.mxu0 %v5536
    %7825 = vmatprep.subr.bf16.mxu0 %v5567
    %7826 = vmatpush2.bf16.msra.mxu0 %v5566
    %7827 = vmatprep.subr.bf16.mxu0 %v5565
    %7828 = vmatpush2.bf16.msra.mxu0 %v5564
    %7829 = vmatprep.subr.bf16.mxu0 %v5563
    %7830 = vmatpush2.bf16.msra.mxu0 %v5562
    %7831 = vmatprep.subr.bf16.mxu0 %v5561
    %7832 = vmatpush2.bf16.msra.mxu0 %v5560
    %7833 = vmatprep.subr.bf16.mxu0 %v5559
    %7834 = vmatpush2.bf16.msra.mxu0 %v5558
    %7835 = vmatprep.subr.bf16.mxu0 %v5557
    %7836 = vmatpush2.bf16.msra.mxu0 %v5556
    %7837 = vmatprep.subr.bf16.mxu0 %v5555
    %7838 = vmatpush2.bf16.msra.mxu0 %v5554
    %7839 = vmatprep.subr.bf16.mxu0 %v5553
    %7840 = vmatpush2.bf16.msra.mxu0 %v5552
    %7841 = vmatprep.mubr.bf16.mxu0 %v1549
    %7842 = vmatmul.mubr.bf16.gmra.mxu0 %v1547
    %v7843 = vpop.f32.mrf.mxu0
    %v7844 = vadd.f32 %v7803, %v7843
    %v7845 = vpop.f32.mrf.mxu0
    %v7846 = vadd.f32 %v7805, %v7845
    %v7847 = vpop.f32.mrf.mxu0
    %v7848 = vpop.f32.mrf.mxu0
    %7849 = vdwg.mxu0
    %7850 = vmatprep.subr.bf16.mxu0 %v5583
    %7851 = vmatpush1.bf16.msra.mxu0 %v5582
    %7852 = vmatprep.subr.bf16.mxu0 %v5581
    %7853 = vmatpush1.bf16.msra.mxu0 %v5580
    %7854 = vmatprep.subr.bf16.mxu0 %v5579
    %7855 = vmatpush1.bf16.msra.mxu0 %v5578
    %7856 = vmatprep.subr.bf16.mxu0 %v5577
    %7857 = vmatpush1.bf16.msra.mxu0 %v5576
    %7858 = vmatprep.subr.bf16.mxu0 %v5575
    %7859 = vmatpush1.bf16.msra.mxu0 %v5574
    %7860 = vmatprep.subr.bf16.mxu0 %v5573
    %7861 = vmatpush1.bf16.msra.mxu0 %v5572
    %7862 = vmatprep.subr.bf16.mxu0 %v5571
    %7863 = vmatpush1.bf16.msra.mxu0 %v5570
    %7864 = vmatprep.subr.bf16.mxu0 %v5569
    %7865 = vmatpush1.bf16.msra.mxu0 %v5568
    %7866 = vmatprep.subr.bf16.mxu0 %v5599
    %7867 = vmatpush2.bf16.msra.mxu0 %v5598
    %7868 = vmatprep.subr.bf16.mxu0 %v5597
    %7869 = vmatpush2.bf16.msra.mxu0 %v5596
    %7870 = vmatprep.subr.bf16.mxu0 %v5595
    %7871 = vmatpush2.bf16.msra.mxu0 %v5594
    %7872 = vmatprep.subr.bf16.mxu0 %v5593
    %7873 = vmatpush2.bf16.msra.mxu0 %v5592
    %7874 = vmatprep.subr.bf16.mxu0 %v5591
    %7875 = vmatpush2.bf16.msra.mxu0 %v5590
    %7876 = vmatprep.subr.bf16.mxu0 %v5589
    %7877 = vmatpush2.bf16.msra.mxu0 %v5588
    %7878 = vmatprep.subr.bf16.mxu0 %v5587
    %7879 = vmatpush2.bf16.msra.mxu0 %v5586
    %7880 = vmatprep.subr.bf16.mxu0 %v5585
    %7881 = vmatpush2.bf16.msra.mxu0 %v5584
    %7882 = vmatprep.mubr.bf16.mxu0 %v1546
    %7883 = vmatmul.mubr.bf16.gmra.mxu0 %v1532
    %v7884 = vpop.f32.mrf.mxu0
    %v7885 = vadd.f32 %v7844, %v7884
    %v7886 = vpop.f32.mrf.mxu0
    %v7887 = vadd.f32 %v7846, %v7886
    %v7888 = vpop.f32.mrf.mxu0
    %v7889 = vpop.f32.mrf.mxu0
    %7890 = vdwg.mxu0
    %7891 = vmatprep.subr.bf16.mxu0 %v5615
    %7892 = vmatpush1.bf16.msra.mxu0 %v5614
    %7893 = vmatprep.subr.bf16.mxu0 %v5613
    %7894 = vmatpush1.bf16.msra.mxu0 %v5612
    %7895 = vmatprep.subr.bf16.mxu0 %v5611
    %7896 = vmatpush1.bf16.msra.mxu0 %v5610
    %7897 = vmatprep.subr.bf16.mxu0 %v5609
    %7898 = vmatpush1.bf16.msra.mxu0 %v5608
    %7899 = vmatprep.subr.bf16.mxu0 %v5607
    %7900 = vmatpush1.bf16.msra.mxu0 %v5606
    %7901 = vmatprep.subr.bf16.mxu0 %v5605
    %7902 = vmatpush1.bf16.msra.mxu0 %v5604
    %7903 = vmatprep.subr.bf16.mxu0 %v5603
    %7904 = vmatpush1.bf16.msra.mxu0 %v5602
    %7905 = vmatprep.subr.bf16.mxu0 %v5601
    %7906 = vmatpush1.bf16.msra.mxu0 %v5600
    %7907 = vmatprep.subr.bf16.mxu0 %v5631
    %7908 = vmatpush2.bf16.msra.mxu0 %v5630
    %7909 = vmatprep.subr.bf16.mxu0 %v5629
    %7910 = vmatpush2.bf16.msra.mxu0 %v5628
    %7911 = vmatprep.subr.bf16.mxu0 %v5627
    %7912 = vmatpush2.bf16.msra.mxu0 %v5626
    %7913 = vmatprep.subr.bf16.mxu0 %v5625
    %7914 = vmatpush2.bf16.msra.mxu0 %v5624
    %7915 = vmatprep.subr.bf16.mxu0 %v5623
    %7916 = vmatpush2.bf16.msra.mxu0 %v5622
    %7917 = vmatprep.subr.bf16.mxu0 %v5621
    %7918 = vmatpush2.bf16.msra.mxu0 %v5620
    %7919 = vmatprep.subr.bf16.mxu0 %v5619
    %7920 = vmatpush2.bf16.msra.mxu0 %v5618
    %7921 = vmatprep.subr.bf16.mxu0 %v5617
    %7922 = vmatpush2.bf16.msra.mxu0 %v5616
    %7923 = vmatprep.mubr.bf16.mxu0 %v1550
    %7924 = vmatmul.mubr.bf16.gmra.mxu0 %v1548
    %v7925 = vpop.f32.mrf.mxu0
    %v7926 = vadd.f32 %v7885, %v7925
    %v7927 = vpop.f32.mrf.mxu0
    %v7928 = vadd.f32 %v7887, %v7927
    %v7929 = vpop.f32.mrf.mxu0
    %v7930 = vpop.f32.mrf.mxu0
    %7931 = vdwg.mxu0
    %7932 = vmatprep.subr.bf16.mxu0 %v5647
    %7933 = vmatpush1.bf16.msra.mxu0 %v5646
    %7934 = vmatprep.subr.bf16.mxu0 %v5645
    %7935 = vmatpush1.bf16.msra.mxu0 %v5644
    %7936 = vmatprep.subr.bf16.mxu0 %v5643
    %7937 = vmatpush1.bf16.msra.mxu0 %v5642
    %7938 = vmatprep.subr.bf16.mxu0 %v5641
    %7939 = vmatpush1.bf16.msra.mxu0 %v5640
    %7940 = vmatprep.subr.bf16.mxu0 %v5639
    %7941 = vmatpush1.bf16.msra.mxu0 %v5638
    %7942 = vmatprep.subr.bf16.mxu0 %v5637
    %7943 = vmatpush1.bf16.msra.mxu0 %v5636
    %7944 = vmatprep.subr.bf16.mxu0 %v5635
    %7945 = vmatpush1.bf16.msra.mxu0 %v5634
    %7946 = vmatprep.subr.bf16.mxu0 %v5633
    %7947 = vmatpush1.bf16.msra.mxu0 %v5632
    %7948 = vmatprep.subr.bf16.mxu0 %v5663
    %7949 = vmatpush2.bf16.msra.mxu0 %v5662
    %7950 = vmatprep.subr.bf16.mxu0 %v5661
    %7951 = vmatpush2.bf16.msra.mxu0 %v5660
    %7952 = vmatprep.subr.bf16.mxu0 %v5659
    %7953 = vmatpush2.bf16.msra.mxu0 %v5658
    %7954 = vmatprep.subr.bf16.mxu0 %v5657
    %7955 = vmatpush2.bf16.msra.mxu0 %v5656
    %7956 = vmatprep.subr.bf16.mxu0 %v5655
    %7957 = vmatpush2.bf16.msra.mxu0 %v5654
    %7958 = vmatprep.subr.bf16.mxu0 %v5653
    %7959 = vmatpush2.bf16.msra.mxu0 %v5652
    %7960 = vmatprep.subr.bf16.mxu0 %v5651
    %7961 = vmatpush2.bf16.msra.mxu0 %v5650
    %7962 = vmatprep.subr.bf16.mxu0 %v5649
    %7963 = vmatpush2.bf16.msra.mxu0 %v5648
    %7964 = vmatprep.mubr.bf16.mxu0 %v1588
    %7965 = vmatmul.mubr.bf16.gmra.mxu0 %v1574
    %v7966 = vpop.f32.mrf.mxu0
    %v7967 = vadd.f32 %v7926, %v7966
    %v7968 = vpop.f32.mrf.mxu0
    %v7969 = vadd.f32 %v7928, %v7968
    %v7970 = vpop.f32.mrf.mxu0
    %v7971 = vpop.f32.mrf.mxu0
    %7972 = vdwg.mxu0
    %7973 = vmatprep.subr.bf16.mxu0 %v5679
    %7974 = vmatpush1.bf16.msra.mxu0 %v5678
    %7975 = vmatprep.subr.bf16.mxu0 %v5677
    %7976 = vmatpush1.bf16.msra.mxu0 %v5676
    %7977 = vmatprep.subr.bf16.mxu0 %v5675
    %7978 = vmatpush1.bf16.msra.mxu0 %v5674
    %7979 = vmatprep.subr.bf16.mxu0 %v5673
    %7980 = vmatpush1.bf16.msra.mxu0 %v5672
    %7981 = vmatprep.subr.bf16.mxu0 %v5671
    %7982 = vmatpush1.bf16.msra.mxu0 %v5670
    %7983 = vmatprep.subr.bf16.mxu0 %v5669
    %7984 = vmatpush1.bf16.msra.mxu0 %v5668
    %7985 = vmatprep.subr.bf16.mxu0 %v5667
    %7986 = vmatpush1.bf16.msra.mxu0 %v5666
    %7987 = vmatprep.subr.bf16.mxu0 %v5665
    %7988 = vmatpush1.bf16.msra.mxu0 %v5664
    %7989 = vmatprep.subr.bf16.mxu0 %v5695
    %7990 = vmatpush2.bf16.msra.mxu0 %v5694
    %7991 = vmatprep.subr.bf16.mxu0 %v5693
    %7992 = vmatpush2.bf16.msra.mxu0 %v5692
    %7993 = vmatprep.subr.bf16.mxu0 %v5691
    %7994 = vmatpush2.bf16.msra.mxu0 %v5690
    %7995 = vmatprep.subr.bf16.mxu0 %v5689
    %7996 = vmatpush2.bf16.msra.mxu0 %v5688
    %7997 = vmatprep.subr.bf16.mxu0 %v5687
    %7998 = vmatpush2.bf16.msra.mxu0 %v5686
    %7999 = vmatprep.subr.bf16.mxu0 %v5685
    %8000 = vmatpush2.bf16.msra.mxu0 %v5684
    %8001 = vmatprep.subr.bf16.mxu0 %v5683
    %8002 = vmatpush2.bf16.msra.mxu0 %v5682
    %8003 = vmatprep.subr.bf16.mxu0 %v5681
    %8004 = vmatpush2.bf16.msra.mxu0 %v5680
    %8005 = vmatprep.mubr.bf16.mxu0 %v1598
    %8006 = vmatmul.mubr.bf16.gmra.mxu0 %v1596
    %v8007 = vpop.f32.mrf.mxu0
    %v8008 = vadd.f32 %v7967, %v8007
    %v8009 = vpop.f32.mrf.mxu0
    %v8010 = vadd.f32 %v7969, %v8009
    %v8011 = vpop.f32.mrf.mxu0
    %v8012 = vpop.f32.mrf.mxu0
    %8013 = vdwg.mxu0
    %8014 = vmatprep.subr.bf16.mxu0 %v5711
    %8015 = vmatpush1.bf16.msra.mxu0 %v5710
    %8016 = vmatprep.subr.bf16.mxu0 %v5709
    %8017 = vmatpush1.bf16.msra.mxu0 %v5708
    %8018 = vmatprep.subr.bf16.mxu0 %v5707
    %8019 = vmatpush1.bf16.msra.mxu0 %v5706
    %8020 = vmatprep.subr.bf16.mxu0 %v5705
    %8021 = vmatpush1.bf16.msra.mxu0 %v5704
    %8022 = vmatprep.subr.bf16.mxu0 %v5703
    %8023 = vmatpush1.bf16.msra.mxu0 %v5702
    %8024 = vmatprep.subr.bf16.mxu0 %v5701
    %8025 = vmatpush1.bf16.msra.mxu0 %v5700
    %8026 = vmatprep.subr.bf16.mxu0 %v5699
    %8027 = vmatpush1.bf16.msra.mxu0 %v5698
    %8028 = vmatprep.subr.bf16.mxu0 %v5697
    %8029 = vmatpush1.bf16.msra.mxu0 %v5696
    %8030 = vmatprep.subr.bf16.mxu0 %v5727
    %8031 = vmatpush2.bf16.msra.mxu0 %v5726
    %8032 = vmatprep.subr.bf16.mxu0 %v5725
    %8033 = vmatpush2.bf16.msra.mxu0 %v5724
    %8034 = vmatprep.subr.bf16.mxu0 %v5723
    %8035 = vmatpush2.bf16.msra.mxu0 %v5722
    %8036 = vmatprep.subr.bf16.mxu0 %v5721
    %8037 = vmatpush2.bf16.msra.mxu0 %v5720
    %8038 = vmatprep.subr.bf16.mxu0 %v5719
    %8039 = vmatpush2.bf16.msra.mxu0 %v5718
    %8040 = vmatprep.subr.bf16.mxu0 %v5717
    %8041 = vmatpush2.bf16.msra.mxu0 %v5716
    %8042 = vmatprep.subr.bf16.mxu0 %v5715
    %8043 = vmatpush2.bf16.msra.mxu0 %v5714
    %8044 = vmatprep.subr.bf16.mxu0 %v5713
    %8045 = vmatpush2.bf16.msra.mxu0 %v5712
    %8046 = vmatprep.mubr.bf16.mxu0 %v1595
    %8047 = vmatmul.mubr.bf16.gmra.mxu0 %v1581
    %v8048 = vpop.f32.mrf.mxu0
    %v8049 = vadd.f32 %v8008, %v8048
    %v8050 = vpop.f32.mrf.mxu0
    %v8051 = vadd.f32 %v8010, %v8050
    %v8052 = vpop.f32.mrf.mxu0
    %v8053 = vpop.f32.mrf.mxu0
    %8054 = vdwg.mxu0
    %8055 = vmatprep.subr.bf16.mxu0 %v5743
    %8056 = vmatpush1.bf16.msra.mxu0 %v5742
    %8057 = vmatprep.subr.bf16.mxu0 %v5741
    %8058 = vmatpush1.bf16.msra.mxu0 %v5740
    %8059 = vmatprep.subr.bf16.mxu0 %v5739
    %8060 = vmatpush1.bf16.msra.mxu0 %v5738
    %8061 = vmatprep.subr.bf16.mxu0 %v5737
    %8062 = vmatpush1.bf16.msra.mxu0 %v5736
    %8063 = vmatprep.subr.bf16.mxu0 %v5735
    %8064 = vmatpush1.bf16.msra.mxu0 %v5734
    %8065 = vmatprep.subr.bf16.mxu0 %v5733
    %8066 = vmatpush1.bf16.msra.mxu0 %v5732
    %8067 = vmatprep.subr.bf16.mxu0 %v5731
    %8068 = vmatpush1.bf16.msra.mxu0 %v5730
    %8069 = vmatprep.subr.bf16.mxu0 %v5729
    %8070 = vmatpush1.bf16.msra.mxu0 %v5728
    %8071 = vmatprep.subr.bf16.mxu0 %v5759
    %8072 = vmatpush2.bf16.msra.mxu0 %v5758
    %8073 = vmatprep.subr.bf16.mxu0 %v5757
    %8074 = vmatpush2.bf16.msra.mxu0 %v5756
    %8075 = vmatprep.subr.bf16.mxu0 %v5755
    %8076 = vmatpush2.bf16.msra.mxu0 %v5754
    %8077 = vmatprep.subr.bf16.mxu0 %v5753
    %8078 = vmatpush2.bf16.msra.mxu0 %v5752
    %8079 = vmatprep.subr.bf16.mxu0 %v5751
    %8080 = vmatpush2.bf16.msra.mxu0 %v5750
    %8081 = vmatprep.subr.bf16.mxu0 %v5749
    %8082 = vmatpush2.bf16.msra.mxu0 %v5748
    %8083 = vmatprep.subr.bf16.mxu0 %v5747
    %8084 = vmatpush2.bf16.msra.mxu0 %v5746
    %8085 = vmatprep.subr.bf16.mxu0 %v5745
    %8086 = vmatpush2.bf16.msra.mxu0 %v5744
    %8087 = vmatprep.mubr.bf16.mxu0 %v1599
    %8088 = vmatmul.mubr.bf16.gmra.mxu0 %v1597
    %v8089 = vpop.f32.mrf.mxu0
    %v8090 = vadd.f32 %v8049, %v8089
    %v8091 = vpop.f32.mrf.mxu0
    %v8092 = vadd.f32 %v8051, %v8091
    %v8093 = vpop.f32.mrf.mxu0
    %v8094 = vpop.f32.mrf.mxu0
    %8095 = vdwg.mxu0
    %v8096 = vld [vmem:[%s0] sm:$0xf]
    %v8099 = vunpack.c.l.s4 1983009808
    %v8100 = vunpack.c.0.s8 %v8099
    %v8101 = vlaneseq
    %v8102 = vshrl.u32 %v8101, 7
    %v8103 = vsub.s32 %v8100, %v8102
    %v8104 = vrot.slane %v8096, %v8103
    %v8105 = vcombine.high %v8104, %v8104
    %8108 = vst [vmem:[#allocation2] sm:$0x3] %v8104
    %8109 = vst [vmem:[#allocation2 + $0x8] sm:$0x3] %v8105
    %v8112 = vrot.slane %v8090, 6
    %v8113 = vrot.slane %v8092, 6
    %8116 = vst [vmem:[#allocation2] sm:$0xc] %v8112
    %8117 = vst [vmem:[#allocation2 + $0x8] sm:$0xc] %v8113
    %v8118 = vld [vmem:[%s2] sm:$0xf]
    %v8121 = vunpack.c.l.s4 1983009808
    %v8122 = vunpack.c.0.s8 %v8121
    %v8123 = vlaneseq
    %v8124 = vshrl.u32 %v8123, 7
    %v8125 = vsub.s32 %v8122, %v8124
    %v8126 = vrot.slane %v8118, %v8125
    %v8127 = vcombine.low %v8126, %v8126
    %8130 = vst [vmem:[#allocation2] sm:$0x30] %v8127
    %8131 = vst [vmem:[#allocation2 + $0x8] sm:$0x30] %v8126
    %v8132 = vld [vmem:[#allocation2] sm:$0x3f]
    %v8133 = vld [vmem:[#allocation2 + $0x8] sm:$0x3f]
    %v8134 = vpack.c.bf16 %v8132, %v8132
    %v8135 = vpack.c.bf16 %v8133, %v8133
    %v8136 = vld [vmem:[#allocation7] sm:$0xff]
    %v8137 = vld [vmem:[#allocation7 + $0x8] sm:$0xff]
    %v8138 = vld [vmem:[#allocation7 + $0x10] sm:$0xff]
    %v8139 = vld [vmem:[#allocation7 + $0x18] sm:$0xff]
    %v8140 = vld [vmem:[#allocation7 + $0x20] sm:$0xff]
    %v8141 = vld [vmem:[#allocation7 + $0x28] sm:$0xff]
    %v8142 = vld [vmem:[#allocation7 + $0x30] sm:$0xff]
    %v8143 = vld [vmem:[#allocation7 + $0x38] sm:$0xff]
    %v8144 = vld [vmem:[#allocation7 + $0x40] sm:$0xff]
    %v8145 = vld [vmem:[#allocation7 + $0x48] sm:$0xff]
    %v8146 = vld [vmem:[#allocation7 + $0x50] sm:$0xff]
    %v8147 = vld [vmem:[#allocation7 + $0x58] sm:$0xff]
    %v8148 = vld [vmem:[#allocation7 + $0x60] sm:$0xff]
    %v8149 = vld [vmem:[#allocation7 + $0x68] sm:$0xff]
    %v8150 = vld [vmem:[#allocation7 + $0x70] sm:$0xff]
    %v8151 = vld [vmem:[#allocation7 + $0x78] sm:$0xff]
    %v8152 = vld [vmem:[#allocation7 + $0x80] sm:$0xff]
    %v8153 = vld [vmem:[#allocation7 + $0x88] sm:$0xff]
    %v8154 = vld [vmem:[#allocation7 + $0x90] sm:$0xff]
    %v8155 = vld [vmem:[#allocation7 + $0x98] sm:$0xff]
    %v8156 = vld [vmem:[#allocation7 + $0xa0] sm:$0xff]
    %v8157 = vld [vmem:[#allocation7 + $0xa8] sm:$0xff]
    %v8158 = vld [vmem:[#allocation7 + $0xb0] sm:$0xff]
    %v8159 = vld [vmem:[#allocation7 + $0xb8] sm:$0xff]
    %v8160 = vld [vmem:[#allocation7 + $0xc0] sm:$0xff]
    %v8161 = vld [vmem:[#allocation7 + $0xc8] sm:$0xff]
    %v8162 = vld [vmem:[#allocation7 + $0xd0] sm:$0xff]
    %v8163 = vld [vmem:[#allocation7 + $0xd8] sm:$0xff]
    %v8164 = vld [vmem:[#allocation7 + $0xe0] sm:$0xff]
    %v8165 = vld [vmem:[#allocation7 + $0xe8] sm:$0xff]
    %v8166 = vld [vmem:[#allocation7 + $0xf0] sm:$0xff]
    %v8167 = vld [vmem:[#allocation7 + $0xf8] sm:$0xff]
    %v8168 = vld [vmem:[#allocation7 + $0x100] sm:$0xff]
    %v8169 = vld [vmem:[#allocation7 + $0x108] sm:$0xff]
    %v8170 = vld [vmem:[#allocation7 + $0x110] sm:$0xff]
    %v8171 = vld [vmem:[#allocation7 + $0x118] sm:$0xff]
    %v8172 = vld [vmem:[#allocation7 + $0x120] sm:$0xff]
    %v8173 = vld [vmem:[#allocation7 + $0x128] sm:$0xff]
    %v8174 = vld [vmem:[#allocation7 + $0x130] sm:$0xff]
    %v8175 = vld [vmem:[#allocation7 + $0x138] sm:$0xff]
    %v8176 = vld [vmem:[#allocation7 + $0x140] sm:$0xff]
    %v8177 = vld [vmem:[#allocation7 + $0x148] sm:$0xff]
    %v8178 = vld [vmem:[#allocation7 + $0x150] sm:$0xff]
    %v8179 = vld [vmem:[#allocation7 + $0x158] sm:$0xff]
    %v8180 = vld [vmem:[#allocation7 + $0x160] sm:$0xff]
    %v8181 = vld [vmem:[#allocation7 + $0x168] sm:$0xff]
    %v8182 = vld [vmem:[#allocation7 + $0x170] sm:$0xff]
    %v8183 = vld [vmem:[#allocation7 + $0x178] sm:$0xff]
    %v8184 = vld [vmem:[#allocation7 + $0x180] sm:$0xff]
    %v8185 = vld [vmem:[#allocation7 + $0x188] sm:$0xff]
    %v8186 = vld [vmem:[#allocation7 + $0x190] sm:$0xff]
    %v8187 = vld [vmem:[#allocation7 + $0x198] sm:$0xff]
    %v8188 = vld [vmem:[#allocation7 + $0x1a0] sm:$0xff]
    %v8189 = vld [vmem:[#allocation7 + $0x1a8] sm:$0xff]
    %v8190 = vld [vmem:[#allocation7 + $0x1b0] sm:$0xff]
    %v8191 = vld [vmem:[#allocation7 + $0x1b8] sm:$0xff]
    %v8192 = vld [vmem:[#allocation7 + $0x1c0] sm:$0xff]
    %v8193 = vld [vmem:[#allocation7 + $0x1c8] sm:$0xff]
    %v8194 = vld [vmem:[#allocation7 + $0x1d0] sm:$0xff]
    %v8195 = vld [vmem:[#allocation7 + $0x1d8] sm:$0xff]
    %v8196 = vld [vmem:[#allocation7 + $0x1e0] sm:$0xff]
    %v8197 = vld [vmem:[#allocation7 + $0x1e8] sm:$0xff]
    %v8198 = vld [vmem:[#allocation7 + $0x1f0] sm:$0xff]
    %v8199 = vld [vmem:[#allocation7 + $0x1f8] sm:$0xff]
    %v8200 = vld [vmem:[#allocation8] sm:$0xf]
    %v8202 = vlaneseq
    %v8203 = vshrl.u32 %v8202, 7
    %v8204 = vsub.s32 0, %v8203
    %v8205 = vrot.slane %v8200, %v8204
    %v8206 = vlaneseq
    %v8207 = vshrl.u32 %v8206, 7
    %v8208 = vsub.s32 1, %v8207
    %v8209 = vrot.slane %v8200, %v8208
    %v8210 = vlaneseq
    %v8211 = vshrl.u32 %v8210, 7
    %v8212 = vsub.s32 2, %v8211
    %v8213 = vrot.slane %v8200, %v8212
    %v8214 = vlaneseq
    %v8215 = vshrl.u32 %v8214, 7
    %v8216 = vsub.s32 3, %v8215
    %v8217 = vrot.slane %v8200, %v8216
    %v8286 = vunpack.c.l.b16 %v8136
    %v8287 = vunpack.c.h.b16 %v8136
    %v8288 = vunpack.c.l.b16 %v8137
    %v8289 = vunpack.c.h.b16 %v8137
    %v8290 = vunpack.c.l.b16 %v8138
    %v8291 = vunpack.c.h.b16 %v8138
    %v8292 = vunpack.c.l.b16 %v8139
    %v8293 = vunpack.c.h.b16 %v8139
    %v8294 = vunpack.c.l.b16 %v8140
    %v8295 = vunpack.c.h.b16 %v8140
    %v8296 = vunpack.c.l.b16 %v8141
    %v8297 = vunpack.c.h.b16 %v8141
    %v8298 = vunpack.c.l.b16 %v8142
    %v8299 = vunpack.c.h.b16 %v8142
    %v8300 = vunpack.c.l.b16 %v8143
    %v8301 = vunpack.c.h.b16 %v8143
    %v8302 = vunpack.c.l.b16 %v8144
    %v8303 = vunpack.c.h.b16 %v8144
    %v8304 = vunpack.c.l.b16 %v8145
    %v8305 = vunpack.c.h.b16 %v8145
    %v8306 = vunpack.c.l.b16 %v8146
    %v8307 = vunpack.c.h.b16 %v8146
    %v8308 = vunpack.c.l.b16 %v8147
    %v8309 = vunpack.c.h.b16 %v8147
    %v8310 = vunpack.c.l.b16 %v8148
    %v8311 = vunpack.c.h.b16 %v8148
    %v8312 = vunpack.c.l.b16 %v8149
    %v8313 = vunpack.c.h.b16 %v8149
    %v8314 = vunpack.c.l.b16 %v8150
    %v8315 = vunpack.c.h.b16 %v8150
    %v8316 = vunpack.c.l.b16 %v8151
    %v8317 = vunpack.c.h.b16 %v8151
    %v8318 = vunpack.c.l.b16 %v8152
    %v8319 = vunpack.c.h.b16 %v8152
    %v8320 = vunpack.c.l.b16 %v8153
    %v8321 = vunpack.c.h.b16 %v8153
    %v8322 = vunpack.c.l.b16 %v8154
    %v8323 = vunpack.c.h.b16 %v8154
    %v8324 = vunpack.c.l.b16 %v8155
    %v8325 = vunpack.c.h.b16 %v8155
    %v8326 = vunpack.c.l.b16 %v8156
    %v8327 = vunpack.c.h.b16 %v8156
    %v8328 = vunpack.c.l.b16 %v8157
    %v8329 = vunpack.c.h.b16 %v8157
    %v8330 = vunpack.c.l.b16 %v8158
    %v8331 = vunpack.c.h.b16 %v8158
    %v8332 = vunpack.c.l.b16 %v8159
    %v8333 = vunpack.c.h.b16 %v8159
    %v8334 = vunpack.c.l.b16 %v8160
    %v8335 = vunpack.c.h.b16 %v8160
    %v8336 = vunpack.c.l.b16 %v8161
    %v8337 = vunpack.c.h.b16 %v8161
    %v8338 = vunpack.c.l.b16 %v8162
    %v8339 = vunpack.c.h.b16 %v8162
    %v8340 = vunpack.c.l.b16 %v8163
    %v8341 = vunpack.c.h.b16 %v8163
    %v8342 = vunpack.c.l.b16 %v8164
    %v8343 = vunpack.c.h.b16 %v8164
    %v8344 = vunpack.c.l.b16 %v8165
    %v8345 = vunpack.c.h.b16 %v8165
    %v8346 = vunpack.c.l.b16 %v8166
    %v8347 = vunpack.c.h.b16 %v8166
    %v8348 = vunpack.c.l.b16 %v8167
    %v8349 = vunpack.c.h.b16 %v8167
    %v8350 = vunpack.c.l.b16 %v8168
    %v8351 = vunpack.c.h.b16 %v8168
    %v8352 = vunpack.c.l.b16 %v8169
    %v8353 = vunpack.c.h.b16 %v8169
    %v8354 = vunpack.c.l.b16 %v8170
    %v8355 = vunpack.c.h.b16 %v8170
    %v8356 = vunpack.c.l.b16 %v8171
    %v8357 = vunpack.c.h.b16 %v8171
    %v8358 = vunpack.c.l.b16 %v8172
    %v8359 = vunpack.c.h.b16 %v8172
    %v8360 = vunpack.c.l.b16 %v8173
    %v8361 = vunpack.c.h.b16 %v8173
    %v8362 = vunpack.c.l.b16 %v8174
    %v8363 = vunpack.c.h.b16 %v8174
    %v8364 = vunpack.c.l.b16 %v8175
    %v8365 = vunpack.c.h.b16 %v8175
    %v8366 = vunpack.c.l.b16 %v8176
    %v8367 = vunpack.c.h.b16 %v8176
    %v8368 = vunpack.c.l.b16 %v8177
    %v8369 = vunpack.c.h.b16 %v8177
    %v8370 = vunpack.c.l.b16 %v8178
    %v8371 = vunpack.c.h.b16 %v8178
    %v8372 = vunpack.c.l.b16 %v8179
    %v8373 = vunpack.c.h.b16 %v8179
    %v8374 = vunpack.c.l.b16 %v8180
    %v8375 = vunpack.c.h.b16 %v8180
    %v8376 = vunpack.c.l.b16 %v8181
    %v8377 = vunpack.c.h.b16 %v8181
    %v8378 = vunpack.c.l.b16 %v8182
    %v8379 = vunpack.c.h.b16 %v8182
    %v8380 = vunpack.c.l.b16 %v8183
    %v8381 = vunpack.c.h.b16 %v8183
    %v8382 = vunpack.c.l.b16 %v8184
    %v8383 = vunpack.c.h.b16 %v8184
    %v8384 = vunpack.c.l.b16 %v8185
    %v8385 = vunpack.c.h.b16 %v8185
    %v8386 = vunpack.c.l.b16 %v8186
    %v8387 = vunpack.c.h.b16 %v8186
    %v8388 = vunpack.c.l.b16 %v8187
    %v8389 = vunpack.c.h.b16 %v8187
    %v8390 = vunpack.c.l.b16 %v8188
    %v8391 = vunpack.c.h.b16 %v8188
    %v8392 = vunpack.c.l.b16 %v8189
    %v8393 = vunpack.c.h.b16 %v8189
    %v8394 = vunpack.c.l.b16 %v8190
    %v8395 = vunpack.c.h.b16 %v8190
    %v8396 = vunpack.c.l.b16 %v8191
    %v8397 = vunpack.c.h.b16 %v8191
    %v8398 = vunpack.c.l.b16 %v8192
    %v8399 = vunpack.c.h.b16 %v8192
    %v8400 = vunpack.c.l.b16 %v8193
    %v8401 = vunpack.c.h.b16 %v8193
    %v8402 = vunpack.c.l.b16 %v8194
    %v8403 = vunpack.c.h.b16 %v8194
    %v8404 = vunpack.c.l.b16 %v8195
    %v8405 = vunpack.c.h.b16 %v8195
    %v8406 = vunpack.c.l.b16 %v8196
    %v8407 = vunpack.c.h.b16 %v8196
    %v8408 = vunpack.c.l.b16 %v8197
    %v8409 = vunpack.c.h.b16 %v8197
    %v8410 = vunpack.c.l.b16 %v8198
    %v8411 = vunpack.c.h.b16 %v8198
    %v8412 = vunpack.c.l.b16 %v8199
    %v8413 = vunpack.c.h.b16 %v8199
    %v8414 = vpack.c.b16 %v8290, %v8286
    %v8415 = vpack.c.b16 %v8291, %v8287
    %v8416 = vpack.c.b16 %v8292, %v8288
    %v8417 = vpack.c.b16 %v8293, %v8289
    %v8418 = vpack.c.b16 %v8298, %v8294
    %v8419 = vpack.c.b16 %v8299, %v8295
    %v8420 = vpack.c.b16 %v8300, %v8296
    %v8421 = vpack.c.b16 %v8301, %v8297
    %v8422 = vpack.c.b16 %v8306, %v8302
    %v8423 = vpack.c.b16 %v8307, %v8303
    %v8424 = vpack.c.b16 %v8308, %v8304
    %v8425 = vpack.c.b16 %v8309, %v8305
    %v8426 = vpack.c.b16 %v8314, %v8310
    %v8427 = vpack.c.b16 %v8315, %v8311
    %v8428 = vpack.c.b16 %v8316, %v8312
    %v8429 = vpack.c.b16 %v8317, %v8313
    %v8430 = vpack.c.b16 %v8322, %v8318
    %v8431 = vpack.c.b16 %v8323, %v8319
    %v8432 = vpack.c.b16 %v8324, %v8320
    %v8433 = vpack.c.b16 %v8325, %v8321
    %v8434 = vpack.c.b16 %v8330, %v8326
    %v8435 = vpack.c.b16 %v8331, %v8327
    %v8436 = vpack.c.b16 %v8332, %v8328
    %v8437 = vpack.c.b16 %v8333, %v8329
    %v8438 = vpack.c.b16 %v8338, %v8334
    %v8439 = vpack.c.b16 %v8339, %v8335
    %v8440 = vpack.c.b16 %v8340, %v8336
    %v8441 = vpack.c.b16 %v8341, %v8337
    %v8442 = vpack.c.b16 %v8346, %v8342
    %v8443 = vpack.c.b16 %v8347, %v8343
    %v8444 = vpack.c.b16 %v8348, %v8344
    %v8445 = vpack.c.b16 %v8349, %v8345
    %v8446 = vpack.c.b16 %v8354, %v8350
    %v8447 = vpack.c.b16 %v8355, %v8351
    %v8448 = vpack.c.b16 %v8356, %v8352
    %v8449 = vpack.c.b16 %v8357, %v8353
    %v8450 = vpack.c.b16 %v8362, %v8358
    %v8451 = vpack.c.b16 %v8363, %v8359
    %v8452 = vpack.c.b16 %v8364, %v8360
    %v8453 = vpack.c.b16 %v8365, %v8361
    %v8454 = vpack.c.b16 %v8370, %v8366
    %v8455 = vpack.c.b16 %v8371, %v8367
    %v8456 = vpack.c.b16 %v8372, %v8368
    %v8457 = vpack.c.b16 %v8373, %v8369
    %v8458 = vpack.c.b16 %v8378, %v8374
    %v8459 = vpack.c.b16 %v8379, %v8375
    %v8460 = vpack.c.b16 %v8380, %v8376
    %v8461 = vpack.c.b16 %v8381, %v8377
    %v8462 = vpack.c.b16 %v8386, %v8382
    %v8463 = vpack.c.b16 %v8387, %v8383
    %v8464 = vpack.c.b16 %v8388, %v8384
    %v8465 = vpack.c.b16 %v8389, %v8385
    %v8466 = vpack.c.b16 %v8394, %v8390
    %v8467 = vpack.c.b16 %v8395, %v8391
    %v8468 = vpack.c.b16 %v8396, %v8392
    %v8469 = vpack.c.b16 %v8397, %v8393
    %v8470 = vpack.c.b16 %v8402, %v8398
    %v8471 = vpack.c.b16 %v8403, %v8399
    %v8472 = vpack.c.b16 %v8404, %v8400
    %v8473 = vpack.c.b16 %v8405, %v8401
    %v8474 = vpack.c.b16 %v8410, %v8406
    %v8475 = vpack.c.b16 %v8411, %v8407
    %v8476 = vpack.c.b16 %v8412, %v8408
    %v8477 = vpack.c.b16 %v8413, %v8409
    %8542 = vmatprep.subr.bf16.mxu0 %v8443
    %8543 = vmatpush1.bf16.msra.mxu0 %v8442
    %8544 = vmatprep.subr.bf16.mxu0 %v8439
    %8545 = vmatpush1.bf16.msra.mxu0 %v8438
    %8546 = vmatprep.subr.bf16.mxu0 %v8435
    %8547 = vmatpush1.bf16.msra.mxu0 %v8434
    %8548 = vmatprep.subr.bf16.mxu0 %v8431
    %8549 = vmatpush1.bf16.msra.mxu0 %v8430
    %8550 = vmatprep.subr.bf16.mxu0 %v8427
    %8551 = vmatpush1.bf16.msra.mxu0 %v8426
    %8552 = vmatprep.subr.bf16.mxu0 %v8423
    %8553 = vmatpush1.bf16.msra.mxu0 %v8422
    %8554 = vmatprep.subr.bf16.mxu0 %v8419
    %8555 = vmatpush1.bf16.msra.mxu0 %v8418
    %8556 = vmatprep.subr.bf16.mxu0 %v8415
    %8557 = vmatpush1.bf16.msra.mxu0 %v8414
    %8558 = vmatprep.subr.bf16.mxu0 %v8475
    %8559 = vmatpush2.bf16.msra.mxu0 %v8474
    %8560 = vmatprep.subr.bf16.mxu0 %v8471
    %8561 = vmatpush2.bf16.msra.mxu0 %v8470
    %8562 = vmatprep.subr.bf16.mxu0 %v8467
    %8563 = vmatpush2.bf16.msra.mxu0 %v8466
    %8564 = vmatprep.subr.bf16.mxu0 %v8463
    %8565 = vmatpush2.bf16.msra.mxu0 %v8462
    %8566 = vmatprep.subr.bf16.mxu0 %v8459
    %8567 = vmatpush2.bf16.msra.mxu0 %v8458
    %8568 = vmatprep.subr.bf16.mxu0 %v8455
    %8569 = vmatpush2.bf16.msra.mxu0 %v8454
    %8570 = vmatprep.subr.bf16.mxu0 %v8451
    %8571 = vmatpush2.bf16.msra.mxu0 %v8450
    %8572 = vmatprep.subr.bf16.mxu0 %v8447
    %8573 = vmatpush2.bf16.msra.mxu0 %v8446
    %8574 = vmatprep.mubr.bf16.mxu0 %v8135
    %8575 = vmatmul.mubr.bf16.gmra.mxu0 %v8134
    %v8576 = vpop.f32.mrf.mxu0
    %v8577 = vadd.f32 %v8205, %v8576
    %v8578 = vpop.f32.mrf.mxu0
    %v8579 = vadd.f32 %v8209, %v8578
    %v8580 = vpop.f32.mrf.mxu0
    %v8581 = vpop.f32.mrf.mxu0
    %8582 = vdwg.mxu0
    %8583 = vmatprep.subr.bf16.mxu0 %v8445
    %8584 = vmatpush1.bf16.msra.mxu0 %v8444
    %8585 = vmatprep.subr.bf16.mxu0 %v8441
    %8586 = vmatpush1.bf16.msra.mxu0 %v8440
    %8587 = vmatprep.subr.bf16.mxu0 %v8437
    %8588 = vmatpush1.bf16.msra.mxu0 %v8436
    %8589 = vmatprep.subr.bf16.mxu0 %v8433
    %8590 = vmatpush1.bf16.msra.mxu0 %v8432
    %8591 = vmatprep.subr.bf16.mxu0 %v8429
    %8592 = vmatpush1.bf16.msra.mxu0 %v8428
    %8593 = vmatprep.subr.bf16.mxu0 %v8425
    %8594 = vmatpush1.bf16.msra.mxu0 %v8424
    %8595 = vmatprep.subr.bf16.mxu0 %v8421
    %8596 = vmatpush1.bf16.msra.mxu0 %v8420
    %8597 = vmatprep.subr.bf16.mxu0 %v8417
    %8598 = vmatpush1.bf16.msra.mxu0 %v8416
    %8599 = vmatprep.subr.bf16.mxu0 %v8477
    %8600 = vmatpush2.bf16.msra.mxu0 %v8476
    %8601 = vmatprep.subr.bf16.mxu0 %v8473
    %8602 = vmatpush2.bf16.msra.mxu0 %v8472
    %8603 = vmatprep.subr.bf16.mxu0 %v8469
    %8604 = vmatpush2.bf16.msra.mxu0 %v8468
    %8605 = vmatprep.subr.bf16.mxu0 %v8465
    %8606 = vmatpush2.bf16.msra.mxu0 %v8464
    %8607 = vmatprep.subr.bf16.mxu0 %v8461
    %8608 = vmatpush2.bf16.msra.mxu0 %v8460
    %8609 = vmatprep.subr.bf16.mxu0 %v8457
    %8610 = vmatpush2.bf16.msra.mxu0 %v8456
    %8611 = vmatprep.subr.bf16.mxu0 %v8453
    %8612 = vmatpush2.bf16.msra.mxu0 %v8452
    %8613 = vmatprep.subr.bf16.mxu0 %v8449
    %8614 = vmatpush2.bf16.msra.mxu0 %v8448
    %8615 = vmatprep.mubr.bf16.mxu0 %v8135
    %8616 = vmatmul.mubr.bf16.gmra.mxu0 %v8134
    %v8617 = vpop.f32.mrf.mxu0
    %v8618 = vadd.f32 %v8213, %v8617
    %v8619 = vpop.f32.mrf.mxu0
    %v8620 = vadd.f32 %v8217, %v8619
    %v8621 = vpop.f32.mrf.mxu0
    %v8622 = vpop.f32.mrf.mxu0
    %8623 = vdwg.mxu0
    %v8624 = vmax.f32 %v8577, 0.0
    %v8625 = vmax.f32 %v8579, 0.0
    %v8626 = vmax.f32 %v8618, 0.0
    %v8627 = vmax.f32 %v8620, 0.0
    %v8628 = vpack.c.bf16 %v8624, %v8624
    %v8629 = vpack.c.bf16 %v8625, %v8625
    %v8630 = vpack.c.bf16 %v8626, %v8626
    %v8631 = vpack.c.bf16 %v8627, %v8627
    %v8632 = vld [vmem:[#allocation10] sm:$0xff]
    %v8633 = vld [vmem:[#allocation10 + $0x8] sm:$0xff]
    %v8634 = vld [vmem:[#allocation10 + $0x10] sm:$0xff]
    %v8635 = vld [vmem:[#allocation10 + $0x18] sm:$0xff]
    %v8636 = vld [vmem:[#allocation10 + $0x20] sm:$0xff]
    %v8637 = vld [vmem:[#allocation10 + $0x28] sm:$0xff]
    %v8638 = vld [vmem:[#allocation10 + $0x30] sm:$0xff]
    %v8639 = vld [vmem:[#allocation10 + $0x38] sm:$0xff]
    %v8640 = vld [vmem:[#allocation10 + $0x40] sm:$0xff]
    %v8641 = vld [vmem:[#allocation10 + $0x48] sm:$0xff]
    %v8642 = vld [vmem:[#allocation10 + $0x50] sm:$0xff]
    %v8643 = vld [vmem:[#allocation10 + $0x58] sm:$0xff]
    %v8644 = vld [vmem:[#allocation10 + $0x60] sm:$0xff]
    %v8645 = vld [vmem:[#allocation10 + $0x68] sm:$0xff]
    %v8646 = vld [vmem:[#allocation10 + $0x70] sm:$0xff]
    %v8647 = vld [vmem:[#allocation10 + $0x78] sm:$0xff]
    %v8648 = vld [vmem:[#allocation10 + $0x80] sm:$0xff]
    %v8649 = vld [vmem:[#allocation10 + $0x88] sm:$0xff]
    %v8650 = vld [vmem:[#allocation10 + $0x90] sm:$0xff]
    %v8651 = vld [vmem:[#allocation10 + $0x98] sm:$0xff]
    %v8652 = vld [vmem:[#allocation10 + $0xa0] sm:$0xff]
    %v8653 = vld [vmem:[#allocation10 + $0xa8] sm:$0xff]
    %v8654 = vld [vmem:[#allocation10 + $0xb0] sm:$0xff]
    %v8655 = vld [vmem:[#allocation10 + $0xb8] sm:$0xff]
    %v8656 = vld [vmem:[#allocation10 + $0xc0] sm:$0xff]
    %v8657 = vld [vmem:[#allocation10 + $0xc8] sm:$0xff]
    %v8658 = vld [vmem:[#allocation10 + $0xd0] sm:$0xff]
    %v8659 = vld [vmem:[#allocation10 + $0xd8] sm:$0xff]
    %v8660 = vld [vmem:[#allocation10 + $0xe0] sm:$0xff]
    %v8661 = vld [vmem:[#allocation10 + $0xe8] sm:$0xff]
    %v8662 = vld [vmem:[#allocation10 + $0xf0] sm:$0xff]
    %v8663 = vld [vmem:[#allocation10 + $0xf8] sm:$0xff]
    %v8664 = vld [vmem:[#allocation10 + $0x100] sm:$0xff]
    %v8665 = vld [vmem:[#allocation10 + $0x108] sm:$0xff]
    %v8666 = vld [vmem:[#allocation10 + $0x110] sm:$0xff]
    %v8667 = vld [vmem:[#allocation10 + $0x118] sm:$0xff]
    %v8668 = vld [vmem:[#allocation10 + $0x120] sm:$0xff]
    %v8669 = vld [vmem:[#allocation10 + $0x128] sm:$0xff]
    %v8670 = vld [vmem:[#allocation10 + $0x130] sm:$0xff]
    %v8671 = vld [vmem:[#allocation10 + $0x138] sm:$0xff]
    %v8672 = vld [vmem:[#allocation10 + $0x140] sm:$0xff]
    %v8673 = vld [vmem:[#allocation10 + $0x148] sm:$0xff]
    %v8674 = vld [vmem:[#allocation10 + $0x150] sm:$0xff]
    %v8675 = vld [vmem:[#allocation10 + $0x158] sm:$0xff]
    %v8676 = vld [vmem:[#allocation10 + $0x160] sm:$0xff]
    %v8677 = vld [vmem:[#allocation10 + $0x168] sm:$0xff]
    %v8678 = vld [vmem:[#allocation10 + $0x170] sm:$0xff]
    %v8679 = vld [vmem:[#allocation10 + $0x178] sm:$0xff]
    %v8680 = vld [vmem:[#allocation10 + $0x180] sm:$0xff]
    %v8681 = vld [vmem:[#allocation10 + $0x188] sm:$0xff]
    %v8682 = vld [vmem:[#allocation10 + $0x190] sm:$0xff]
    %v8683 = vld [vmem:[#allocation10 + $0x198] sm:$0xff]
    %v8684 = vld [vmem:[#allocation10 + $0x1a0] sm:$0xff]
    %v8685 = vld [vmem:[#allocation10 + $0x1a8] sm:$0xff]
    %v8686 = vld [vmem:[#allocation10 + $0x1b0] sm:$0xff]
    %v8687 = vld [vmem:[#allocation10 + $0x1b8] sm:$0xff]
    %v8688 = vld [vmem:[#allocation10 + $0x1c0] sm:$0xff]
    %v8689 = vld [vmem:[#allocation10 + $0x1c8] sm:$0xff]
    %v8690 = vld [vmem:[#allocation10 + $0x1d0] sm:$0xff]
    %v8691 = vld [vmem:[#allocation10 + $0x1d8] sm:$0xff]
    %v8692 = vld [vmem:[#allocation10 + $0x1e0] sm:$0xff]
    %v8693 = vld [vmem:[#allocation10 + $0x1e8] sm:$0xff]
    %v8694 = vld [vmem:[#allocation10 + $0x1f0] sm:$0xff]
    %v8695 = vld [vmem:[#allocation10 + $0x1f8] sm:$0xff]
    %v8696 = vld [vmem:[#allocation10 + $0x200] sm:$0xff]
    %v8697 = vld [vmem:[#allocation10 + $0x208] sm:$0xff]
    %v8698 = vld [vmem:[#allocation10 + $0x210] sm:$0xff]
    %v8699 = vld [vmem:[#allocation10 + $0x218] sm:$0xff]
    %v8700 = vld [vmem:[#allocation10 + $0x220] sm:$0xff]
    %v8701 = vld [vmem:[#allocation10 + $0x228] sm:$0xff]
    %v8702 = vld [vmem:[#allocation10 + $0x230] sm:$0xff]
    %v8703 = vld [vmem:[#allocation10 + $0x238] sm:$0xff]
    %v8704 = vld [vmem:[#allocation10 + $0x240] sm:$0xff]
    %v8705 = vld [vmem:[#allocation10 + $0x248] sm:$0xff]
    %v8706 = vld [vmem:[#allocation10 + $0x250] sm:$0xff]
    %v8707 = vld [vmem:[#allocation10 + $0x258] sm:$0xff]
    %v8708 = vld [vmem:[#allocation10 + $0x260] sm:$0xff]
    %v8709 = vld [vmem:[#allocation10 + $0x268] sm:$0xff]
    %v8710 = vld [vmem:[#allocation10 + $0x270] sm:$0xff]
    %v8711 = vld [vmem:[#allocation10 + $0x278] sm:$0xff]
    %v8712 = vld [vmem:[#allocation10 + $0x280] sm:$0xff]
    %v8713 = vld [vmem:[#allocation10 + $0x288] sm:$0xff]
    %v8714 = vld [vmem:[#allocation10 + $0x290] sm:$0xff]
    %v8715 = vld [vmem:[#allocation10 + $0x298] sm:$0xff]
    %v8716 = vld [vmem:[#allocation10 + $0x2a0] sm:$0xff]
    %v8717 = vld [vmem:[#allocation10 + $0x2a8] sm:$0xff]
    %v8718 = vld [vmem:[#allocation10 + $0x2b0] sm:$0xff]
    %v8719 = vld [vmem:[#allocation10 + $0x2b8] sm:$0xff]
    %v8720 = vld [vmem:[#allocation10 + $0x2c0] sm:$0xff]
    %v8721 = vld [vmem:[#allocation10 + $0x2c8] sm:$0xff]
    %v8722 = vld [vmem:[#allocation10 + $0x2d0] sm:$0xff]
    %v8723 = vld [vmem:[#allocation10 + $0x2d8] sm:$0xff]
    %v8724 = vld [vmem:[#allocation10 + $0x2e0] sm:$0xff]
    %v8725 = vld [vmem:[#allocation10 + $0x2e8] sm:$0xff]
    %v8726 = vld [vmem:[#allocation10 + $0x2f0] sm:$0xff]
    %v8727 = vld [vmem:[#allocation10 + $0x2f8] sm:$0xff]
    %v8728 = vld [vmem:[#allocation10 + $0x300] sm:$0xff]
    %v8729 = vld [vmem:[#allocation10 + $0x308] sm:$0xff]
    %v8730 = vld [vmem:[#allocation10 + $0x310] sm:$0xff]
    %v8731 = vld [vmem:[#allocation10 + $0x318] sm:$0xff]
    %v8732 = vld [vmem:[#allocation10 + $0x320] sm:$0xff]
    %v8733 = vld [vmem:[#allocation10 + $0x328] sm:$0xff]
    %v8734 = vld [vmem:[#allocation10 + $0x330] sm:$0xff]
    %v8735 = vld [vmem:[#allocation10 + $0x338] sm:$0xff]
    %v8736 = vld [vmem:[#allocation10 + $0x340] sm:$0xff]
    %v8737 = vld [vmem:[#allocation10 + $0x348] sm:$0xff]
    %v8738 = vld [vmem:[#allocation10 + $0x350] sm:$0xff]
    %v8739 = vld [vmem:[#allocation10 + $0x358] sm:$0xff]
    %v8740 = vld [vmem:[#allocation10 + $0x360] sm:$0xff]
    %v8741 = vld [vmem:[#allocation10 + $0x368] sm:$0xff]
    %v8742 = vld [vmem:[#allocation10 + $0x370] sm:$0xff]
    %v8743 = vld [vmem:[#allocation10 + $0x378] sm:$0xff]
    %v8744 = vld [vmem:[#allocation10 + $0x380] sm:$0xff]
    %v8745 = vld [vmem:[#allocation10 + $0x388] sm:$0xff]
    %v8746 = vld [vmem:[#allocation10 + $0x390] sm:$0xff]
    %v8747 = vld [vmem:[#allocation10 + $0x398] sm:$0xff]
    %v8748 = vld [vmem:[#allocation10 + $0x3a0] sm:$0xff]
    %v8749 = vld [vmem:[#allocation10 + $0x3a8] sm:$0xff]
    %v8750 = vld [vmem:[#allocation10 + $0x3b0] sm:$0xff]
    %v8751 = vld [vmem:[#allocation10 + $0x3b8] sm:$0xff]
    %v8752 = vld [vmem:[#allocation10 + $0x3c0] sm:$0xff]
    %v8753 = vld [vmem:[#allocation10 + $0x3c8] sm:$0xff]
    %v8754 = vld [vmem:[#allocation10 + $0x3d0] sm:$0xff]
    %v8755 = vld [vmem:[#allocation10 + $0x3d8] sm:$0xff]
    %v8756 = vld [vmem:[#allocation10 + $0x3e0] sm:$0xff]
    %v8757 = vld [vmem:[#allocation10 + $0x3e8] sm:$0xff]
    %v8758 = vld [vmem:[#allocation10 + $0x3f0] sm:$0xff]
    %v8759 = vld [vmem:[#allocation10 + $0x3f8] sm:$0xff]
    %v8760 = vld [vmem:[#allocation11] sm:$0xf]
    %v8762 = vlaneseq
    %v8763 = vshrl.u32 %v8762, 7
    %v8764 = vsub.s32 0, %v8763
    %v8765 = vrot.slane %v8760, %v8764
    %v8766 = vlaneseq
    %v8767 = vshrl.u32 %v8766, 7
    %v8768 = vsub.s32 1, %v8767
    %v8769 = vrot.slane %v8760, %v8768
    %v8770 = vlaneseq
    %v8771 = vshrl.u32 %v8770, 7
    %v8772 = vsub.s32 2, %v8771
    %v8773 = vrot.slane %v8760, %v8772
    %v8774 = vlaneseq
    %v8775 = vshrl.u32 %v8774, 7
    %v8776 = vsub.s32 3, %v8775
    %v8777 = vrot.slane %v8760, %v8776
    %v8910 = vunpack.c.l.b16 %v8632
    %v8911 = vunpack.c.h.b16 %v8632
    %v8912 = vunpack.c.l.b16 %v8633
    %v8913 = vunpack.c.h.b16 %v8633
    %v8914 = vunpack.c.l.b16 %v8634
    %v8915 = vunpack.c.h.b16 %v8634
    %v8916 = vunpack.c.l.b16 %v8635
    %v8917 = vunpack.c.h.b16 %v8635
    %v8918 = vunpack.c.l.b16 %v8636
    %v8919 = vunpack.c.h.b16 %v8636
    %v8920 = vunpack.c.l.b16 %v8637
    %v8921 = vunpack.c.h.b16 %v8637
    %v8922 = vunpack.c.l.b16 %v8638
    %v8923 = vunpack.c.h.b16 %v8638
    %v8924 = vunpack.c.l.b16 %v8639
    %v8925 = vunpack.c.h.b16 %v8639
    %v8926 = vunpack.c.l.b16 %v8640
    %v8927 = vunpack.c.h.b16 %v8640
    %v8928 = vunpack.c.l.b16 %v8641
    %v8929 = vunpack.c.h.b16 %v8641
    %v8930 = vunpack.c.l.b16 %v8642
    %v8931 = vunpack.c.h.b16 %v8642
    %v8932 = vunpack.c.l.b16 %v8643
    %v8933 = vunpack.c.h.b16 %v8643
    %v8934 = vunpack.c.l.b16 %v8644
    %v8935 = vunpack.c.h.b16 %v8644
    %v8936 = vunpack.c.l.b16 %v8645
    %v8937 = vunpack.c.h.b16 %v8645
    %v8938 = vunpack.c.l.b16 %v8646
    %v8939 = vunpack.c.h.b16 %v8646
    %v8940 = vunpack.c.l.b16 %v8647
    %v8941 = vunpack.c.h.b16 %v8647
    %v8942 = vunpack.c.l.b16 %v8648
    %v8943 = vunpack.c.h.b16 %v8648
    %v8944 = vunpack.c.l.b16 %v8649
    %v8945 = vunpack.c.h.b16 %v8649
    %v8946 = vunpack.c.l.b16 %v8650
    %v8947 = vunpack.c.h.b16 %v8650
    %v8948 = vunpack.c.l.b16 %v8651
    %v8949 = vunpack.c.h.b16 %v8651
    %v8950 = vunpack.c.l.b16 %v8652
    %v8951 = vunpack.c.h.b16 %v8652
    %v8952 = vunpack.c.l.b16 %v8653
    %v8953 = vunpack.c.h.b16 %v8653
    %v8954 = vunpack.c.l.b16 %v8654
    %v8955 = vunpack.c.h.b16 %v8654
    %v8956 = vunpack.c.l.b16 %v8655
    %v8957 = vunpack.c.h.b16 %v8655
    %v8958 = vunpack.c.l.b16 %v8656
    %v8959 = vunpack.c.h.b16 %v8656
    %v8960 = vunpack.c.l.b16 %v8657
    %v8961 = vunpack.c.h.b16 %v8657
    %v8962 = vunpack.c.l.b16 %v8658
    %v8963 = vunpack.c.h.b16 %v8658
    %v8964 = vunpack.c.l.b16 %v8659
    %v8965 = vunpack.c.h.b16 %v8659
    %v8966 = vunpack.c.l.b16 %v8660
    %v8967 = vunpack.c.h.b16 %v8660
    %v8968 = vunpack.c.l.b16 %v8661
    %v8969 = vunpack.c.h.b16 %v8661
    %v8970 = vunpack.c.l.b16 %v8662
    %v8971 = vunpack.c.h.b16 %v8662
    %v8972 = vunpack.c.l.b16 %v8663
    %v8973 = vunpack.c.h.b16 %v8663
    %v8974 = vunpack.c.l.b16 %v8664
    %v8975 = vunpack.c.h.b16 %v8664
    %v8976 = vunpack.c.l.b16 %v8665
    %v8977 = vunpack.c.h.b16 %v8665
    %v8978 = vunpack.c.l.b16 %v8666
    %v8979 = vunpack.c.h.b16 %v8666
    %v8980 = vunpack.c.l.b16 %v8667
    %v8981 = vunpack.c.h.b16 %v8667
    %v8982 = vunpack.c.l.b16 %v8668
    %v8983 = vunpack.c.h.b16 %v8668
    %v8984 = vunpack.c.l.b16 %v8669
    %v8985 = vunpack.c.h.b16 %v8669
    %v8986 = vunpack.c.l.b16 %v8670
    %v8987 = vunpack.c.h.b16 %v8670
    %v8988 = vunpack.c.l.b16 %v8671
    %v8989 = vunpack.c.h.b16 %v8671
    %v8990 = vunpack.c.l.b16 %v8672
    %v8991 = vunpack.c.h.b16 %v8672
    %v8992 = vunpack.c.l.b16 %v8673
    %v8993 = vunpack.c.h.b16 %v8673
    %v8994 = vunpack.c.l.b16 %v8674
    %v8995 = vunpack.c.h.b16 %v8674
    %v8996 = vunpack.c.l.b16 %v8675
    %v8997 = vunpack.c.h.b16 %v8675
    %v8998 = vunpack.c.l.b16 %v8676
    %v8999 = vunpack.c.h.b16 %v8676
    %v9000 = vunpack.c.l.b16 %v8677
    %v9001 = vunpack.c.h.b16 %v8677
    %v9002 = vunpack.c.l.b16 %v8678
    %v9003 = vunpack.c.h.b16 %v8678
    %v9004 = vunpack.c.l.b16 %v8679
    %v9005 = vunpack.c.h.b16 %v8679
    %v9006 = vunpack.c.l.b16 %v8680
    %v9007 = vunpack.c.h.b16 %v8680
    %v9008 = vunpack.c.l.b16 %v8681
    %v9009 = vunpack.c.h.b16 %v8681
    %v9010 = vunpack.c.l.b16 %v8682
    %v9011 = vunpack.c.h.b16 %v8682
    %v9012 = vunpack.c.l.b16 %v8683
    %v9013 = vunpack.c.h.b16 %v8683
    %v9014 = vunpack.c.l.b16 %v8684
    %v9015 = vunpack.c.h.b16 %v8684
    %v9016 = vunpack.c.l.b16 %v8685
    %v9017 = vunpack.c.h.b16 %v8685
    %v9018 = vunpack.c.l.b16 %v8686
    %v9019 = vunpack.c.h.b16 %v8686
    %v9020 = vunpack.c.l.b16 %v8687
    %v9021 = vunpack.c.h.b16 %v8687
    %v9022 = vunpack.c.l.b16 %v8688
    %v9023 = vunpack.c.h.b16 %v8688
    %v9024 = vunpack.c.l.b16 %v8689
    %v9025 = vunpack.c.h.b16 %v8689
    %v9026 = vunpack.c.l.b16 %v8690
    %v9027 = vunpack.c.h.b16 %v8690
    %v9028 = vunpack.c.l.b16 %v8691
    %v9029 = vunpack.c.h.b16 %v8691
    %v9030 = vunpack.c.l.b16 %v8692
    %v9031 = vunpack.c.h.b16 %v8692
    %v9032 = vunpack.c.l.b16 %v8693
    %v9033 = vunpack.c.h.b16 %v8693
    %v9034 = vunpack.c.l.b16 %v8694
    %v9035 = vunpack.c.h.b16 %v8694
    %v9036 = vunpack.c.l.b16 %v8695
    %v9037 = vunpack.c.h.b16 %v8695
    %v9038 = vunpack.c.l.b16 %v8696
    %v9039 = vunpack.c.h.b16 %v8696
    %v9040 = vunpack.c.l.b16 %v8697
    %v9041 = vunpack.c.h.b16 %v8697
    %v9042 = vunpack.c.l.b16 %v8698
    %v9043 = vunpack.c.h.b16 %v8698
    %v9044 = vunpack.c.l.b16 %v8699
    %v9045 = vunpack.c.h.b16 %v8699
    %v9046 = vunpack.c.l.b16 %v8700
    %v9047 = vunpack.c.h.b16 %v8700
    %v9048 = vunpack.c.l.b16 %v8701
    %v9049 = vunpack.c.h.b16 %v8701
    %v9050 = vunpack.c.l.b16 %v8702
    %v9051 = vunpack.c.h.b16 %v8702
    %v9052 = vunpack.c.l.b16 %v8703
    %v9053 = vunpack.c.h.b16 %v8703
    %v9054 = vunpack.c.l.b16 %v8704
    %v9055 = vunpack.c.h.b16 %v8704
    %v9056 = vunpack.c.l.b16 %v8705
    %v9057 = vunpack.c.h.b16 %v8705
    %v9058 = vunpack.c.l.b16 %v8706
    %v9059 = vunpack.c.h.b16 %v8706
    %v9060 = vunpack.c.l.b16 %v8707
    %v9061 = vunpack.c.h.b16 %v8707
    %v9062 = vunpack.c.l.b16 %v8708
    %v9063 = vunpack.c.h.b16 %v8708
    %v9064 = vunpack.c.l.b16 %v8709
    %v9065 = vunpack.c.h.b16 %v8709
    %v9066 = vunpack.c.l.b16 %v8710
    %v9067 = vunpack.c.h.b16 %v8710
    %v9068 = vunpack.c.l.b16 %v8711
    %v9069 = vunpack.c.h.b16 %v8711
    %v9070 = vunpack.c.l.b16 %v8712
    %v9071 = vunpack.c.h.b16 %v8712
    %v9072 = vunpack.c.l.b16 %v8713
    %v9073 = vunpack.c.h.b16 %v8713
    %v9074 = vunpack.c.l.b16 %v8714
    %v9075 = vunpack.c.h.b16 %v8714
    %v9076 = vunpack.c.l.b16 %v8715
    %v9077 = vunpack.c.h.b16 %v8715
    %v9078 = vunpack.c.l.b16 %v8716
    %v9079 = vunpack.c.h.b16 %v8716
    %v9080 = vunpack.c.l.b16 %v8717
    %v9081 = vunpack.c.h.b16 %v8717
    %v9082 = vunpack.c.l.b16 %v8718
    %v9083 = vunpack.c.h.b16 %v8718
    %v9084 = vunpack.c.l.b16 %v8719
    %v9085 = vunpack.c.h.b16 %v8719
    %v9086 = vunpack.c.l.b16 %v8720
    %v9087 = vunpack.c.h.b16 %v8720
    %v9088 = vunpack.c.l.b16 %v8721
    %v9089 = vunpack.c.h.b16 %v8721
    %v9090 = vunpack.c.l.b16 %v8722
    %v9091 = vunpack.c.h.b16 %v8722
    %v9092 = vunpack.c.l.b16 %v8723
    %v9093 = vunpack.c.h.b16 %v8723
    %v9094 = vunpack.c.l.b16 %v8724
    %v9095 = vunpack.c.h.b16 %v8724
    %v9096 = vunpack.c.l.b16 %v8725
    %v9097 = vunpack.c.h.b16 %v8725
    %v9098 = vunpack.c.l.b16 %v8726
    %v9099 = vunpack.c.h.b16 %v8726
    %v9100 = vunpack.c.l.b16 %v8727
    %v9101 = vunpack.c.h.b16 %v8727
    %v9102 = vunpack.c.l.b16 %v8728
    %v9103 = vunpack.c.h.b16 %v8728
    %v9104 = vunpack.c.l.b16 %v8729
    %v9105 = vunpack.c.h.b16 %v8729
    %v9106 = vunpack.c.l.b16 %v8730
    %v9107 = vunpack.c.h.b16 %v8730
    %v9108 = vunpack.c.l.b16 %v8731
    %v9109 = vunpack.c.h.b16 %v8731
    %v9110 = vunpack.c.l.b16 %v8732
    %v9111 = vunpack.c.h.b16 %v8732
    %v9112 = vunpack.c.l.b16 %v8733
    %v9113 = vunpack.c.h.b16 %v8733
    %v9114 = vunpack.c.l.b16 %v8734
    %v9115 = vunpack.c.h.b16 %v8734
    %v9116 = vunpack.c.l.b16 %v8735
    %v9117 = vunpack.c.h.b16 %v8735
    %v9118 = vunpack.c.l.b16 %v8736
    %v9119 = vunpack.c.h.b16 %v8736
    %v9120 = vunpack.c.l.b16 %v8737
    %v9121 = vunpack.c.h.b16 %v8737
    %v9122 = vunpack.c.l.b16 %v8738
    %v9123 = vunpack.c.h.b16 %v8738
    %v9124 = vunpack.c.l.b16 %v8739
    %v9125 = vunpack.c.h.b16 %v8739
    %v9126 = vunpack.c.l.b16 %v8740
    %v9127 = vunpack.c.h.b16 %v8740
    %v9128 = vunpack.c.l.b16 %v8741
    %v9129 = vunpack.c.h.b16 %v8741
    %v9130 = vunpack.c.l.b16 %v8742
    %v9131 = vunpack.c.h.b16 %v8742
    %v9132 = vunpack.c.l.b16 %v8743
    %v9133 = vunpack.c.h.b16 %v8743
    %v9134 = vunpack.c.l.b16 %v8744
    %v9135 = vunpack.c.h.b16 %v8744
    %v9136 = vunpack.c.l.b16 %v8745
    %v9137 = vunpack.c.h.b16 %v8745
    %v9138 = vunpack.c.l.b16 %v8746
    %v9139 = vunpack.c.h.b16 %v8746
    %v9140 = vunpack.c.l.b16 %v8747
    %v9141 = vunpack.c.h.b16 %v8747
    %v9142 = vunpack.c.l.b16 %v8748
    %v9143 = vunpack.c.h.b16 %v8748
    %v9144 = vunpack.c.l.b16 %v8749
    %v9145 = vunpack.c.h.b16 %v8749
    %v9146 = vunpack.c.l.b16 %v8750
    %v9147 = vunpack.c.h.b16 %v8750
    %v9148 = vunpack.c.l.b16 %v8751
    %v9149 = vunpack.c.h.b16 %v8751
    %v9150 = vunpack.c.l.b16 %v8752
    %v9151 = vunpack.c.h.b16 %v8752
    %v9152 = vunpack.c.l.b16 %v8753
    %v9153 = vunpack.c.h.b16 %v8753
    %v9154 = vunpack.c.l.b16 %v8754
    %v9155 = vunpack.c.h.b16 %v8754
    %v9156 = vunpack.c.l.b16 %v8755
    %v9157 = vunpack.c.h.b16 %v8755
    %v9158 = vunpack.c.l.b16 %v8756
    %v9159 = vunpack.c.h.b16 %v8756
    %v9160 = vunpack.c.l.b16 %v8757
    %v9161 = vunpack.c.h.b16 %v8757
    %v9162 = vunpack.c.l.b16 %v8758
    %v9163 = vunpack.c.h.b16 %v8758
    %v9164 = vunpack.c.l.b16 %v8759
    %v9165 = vunpack.c.h.b16 %v8759
    %v9166 = vpack.c.b16 %v8914, %v8910
    %v9167 = vpack.c.b16 %v8915, %v8911
    %v9168 = vpack.c.b16 %v8916, %v8912
    %v9169 = vpack.c.b16 %v8917, %v8913
    %v9170 = vpack.c.b16 %v8922, %v8918
    %v9171 = vpack.c.b16 %v8923, %v8919
    %v9172 = vpack.c.b16 %v8924, %v8920
    %v9173 = vpack.c.b16 %v8925, %v8921
    %v9174 = vpack.c.b16 %v8930, %v8926
    %v9175 = vpack.c.b16 %v8931, %v8927
    %v9176 = vpack.c.b16 %v8932, %v8928
    %v9177 = vpack.c.b16 %v8933, %v8929
    %v9178 = vpack.c.b16 %v8938, %v8934
    %v9179 = vpack.c.b16 %v8939, %v8935
    %v9180 = vpack.c.b16 %v8940, %v8936
    %v9181 = vpack.c.b16 %v8941, %v8937
    %v9182 = vpack.c.b16 %v8946, %v8942
    %v9183 = vpack.c.b16 %v8947, %v8943
    %v9184 = vpack.c.b16 %v8948, %v8944
    %v9185 = vpack.c.b16 %v8949, %v8945
    %v9186 = vpack.c.b16 %v8954, %v8950
    %v9187 = vpack.c.b16 %v8955, %v8951
    %v9188 = vpack.c.b16 %v8956, %v8952
    %v9189 = vpack.c.b16 %v8957, %v8953
    %v9190 = vpack.c.b16 %v8962, %v8958
    %v9191 = vpack.c.b16 %v8963, %v8959
    %v9192 = vpack.c.b16 %v8964, %v8960
    %v9193 = vpack.c.b16 %v8965, %v8961
    %v9194 = vpack.c.b16 %v8970, %v8966
    %v9195 = vpack.c.b16 %v8971, %v8967
    %v9196 = vpack.c.b16 %v8972, %v8968
    %v9197 = vpack.c.b16 %v8973, %v8969
    %v9198 = vpack.c.b16 %v8978, %v8974
    %v9199 = vpack.c.b16 %v8979, %v8975
    %v9200 = vpack.c.b16 %v8980, %v8976
    %v9201 = vpack.c.b16 %v8981, %v8977
    %v9202 = vpack.c.b16 %v8986, %v8982
    %v9203 = vpack.c.b16 %v8987, %v8983
    %v9204 = vpack.c.b16 %v8988, %v8984
    %v9205 = vpack.c.b16 %v8989, %v8985
    %v9206 = vpack.c.b16 %v8994, %v8990
    %v9207 = vpack.c.b16 %v8995, %v8991
    %v9208 = vpack.c.b16 %v8996, %v8992
    %v9209 = vpack.c.b16 %v8997, %v8993
    %v9210 = vpack.c.b16 %v9002, %v8998
    %v9211 = vpack.c.b16 %v9003, %v8999
    %v9212 = vpack.c.b16 %v9004, %v9000
    %v9213 = vpack.c.b16 %v9005, %v9001
    %v9214 = vpack.c.b16 %v9010, %v9006
    %v9215 = vpack.c.b16 %v9011, %v9007
    %v9216 = vpack.c.b16 %v9012, %v9008
    %v9217 = vpack.c.b16 %v9013, %v9009
    %v9218 = vpack.c.b16 %v9018, %v9014
    %v9219 = vpack.c.b16 %v9019, %v9015
    %v9220 = vpack.c.b16 %v9020, %v9016
    %v9221 = vpack.c.b16 %v9021, %v9017
    %v9222 = vpack.c.b16 %v9026, %v9022
    %v9223 = vpack.c.b16 %v9027, %v9023
    %v9224 = vpack.c.b16 %v9028, %v9024
    %v9225 = vpack.c.b16 %v9029, %v9025
    %v9226 = vpack.c.b16 %v9034, %v9030
    %v9227 = vpack.c.b16 %v9035, %v9031
    %v9228 = vpack.c.b16 %v9036, %v9032
    %v9229 = vpack.c.b16 %v9037, %v9033
    %v9230 = vpack.c.b16 %v9042, %v9038
    %v9231 = vpack.c.b16 %v9043, %v9039
    %v9232 = vpack.c.b16 %v9044, %v9040
    %v9233 = vpack.c.b16 %v9045, %v9041
    %v9234 = vpack.c.b16 %v9050, %v9046
    %v9235 = vpack.c.b16 %v9051, %v9047
    %v9236 = vpack.c.b16 %v9052, %v9048
    %v9237 = vpack.c.b16 %v9053, %v9049
    %v9238 = vpack.c.b16 %v9058, %v9054
    %v9239 = vpack.c.b16 %v9059, %v9055
    %v9240 = vpack.c.b16 %v9060, %v9056
    %v9241 = vpack.c.b16 %v9061, %v9057
    %v9242 = vpack.c.b16 %v9066, %v9062
    %v9243 = vpack.c.b16 %v9067, %v9063
    %v9244 = vpack.c.b16 %v9068, %v9064
    %v9245 = vpack.c.b16 %v9069, %v9065
    %v9246 = vpack.c.b16 %v9074, %v9070
    %v9247 = vpack.c.b16 %v9075, %v9071
    %v9248 = vpack.c.b16 %v9076, %v9072
    %v9249 = vpack.c.b16 %v9077, %v9073
    %v9250 = vpack.c.b16 %v9082, %v9078
    %v9251 = vpack.c.b16 %v9083, %v9079
    %v9252 = vpack.c.b16 %v9084, %v9080
    %v9253 = vpack.c.b16 %v9085, %v9081
    %v9254 = vpack.c.b16 %v9090, %v9086
    %v9255 = vpack.c.b16 %v9091, %v9087
    %v9256 = vpack.c.b16 %v9092, %v9088
    %v9257 = vpack.c.b16 %v9093, %v9089
    %v9258 = vpack.c.b16 %v9098, %v9094
    %v9259 = vpack.c.b16 %v9099, %v9095
    %v9260 = vpack.c.b16 %v9100, %v9096
    %v9261 = vpack.c.b16 %v9101, %v9097
    %v9262 = vpack.c.b16 %v9106, %v9102
    %v9263 = vpack.c.b16 %v9107, %v9103
    %v9264 = vpack.c.b16 %v9108, %v9104
    %v9265 = vpack.c.b16 %v9109, %v9105
    %v9266 = vpack.c.b16 %v9114, %v9110
    %v9267 = vpack.c.b16 %v9115, %v9111
    %v9268 = vpack.c.b16 %v9116, %v9112
    %v9269 = vpack.c.b16 %v9117, %v9113
    %v9270 = vpack.c.b16 %v9122, %v9118
    %v9271 = vpack.c.b16 %v9123, %v9119
    %v9272 = vpack.c.b16 %v9124, %v9120
    %v9273 = vpack.c.b16 %v9125, %v9121
    %v9274 = vpack.c.b16 %v9130, %v9126
    %v9275 = vpack.c.b16 %v9131, %v9127
    %v9276 = vpack.c.b16 %v9132, %v9128
    %v9277 = vpack.c.b16 %v9133, %v9129
    %v9278 = vpack.c.b16 %v9138, %v9134
    %v9279 = vpack.c.b16 %v9139, %v9135
    %v9280 = vpack.c.b16 %v9140, %v9136
    %v9281 = vpack.c.b16 %v9141, %v9137
    %v9282 = vpack.c.b16 %v9146, %v9142
    %v9283 = vpack.c.b16 %v9147, %v9143
    %v9284 = vpack.c.b16 %v9148, %v9144
    %v9285 = vpack.c.b16 %v9149, %v9145
    %v9286 = vpack.c.b16 %v9154, %v9150
    %v9287 = vpack.c.b16 %v9155, %v9151
    %v9288 = vpack.c.b16 %v9156, %v9152
    %v9289 = vpack.c.b16 %v9157, %v9153
    %v9290 = vpack.c.b16 %v9162, %v9158
    %v9291 = vpack.c.b16 %v9163, %v9159
    %v9292 = vpack.c.b16 %v9164, %v9160
    %v9293 = vpack.c.b16 %v9165, %v9161
    %9422 = vmatprep.subr.bf16.mxu0 %v9195
    %9423 = vmatpush1.bf16.msra.mxu0 %v9194
    %9424 = vmatprep.subr.bf16.mxu0 %v9191
    %9425 = vmatpush1.bf16.msra.mxu0 %v9190
    %9426 = vmatprep.subr.bf16.mxu0 %v9187
    %9427 = vmatpush1.bf16.msra.mxu0 %v9186
    %9428 = vmatprep.subr.bf16.mxu0 %v9183
    %9429 = vmatpush1.bf16.msra.mxu0 %v9182
    %9430 = vmatprep.subr.bf16.mxu0 %v9179
    %9431 = vmatpush1.bf16.msra.mxu0 %v9178
    %9432 = vmatprep.subr.bf16.mxu0 %v9175
    %9433 = vmatpush1.bf16.msra.mxu0 %v9174
    %9434 = vmatprep.subr.bf16.mxu0 %v9171
    %9435 = vmatpush1.bf16.msra.mxu0 %v9170
    %9436 = vmatprep.subr.bf16.mxu0 %v9167
    %9437 = vmatpush1.bf16.msra.mxu0 %v9166
    %9438 = vmatprep.subr.bf16.mxu0 %v9227
    %9439 = vmatpush2.bf16.msra.mxu0 %v9226
    %9440 = vmatprep.subr.bf16.mxu0 %v9223
    %9441 = vmatpush2.bf16.msra.mxu0 %v9222
    %9442 = vmatprep.subr.bf16.mxu0 %v9219
    %9443 = vmatpush2.bf16.msra.mxu0 %v9218
    %9444 = vmatprep.subr.bf16.mxu0 %v9215
    %9445 = vmatpush2.bf16.msra.mxu0 %v9214
    %9446 = vmatprep.subr.bf16.mxu0 %v9211
    %9447 = vmatpush2.bf16.msra.mxu0 %v9210
    %9448 = vmatprep.subr.bf16.mxu0 %v9207
    %9449 = vmatpush2.bf16.msra.mxu0 %v9206
    %9450 = vmatprep.subr.bf16.mxu0 %v9203
    %9451 = vmatpush2.bf16.msra.mxu0 %v9202
    %9452 = vmatprep.subr.bf16.mxu0 %v9199
    %9453 = vmatpush2.bf16.msra.mxu0 %v9198
    %9454 = vmatprep.mubr.bf16.mxu0 %v8629
    %9455 = vmatmul.mubr.bf16.gmra.mxu0 %v8628
    %v9456 = vpop.f32.mrf.mxu0
    %v9457 = vadd.f32 %v8765, %v9456
    %v9458 = vpop.f32.mrf.mxu0
    %v9459 = vadd.f32 %v8769, %v9458
    %v9460 = vpop.f32.mrf.mxu0
    %v9461 = vpop.f32.mrf.mxu0
    %9462 = vdwg.mxu0
    %9463 = vmatprep.subr.bf16.mxu0 %v9259
    %9464 = vmatpush1.bf16.msra.mxu0 %v9258
    %9465 = vmatprep.subr.bf16.mxu0 %v9255
    %9466 = vmatpush1.bf16.msra.mxu0 %v9254
    %9467 = vmatprep.subr.bf16.mxu0 %v9251
    %9468 = vmatpush1.bf16.msra.mxu0 %v9250
    %9469 = vmatprep.subr.bf16.mxu0 %v9247
    %9470 = vmatpush1.bf16.msra.mxu0 %v9246
    %9471 = vmatprep.subr.bf16.mxu0 %v9243
    %9472 = vmatpush1.bf16.msra.mxu0 %v9242
    %9473 = vmatprep.subr.bf16.mxu0 %v9239
    %9474 = vmatpush1.bf16.msra.mxu0 %v9238
    %9475 = vmatprep.subr.bf16.mxu0 %v9235
    %9476 = vmatpush1.bf16.msra.mxu0 %v9234
    %9477 = vmatprep.subr.bf16.mxu0 %v9231
    %9478 = vmatpush1.bf16.msra.mxu0 %v9230
    %9479 = vmatprep.subr.bf16.mxu0 %v9291
    %9480 = vmatpush2.bf16.msra.mxu0 %v9290
    %9481 = vmatprep.subr.bf16.mxu0 %v9287
    %9482 = vmatpush2.bf16.msra.mxu0 %v9286
    %9483 = vmatprep.subr.bf16.mxu0 %v9283
    %9484 = vmatpush2.bf16.msra.mxu0 %v9282
    %9485 = vmatprep.subr.bf16.mxu0 %v9279
    %9486 = vmatpush2.bf16.msra.mxu0 %v9278
    %9487 = vmatprep.subr.bf16.mxu0 %v9275
    %9488 = vmatpush2.bf16.msra.mxu0 %v9274
    %9489 = vmatprep.subr.bf16.mxu0 %v9271
    %9490 = vmatpush2.bf16.msra.mxu0 %v9270
    %9491 = vmatprep.subr.bf16.mxu0 %v9267
    %9492 = vmatpush2.bf16.msra.mxu0 %v9266
    %9493 = vmatprep.subr.bf16.mxu0 %v9263
    %9494 = vmatpush2.bf16.msra.mxu0 %v9262
    %9495 = vmatprep.mubr.bf16.mxu0 %v8631
    %9496 = vmatmul.mubr.bf16.gmra.mxu0 %v8630
    %v9497 = vpop.f32.mrf.mxu0
    %v9498 = vadd.f32 %v9457, %v9497
    %v9499 = vpop.f32.mrf.mxu0
    %v9500 = vadd.f32 %v9459, %v9499
    %v9501 = vpop.f32.mrf.mxu0
    %v9502 = vpop.f32.mrf.mxu0
    %9503 = vdwg.mxu0
    %9504 = vmatprep.subr.bf16.mxu0 %v9197
    %9505 = vmatpush1.bf16.msra.mxu0 %v9196
    %9506 = vmatprep.subr.bf16.mxu0 %v9193
    %9507 = vmatpush1.bf16.msra.mxu0 %v9192
    %9508 = vmatprep.subr.bf16.mxu0 %v9189
    %9509 = vmatpush1.bf16.msra.mxu0 %v9188
    %9510 = vmatprep.subr.bf16.mxu0 %v9185
    %9511 = vmatpush1.bf16.msra.mxu0 %v9184
    %9512 = vmatprep.subr.bf16.mxu0 %v9181
    %9513 = vmatpush1.bf16.msra.mxu0 %v9180
    %9514 = vmatprep.subr.bf16.mxu0 %v9177
    %9515 = vmatpush1.bf16.msra.mxu0 %v9176
    %9516 = vmatprep.subr.bf16.mxu0 %v9173
    %9517 = vmatpush1.bf16.msra.mxu0 %v9172
    %9518 = vmatprep.subr.bf16.mxu0 %v9169
    %9519 = vmatpush1.bf16.msra.mxu0 %v9168
    %9520 = vmatprep.subr.bf16.mxu0 %v9229
    %9521 = vmatpush2.bf16.msra.mxu0 %v9228
    %9522 = vmatprep.subr.bf16.mxu0 %v9225
    %9523 = vmatpush2.bf16.msra.mxu0 %v9224
    %9524 = vmatprep.subr.bf16.mxu0 %v9221
    %9525 = vmatpush2.bf16.msra.mxu0 %v9220
    %9526 = vmatprep.subr.bf16.mxu0 %v9217
    %9527 = vmatpush2.bf16.msra.mxu0 %v9216
    %9528 = vmatprep.subr.bf16.mxu0 %v9213
    %9529 = vmatpush2.bf16.msra.mxu0 %v9212
    %9530 = vmatprep.subr.bf16.mxu0 %v9209
    %9531 = vmatpush2.bf16.msra.mxu0 %v9208
    %9532 = vmatprep.subr.bf16.mxu0 %v9205
    %9533 = vmatpush2.bf16.msra.mxu0 %v9204
    %9534 = vmatprep.subr.bf16.mxu0 %v9201
    %9535 = vmatpush2.bf16.msra.mxu0 %v9200
    %9536 = vmatprep.mubr.bf16.mxu0 %v8629
    %9537 = vmatmul.mubr.bf16.gmra.mxu0 %v8628
    %v9538 = vpop.f32.mrf.mxu0
    %v9539 = vadd.f32 %v8773, %v9538
    %v9540 = vpop.f32.mrf.mxu0
    %v9541 = vadd.f32 %v8777, %v9540
    %v9542 = vpop.f32.mrf.mxu0
    %v9543 = vpop.f32.mrf.mxu0
    %9544 = vdwg.mxu0
    %9545 = vmatprep.subr.bf16.mxu0 %v9261
    %9546 = vmatpush1.bf16.msra.mxu0 %v9260
    %9547 = vmatprep.subr.bf16.mxu0 %v9257
    %9548 = vmatpush1.bf16.msra.mxu0 %v9256
    %9549 = vmatprep.subr.bf16.mxu0 %v9253
    %9550 = vmatpush1.bf16.msra.mxu0 %v9252
    %9551 = vmatprep.subr.bf16.mxu0 %v9249
    %9552 = vmatpush1.bf16.msra.mxu0 %v9248
    %9553 = vmatprep.subr.bf16.mxu0 %v9245
    %9554 = vmatpush1.bf16.msra.mxu0 %v9244
    %9555 = vmatprep.subr.bf16.mxu0 %v9241
    %9556 = vmatpush1.bf16.msra.mxu0 %v9240
    %9557 = vmatprep.subr.bf16.mxu0 %v9237
    %9558 = vmatpush1.bf16.msra.mxu0 %v9236
    %9559 = vmatprep.subr.bf16.mxu0 %v9233
    %9560 = vmatpush1.bf16.msra.mxu0 %v9232
    %9561 = vmatprep.subr.bf16.mxu0 %v9293
    %9562 = vmatpush2.bf16.msra.mxu0 %v9292
    %9563 = vmatprep.subr.bf16.mxu0 %v9289
    %9564 = vmatpush2.bf16.msra.mxu0 %v9288
    %9565 = vmatprep.subr.bf16.mxu0 %v9285
    %9566 = vmatpush2.bf16.msra.mxu0 %v9284
    %9567 = vmatprep.subr.bf16.mxu0 %v9281
    %9568 = vmatpush2.bf16.msra.mxu0 %v9280
    %9569 = vmatprep.subr.bf16.mxu0 %v9277
    %9570 = vmatpush2.bf16.msra.mxu0 %v9276
    %9571 = vmatprep.subr.bf16.mxu0 %v9273
    %9572 = vmatpush2.bf16.msra.mxu0 %v9272
    %9573 = vmatprep.subr.bf16.mxu0 %v9269
    %9574 = vmatpush2.bf16.msra.mxu0 %v9268
    %9575 = vmatprep.subr.bf16.mxu0 %v9265
    %9576 = vmatpush2.bf16.msra.mxu0 %v9264
    %9577 = vmatprep.mubr.bf16.mxu0 %v8631
    %9578 = vmatmul.mubr.bf16.gmra.mxu0 %v8630
    %v9579 = vpop.f32.mrf.mxu0
    %v9580 = vadd.f32 %v9539, %v9579
    %v9581 = vpop.f32.mrf.mxu0
    %v9582 = vadd.f32 %v9541, %v9581
    %v9583 = vpop.f32.mrf.mxu0
    %v9584 = vpop.f32.mrf.mxu0
    %9585 = vdwg.mxu0
    %v9586 = vmax.f32 %v9498, 0.0
    %v9587 = vmax.f32 %v9500, 0.0
    %v9588 = vmax.f32 %v9580, 0.0
    %v9589 = vmax.f32 %v9582, 0.0
    %v9590 = vpack.c.bf16 %v9586, %v9586
    %v9591 = vpack.c.bf16 %v9587, %v9587
    %v9592 = vpack.c.bf16 %v9588, %v9588
    %v9593 = vpack.c.bf16 %v9589, %v9589
    %v9594 = vld [vmem:[#allocation13] sm:$0xff]
    %v9595 = vld [vmem:[#allocation13 + $0x8] sm:$0xff]
    %v9596 = vld [vmem:[#allocation13 + $0x10] sm:$0xff]
    %v9597 = vld [vmem:[#allocation13 + $0x18] sm:$0xff]
    %v9598 = vld [vmem:[#allocation13 + $0x20] sm:$0xff]
    %v9599 = vld [vmem:[#allocation13 + $0x28] sm:$0xff]
    %v9600 = vld [vmem:[#allocation13 + $0x30] sm:$0xff]
    %v9601 = vld [vmem:[#allocation13 + $0x38] sm:$0xff]
    %v9602 = vld [vmem:[#allocation13 + $0x40] sm:$0xff]
    %v9603 = vld [vmem:[#allocation13 + $0x48] sm:$0xff]
    %v9604 = vld [vmem:[#allocation13 + $0x50] sm:$0xff]
    %v9605 = vld [vmem:[#allocation13 + $0x58] sm:$0xff]
    %v9606 = vld [vmem:[#allocation13 + $0x60] sm:$0xff]
    %v9607 = vld [vmem:[#allocation13 + $0x68] sm:$0xff]
    %v9608 = vld [vmem:[#allocation13 + $0x70] sm:$0xff]
    %v9609 = vld [vmem:[#allocation13 + $0x78] sm:$0xff]
    %v9610 = vld [vmem:[#allocation13 + $0x80] sm:$0xff]
    %v9611 = vld [vmem:[#allocation13 + $0x88] sm:$0xff]
    %v9612 = vld [vmem:[#allocation13 + $0x90] sm:$0xff]
    %v9613 = vld [vmem:[#allocation13 + $0x98] sm:$0xff]
    %v9614 = vld [vmem:[#allocation13 + $0xa0] sm:$0xff]
    %v9615 = vld [vmem:[#allocation13 + $0xa8] sm:$0xff]
    %v9616 = vld [vmem:[#allocation13 + $0xb0] sm:$0xff]
    %v9617 = vld [vmem:[#allocation13 + $0xb8] sm:$0xff]
    %v9618 = vld [vmem:[#allocation13 + $0xc0] sm:$0xff]
    %v9619 = vld [vmem:[#allocation13 + $0xc8] sm:$0xff]
    %v9620 = vld [vmem:[#allocation13 + $0xd0] sm:$0xff]
    %v9621 = vld [vmem:[#allocation13 + $0xd8] sm:$0xff]
    %v9622 = vld [vmem:[#allocation13 + $0xe0] sm:$0xff]
    %v9623 = vld [vmem:[#allocation13 + $0xe8] sm:$0xff]
    %v9624 = vld [vmem:[#allocation13 + $0xf0] sm:$0xff]
    %v9625 = vld [vmem:[#allocation13 + $0xf8] sm:$0xff]
    %v9626 = vld [vmem:[#allocation13 + $0x100] sm:$0xff]
    %v9627 = vld [vmem:[#allocation13 + $0x108] sm:$0xff]
    %v9628 = vld [vmem:[#allocation13 + $0x110] sm:$0xff]
    %v9629 = vld [vmem:[#allocation13 + $0x118] sm:$0xff]
    %v9630 = vld [vmem:[#allocation13 + $0x120] sm:$0xff]
    %v9631 = vld [vmem:[#allocation13 + $0x128] sm:$0xff]
    %v9632 = vld [vmem:[#allocation13 + $0x130] sm:$0xff]
    %v9633 = vld [vmem:[#allocation13 + $0x138] sm:$0xff]
    %v9634 = vld [vmem:[#allocation13 + $0x140] sm:$0xff]
    %v9635 = vld [vmem:[#allocation13 + $0x148] sm:$0xff]
    %v9636 = vld [vmem:[#allocation13 + $0x150] sm:$0xff]
    %v9637 = vld [vmem:[#allocation13 + $0x158] sm:$0xff]
    %v9638 = vld [vmem:[#allocation13 + $0x160] sm:$0xff]
    %v9639 = vld [vmem:[#allocation13 + $0x168] sm:$0xff]
    %v9640 = vld [vmem:[#allocation13 + $0x170] sm:$0xff]
    %v9641 = vld [vmem:[#allocation13 + $0x178] sm:$0xff]
    %v9642 = vld [vmem:[#allocation13 + $0x180] sm:$0xff]
    %v9643 = vld [vmem:[#allocation13 + $0x188] sm:$0xff]
    %v9644 = vld [vmem:[#allocation13 + $0x190] sm:$0xff]
    %v9645 = vld [vmem:[#allocation13 + $0x198] sm:$0xff]
    %v9646 = vld [vmem:[#allocation13 + $0x1a0] sm:$0xff]
    %v9647 = vld [vmem:[#allocation13 + $0x1a8] sm:$0xff]
    %v9648 = vld [vmem:[#allocation13 + $0x1b0] sm:$0xff]
    %v9649 = vld [vmem:[#allocation13 + $0x1b8] sm:$0xff]
    %v9650 = vld [vmem:[#allocation13 + $0x1c0] sm:$0xff]
    %v9651 = vld [vmem:[#allocation13 + $0x1c8] sm:$0xff]
    %v9652 = vld [vmem:[#allocation13 + $0x1d0] sm:$0xff]
    %v9653 = vld [vmem:[#allocation13 + $0x1d8] sm:$0xff]
    %v9654 = vld [vmem:[#allocation13 + $0x1e0] sm:$0xff]
    %v9655 = vld [vmem:[#allocation13 + $0x1e8] sm:$0xff]
    %v9656 = vld [vmem:[#allocation13 + $0x1f0] sm:$0xff]
    %v9657 = vld [vmem:[#allocation13 + $0x1f8] sm:$0xff]
    %v9658 = vld [vmem:[#allocation14] sm:$0x3]
    %v9660 = vlaneseq
    %v9661 = vshrl.u32 %v9660, 7
    %v9662 = vsub.s32 0, %v9661
    %v9663 = vrot.slane %v9658, %v9662
    %v9664 = vlaneseq
    %v9665 = vshrl.u32 %v9664, 7
    %v9666 = vsub.s32 1, %v9665
    %v9667 = vrot.slane %v9658, %v9666
    %v9734 = vunpack.c.l.b16 %v9594
    %v9735 = vunpack.c.h.b16 %v9594
    %v9736 = vunpack.c.l.b16 %v9595
    %v9737 = vunpack.c.h.b16 %v9595
    %v9738 = vunpack.c.l.b16 %v9596
    %v9739 = vunpack.c.h.b16 %v9596
    %v9740 = vunpack.c.l.b16 %v9597
    %v9741 = vunpack.c.h.b16 %v9597
    %v9742 = vunpack.c.l.b16 %v9598
    %v9743 = vunpack.c.h.b16 %v9598
    %v9744 = vunpack.c.l.b16 %v9599
    %v9745 = vunpack.c.h.b16 %v9599
    %v9746 = vunpack.c.l.b16 %v9600
    %v9747 = vunpack.c.h.b16 %v9600
    %v9748 = vunpack.c.l.b16 %v9601
    %v9749 = vunpack.c.h.b16 %v9601
    %v9750 = vunpack.c.l.b16 %v9602
    %v9751 = vunpack.c.h.b16 %v9602
    %v9752 = vunpack.c.l.b16 %v9603
    %v9753 = vunpack.c.h.b16 %v9603
    %v9754 = vunpack.c.l.b16 %v9604
    %v9755 = vunpack.c.h.b16 %v9604
    %v9756 = vunpack.c.l.b16 %v9605
    %v9757 = vunpack.c.h.b16 %v9605
    %v9758 = vunpack.c.l.b16 %v9606
    %v9759 = vunpack.c.h.b16 %v9606
    %v9760 = vunpack.c.l.b16 %v9607
    %v9761 = vunpack.c.h.b16 %v9607
    %v9762 = vunpack.c.l.b16 %v9608
    %v9763 = vunpack.c.h.b16 %v9608
    %v9764 = vunpack.c.l.b16 %v9609
    %v9765 = vunpack.c.h.b16 %v9609
    %v9766 = vunpack.c.l.b16 %v9610
    %v9767 = vunpack.c.h.b16 %v9610
    %v9768 = vunpack.c.l.b16 %v9611
    %v9769 = vunpack.c.h.b16 %v9611
    %v9770 = vunpack.c.l.b16 %v9612
    %v9771 = vunpack.c.h.b16 %v9612
    %v9772 = vunpack.c.l.b16 %v9613
    %v9773 = vunpack.c.h.b16 %v9613
    %v9774 = vunpack.c.l.b16 %v9614
    %v9775 = vunpack.c.h.b16 %v9614
    %v9776 = vunpack.c.l.b16 %v9615
    %v9777 = vunpack.c.h.b16 %v9615
    %v9778 = vunpack.c.l.b16 %v9616
    %v9779 = vunpack.c.h.b16 %v9616
    %v9780 = vunpack.c.l.b16 %v9617
    %v9781 = vunpack.c.h.b16 %v9617
    %v9782 = vunpack.c.l.b16 %v9618
    %v9783 = vunpack.c.h.b16 %v9618
    %v9784 = vunpack.c.l.b16 %v9619
    %v9785 = vunpack.c.h.b16 %v9619
    %v9786 = vunpack.c.l.b16 %v9620
    %v9787 = vunpack.c.h.b16 %v9620
    %v9788 = vunpack.c.l.b16 %v9621
    %v9789 = vunpack.c.h.b16 %v9621
    %v9790 = vunpack.c.l.b16 %v9622
    %v9791 = vunpack.c.h.b16 %v9622
    %v9792 = vunpack.c.l.b16 %v9623
    %v9793 = vunpack.c.h.b16 %v9623
    %v9794 = vunpack.c.l.b16 %v9624
    %v9795 = vunpack.c.h.b16 %v9624
    %v9796 = vunpack.c.l.b16 %v9625
    %v9797 = vunpack.c.h.b16 %v9625
    %v9798 = vunpack.c.l.b16 %v9626
    %v9799 = vunpack.c.h.b16 %v9626
    %v9800 = vunpack.c.l.b16 %v9627
    %v9801 = vunpack.c.h.b16 %v9627
    %v9802 = vunpack.c.l.b16 %v9628
    %v9803 = vunpack.c.h.b16 %v9628
    %v9804 = vunpack.c.l.b16 %v9629
    %v9805 = vunpack.c.h.b16 %v9629
    %v9806 = vunpack.c.l.b16 %v9630
    %v9807 = vunpack.c.h.b16 %v9630
    %v9808 = vunpack.c.l.b16 %v9631
    %v9809 = vunpack.c.h.b16 %v9631
    %v9810 = vunpack.c.l.b16 %v9632
    %v9811 = vunpack.c.h.b16 %v9632
    %v9812 = vunpack.c.l.b16 %v9633
    %v9813 = vunpack.c.h.b16 %v9633
    %v9814 = vunpack.c.l.b16 %v9634
    %v9815 = vunpack.c.h.b16 %v9634
    %v9816 = vunpack.c.l.b16 %v9635
    %v9817 = vunpack.c.h.b16 %v9635
    %v9818 = vunpack.c.l.b16 %v9636
    %v9819 = vunpack.c.h.b16 %v9636
    %v9820 = vunpack.c.l.b16 %v9637
    %v9821 = vunpack.c.h.b16 %v9637
    %v9822 = vunpack.c.l.b16 %v9638
    %v9823 = vunpack.c.h.b16 %v9638
    %v9824 = vunpack.c.l.b16 %v9639
    %v9825 = vunpack.c.h.b16 %v9639
    %v9826 = vunpack.c.l.b16 %v9640
    %v9827 = vunpack.c.h.b16 %v9640
    %v9828 = vunpack.c.l.b16 %v9641
    %v9829 = vunpack.c.h.b16 %v9641
    %v9830 = vunpack.c.l.b16 %v9642
    %v9831 = vunpack.c.h.b16 %v9642
    %v9832 = vunpack.c.l.b16 %v9643
    %v9833 = vunpack.c.h.b16 %v9643
    %v9834 = vunpack.c.l.b16 %v9644
    %v9835 = vunpack.c.h.b16 %v9644
    %v9836 = vunpack.c.l.b16 %v9645
    %v9837 = vunpack.c.h.b16 %v9645
    %v9838 = vunpack.c.l.b16 %v9646
    %v9839 = vunpack.c.h.b16 %v9646
    %v9840 = vunpack.c.l.b16 %v9647
    %v9841 = vunpack.c.h.b16 %v9647
    %v9842 = vunpack.c.l.b16 %v9648
    %v9843 = vunpack.c.h.b16 %v9648
    %v9844 = vunpack.c.l.b16 %v9649
    %v9845 = vunpack.c.h.b16 %v9649
    %v9846 = vunpack.c.l.b16 %v9650
    %v9847 = vunpack.c.h.b16 %v9650
    %v9848 = vunpack.c.l.b16 %v9651
    %v9849 = vunpack.c.h.b16 %v9651
    %v9850 = vunpack.c.l.b16 %v9652
    %v9851 = vunpack.c.h.b16 %v9652
    %v9852 = vunpack.c.l.b16 %v9653
    %v9853 = vunpack.c.h.b16 %v9653
    %v9854 = vunpack.c.l.b16 %v9654
    %v9855 = vunpack.c.h.b16 %v9654
    %v9856 = vunpack.c.l.b16 %v9655
    %v9857 = vunpack.c.h.b16 %v9655
    %v9858 = vunpack.c.l.b16 %v9656
    %v9859 = vunpack.c.h.b16 %v9656
    %v9860 = vunpack.c.l.b16 %v9657
    %v9861 = vunpack.c.h.b16 %v9657
    %v9862 = vpack.c.b16 %v9736, %v9734
    %v9863 = vpack.c.b16 %v9737, %v9735
    %v9864 = vpack.c.b16 %v9740, %v9738
    %v9865 = vpack.c.b16 %v9741, %v9739
    %v9866 = vpack.c.b16 %v9744, %v9742
    %v9867 = vpack.c.b16 %v9745, %v9743
    %v9868 = vpack.c.b16 %v9748, %v9746
    %v9869 = vpack.c.b16 %v9749, %v9747
    %v9870 = vpack.c.b16 %v9752, %v9750
    %v9871 = vpack.c.b16 %v9753, %v9751
    %v9872 = vpack.c.b16 %v9756, %v9754
    %v9873 = vpack.c.b16 %v9757, %v9755
    %v9874 = vpack.c.b16 %v9760, %v9758
    %v9875 = vpack.c.b16 %v9761, %v9759
    %v9876 = vpack.c.b16 %v9764, %v9762
    %v9877 = vpack.c.b16 %v9765, %v9763
    %v9878 = vpack.c.b16 %v9768, %v9766
    %v9879 = vpack.c.b16 %v9769, %v9767
    %v9880 = vpack.c.b16 %v9772, %v9770
    %v9881 = vpack.c.b16 %v9773, %v9771
    %v9882 = vpack.c.b16 %v9776, %v9774
    %v9883 = vpack.c.b16 %v9777, %v9775
    %v9884 = vpack.c.b16 %v9780, %v9778
    %v9885 = vpack.c.b16 %v9781, %v9779
    %v9886 = vpack.c.b16 %v9784, %v9782
    %v9887 = vpack.c.b16 %v9785, %v9783
    %v9888 = vpack.c.b16 %v9788, %v9786
    %v9889 = vpack.c.b16 %v9789, %v9787
    %v9890 = vpack.c.b16 %v9792, %v9790
    %v9891 = vpack.c.b16 %v9793, %v9791
    %v9892 = vpack.c.b16 %v9796, %v9794
    %v9893 = vpack.c.b16 %v9797, %v9795
    %v9894 = vpack.c.b16 %v9800, %v9798
    %v9895 = vpack.c.b16 %v9801, %v9799
    %v9896 = vpack.c.b16 %v9804, %v9802
    %v9897 = vpack.c.b16 %v9805, %v9803
    %v9898 = vpack.c.b16 %v9808, %v9806
    %v9899 = vpack.c.b16 %v9809, %v9807
    %v9900 = vpack.c.b16 %v9812, %v9810
    %v9901 = vpack.c.b16 %v9813, %v9811
    %v9902 = vpack.c.b16 %v9816, %v9814
    %v9903 = vpack.c.b16 %v9817, %v9815
    %v9904 = vpack.c.b16 %v9820, %v9818
    %v9905 = vpack.c.b16 %v9821, %v9819
    %v9906 = vpack.c.b16 %v9824, %v9822
    %v9907 = vpack.c.b16 %v9825, %v9823
    %v9908 = vpack.c.b16 %v9828, %v9826
    %v9909 = vpack.c.b16 %v9829, %v9827
    %v9910 = vpack.c.b16 %v9832, %v9830
    %v9911 = vpack.c.b16 %v9833, %v9831
    %v9912 = vpack.c.b16 %v9836, %v9834
    %v9913 = vpack.c.b16 %v9837, %v9835
    %v9914 = vpack.c.b16 %v9840, %v9838
    %v9915 = vpack.c.b16 %v9841, %v9839
    %v9916 = vpack.c.b16 %v9844, %v9842
    %v9917 = vpack.c.b16 %v9845, %v9843
    %v9918 = vpack.c.b16 %v9848, %v9846
    %v9919 = vpack.c.b16 %v9849, %v9847
    %v9920 = vpack.c.b16 %v9852, %v9850
    %v9921 = vpack.c.b16 %v9853, %v9851
    %v9922 = vpack.c.b16 %v9856, %v9854
    %v9923 = vpack.c.b16 %v9857, %v9855
    %v9924 = vpack.c.b16 %v9860, %v9858
    %v9925 = vpack.c.b16 %v9861, %v9859
    %9990 = vmatprep.subr.bf16.mxu0 %v9877
    %9991 = vmatpush1.bf16.msra.mxu0 %v9876
    %9992 = vmatprep.subr.bf16.mxu0 %v9875
    %9993 = vmatpush1.bf16.msra.mxu0 %v9874
    %9994 = vmatprep.subr.bf16.mxu0 %v9873
    %9995 = vmatpush1.bf16.msra.mxu0 %v9872
    %9996 = vmatprep.subr.bf16.mxu0 %v9871
    %9997 = vmatpush1.bf16.msra.mxu0 %v9870
    %9998 = vmatprep.subr.bf16.mxu0 %v9869
    %9999 = vmatpush1.bf16.msra.mxu0 %v9868
    %10000 = vmatprep.subr.bf16.mxu0 %v9867
    %10001 = vmatpush1.bf16.msra.mxu0 %v9866
    %10002 = vmatprep.subr.bf16.mxu0 %v9865
    %10003 = vmatpush1.bf16.msra.mxu0 %v9864
    %10004 = vmatprep.subr.bf16.mxu0 %v9863
    %10005 = vmatpush1.bf16.msra.mxu0 %v9862
    %10006 = vmatprep.subr.bf16.mxu0 %v9893
    %10007 = vmatpush2.bf16.msra.mxu0 %v9892
    %10008 = vmatprep.subr.bf16.mxu0 %v9891
    %10009 = vmatpush2.bf16.msra.mxu0 %v9890
    %10010 = vmatprep.subr.bf16.mxu0 %v9889
    %10011 = vmatpush2.bf16.msra.mxu0 %v9888
    %10012 = vmatprep.subr.bf16.mxu0 %v9887
    %10013 = vmatpush2.bf16.msra.mxu0 %v9886
    %10014 = vmatprep.subr.bf16.mxu0 %v9885
    %10015 = vmatpush2.bf16.msra.mxu0 %v9884
    %10016 = vmatprep.subr.bf16.mxu0 %v9883
    %10017 = vmatpush2.bf16.msra.mxu0 %v9882
    %10018 = vmatprep.subr.bf16.mxu0 %v9881
    %10019 = vmatpush2.bf16.msra.mxu0 %v9880
    %10020 = vmatprep.subr.bf16.mxu0 %v9879
    %10021 = vmatpush2.bf16.msra.mxu0 %v9878
    %10022 = vmatprep.mubr.bf16.mxu0 %v9591
    %10023 = vmatmul.mubr.bf16.gmra.mxu0 %v9590
    %v10024 = vpop.f32.mrf.mxu0
    %v10025 = vadd.f32 %v9663, %v10024
    %v10026 = vpop.f32.mrf.mxu0
    %v10027 = vadd.f32 %v9667, %v10026
    %v10028 = vpop.f32.mrf.mxu0
    %v10029 = vpop.f32.mrf.mxu0
    %10030 = vdwg.mxu0
    %10031 = vmatprep.subr.bf16.mxu0 %v9909
    %10032 = vmatpush1.bf16.msra.mxu0 %v9908
    %10033 = vmatprep.subr.bf16.mxu0 %v9907
    %10034 = vmatpush1.bf16.msra.mxu0 %v9906
    %10035 = vmatprep.subr.bf16.mxu0 %v9905
    %10036 = vmatpush1.bf16.msra.mxu0 %v9904
    %10037 = vmatprep.subr.bf16.mxu0 %v9903
    %10038 = vmatpush1.bf16.msra.mxu0 %v9902
    %10039 = vmatprep.subr.bf16.mxu0 %v9901
    %10040 = vmatpush1.bf16.msra.mxu0 %v9900
    %10041 = vmatprep.subr.bf16.mxu0 %v9899
    %10042 = vmatpush1.bf16.msra.mxu0 %v9898
    %10043 = vmatprep.subr.bf16.mxu0 %v9897
    %10044 = vmatpush1.bf16.msra.mxu0 %v9896
    %10045 = vmatprep.subr.bf16.mxu0 %v9895
    %10046 = vmatpush1.bf16.msra.mxu0 %v9894
    %10047 = vmatprep.subr.bf16.mxu0 %v9925
    %10048 = vmatpush2.bf16.msra.mxu0 %v9924
    %10049 = vmatprep.subr.bf16.mxu0 %v9923
    %10050 = vmatpush2.bf16.msra.mxu0 %v9922
    %10051 = vmatprep.subr.bf16.mxu0 %v9921
    %10052 = vmatpush2.bf16.msra.mxu0 %v9920
    %10053 = vmatprep.subr.bf16.mxu0 %v9919
    %10054 = vmatpush2.bf16.msra.mxu0 %v9918
    %10055 = vmatprep.subr.bf16.mxu0 %v9917
    %10056 = vmatpush2.bf16.msra.mxu0 %v9916
    %10057 = vmatprep.subr.bf16.mxu0 %v9915
    %10058 = vmatpush2.bf16.msra.mxu0 %v9914
    %10059 = vmatprep.subr.bf16.mxu0 %v9913
    %10060 = vmatpush2.bf16.msra.mxu0 %v9912
    %10061 = vmatprep.subr.bf16.mxu0 %v9911
    %10062 = vmatpush2.bf16.msra.mxu0 %v9910
    %10063 = vmatprep.mubr.bf16.mxu0 %v9593
    %10064 = vmatmul.mubr.bf16.gmra.mxu0 %v9592
    %v10065 = vpop.f32.mrf.mxu0
    %v10066 = vadd.f32 %v10025, %v10065
    %v10067 = vpop.f32.mrf.mxu0
    %v10068 = vadd.f32 %v10027, %v10067
    %v10069 = vpop.f32.mrf.mxu0
    %v10070 = vpop.f32.mrf.mxu0
    %10071 = vdwg.mxu0
    %v10072 = vmax.f32 %v10066, 0.0
    %v10073 = vmax.f32 %v10068, 0.0
    %v10074 = vld [vmem:[%s11] sm:$0xff]
    %v10075 = vld [vmem:[%s11 + $0x8] sm:$0xff]
    %v10076 = vld [vmem:[%s11 + $0x10] sm:$0xff]
    %v10077 = vld [vmem:[%s11 + $0x18] sm:$0xff]
    %v10078 = vld [vmem:[%s11 + $0x20] sm:$0xff]
    %v10079 = vld [vmem:[%s11 + $0x28] sm:$0xff]
    %v10080 = vld [vmem:[%s11 + $0x30] sm:$0xff]
    %v10081 = vld [vmem:[%s11 + $0x38] sm:$0xff]
    %v10082 = vld [vmem:[%s11 + $0x40] sm:$0xff]
    %v10083 = vld [vmem:[%s11 + $0x48] sm:$0xff]
    %v10084 = vld [vmem:[%s11 + $0x50] sm:$0xff]
    %v10085 = vld [vmem:[%s11 + $0x58] sm:$0xff]
    %v10086 = vld [vmem:[%s11 + $0x60] sm:$0xff]
    %v10087 = vld [vmem:[%s11 + $0x68] sm:$0xff]
    %v10088 = vld [vmem:[%s11 + $0x70] sm:$0xff]
    %v10089 = vld [vmem:[%s11 + $0x78] sm:$0xff]
    %v10090 = vld [vmem:[%s11 + $0x80] sm:$0xff]
    %v10091 = vld [vmem:[%s11 + $0x88] sm:$0xff]
    %v10092 = vld [vmem:[%s11 + $0x90] sm:$0xff]
    %v10093 = vld [vmem:[%s11 + $0x98] sm:$0xff]
    %v10094 = vld [vmem:[%s11 + $0xa0] sm:$0xff]
    %v10095 = vld [vmem:[%s11 + $0xa8] sm:$0xff]
    %v10096 = vld [vmem:[%s11 + $0xb0] sm:$0xff]
    %v10097 = vld [vmem:[%s11 + $0xb8] sm:$0xff]
    %v10098 = vld [vmem:[%s11 + $0xc0] sm:$0xff]
    %v10099 = vld [vmem:[%s11 + $0xc8] sm:$0xff]
    %v10100 = vld [vmem:[%s11 + $0xd0] sm:$0xff]
    %v10101 = vld [vmem:[%s11 + $0xd8] sm:$0xff]
    %v10102 = vld [vmem:[%s11 + $0xe0] sm:$0xff]
    %v10103 = vld [vmem:[%s11 + $0xe8] sm:$0xff]
    %v10104 = vld [vmem:[%s11 + $0xf0] sm:$0xff]
    %v10105 = vld [vmem:[%s11 + $0xf8] sm:$0xff]
    %v10106 = vld [vmem:[#allocation16] sm:$0x1]
    %v10108 = vlaneseq
    %v10109 = vshrl.u32 %v10108, 7
    %v10110 = vsub.s32 0, %v10109
    %v10111 = vrot.slane %v10106, %v10110
    %10113 = vmatprep.subr.mxu0 0.0
    %10114 = vmatpush1.msra.mxu0 %v10089
    %10115 = vmatprep.subr.mxu0 0.0
    %10116 = vmatpush1.msra.mxu0 %v10088
    %10117 = vmatprep.subr.mxu0 0.0
    %10118 = vmatpush1.msra.mxu0 %v10087
    %10119 = vmatprep.subr.mxu0 0.0
    %10120 = vmatpush1.msra.mxu0 %v10086
    %10121 = vmatprep.subr.mxu0 0.0
    %10122 = vmatpush1.msra.mxu0 %v10085
    %10123 = vmatprep.subr.mxu0 0.0
    %10124 = vmatpush1.msra.mxu0 %v10084
    %10125 = vmatprep.subr.mxu0 0.0
    %10126 = vmatpush1.msra.mxu0 %v10083
    %10127 = vmatprep.subr.mxu0 0.0
    %10128 = vmatpush1.msra.mxu0 %v10082
    %10129 = vmatprep.subr.mxu0 0.0
    %10130 = vmatpush1.msra.mxu0 %v10081
    %10131 = vmatprep.subr.mxu0 0.0
    %10132 = vmatpush1.msra.mxu0 %v10080
    %10133 = vmatprep.subr.mxu0 0.0
    %10134 = vmatpush1.msra.mxu0 %v10079
    %10135 = vmatprep.subr.mxu0 0.0
    %10136 = vmatpush1.msra.mxu0 %v10078
    %10137 = vmatprep.subr.mxu0 0.0
    %10138 = vmatpush1.msra.mxu0 %v10077
    %10139 = vmatprep.subr.mxu0 0.0
    %10140 = vmatpush1.msra.mxu0 %v10076
    %10141 = vmatprep.subr.mxu0 0.0
    %10142 = vmatpush1.msra.mxu0 %v10075
    %10143 = vmatprep.subr.mxu0 0.0
    %10144 = vmatpush1.msra.mxu0 %v10074
    %10145 = vmatprep.subr.mxu0 0.0
    %10146 = vmatpush2.msra.mxu0 %v10105
    %10147 = vmatprep.subr.mxu0 0.0
    %10148 = vmatpush2.msra.mxu0 %v10104
    %10149 = vmatprep.subr.mxu0 0.0
    %10150 = vmatpush2.msra.mxu0 %v10103
    %10151 = vmatprep.subr.mxu0 0.0
    %10152 = vmatpush2.msra.mxu0 %v10102
    %10153 = vmatprep.subr.mxu0 0.0
    %10154 = vmatpush2.msra.mxu0 %v10101
    %10155 = vmatprep.subr.mxu0 0.0
    %10156 = vmatpush2.msra.mxu0 %v10100
    %10157 = vmatprep.subr.mxu0 0.0
    %10158 = vmatpush2.msra.mxu0 %v10099
    %10159 = vmatprep.subr.mxu0 0.0
    %10160 = vmatpush2.msra.mxu0 %v10098
    %10161 = vmatprep.subr.mxu0 0.0
    %10162 = vmatpush2.msra.mxu0 %v10097
    %10163 = vmatprep.subr.mxu0 0.0
    %10164 = vmatpush2.msra.mxu0 %v10096
    %10165 = vmatprep.subr.mxu0 0.0
    %10166 = vmatpush2.msra.mxu0 %v10095
    %10167 = vmatprep.subr.mxu0 0.0
    %10168 = vmatpush2.msra.mxu0 %v10094
    %10169 = vmatprep.subr.mxu0 0.0
    %10170 = vmatpush2.msra.mxu0 %v10093
    %10171 = vmatprep.subr.mxu0 0.0
    %10172 = vmatpush2.msra.mxu0 %v10092
    %10173 = vmatprep.subr.mxu0 0.0
    %10174 = vmatpush2.msra.mxu0 %v10091
    %10175 = vmatprep.subr.mxu0 0.0
    %10176 = vmatpush2.msra.mxu0 %v10090
    %10177 = vmatprep.mubr.f32.mxu0 %v10073
    %10178 = vmatmul.mubr.f32.gmra.mxu0 %v10072
    %v10179 = vpop.f32.mrf.mxu0
    %v10180 = vadd.f32 %v10111, %v10179
    %v10181 = vpop.f32.mrf.mxu0
    %10182 = vdwg.mxu0
    %vm10183 = vcmask 78848
    %10184 = vst.msk [vmem:[%s13] sm:$0x3f] %vm10183, %v10180
    // Predicated region
    $region90: #{multimodal_forward.3} parent=1 // pred_check
      _
    $region91: #{multimodal_forward.3} parent=1 // pred_check_branch
      %10186 = sbr.rel (0) target = $region93
    $region92: #{multimodal_forward.3} parent=1 // pred_region
      _
    $region93: #{multimodal_forward.3} parent=1 // pred_fallthru
      _
    // Predicated region
    $region94: #{multimodal_forward.3} parent=1 // pred_check
      _
    $region95: #{multimodal_forward.3} parent=1 // pred_check_branch
      %10188 = sbr.rel (0) target = $region97
    $region96: #{multimodal_forward.3} parent=1 // pred_region
      _
    $region97: #{multimodal_forward.3} parent=1 // pred_fallthru
      _
    %10189 = vsyncpa [#allocation4], 1
    %10190 = vsyncpa [#allocation6], 1
    %10191 = vsyncpa [#allocation9], 1
    %10192 = vsyncpa [#allocation12], 1
    %10193 = vsyncpa [#allocation15], 1

</llo_original>
